<compile_context>
chip_gen: v7x
topology: tpu7x:2x2x1
jax: 0.10.0
libtpu: 0.0.40
codegen_flags: <defaults>
</compile_context>

<pallas_src>
import math

import jax
import jax.numpy as jnp
from jax.experimental import pallas as pl
from jax.experimental.pallas import tpu as pltpu


def cvae_kernel(
    xcat_ref, cat_ref, eps_ref,
    w1_ref, b1_ref,
    wmusig_ref, bmusig_ref,
    w3z_ref, w3c_ref, b3_ref,
    w4_ref, b4_ref,
    dec_ref, mulogvar_ref,
):
    LAT = eps_ref.shape[1]

    # ---- encode: h1 = relu([x|cat|0] @ W1 + b1) ----  (bf16 mm, f32 acc)
    h1 = (
        jnp.dot(xcat_ref[...], w1_ref[...], preferred_element_type=jnp.float32)
        + b1_ref[...]
    )
    h1 = jnp.maximum(h1, 0.0)

    # ---- fused latent heads: [mu | logvar | 0-pad] (128 lanes) ----
    mulogvar = (
        jnp.dot(h1.astype(jnp.bfloat16), wmusig_ref[...],
                preferred_element_type=jnp.float32)
        + bmusig_ref[...]
    )
    mu = mulogvar[:, :LAT]
    logvar = mulogvar[:, LAT:2 * LAT]

    # ---- reparameterize (training mode), f32 ----
    z = mu + eps_ref[...] * jnp.exp(0.5 * logvar)

    # ---- decode: relu(z @ W3z + cat @ W3c + b3) ----
    h3 = (
        jnp.dot(z.astype(jnp.bfloat16), w3z_ref[...],
                preferred_element_type=jnp.float32)
        + jnp.dot(cat_ref[...], w3c_ref[...],
                  preferred_element_type=jnp.float32)
        + b3_ref[...]
    )
    h3 = jnp.maximum(h3, 0.0)

    logits = (
        jnp.dot(h3.astype(jnp.bfloat16), w4_ref[...],
                preferred_element_type=jnp.float32)
        + b4_ref[...]
    )

    # sigmoid(x) = 1 / (1 + exp(-x)): exp on EUP, approx reciprocal on EUP
    # (keeps the divide off the VALU slot).  f32 math, bf16 store.
    dec = pl.reciprocal(1.0 + jnp.exp(-logits), approx=True)
    dec_ref[...] = dec.astype(dec_ref.dtype)
    mulogvar_ref[...] = mulogvar


def _round_up(n, m):
    return ((n + m - 1) // m) * m


def _choose_tile(n, tb):
    """Batch tile: multiple of 32 (bf16 sublane packing) and >=2 grid steps
    when the batch allows it (so v7x's two TensorCores both get work)."""
    tb_eff = min(tb, _round_up(n, 32))
    if _round_up(n, tb_eff) // tb_eff < 2 and n >= 256:
        tb_eff = _round_up((n + 1) // 2, 32)
    return tb_eff


def cvae_forward(x, category, eps, params, *, tb=512):
    """Batch-tiled Pallas forward.

    Returns (decoded[bf16, (N, IN)], mu[f32, (N, LAT)], logvar[f32, (N, LAT)]).
    """
    N, IN = x.shape
    C = category.shape[1]
    LAT = eps.shape[1]
    H = params["b1"].shape[1]
    INC_PAD = params["w1"].shape[0]       # padded (input_size + n_classes)
    IN_PAD = params["w4"].shape[1]        # padded input_size (decoder out)
    MUSIG_PAD = params["wmusig"].shape[1]  # padded 2*latent_dim (>=128)

    tb_eff = _choose_tile(N, tb)
    n_pad = _round_up(N, tb_eff)

    # Fold the one-hot category into the encoder input: [x | cat | 0-pad].
    xcat = jnp.zeros((n_pad, INC_PAD), jnp.bfloat16)
    xcat = xcat.at[:N, :IN].set(x.astype(jnp.bfloat16))
    xcat = xcat.at[:N, IN:IN + C].set(category.astype(jnp.bfloat16))

    cat_b = jnp.zeros((n_pad, C), jnp.bfloat16).at[:N].set(
        category.astype(jnp.bfloat16))
    eps_f = jnp.zeros((n_pad, LAT), jnp.float32).at[:N].set(
        eps.astype(jnp.float32))

    grid = (n_pad // tb_eff,)

    def batch_spec(feat):
        return pl.BlockSpec((tb_eff, feat), lambda i: (i, 0))

    def resident_spec(arr):
        # Constant index_map: weights/biases stay VMEM-resident (DMA'd once).
        return pl.BlockSpec(arr.shape, lambda i: (0, 0))

    operands = (
        xcat, cat_b, eps_f,
        params["w1"], params["b1"],
        params["wmusig"], params["bmusig"],
        params["w3z"], params["w3c"], params["b3"],
        params["w4"], params["b4"],
    )
    in_specs = [
        batch_spec(INC_PAD), batch_spec(C), batch_spec(LAT),
        resident_spec(params["w1"]), resident_spec(params["b1"]),
        resident_spec(params["wmusig"]), resident_spec(params["bmusig"]),
        resident_spec(params["w3z"]), resident_spec(params["w3c"]),
        resident_spec(params["b3"]),
        resident_spec(params["w4"]), resident_spec(params["b4"]),
    ]

    # Advisory cost estimate for XLA's scheduler.
    flops = 2 * n_pad * (INC_PAD * H + H * MUSIG_PAD + LAT * H + C * H + H * IN_PAD)
    transcendentals = n_pad * (LAT + 2 * IN_PAD)   # reparam exp + sigmoid exp/rcp
    weight_bytes = sum(int(v.size) * v.dtype.itemsize for v in params.values())
    bytes_accessed = (
        n_pad * (INC_PAD * 2 + C * 2 + LAT * 4)    # streamed inputs
        + n_pad * (IN_PAD * 2 + MUSIG_PAD * 4)     # streamed outputs
        + weight_bytes
    )

    dec, mulogvar = pl.pallas_call(
        cvae_kernel,
        grid=grid,
        out_shape=(
            jax.ShapeDtypeStruct((n_pad, IN_PAD), jnp.bfloat16),
            jax.ShapeDtypeStruct((n_pad, MUSIG_PAD), jnp.float32),
        ),
        in_specs=in_specs,
        out_specs=(batch_spec(IN_PAD), batch_spec(MUSIG_PAD)),
        compiler_params=pltpu.CompilerParams(
            dimension_semantics=("parallel",),
        ),
        cost_estimate=pl.CostEstimate(
            flops=int(flops),
            transcendentals=int(transcendentals),
            bytes_accessed=int(bytes_accessed),
        ),
    )(*operands)

    decoded = dec[:N, :IN]                 # bf16; cast in caller if f32 needed
    mu = mulogvar[:N, :LAT]
    logvar = mulogvar[:N, LAT:2 * LAT]
    return decoded, mu, logvar


def init_params(key, input_size, n_classes, hidden_dim, latent_dim):
    """PyTorch-Linear-style init (uniform +-1/sqrt(fan_in)), then repacked:

      * fc1 kept fused over [x | category], rows zero-padded to a 128-multiple
      * fc2_mu / fc2_sigma fused into one head, zero-padded to >=128 lanes
      * fc3 split into a z-part and a category-part
      * fc4 output columns zero-padded to a 128-multiple

    Matmul weights are bf16; biases stay f32 (added after f32 accumulation).
    """
    ks = jax.random.split(key, 10)

    def linear(kw, kb, fan_in, fan_out):
        bound = 1.0 / math.sqrt(fan_in)
        w = jax.random.uniform(kw, (fan_in, fan_out), jnp.float32, -bound, bound)
        b = jax.random.uniform(kb, (1, fan_out), jnp.float32, -bound, bound)
        return w, b

    w1, b1 = linear(ks[0], ks[1], input_size + n_classes, hidden_dim)
    wmu, bmu = linear(ks[2], ks[3], hidden_dim, latent_dim)
    wsig, bsig = linear(ks[4], ks[5], hidden_dim, latent_dim)
    w3, b3 = linear(ks[6], ks[7], latent_dim + n_classes, hidden_dim)
    w4, b4 = linear(ks[8], ks[9], hidden_dim, input_size)

    inc = input_size + n_classes
    inc_pad = _round_up(inc, 128)
    in_pad = _round_up(input_size, 128)
    musig_pad = _round_up(2 * latent_dim, 128)

    w1_pad = jnp.zeros((inc_pad, hidden_dim), jnp.float32).at[:inc].set(w1)

    wmusig = jnp.zeros((hidden_dim, musig_pad), jnp.float32)
    wmusig = wmusig.at[:, :latent_dim].set(wmu)
    wmusig = wmusig.at[:, latent_dim:2 * latent_dim].set(wsig)
    bmusig = jnp.zeros((1, musig_pad), jnp.float32)
    bmusig = bmusig.at[:, :latent_dim].set(bmu)
    bmusig = bmusig.at[:, latent_dim:2 * latent_dim].set(bsig)

    w4_pad = jnp.zeros((hidden_dim, in_pad), jnp.float32).at[:, :input_size].set(w4)
    b4_pad = jnp.zeros((1, in_pad), jnp.float32).at[:, :input_size].set(b4)

    return {
        "w1": w1_pad.astype(jnp.bfloat16),               # (INC_PAD, H)
        "b1": b1,                                        # (1, H)
        "wmusig": wmusig.astype(jnp.bfloat16),           # (H, MUSIG_PAD)
        "bmusig": bmusig,                                # (1, MUSIG_PAD)
        "w3z": w3[:latent_dim].astype(jnp.bfloat16),     # (LAT, H)
        "w3c": w3[latent_dim:].astype(jnp.bfloat16),     # (C, H)
        "b3": b3,                                        # (1, H)
        "w4": w4_pad.astype(jnp.bfloat16),               # (H, IN_PAD)
        "b4": b4_pad,                                    # (1, IN_PAD)
    }


def cvae_reference(x, category, eps, params):
    """Pure-JAX reference with identical dtype discipline (bf16 mm, f32 acc),
    exact sigmoid (tolerance covers the kernel's approx reciprocal + bf16 out)."""
    N, IN = x.shape
    C = category.shape[1]
    LAT = eps.shape[1]
    INC_PAD = params["w1"].shape[0]

    xcat = jnp.zeros((N, INC_PAD), jnp.bfloat16)
    xcat = xcat.at[:, :IN].set(x.astype(jnp.bfloat16))
    xcat = xcat.at[:, IN:IN + C].set(category.astype(jnp.bfloat16))

    h1 = jnp.maximum(
        jnp.dot(xcat, params["w1"], preferred_element_type=jnp.float32)
        + params["b1"], 0.0)
    mulogvar = (jnp.dot(h1.astype(jnp.bfloat16), params["wmusig"],
                        preferred_element_type=jnp.float32) + params["bmusig"])
    mu, logvar = mulogvar[:, :LAT], mulogvar[:, LAT:2 * LAT]
    z = mu + eps * jnp.exp(0.5 * logvar)
    h3 = jnp.maximum(
        jnp.dot(z.astype(jnp.bfloat16), params["w3z"],
                preferred_element_type=jnp.float32)
        + jnp.dot(category.astype(jnp.bfloat16), params["w3c"],
                  preferred_element_type=jnp.float32)
        + params["b3"], 0.0)
    logits = (jnp.dot(h3.astype(jnp.bfloat16), params["w4"],
                      preferred_element_type=jnp.float32) + params["b4"])
    dec = jax.nn.sigmoid(logits)[:, :IN]
    return dec, mu, logvar


if __name__ == "__main__":
    # Shapes consistent with the module's 2-D (N x features) forward.
    N = 512
    INPUT_SIZE = 784
    N_CLASSES = 10
    HIDDEN_DIM = 256
    LATENT_DIM = 16

    key = jax.random.PRNGKey(0)
    kx, kc, keps, kp = jax.random.split(key, 4)

    x = jax.random.uniform(kx, (N, INPUT_SIZE), jnp.float32)           # pixel-like
    cat_idx = jax.random.randint(kc, (N,), 0, N_CLASSES)
    category = jax.nn.one_hot(cat_idx, N_CLASSES, dtype=jnp.float32)   # (N, C)
    eps = jax.random.normal(keps, (N, LATENT_DIM), jnp.float32)        # reparam noise

    params = init_params(kp, INPUT_SIZE, N_CLASSES, HIDDEN_DIM, LATENT_DIM)

    decoded, mu, logvar = cvae_forward(x, category, eps, params, tb=512)
    jax.block_until_ready((decoded, mu, logvar))

    # Correctness check against a pure-JAX reference with the same numerics.
    dec_ref, mu_ref, logvar_ref = cvae_reference(x, category, eps, params)
    assert decoded.shape == (N, INPUT_SIZE)
    assert mu.shape == (N, LATENT_DIM) and logvar.shape == (N, LATENT_DIM)
    assert jnp.allclose(decoded.astype(jnp.float32), dec_ref, atol=2e-2, rtol=2e-2)
    assert jnp.allclose(mu, mu_ref, atol=2e-2, rtol=2e-2)
    assert jnp.allclose(logvar, logvar_ref, atol=2e-2, rtol=2e-2)

    print("KERNEL_OK")
</pallas_src>

<mosaic_0001>
module attributes {stable_mosaic.version = 11 : i64} {
  func.func @cvae_kernel(%arg0: i32, %arg1: memref<256x896xbf16, #tpu.memory_space<vmem>>, %arg2: memref<256x10xbf16, #tpu.memory_space<vmem>>, %arg3: memref<256x16xf32, #tpu.memory_space<vmem>>, %arg4: memref<896x256xbf16, #tpu.memory_space<vmem>>, %arg5: memref<1x256xf32, #tpu.memory_space<vmem>>, %arg6: memref<256x128xbf16, #tpu.memory_space<vmem>>, %arg7: memref<1x128xf32, #tpu.memory_space<vmem>>, %arg8: memref<16x256xbf16, #tpu.memory_space<vmem>>, %arg9: memref<10x256xbf16, #tpu.memory_space<vmem>>, %arg10: memref<1x256xf32, #tpu.memory_space<vmem>>, %arg11: memref<256x896xbf16, #tpu.memory_space<vmem>>, %arg12: memref<1x896xf32, #tpu.memory_space<vmem>>, %arg13: memref<256x896xbf16, #tpu.memory_space<vmem>>, %arg14: memref<256x128xf32, #tpu.memory_space<vmem>>) attributes {dimension_semantics = [#tpu.dimension_semantics<parallel>], iteration_bounds = array<i64: 2>, scalar_prefetch = 0 : i64, scratch_operands = 0 : i64, tpu.core_type = #tpu.core_type<tc>, window_params = [{transform_indices = @transform_0, window_bounds = array<i64: 256, 896>}, {transform_indices = @transform_1, window_bounds = array<i64: 256, 10>}, {transform_indices = @transform_2, window_bounds = array<i64: 256, 16>}, {pipeline_mode = #tpu.pipeline_mode<synchronous>, transform_indices = @transform_3, window_bounds = array<i64: 896, 256>}, {pipeline_mode = #tpu.pipeline_mode<synchronous>, transform_indices = @transform_4, window_bounds = array<i64: 1, 256>}, {pipeline_mode = #tpu.pipeline_mode<synchronous>, transform_indices = @transform_5, window_bounds = array<i64: 256, 128>}, {pipeline_mode = #tpu.pipeline_mode<synchronous>, transform_indices = @transform_6, window_bounds = array<i64: 1, 128>}, {pipeline_mode = #tpu.pipeline_mode<synchronous>, transform_indices = @transform_7, window_bounds = array<i64: 16, 256>}, {pipeline_mode = #tpu.pipeline_mode<synchronous>, transform_indices = @transform_8, window_bounds = array<i64: 10, 256>}, {pipeline_mode = #tpu.pipeline_mode<synchronous>, transform_indices = @transform_9, window_bounds = array<i64: 1, 256>}, {pipeline_mode = #tpu.pipeline_mode<synchronous>, transform_indices = @transform_10, window_bounds = array<i64: 256, 896>}, {pipeline_mode = #tpu.pipeline_mode<synchronous>, transform_indices = @transform_11, window_bounds = array<i64: 1, 896>}, {transform_indices = @transform_12, window_bounds = array<i64: 256, 896>}, {transform_indices = @transform_13, window_bounds = array<i64: 256, 128>}]} {
    %c0 = arith.constant 0 : index
    %c0_0 = arith.constant 0 : index
    %0 = vector.load %arg1[%c0, %c0_0] : memref<256x896xbf16, #tpu.memory_space<vmem>>, vector<256x896xbf16>
    %c0_1 = arith.constant 0 : index
    %c0_2 = arith.constant 0 : index
    %1 = vector.load %arg4[%c0_1, %c0_2] : memref<896x256xbf16, #tpu.memory_space<vmem>>, vector<896x256xbf16>
    %cst = arith.constant dense<0.000000e+00> : vector<256x256xf32>
    %2 = tpu.matmul %0, %1, %cst {dimension_numbers = #tpu.dot_dimension_numbers<[1], [0], [0], [1], [0, 0, 1, 1], [], []>} : vector<256x896xbf16>, vector<896x256xbf16>, vector<256x256xf32> -> vector<256x256xf32>
    %c0_3 = arith.constant 0 : index
    %c0_4 = arith.constant 0 : index
    %3 = vector.load %arg5[%c0_3, %c0_4] : memref<1x256xf32, #tpu.memory_space<vmem>>, vector<1x256xf32>
    %4 = vector.broadcast %3 : vector<1x256xf32> to vector<256x256xf32>
    %5 = arith.addf %2, %4 : vector<256x256xf32>
    %cst_5 = arith.constant 0.000000e+00 : f32
    %6 = vector.broadcast %cst_5 : f32 to vector<256x256xf32>
    %7 = arith.maximumf %5, %6 : vector<256x256xf32>
    %8 = arith.truncf %7 : vector<256x256xf32> to vector<256x256xbf16>
    %c0_6 = arith.constant 0 : index
    %c0_7 = arith.constant 0 : index
    %9 = vector.load %arg6[%c0_6, %c0_7] : memref<256x128xbf16, #tpu.memory_space<vmem>>, vector<256x128xbf16>
    %cst_8 = arith.constant dense<0.000000e+00> : vector<256x128xf32>
    %10 = tpu.matmul %8, %9, %cst_8 {dimension_numbers = #tpu.dot_dimension_numbers<[1], [0], [0], [1], [0, 0, 1, 1], [], []>} : vector<256x256xbf16>, vector<256x128xbf16>, vector<256x128xf32> -> vector<256x128xf32>
    %c0_9 = arith.constant 0 : index
    %c0_10 = arith.constant 0 : index
    %11 = vector.load %arg7[%c0_9, %c0_10] : memref<1x128xf32, #tpu.memory_space<vmem>>, vector<1x128xf32>
    %12 = vector.broadcast %11 : vector<1x128xf32> to vector<256x128xf32>
    %13 = arith.addf %10, %12 : vector<256x128xf32>
    %14 = vector.extract_strided_slice %13 {offsets = [0, 0], sizes = [256, 16], strides = [1, 1]} : vector<256x128xf32> to vector<256x16xf32>
    %15 = vector.extract_strided_slice %13 {offsets = [0, 16], sizes = [256, 16], strides = [1, 1]} : vector<256x128xf32> to vector<256x16xf32>
    %c0_11 = arith.constant 0 : index
    %c0_12 = arith.constant 0 : index
    %16 = vector.load %arg3[%c0_11, %c0_12] : memref<256x16xf32, #tpu.memory_space<vmem>>, vector<256x16xf32>
    %cst_13 = arith.constant 5.000000e-01 : f32
    %17 = vector.broadcast %cst_13 : f32 to vector<256x16xf32>
    %18 = arith.mulf %17, %15 : vector<256x16xf32>
    %19 = math.exp %18 : vector<256x16xf32>
    %20 = arith.mulf %16, %19 : vector<256x16xf32>
    %21 = arith.addf %14, %20 : vector<256x16xf32>
    %22 = arith.truncf %21 : vector<256x16xf32> to vector<256x16xbf16>
    %c0_14 = arith.constant 0 : index
    %c0_15 = arith.constant 0 : index
    %23 = vector.load %arg8[%c0_14, %c0_15] : memref<16x256xbf16, #tpu.memory_space<vmem>>, vector<16x256xbf16>
    %cst_16 = arith.constant dense<0.000000e+00> : vector<256x256xf32>
    %24 = tpu.matmul %22, %23, %cst_16 {dimension_numbers = #tpu.dot_dimension_numbers<[1], [0], [0], [1], [0, 0, 1, 1], [], []>} : vector<256x16xbf16>, vector<16x256xbf16>, vector<256x256xf32> -> vector<256x256xf32>
    %c0_17 = arith.constant 0 : index
    %c0_18 = arith.constant 0 : index
    %25 = vector.load %arg2[%c0_17, %c0_18] : memref<256x10xbf16, #tpu.memory_space<vmem>>, vector<256x10xbf16>
    %c0_19 = arith.constant 0 : index
    %c0_20 = arith.constant 0 : index
    %26 = vector.load %arg9[%c0_19, %c0_20] : memref<10x256xbf16, #tpu.memory_space<vmem>>, vector<10x256xbf16>
    %cst_21 = arith.constant dense<0.000000e+00> : vector<256x256xf32>
    %27 = tpu.matmul %25, %26, %cst_21 {dimension_numbers = #tpu.dot_dimension_numbers<[1], [0], [0], [1], [0, 0, 1, 1], [], []>} : vector<256x10xbf16>, vector<10x256xbf16>, vector<256x256xf32> -> vector<256x256xf32>
    %28 = arith.addf %24, %27 : vector<256x256xf32>
    %c0_22 = arith.constant 0 : index
    %c0_23 = arith.constant 0 : index
    %29 = vector.load %arg10[%c0_22, %c0_23] : memref<1x256xf32, #tpu.memory_space<vmem>>, vector<1x256xf32>
    %30 = vector.broadcast %29 : vector<1x256xf32> to vector<256x256xf32>
    %31 = arith.addf %28, %30 : vector<256x256xf32>
    %cst_24 = arith.constant 0.000000e+00 : f32
    %32 = vector.broadcast %cst_24 : f32 to vector<256x256xf32>
    %33 = arith.maximumf %31, %32 : vector<256x256xf32>
    %34 = arith.truncf %33 : vector<256x256xf32> to vector<256x256xbf16>
    %c0_25 = arith.constant 0 : index
    %c0_26 = arith.constant 0 : index
    %35 = vector.load %arg11[%c0_25, %c0_26] : memref<256x896xbf16, #tpu.memory_space<vmem>>, vector<256x896xbf16>
    %cst_27 = arith.constant dense<0.000000e+00> : vector<256x896xf32>
    %36 = tpu.matmul %34, %35, %cst_27 {dimension_numbers = #tpu.dot_dimension_numbers<[1], [0], [0], [1], [0, 0, 1, 1], [], []>} : vector<256x256xbf16>, vector<256x896xbf16>, vector<256x896xf32> -> vector<256x896xf32>
    %c0_28 = arith.constant 0 : index
    %c0_29 = arith.constant 0 : index
    %37 = vector.load %arg12[%c0_28, %c0_29] : memref<1x896xf32, #tpu.memory_space<vmem>>, vector<1x896xf32>
    %38 = vector.broadcast %37 : vector<1x896xf32> to vector<256x896xf32>
    %39 = arith.addf %36, %38 : vector<256x896xf32>
    %cst_30 = arith.constant 0.000000e+00 : f32
    %40 = vector.broadcast %cst_30 : f32 to vector<256x896xf32>
    %41 = arith.subf %40, %39 : vector<256x896xf32>
    %42 = math.exp %41 : vector<256x896xf32>
    %cst_31 = arith.constant 1.000000e+00 : f32
    %43 = vector.broadcast %cst_31 : f32 to vector<256x896xf32>
    %44 = arith.addf %43, %42 : vector<256x896xf32>
    %45 = tpu.reciprocal %44 {approx = true} : vector<256x896xf32> -> vector<256x896xf32>
    %46 = arith.truncf %45 : vector<256x896xf32> to vector<256x896xbf16>
    %c0_32 = arith.constant 0 : index
    %c0_33 = arith.constant 0 : index
    %47 = vector.load %arg13[%c0_32, %c0_33] : memref<256x896xbf16, #tpu.memory_space<vmem>>, vector<256x896xbf16>
    tpu.vector_store %arg13[%c0_32, %c0_33], %46 {strides = array<i32>} : memref<256x896xbf16, #tpu.memory_space<vmem>>, vector<256x896xbf16>,
    %c0_34 = arith.constant 0 : index
    %c0_35 = arith.constant 0 : index
    %48 = vector.load %arg14[%c0_34, %c0_35] : memref<256x128xf32, #tpu.memory_space<vmem>>, vector<256x128xf32>
    tpu.vector_store %arg14[%c0_34, %c0_35], %13 {strides = array<i32>} : memref<256x128xf32, #tpu.memory_space<vmem>>, vector<256x128xf32>,
    return
  }
  func.func @transform_0(%arg0: i32) -> (i32, i32) {
    %c0_i32 = arith.constant 0 : i32
    %c0_i32_0 = arith.constant 0 : i32
    return %arg0, %c0_i32 : i32, i32
  }
  func.func @transform_1(%arg0: i32) -> (i32, i32) {
    %c0_i32 = arith.constant 0 : i32
    %c0_i32_0 = arith.constant 0 : i32
    return %arg0, %c0_i32 : i32, i32
  }
  func.func @transform_2(%arg0: i32) -> (i32, i32) {
    %c0_i32 = arith.constant 0 : i32
    %c0_i32_0 = arith.constant 0 : i32
    return %arg0, %c0_i32 : i32, i32
  }
  func.func @transform_3(%arg0: i32) -> (i32, i32) {
    %c0_i32 = arith.constant 0 : i32
    %c0_i32_0 = arith.constant 0 : i32
    %c0_i32_1 = arith.constant 0 : i32
    return %c0_i32, %c0_i32_0 : i32, i32
  }
  func.func @transform_4(%arg0: i32) -> (i32, i32) {
    %c0_i32 = arith.constant 0 : i32
    %c0_i32_0 = arith.constant 0 : i32
    %c0_i32_1 = arith.constant 0 : i32
    return %c0_i32, %c0_i32_0 : i32, i32
  }
  func.func @transform_5(%arg0: i32) -> (i32, i32) {
    %c0_i32 = arith.constant 0 : i32
    %c0_i32_0 = arith.constant 0 : i32
    %c0_i32_1 = arith.constant 0 : i32
    return %c0_i32, %c0_i32_0 : i32, i32
  }
  func.func @transform_6(%arg0: i32) -> (i32, i32) {
    %c0_i32 = arith.constant 0 : i32
    %c0_i32_0 = arith.constant 0 : i32
    %c0_i32_1 = arith.constant 0 : i32
    return %c0_i32, %c0_i32_0 : i32, i32
  }
  func.func @transform_7(%arg0: i32) -> (i32, i32) {
    %c0_i32 = arith.constant 0 : i32
    %c0_i32_0 = arith.constant 0 : i32
    %c0_i32_1 = arith.constant 0 : i32
    return %c0_i32, %c0_i32_0 : i32, i32
  }
  func.func @transform_8(%arg0: i32) -> (i32, i32) {
    %c0_i32 = arith.constant 0 : i32
    %c0_i32_0 = arith.constant 0 : i32
    %c0_i32_1 = arith.constant 0 : i32
    return %c0_i32, %c0_i32_0 : i32, i32
  }
  func.func @transform_9(%arg0: i32) -> (i32, i32) {
    %c0_i32 = arith.constant 0 : i32
    %c0_i32_0 = arith.constant 0 : i32
    %c0_i32_1 = arith.constant 0 : i32
    return %c0_i32, %c0_i32_0 : i32, i32
  }
  func.func @transform_10(%arg0: i32) -> (i32, i32) {
    %c0_i32 = arith.constant 0 : i32
    %c0_i32_0 = arith.constant 0 : i32
    %c0_i32_1 = arith.constant 0 : i32
    return %c0_i32, %c0_i32_0 : i32, i32
  }
  func.func @transform_11(%arg0: i32) -> (i32, i32) {
    %c0_i32 = arith.constant 0 : i32
    %c0_i32_0 = arith.constant 0 : i32
    %c0_i32_1 = arith.constant 0 : i32
    return %c0_i32, %c0_i32_0 : i32, i32
  }
  func.func @transform_12(%arg0: i32) -> (i32, i32) {
    %c0_i32 = arith.constant 0 : i32
    %c0_i32_0 = arith.constant 0 : i32
    return %arg0, %c0_i32 : i32, i32
  }
  func.func @transform_13(%arg0: i32) -> (i32, i32) {
    %c0_i32 = arith.constant 0 : i32
    %c0_i32_0 = arith.constant 0 : i32
    return %arg0, %c0_i32 : i32, i32
  }
}

</mosaic_0001>

<llo_original>
// kernel: tpu_custom_call.1
$region0: #{tpu_custom_call.1}
  #allocation0 [shape = 'u32[]', space=smem, size = 0x4, offset = 0x4, fixed_abs, tag = 'smem constant byte address 0x4 - core index']
  #allocation1 [shape = 'u32[144,128]{1,0:T(1,128)}', space=vmem, size = 0x12000, scoped, tag = 'internal scratch']
  %s0 = inlined_call_operand.hbm [shape: bf16[512,896], index: 0, kind: input, shape index: {}]
  %s1 = inlined_call_operand.vmem [shape: bf16[512,10], index: 1, kind: input, shape index: {}]
  %s2 = inlined_call_operand.vmem [shape: f32[512,16], index: 2, kind: input, shape index: {}]
  %s3 = inlined_call_operand.hbm [shape: bf16[896,256], index: 3, kind: input, shape index: {}]
  %s4 = inlined_call_operand.vmem [shape: f32[1,256], index: 4, kind: input, shape index: {}]
  %s5 = inlined_call_operand.hbm [shape: bf16[256,128], index: 5, kind: input, shape index: {}]
  %s6 = inlined_call_operand.vmem [shape: f32[1,128], index: 6, kind: input, shape index: {}]
  %s7 = inlined_call_operand.hbm [shape: bf16[16,256], index: 7, kind: input, shape index: {}]
  %s8 = inlined_call_operand.hbm [shape: bf16[10,256], index: 8, kind: input, shape index: {}]
  %s9 = inlined_call_operand.vmem [shape: f32[1,256], index: 9, kind: input, shape index: {}]
  %s10 = inlined_call_operand.vmem [shape: bf16[256,896], index: 10, kind: input, shape index: {}]
  %s11 = inlined_call_operand.hbm [shape: f32[1,896], index: 11, kind: input, shape index: {}]
  %s12 = inlined_call_operand.hbm [shape: bf16[512,896], index: 12, kind: output, shape index: {0}]
  %s13 = inlined_call_operand.hbm [shape: f32[512,128], index: 13, kind: output, shape index: {1}]
  %14 = xla_tuple %s12, %s13
  %s15 = sld [smem:[#allocation0]]
  $region113: #{tpu_custom_call.1} parent=0
    _
  %s17 = ssub.s32 1, %s15
  %s18 = scalar_select 0, %s17, %s15
  $region1: #{tpu_custom_call.1} parent=0
    #allocation2 [shape = 'u8[917504]{0}', space=vmem, size = 0xe0000, scoped, tag = 'input window, operand 0']
    #allocation3 [shape = 's32[2]{0}', space=sflag, size = 0x8, scoped, tag = 'scoped memory for tpu_custom_call.1']
    #allocation4 [shape = 's32[2]{0}', space=sflag, size = 0x8, scoped, tag = 'scoped memory for tpu_custom_call.1']
    #allocation5 [shape = 'u8[458752]{0}', space=vmem, size = 0x70000, scoped, tag = 'input window, operand 3, single buffered']
    #allocation6 [shape = 's32[1]{0}', space=sflag, size = 0x4, scoped, tag = 'scoped memory for tpu_custom_call.1']
    #allocation7 [shape = 'u8[65536]{0}', space=vmem, size = 0x10000, scoped, tag = 'input window, operand 5, single buffered']
    #allocation8 [shape = 'u8[8192]{0}', space=vmem, size = 0x2000, scoped, tag = 'input window, operand 7, single buffered']
    #allocation9 [shape = 's32[1]{0}', space=sflag, size = 0x4, scoped, tag = 'scoped memory for tpu_custom_call.1']
    #allocation10 [shape = 'u8[8192]{0}', space=vmem, size = 0x2000, scoped, tag = 'input window, operand 8, single buffered']
    #allocation11 [shape = 'u8[3584]{0}', space=vmem, size = 0x1000, scoped, tag = 'input window, operand 11, single buffered']
    #allocation12 [shape = 's32[1]{0}', space=sflag, size = 0x4, scoped, tag = 'scoped memory for tpu_custom_call.1']
    #allocation13 [shape = 'u8[917504]{0}', space=vmem, size = 0xe0000, scoped, tag = 'output window, operand 0']
    #allocation14 [shape = 'u8[262144]{0}', space=vmem, size = 0x40000, scoped, tag = 'output window, operand 1']
    #allocation15 [shape = 's32[2]{0}', space=sflag, size = 0x8, scoped, tag = 'scoped memory for tpu_custom_call.1']
    %19 = vsyncpa [#allocation3], 0
    %s20 = scalar_lea.sflag [#allocation3], 1
    %21 = vsyncpa %s20, 0
    %22 = vsyncpa [#allocation6], 0
    %23 = vsyncpa [#allocation9], 0
    %24 = vsyncpa [#allocation12], 0
    %25 = vsyncpa [#allocation4], 0
    %s26 = scalar_lea.sflag [#allocation4], 1
    %27 = vsyncpa %s26, 0
    %28 = vsyncpa [#allocation15], 0
    %s29 = scalar_lea.sflag [#allocation15], 1
    %30 = vsyncpa %s29, 0
    loop: start=0, step=1, limit=4
    $region2: #{tpu_custom_call.1} parent=1 // loop_pre_header
      _
    $region3: #{tpu_custom_call.1} parent=1 // loop_header
      %s32 = sphi 0, %s36
      %p33 = scmp.ge.s32.totalorder %s32, 4
      %s42 = sphi 0, %s44
      %s45 = sphi 0, %s42
      %s46 = sphi 0, %s45
      %s62 = sphi 0, %s46
      %s68 = sphi 0, %s70
      %s71 = sphi 0, %s68
      %s72 = sphi 0, %s71
      %s88 = sphi 0, %s72
      %s94 = sphi 0, %s96
      %s97 = sphi 0, %s94
      %s98 = sphi 0, %s97
      %s114 = sphi 0, %s98
      %s118 = sphi 0, %s118
      %s120 = sphi 0, %s118
      %s121 = sphi 0, %s120
      %s135 = sphi 0, %s121
      %s139 = sphi 0, %s139
      %s141 = sphi 0, %s139
      %s142 = sphi 0, %s141
      %s156 = sphi 0, %s142
      %s160 = sphi 0, %s160
      %s162 = sphi 0, %s160
      %s163 = sphi 0, %s162
      %s177 = sphi 0, %s163
      %s181 = sphi 0, %s181
      %s183 = sphi 0, %s181
      %s184 = sphi 0, %s183
      %s198 = sphi 0, %s184
      %s202 = sphi 0, %s202
      %s204 = sphi 0, %s202
      %s205 = sphi 0, %s204
      %s219 = sphi 0, %s205
      %s223 = sphi 0, %s223
      %s225 = sphi 0, %s223
      %s226 = sphi 0, %s225
      %s240 = sphi 0, %s226
      %s244 = sphi 0, %s244
      %s246 = sphi 0, %s244
      %s247 = sphi 0, %s246
      %s261 = sphi 0, %s247
      %s265 = sphi 0, %s265
      %s267 = sphi 0, %s265
      %s268 = sphi 0, %s267
      %s282 = sphi 0, %s268
      %s286 = sphi 0, %s286
      %s288 = sphi 0, %s286
      %s289 = sphi 0, %s288
      %s303 = sphi 0, %s289
      %s309 = sphi 0, %s311
      %s312 = sphi 0, %s309
      %s313 = sphi 0, %s312
      %s329 = sphi 0, %s313
      %s335 = sphi 0, %s337
      %s338 = sphi 0, %s335
      %s339 = sphi 0, %s338
      %s355 = sphi 0, %s339
    $region4: #{tpu_custom_call.1} parent=1 // loop_header_branch
      %35 = sbr.rel (%p33) target = $region8
    $region5: #{tpu_custom_call.1} parent=1 // loop_body
      %s37 = ssub.s32 %s32, 1
      %s38 = ssub.s32 %s32, 2
      %s39 = sadd.s32 %s32, 1
      %s40 = ssub.s32 %s32, %s39
      %p41 = scmp.eq.s32.totalorder %s40, 0
      %s43 = sadd.s32 %s42, 1
      %s44 = scalar_select %p41, %s42, %s43
      %p47 = pneg %p41
      %p48 = scmp.eq.s32.totalorder %s32, 1
      %p49 = por %p47, %p48
      %p50 = scmp.ne.s32.totalorder %s42, %s45
      %p51 = scmp.eq.s32.totalorder %s32, 0
      %p52 = por %p50, %p51
      %p53 = scmp.ne.s32.totalorder %s42, %s45
      %p54 = scmp.eq.s32.totalorder %s37, 1
      %p55 = por %p53, %p54
      %p56 = scmp.ne.s32.totalorder %s45, %s46
      %p57 = scmp.eq.s32.totalorder %s37, 0
      %p58 = por %p56, %p57
      %p59 = scmp.ne.s32.totalorder %s45, %s46
      %p60 = scmp.eq.s32.totalorder %s38, 1
      %p61 = por %p59, %p60
      %p63 = scmp.ne.s32.totalorder %s46, %s62
      %p64 = scmp.eq.s32.totalorder %s38, 0
      %p65 = por %p63, %p64
      %s66 = ssub.s32 %s32, %s39
      %p67 = scmp.eq.s32.totalorder %s66, 0
      %s69 = sadd.s32 %s68, 1
      %s70 = scalar_select %p67, %s68, %s69
      %p73 = pneg %p67
      %p74 = scmp.eq.s32.totalorder %s32, 1
      %p75 = por %p73, %p74
      %p76 = scmp.ne.s32.totalorder %s68, %s71
      %p77 = scmp.eq.s32.totalorder %s32, 0
      %p78 = por %p76, %p77
      %p79 = scmp.ne.s32.totalorder %s68, %s71
      %p80 = scmp.eq.s32.totalorder %s37, 1
      %p81 = por %p79, %p80
      %p82 = scmp.ne.s32.totalorder %s71, %s72
      %p83 = scmp.eq.s32.totalorder %s37, 0
      %p84 = por %p82, %p83
      %p85 = scmp.ne.s32.totalorder %s71, %s72
      %p86 = scmp.eq.s32.totalorder %s38, 1
      %p87 = por %p85, %p86
      %p89 = scmp.ne.s32.totalorder %s72, %s88
      %p90 = scmp.eq.s32.totalorder %s38, 0
      %p91 = por %p89, %p90
      %s92 = ssub.s32 %s32, %s39
      %p93 = scmp.eq.s32.totalorder %s92, 0
      %s95 = sadd.s32 %s94, 1
      %s96 = scalar_select %p93, %s94, %s95
      %p99 = pneg %p93
      %p100 = scmp.eq.s32.totalorder %s32, 1
      %p101 = por %p99, %p100
      %p102 = scmp.ne.s32.totalorder %s94, %s97
      %p103 = scmp.eq.s32.totalorder %s32, 0
      %p104 = por %p102, %p103
      %p105 = scmp.ne.s32.totalorder %s94, %s97
      %p106 = scmp.eq.s32.totalorder %s37, 1
      %p107 = por %p105, %p106
      %p108 = scmp.ne.s32.totalorder %s97, %s98
      %p109 = scmp.eq.s32.totalorder %s37, 0
      %p110 = por %p108, %p109
      %p111 = scmp.ne.s32.totalorder %s97, %s98
      %p112 = scmp.eq.s32.totalorder %s38, 1
      %p113 = por %p111, %p112
      %p115 = scmp.ne.s32.totalorder %s98, %s114
      %p116 = scmp.eq.s32.totalorder %s38, 0
      %p117 = por %p115, %p116
      %s119 = sadd.s32 %s118, 1
      %p122 = scmp.eq.s32.totalorder %s32, 1
      %p123 = scmp.ne.s32.totalorder %s118, %s120
      %p124 = scmp.eq.s32.totalorder %s32, 0
      %p125 = por %p123, %p124
      %p126 = scmp.ne.s32.totalorder %s118, %s120
      %p127 = scmp.eq.s32.totalorder %s37, 1
      %p128 = por %p126, %p127
      %p129 = scmp.ne.s32.totalorder %s120, %s121
      %p130 = scmp.eq.s32.totalorder %s37, 0
      %p131 = por %p129, %p130
      %p132 = scmp.ne.s32.totalorder %s120, %s121
      %p133 = scmp.eq.s32.totalorder %s38, 1
      %p134 = por %p132, %p133
      %p136 = scmp.ne.s32.totalorder %s121, %s135
      %p137 = scmp.eq.s32.totalorder %s38, 0
      %p138 = por %p136, %p137
      %s140 = sadd.s32 %s139, 1
      %p143 = scmp.eq.s32.totalorder %s32, 1
      %p144 = scmp.ne.s32.totalorder %s139, %s141
      %p145 = scmp.eq.s32.totalorder %s32, 0
      %p146 = por %p144, %p145
      %p147 = scmp.ne.s32.totalorder %s139, %s141
      %p148 = scmp.eq.s32.totalorder %s37, 1
      %p149 = por %p147, %p148
      %p150 = scmp.ne.s32.totalorder %s141, %s142
      %p151 = scmp.eq.s32.totalorder %s37, 0
      %p152 = por %p150, %p151
      %p153 = scmp.ne.s32.totalorder %s141, %s142
      %p154 = scmp.eq.s32.totalorder %s38, 1
      %p155 = por %p153, %p154
      %p157 = scmp.ne.s32.totalorder %s142, %s156
      %p158 = scmp.eq.s32.totalorder %s38, 0
      %p159 = por %p157, %p158
      %s161 = sadd.s32 %s160, 1
      %p164 = scmp.eq.s32.totalorder %s32, 1
      %p165 = scmp.ne.s32.totalorder %s160, %s162
      %p166 = scmp.eq.s32.totalorder %s32, 0
      %p167 = por %p165, %p166
      %p168 = scmp.ne.s32.totalorder %s160, %s162
      %p169 = scmp.eq.s32.totalorder %s37, 1
      %p170 = por %p168, %p169
      %p171 = scmp.ne.s32.totalorder %s162, %s163
      %p172 = scmp.eq.s32.totalorder %s37, 0
      %p173 = por %p171, %p172
      %p174 = scmp.ne.s32.totalorder %s162, %s163
      %p175 = scmp.eq.s32.totalorder %s38, 1
      %p176 = por %p174, %p175
      %p178 = scmp.ne.s32.totalorder %s163, %s177
      %p179 = scmp.eq.s32.totalorder %s38, 0
      %p180 = por %p178, %p179
      %s182 = sadd.s32 %s181, 1
      %p185 = scmp.eq.s32.totalorder %s32, 1
      %p186 = scmp.ne.s32.totalorder %s181, %s183
      %p187 = scmp.eq.s32.totalorder %s32, 0
      %p188 = por %p186, %p187
      %p189 = scmp.ne.s32.totalorder %s181, %s183
      %p190 = scmp.eq.s32.totalorder %s37, 1
      %p191 = por %p189, %p190
      %p192 = scmp.ne.s32.totalorder %s183, %s184
      %p193 = scmp.eq.s32.totalorder %s37, 0
      %p194 = por %p192, %p193
      %p195 = scmp.ne.s32.totalorder %s183, %s184
      %p196 = scmp.eq.s32.totalorder %s38, 1
      %p197 = por %p195, %p196
      %p199 = scmp.ne.s32.totalorder %s184, %s198
      %p200 = scmp.eq.s32.totalorder %s38, 0
      %p201 = por %p199, %p200
      %s203 = sadd.s32 %s202, 1
      %p206 = scmp.eq.s32.totalorder %s32, 1
      %p207 = scmp.ne.s32.totalorder %s202, %s204
      %p208 = scmp.eq.s32.totalorder %s32, 0
      %p209 = por %p207, %p208
      %p210 = scmp.ne.s32.totalorder %s202, %s204
      %p211 = scmp.eq.s32.totalorder %s37, 1
      %p212 = por %p210, %p211
      %p213 = scmp.ne.s32.totalorder %s204, %s205
      %p214 = scmp.eq.s32.totalorder %s37, 0
      %p215 = por %p213, %p214
      %p216 = scmp.ne.s32.totalorder %s204, %s205
      %p217 = scmp.eq.s32.totalorder %s38, 1
      %p218 = por %p216, %p217
      %p220 = scmp.ne.s32.totalorder %s205, %s219
      %p221 = scmp.eq.s32.totalorder %s38, 0
      %p222 = por %p220, %p221
      %s224 = sadd.s32 %s223, 1
      %p227 = scmp.eq.s32.totalorder %s32, 1
      %p228 = scmp.ne.s32.totalorder %s223, %s225
      %p229 = scmp.eq.s32.totalorder %s32, 0
      %p230 = por %p228, %p229
      %p231 = scmp.ne.s32.totalorder %s223, %s225
      %p232 = scmp.eq.s32.totalorder %s37, 1
      %p233 = por %p231, %p232
      %p234 = scmp.ne.s32.totalorder %s225, %s226
      %p235 = scmp.eq.s32.totalorder %s37, 0
      %p236 = por %p234, %p235
      %p237 = scmp.ne.s32.totalorder %s225, %s226
      %p238 = scmp.eq.s32.totalorder %s38, 1
      %p239 = por %p237, %p238
      %p241 = scmp.ne.s32.totalorder %s226, %s240
      %p242 = scmp.eq.s32.totalorder %s38, 0
      %p243 = por %p241, %p242
      %s245 = sadd.s32 %s244, 1
      %p248 = scmp.eq.s32.totalorder %s32, 1
      %p249 = scmp.ne.s32.totalorder %s244, %s246
      %p250 = scmp.eq.s32.totalorder %s32, 0
      %p251 = por %p249, %p250
      %p252 = scmp.ne.s32.totalorder %s244, %s246
      %p253 = scmp.eq.s32.totalorder %s37, 1
      %p254 = por %p252, %p253
      %p255 = scmp.ne.s32.totalorder %s246, %s247
      %p256 = scmp.eq.s32.totalorder %s37, 0
      %p257 = por %p255, %p256
      %p258 = scmp.ne.s32.totalorder %s246, %s247
      %p259 = scmp.eq.s32.totalorder %s38, 1
      %p260 = por %p258, %p259
      %p262 = scmp.ne.s32.totalorder %s247, %s261
      %p263 = scmp.eq.s32.totalorder %s38, 0
      %p264 = por %p262, %p263
      %s266 = sadd.s32 %s265, 1
      %p269 = scmp.eq.s32.totalorder %s32, 1
      %p270 = scmp.ne.s32.totalorder %s265, %s267
      %p271 = scmp.eq.s32.totalorder %s32, 0
      %p272 = por %p270, %p271
      %p273 = scmp.ne.s32.totalorder %s265, %s267
      %p274 = scmp.eq.s32.totalorder %s37, 1
      %p275 = por %p273, %p274
      %p276 = scmp.ne.s32.totalorder %s267, %s268
      %p277 = scmp.eq.s32.totalorder %s37, 0
      %p278 = por %p276, %p277
      %p279 = scmp.ne.s32.totalorder %s267, %s268
      %p280 = scmp.eq.s32.totalorder %s38, 1
      %p281 = por %p279, %p280
      %p283 = scmp.ne.s32.totalorder %s268, %s282
      %p284 = scmp.eq.s32.totalorder %s38, 0
      %p285 = por %p283, %p284
      %s287 = sadd.s32 %s286, 1
      %p290 = scmp.eq.s32.totalorder %s32, 1
      %p291 = scmp.ne.s32.totalorder %s286, %s288
      %p292 = scmp.eq.s32.totalorder %s32, 0
      %p293 = por %p291, %p292
      %p294 = scmp.ne.s32.totalorder %s286, %s288
      %p295 = scmp.eq.s32.totalorder %s37, 1
      %p296 = por %p294, %p295
      %p297 = scmp.ne.s32.totalorder %s288, %s289
      %p298 = scmp.eq.s32.totalorder %s37, 0
      %p299 = por %p297, %p298
      %p300 = scmp.ne.s32.totalorder %s288, %s289
      %p301 = scmp.eq.s32.totalorder %s38, 1
      %p302 = por %p300, %p301
      %p304 = scmp.ne.s32.totalorder %s289, %s303
      %p305 = scmp.eq.s32.totalorder %s38, 0
      %p306 = por %p304, %p305
      %s307 = ssub.s32 %s32, %s39
      %p308 = scmp.eq.s32.totalorder %s307, 0
      %s310 = sadd.s32 %s309, 1
      %s311 = scalar_select %p308, %s309, %s310
      %p314 = pneg %p308
      %p315 = scmp.eq.s32.totalorder %s32, 1
      %p316 = por %p314, %p315
      %p317 = scmp.ne.s32.totalorder %s309, %s312
      %p318 = scmp.eq.s32.totalorder %s32, 0
      %p319 = por %p317, %p318
      %p320 = scmp.ne.s32.totalorder %s309, %s312
      %p321 = scmp.eq.s32.totalorder %s37, 1
      %p322 = por %p320, %p321
      %p323 = scmp.ne.s32.totalorder %s312, %s313
      %p324 = scmp.eq.s32.totalorder %s37, 0
      %p325 = por %p323, %p324
      %p326 = scmp.ne.s32.totalorder %s312, %s313
      %p327 = scmp.eq.s32.totalorder %s38, 1
      %p328 = por %p326, %p327
      %p330 = scmp.ne.s32.totalorder %s313, %s329
      %p331 = scmp.eq.s32.totalorder %s38, 0
      %p332 = por %p330, %p331
      %s333 = ssub.s32 %s32, %s39
      %p334 = scmp.eq.s32.totalorder %s333, 0
      %s336 = sadd.s32 %s335, 1
      %s337 = scalar_select %p334, %s335, %s336
      %p340 = pneg %p334
      %p341 = scmp.eq.s32.totalorder %s32, 1
      %p342 = por %p340, %p341
      %p343 = scmp.ne.s32.totalorder %s335, %s338
      %p344 = scmp.eq.s32.totalorder %s32, 0
      %p345 = por %p343, %p344
      %p346 = scmp.ne.s32.totalorder %s335, %s338
      %p347 = scmp.eq.s32.totalorder %s37, 1
      %p348 = por %p346, %p347
      %p349 = scmp.ne.s32.totalorder %s338, %s339
      %p350 = scmp.eq.s32.totalorder %s37, 0
      %p351 = por %p349, %p350
      %p352 = scmp.ne.s32.totalorder %s338, %s339
      %p353 = scmp.eq.s32.totalorder %s38, 1
      %p354 = por %p352, %p353
      %p356 = scmp.ne.s32.totalorder %s339, %s355
      %p357 = scmp.eq.s32.totalorder %s38, 0
      %p358 = por %p356, %p357
      %p359 = scmp.le.s32.totalorder 1, %s32
      %p360 = scmp.lt.s32.totalorder %s32, 3
      %p361 = pnand %p359, %p360
      %p362 = pneg %p361
      // Predicated region
      $region9: #{tpu_custom_call.1} parent=5 // pred_check
        _
      $region10: #{tpu_custom_call.1} parent=5 // pred_check_branch
        %364 = sbr.rel (%p361) target = $region12
      $region11: #{tpu_custom_call.1} parent=5 // pred_region
        %s365 = ssub.s32 %s32, 1
        // Predicated region
        $region13: #{tpu_custom_call.1} parent=11 // pred_check
          %p366 = pneg %p131
        $region14: #{tpu_custom_call.1} parent=11 // pred_check_branch
          %368 = sbr.rel (%p366) target = $region16
        $region15: #{tpu_custom_call.1} parent=11 // pred_region
          %s370 = ssub.s32 14336, 14336
          %371 = vsyncadd [#allocation6], %s370
          %s372 = sshll.u32 [#allocation5], 4
          %s373 = int_to_ptr.vmem [resolvable:$true] %s372
          %378 = dma.hbm_to_vmem [thread:$0]  %s3, 14336, %s373, [#allocation6], 128, 128, 8
        $region16: #{tpu_custom_call.1} parent=11 // pred_fallthru
          _
        // Predicated region
        $region17: #{tpu_custom_call.1} parent=11 // pred_check
          %p379 = pneg %p152
        $region18: #{tpu_custom_call.1} parent=11 // pred_check_branch
          %381 = sbr.rel (%p379) target = $region20
        $region19: #{tpu_custom_call.1} parent=11 // pred_region
          _
        $region20: #{tpu_custom_call.1} parent=11 // pred_fallthru
          _
        // Predicated region
        $region21: #{tpu_custom_call.1} parent=11 // pred_check
          %p382 = pneg %p173
        $region22: #{tpu_custom_call.1} parent=11 // pred_check_branch
          %384 = sbr.rel (%p382) target = $region24
        $region23: #{tpu_custom_call.1} parent=11 // pred_region
          %s386 = ssub.s32 2048, 2048
          %387 = vsyncadd [#allocation6], %s386
          %s388 = sshll.u32 [#allocation7], 4
          %s389 = int_to_ptr.vmem [resolvable:$true] %s388
          %394 = dma.hbm_to_vmem [thread:$0]  %s5, 2048, %s389, [#allocation6], 64, 64, 4
        $region24: #{tpu_custom_call.1} parent=11 // pred_fallthru
          _
        // Predicated region
        $region25: #{tpu_custom_call.1} parent=11 // pred_check
          %p395 = pneg %p194
        $region26: #{tpu_custom_call.1} parent=11 // pred_check_branch
          %397 = sbr.rel (%p395) target = $region28
        $region27: #{tpu_custom_call.1} parent=11 // pred_region
          _
        $region28: #{tpu_custom_call.1} parent=11 // pred_fallthru
          _
        // Predicated region
        $region29: #{tpu_custom_call.1} parent=11 // pred_check
          %p398 = pneg %p215
        $region30: #{tpu_custom_call.1} parent=11 // pred_check_branch
          %400 = sbr.rel (%p398) target = $region32
        $region31: #{tpu_custom_call.1} parent=11 // pred_region
          %s402 = ssub.s32 256, 256
          %403 = vsyncadd [#allocation9], %s402
          %s404 = sshll.u32 [#allocation8], 4
          %s405 = int_to_ptr.vmem [resolvable:$true] %s404
          %410 = dma.hbm_to_vmem [thread:$0]  %s7, 256, %s405, [#allocation9], 128, 128, 8
        $region32: #{tpu_custom_call.1} parent=11 // pred_fallthru
          _
        // Predicated region
        $region33: #{tpu_custom_call.1} parent=11 // pred_check
          %p411 = pneg %p236
        $region34: #{tpu_custom_call.1} parent=11 // pred_check_branch
          %413 = sbr.rel (%p411) target = $region36
        $region35: #{tpu_custom_call.1} parent=11 // pred_region
          %s415 = ssub.s32 256, 256
          %416 = vsyncadd [#allocation9], %s415
          %s417 = sshll.u32 [#allocation10], 4
          %s418 = int_to_ptr.vmem [resolvable:$true] %s417
          %423 = dma.hbm_to_vmem [thread:$0]  %s8, 256, %s418, [#allocation9], 128, 128, 8
        $region36: #{tpu_custom_call.1} parent=11 // pred_fallthru
          _
        // Predicated region
        $region37: #{tpu_custom_call.1} parent=11 // pred_check
          %p424 = pneg %p257
        $region38: #{tpu_custom_call.1} parent=11 // pred_check_branch
          %426 = sbr.rel (%p424) target = $region40
        $region39: #{tpu_custom_call.1} parent=11 // pred_region
          _
        $region40: #{tpu_custom_call.1} parent=11 // pred_fallthru
          _
        // Predicated region
        $region41: #{tpu_custom_call.1} parent=11 // pred_check
          %p427 = pneg %p278
        $region42: #{tpu_custom_call.1} parent=11 // pred_check_branch
          %429 = sbr.rel (%p427) target = $region44
        $region43: #{tpu_custom_call.1} parent=11 // pred_region
          _
        $region44: #{tpu_custom_call.1} parent=11 // pred_fallthru
          _
        // Predicated region
        $region45: #{tpu_custom_call.1} parent=11 // pred_check
          %p430 = pneg %p299
        $region46: #{tpu_custom_call.1} parent=11 // pred_check_branch
          %432 = sbr.rel (%p430) target = $region48
        $region47: #{tpu_custom_call.1} parent=11 // pred_region
          %s434 = ssub.s32 112, 112
          %435 = vsyncadd [#allocation12], %s434
          %s437 = sshll.u32 [#allocation11], 4
          %s438 = int_to_ptr.vmem [resolvable:$true] %s437
          %440 = dma.hbm_to_vmem [thread:$0]  %s11, 112, %s438, [#allocation12]
        $region48: #{tpu_custom_call.1} parent=11 // pred_fallthru
          _
      $region12: #{tpu_custom_call.1} parent=5 // pred_fallthru
        _
      %p441 = scmp.lt.s32.totalorder %s32, 2
      // Predicated region
      $region49: #{tpu_custom_call.1} parent=5 // pred_check
        %p442 = pneg %p441
      $region50: #{tpu_custom_call.1} parent=5 // pred_check_branch
        %444 = sbr.rel (%p442) target = $region52
      $region51: #{tpu_custom_call.1} parent=5 // pred_region
        // Predicated region
        $region53: #{tpu_custom_call.1} parent=51 // pred_check
          %p445 = pneg %p52
        $region54: #{tpu_custom_call.1} parent=51 // pred_check_branch
          %447 = sbr.rel (%p445) target = $region56
        $region55: #{tpu_custom_call.1} parent=51 // pred_region
          %s448 = sand.u32 %s42, 1
          %s449 = scalar_lea.sflag [#allocation3], %s448
          %s450 = sand.u32 %s42, 1
          %s451 = smul.addr %s450, 896
          %s452 = scalar_lea.vmem [#allocation2], %s451
          %s453 = smul.u32 32, %s32
          %s455 = ssub.s32 14336, 14336
          %456 = vsyncadd %s449, %s455
          %s457 = smul.addr %s453, 7
          %s458 = smul.addr %s457, 64
          %s459 = scalar_lea.hbm %s0, %s458
          %s460 = sshll.u32 %s452, 4
          %s461 = int_to_ptr.vmem [resolvable:$true] %s460
          %466 = dma.hbm_to_vmem [thread:$0]  %s459, 14336, %s461, %s449, 448, 448, 28
        $region56: #{tpu_custom_call.1} parent=51 // pred_fallthru
          _
        // Predicated region
        $region57: #{tpu_custom_call.1} parent=51 // pred_check
          %p467 = pneg %p78
        $region58: #{tpu_custom_call.1} parent=51 // pred_check_branch
          %469 = sbr.rel (%p467) target = $region60
        $region59: #{tpu_custom_call.1} parent=51 // pred_region
          %s470 = smul.u32 32, %s32
          %p471 = scmp.lt.s32.totalorder %s470, 63
          %s472 = scalar_select %p471, %s470, 63
          %s473 = smul.addr %s472, 4
          %s474 = scalar_lea.vmem %s1, %s473
          %s475 = smul.u32 32, %s32
        $region60: #{tpu_custom_call.1} parent=51 // pred_fallthru
          _
        // Predicated region
        $region61: #{tpu_custom_call.1} parent=51 // pred_check
          %p476 = pneg %p104
        $region62: #{tpu_custom_call.1} parent=51 // pred_check_branch
          %478 = sbr.rel (%p476) target = $region64
        $region63: #{tpu_custom_call.1} parent=51 // pred_region
          %s479 = smul.u32 32, %s32
          %p480 = scmp.lt.s32.totalorder %s479, 63
          %s481 = scalar_select %p480, %s479, 63
          %s482 = smul.addr %s481, 8
          %s483 = scalar_lea.vmem %s2, %s482
          %s484 = smul.u32 32, %s32
        $region64: #{tpu_custom_call.1} parent=51 // pred_fallthru
          _
      $region52: #{tpu_custom_call.1} parent=5 // pred_fallthru
        _
      %p485 = scmp.le.s32.totalorder 1, %s32
      %p486 = scmp.lt.s32.totalorder %s32, 3
      %p487 = pnand %p485, %p486
      %p488 = pneg %p487
      // Predicated region
      $region65: #{tpu_custom_call.1} parent=5 // pred_check
        _
      $region66: #{tpu_custom_call.1} parent=5 // pred_check_branch
        %490 = sbr.rel (%p487) target = $region68
      $region67: #{tpu_custom_call.1} parent=5 // pred_region
        %s491 = ssub.s32 %s32, 1
        %s492 = sand.u32 %s45, 1
        %s493 = scalar_lea.sflag [#allocation3], %s492
        %s494 = sand.u32 %s45, 1
        %s495 = smul.addr %s494, 896
        %s496 = scalar_lea.vmem [#allocation2], %s495
        // Predicated region
        $region69: #{tpu_custom_call.1} parent=67 // pred_check
          %p497 = pneg %p58
        $region70: #{tpu_custom_call.1} parent=67 // pred_check_branch
          %499 = sbr.rel (%p497) target = $region72
        $region71: #{tpu_custom_call.1} parent=67 // pred_region
          %500 = dma.done %s493, 14336
        $region72: #{tpu_custom_call.1} parent=67 // pred_fallthru
          _
        // Predicated region
        $region73: #{tpu_custom_call.1} parent=67 // pred_check
          %p501 = pneg %p131
        $region74: #{tpu_custom_call.1} parent=67 // pred_check_branch
          %503 = sbr.rel (%p501) target = $region76
        $region75: #{tpu_custom_call.1} parent=67 // pred_region
          %504 = dma.done [#allocation6], 14336
        $region76: #{tpu_custom_call.1} parent=67 // pred_fallthru
          _
        // Predicated region
        $region77: #{tpu_custom_call.1} parent=67 // pred_check
          %p505 = pneg %p173
        $region78: #{tpu_custom_call.1} parent=67 // pred_check_branch
          %507 = sbr.rel (%p505) target = $region80
        $region79: #{tpu_custom_call.1} parent=67 // pred_region
          %508 = dma.done [#allocation6], 2048
        $region80: #{tpu_custom_call.1} parent=67 // pred_fallthru
          _
        // Predicated region
        $region81: #{tpu_custom_call.1} parent=67 // pred_check
          %p509 = pneg %p215
        $region82: #{tpu_custom_call.1} parent=67 // pred_check_branch
          %511 = sbr.rel (%p509) target = $region84
        $region83: #{tpu_custom_call.1} parent=67 // pred_region
          %512 = dma.done [#allocation9], 256
        $region84: #{tpu_custom_call.1} parent=67 // pred_fallthru
          _
        // Predicated region
        $region85: #{tpu_custom_call.1} parent=67 // pred_check
          %p513 = pneg %p236
        $region86: #{tpu_custom_call.1} parent=67 // pred_check_branch
          %515 = sbr.rel (%p513) target = $region88
        $region87: #{tpu_custom_call.1} parent=67 // pred_region
          %516 = dma.done [#allocation9], 256
        $region88: #{tpu_custom_call.1} parent=67 // pred_fallthru
          _
        // Predicated region
        $region89: #{tpu_custom_call.1} parent=67 // pred_check
          %p517 = pneg %p299
        $region90: #{tpu_custom_call.1} parent=67 // pred_check_branch
          %519 = sbr.rel (%p517) target = $region92
        $region91: #{tpu_custom_call.1} parent=67 // pred_region
          %520 = dma.done [#allocation12], 112
        $region92: #{tpu_custom_call.1} parent=67 // pred_fallthru
          _
        %s521 = sand.u32 %s45, 1
        %s522 = scalar_lea.sflag [#allocation3], %s521
        %s523 = sand.u32 %s45, 1
        %s524 = smul.addr %s523, 896
        %s525 = scalar_lea.vmem [#allocation2], %s524
        %p526 = pneg %p58
        %p527 = pneg %p55
        %s528 = smul.u32 32, %s37
        %p529 = scmp.lt.s32.totalorder %s528, 63
        %s530 = scalar_select %p529, %s528, 63
        %s531 = smul.addr %s530, 4
        %s532 = scalar_lea.vmem %s1, %s531
        %p533 = pneg %p84
        %p534 = pneg %p81
        %s535 = smul.u32 32, %s37
        %p536 = scmp.lt.s32.totalorder %s535, 63
        %s537 = scalar_select %p536, %s535, 63
        %s538 = smul.addr %s537, 8
        %s539 = scalar_lea.vmem %s2, %s538
        %p540 = pneg %p110
        %p541 = pneg %p107
        %p542 = pneg %p131
        %p543 = pneg %p128
        %p544 = pneg %p152
        %p545 = pneg %p149
        %p546 = pneg %p173
        %p547 = pneg %p170
        %p548 = pneg %p194
        %p549 = pneg %p191
        %p550 = pneg %p215
        %p551 = pneg %p212
        %p552 = pneg %p236
        %p553 = pneg %p233
        %p554 = pneg %p257
        %p555 = pneg %p254
        %p556 = pneg %p278
        %p557 = pneg %p275
        %p558 = pneg %p299
        %p559 = pneg %p296
        %p560 = pneg %p325
        %p561 = pneg %p322
        %s562 = sand.u32 %s312, 1
        %s563 = scalar_lea.sflag [#allocation4], %s562
        %s564 = sand.u32 %s312, 1
        %s565 = smul.addr %s564, 896
        %s566 = scalar_lea.vmem [#allocation13], %s565
        %p567 = pneg %p351
        %p568 = pneg %p348
        %s569 = sand.u32 %s338, 1
        %s570 = scalar_lea.sflag [#allocation15], %s569
        %s571 = sand.u32 %s338, 1
        %s572 = smul.addr %s571, 256
        %s573 = scalar_lea.vmem [#allocation14], %s572
        %s574 = smul.u32 32, %s37
        %s575 = smul.u32 32, %s37
        %p576 = scmp.lt.s32.totalorder %s575, 63
        %s577 = scalar_select %p576, %s575, 63
        %s578 = smul.addr %s577, 4
        %s579 = scalar_lea.vmem %s1, %s578
        %s580 = smul.u32 32, %s37
        %s581 = smul.u32 32, %s37
        %p582 = scmp.lt.s32.totalorder %s581, 63
        %s583 = scalar_select %p582, %s581, 63
        %s584 = smul.addr %s583, 8
        %s585 = scalar_lea.vmem %s2, %s584
        %s586 = smul.u32 32, %s37
        %s587 = smul.u32 32, %s37
        %s588 = smul.u32 32, %s37
        %v590 = vld [vmem:[%s496] sm:$0xff]
        %v591 = vld [vmem:[%s496 + $0x8] sm:$0xff]
        %v592 = vld [vmem:[%s496 + $0x10] sm:$0xff]
        %v593 = vld [vmem:[%s496 + $0x18] sm:$0xf]
        %v594 = vld [vmem:[%s496 + $0x1c] sm:$0xff]
        %v595 = vld [vmem:[%s496 + $0x24] sm:$0xff]
        %v596 = vld [vmem:[%s496 + $0x2c] sm:$0xff]
        %v597 = vld [vmem:[%s496 + $0x34] sm:$0xf]
        %v598 = vld [vmem:[%s496 + $0x38] sm:$0xff]
        %v599 = vld [vmem:[%s496 + $0x40] sm:$0xff]
        %v600 = vld [vmem:[%s496 + $0x48] sm:$0xff]
        %v601 = vld [vmem:[%s496 + $0x50] sm:$0xf]
        %v602 = vld [vmem:[%s496 + $0x54] sm:$0xff]
        %v603 = vld [vmem:[%s496 + $0x5c] sm:$0xff]
        %v604 = vld [vmem:[%s496 + $0x64] sm:$0xff]
        %v605 = vld [vmem:[%s496 + $0x6c] sm:$0xf]
        %v606 = vld [vmem:[%s496 + $0x70] sm:$0xff]
        %v607 = vld [vmem:[%s496 + $0x78] sm:$0xff]
        %v608 = vld [vmem:[%s496 + $0x80] sm:$0xff]
        %v609 = vld [vmem:[%s496 + $0x88] sm:$0xf]
        %v610 = vld [vmem:[%s496 + $0x8c] sm:$0xff]
        %v611 = vld [vmem:[%s496 + $0x94] sm:$0xff]
        %v612 = vld [vmem:[%s496 + $0x9c] sm:$0xff]
        %v613 = vld [vmem:[%s496 + $0xa4] sm:$0xf]
        %v614 = vld [vmem:[%s496 + $0xa8] sm:$0xff]
        %v615 = vld [vmem:[%s496 + $0xb0] sm:$0xff]
        %v616 = vld [vmem:[%s496 + $0xb8] sm:$0xff]
        %v617 = vld [vmem:[%s496 + $0xc0] sm:$0xf]
        %v618 = vld [vmem:[%s496 + $0xc4] sm:$0xff]
        %v619 = vld [vmem:[%s496 + $0xcc] sm:$0xff]
        %v620 = vld [vmem:[%s496 + $0xd4] sm:$0xff]
        %v621 = vld [vmem:[%s496 + $0xdc] sm:$0xf]
        %v622 = vld [vmem:[%s496 + $0xe0] sm:$0xff]
        %v623 = vld [vmem:[%s496 + $0xe8] sm:$0xff]
        %v624 = vld [vmem:[%s496 + $0xf0] sm:$0xff]
        %v625 = vld [vmem:[%s496 + $0xf8] sm:$0xf]
        %v626 = vld [vmem:[%s496 + $0xfc] sm:$0xff]
        %v627 = vld [vmem:[%s496 + $0x104] sm:$0xff]
        %v628 = vld [vmem:[%s496 + $0x10c] sm:$0xff]
        %v629 = vld [vmem:[%s496 + $0x114] sm:$0xf]
        %v630 = vld [vmem:[%s496 + $0x118] sm:$0xff]
        %v631 = vld [vmem:[%s496 + $0x120] sm:$0xff]
        %v632 = vld [vmem:[%s496 + $0x128] sm:$0xff]
        %v633 = vld [vmem:[%s496 + $0x130] sm:$0xf]
        %v634 = vld [vmem:[%s496 + $0x134] sm:$0xff]
        %v635 = vld [vmem:[%s496 + $0x13c] sm:$0xff]
        %v636 = vld [vmem:[%s496 + $0x144] sm:$0xff]
        %v637 = vld [vmem:[%s496 + $0x14c] sm:$0xf]
        %v638 = vld [vmem:[%s496 + $0x150] sm:$0xff]
        %v639 = vld [vmem:[%s496 + $0x158] sm:$0xff]
        %v640 = vld [vmem:[%s496 + $0x160] sm:$0xff]
        %v641 = vld [vmem:[%s496 + $0x168] sm:$0xf]
        %v642 = vld [vmem:[%s496 + $0x16c] sm:$0xff]
        %v643 = vld [vmem:[%s496 + $0x174] sm:$0xff]
        %v644 = vld [vmem:[%s496 + $0x17c] sm:$0xff]
        %v645 = vld [vmem:[%s496 + $0x184] sm:$0xf]
        %v646 = vld [vmem:[%s496 + $0x188] sm:$0xff]
        %v647 = vld [vmem:[%s496 + $0x190] sm:$0xff]
        %v648 = vld [vmem:[%s496 + $0x198] sm:$0xff]
        %v649 = vld [vmem:[%s496 + $0x1a0] sm:$0xf]
        %v650 = vld [vmem:[%s496 + $0x1a4] sm:$0xff]
        %v651 = vld [vmem:[%s496 + $0x1ac] sm:$0xff]
        %v652 = vld [vmem:[%s496 + $0x1b4] sm:$0xff]
        %v653 = vld [vmem:[%s496 + $0x1bc] sm:$0xf]
        %v654 = vld [vmem:[%s496 + $0x1c0] sm:$0xff]
        %v655 = vld [vmem:[%s496 + $0x1c8] sm:$0xff]
        %v656 = vld [vmem:[%s496 + $0x1d0] sm:$0xff]
        %v657 = vld [vmem:[%s496 + $0x1d8] sm:$0xf]
        %v658 = vld [vmem:[%s496 + $0x1dc] sm:$0xff]
        %v659 = vld [vmem:[%s496 + $0x1e4] sm:$0xff]
        %v660 = vld [vmem:[%s496 + $0x1ec] sm:$0xff]
        %v661 = vld [vmem:[%s496 + $0x1f4] sm:$0xf]
        %v662 = vld [vmem:[%s496 + $0x1f8] sm:$0xff]
        %v663 = vld [vmem:[%s496 + $0x200] sm:$0xff]
        %v664 = vld [vmem:[%s496 + $0x208] sm:$0xff]
        %v665 = vld [vmem:[%s496 + $0x210] sm:$0xf]
        %v666 = vld [vmem:[%s496 + $0x214] sm:$0xff]
        %v667 = vld [vmem:[%s496 + $0x21c] sm:$0xff]
        %v668 = vld [vmem:[%s496 + $0x224] sm:$0xff]
        %v669 = vld [vmem:[%s496 + $0x22c] sm:$0xf]
        %v670 = vld [vmem:[%s496 + $0x230] sm:$0xff]
        %v671 = vld [vmem:[%s496 + $0x238] sm:$0xff]
        %v672 = vld [vmem:[%s496 + $0x240] sm:$0xff]
        %v673 = vld [vmem:[%s496 + $0x248] sm:$0xf]
        %v674 = vld [vmem:[%s496 + $0x24c] sm:$0xff]
        %v675 = vld [vmem:[%s496 + $0x254] sm:$0xff]
        %v676 = vld [vmem:[%s496 + $0x25c] sm:$0xff]
        %v677 = vld [vmem:[%s496 + $0x264] sm:$0xf]
        %v678 = vld [vmem:[%s496 + $0x268] sm:$0xff]
        %v679 = vld [vmem:[%s496 + $0x270] sm:$0xff]
        %v680 = vld [vmem:[%s496 + $0x278] sm:$0xff]
        %v681 = vld [vmem:[%s496 + $0x280] sm:$0xf]
        %v682 = vld [vmem:[%s496 + $0x284] sm:$0xff]
        %v683 = vld [vmem:[%s496 + $0x28c] sm:$0xff]
        %v684 = vld [vmem:[%s496 + $0x294] sm:$0xff]
        %v685 = vld [vmem:[%s496 + $0x29c] sm:$0xf]
        %v686 = vld [vmem:[%s496 + $0x2a0] sm:$0xff]
        %v687 = vld [vmem:[%s496 + $0x2a8] sm:$0xff]
        %v688 = vld [vmem:[%s496 + $0x2b0] sm:$0xff]
        %v689 = vld [vmem:[%s496 + $0x2b8] sm:$0xf]
        %v690 = vld [vmem:[%s496 + $0x2bc] sm:$0xff]
        %v691 = vld [vmem:[%s496 + $0x2c4] sm:$0xff]
        %v692 = vld [vmem:[%s496 + $0x2cc] sm:$0xff]
        %v693 = vld [vmem:[%s496 + $0x2d4] sm:$0xf]
        %v694 = vld [vmem:[%s496 + $0x2d8] sm:$0xff]
        %v695 = vld [vmem:[%s496 + $0x2e0] sm:$0xff]
        %v696 = vld [vmem:[%s496 + $0x2e8] sm:$0xff]
        %v697 = vld [vmem:[%s496 + $0x2f0] sm:$0xf]
        %v698 = vld [vmem:[%s496 + $0x2f4] sm:$0xff]
        %v699 = vld [vmem:[%s496 + $0x2fc] sm:$0xff]
        %v700 = vld [vmem:[%s496 + $0x304] sm:$0xff]
        %v701 = vld [vmem:[%s496 + $0x30c] sm:$0xf]
        %v702 = vld [vmem:[%s496 + $0x310] sm:$0xff]
        %v703 = vld [vmem:[%s496 + $0x318] sm:$0xff]
        %v704 = vld [vmem:[%s496 + $0x320] sm:$0xff]
        %v705 = vld [vmem:[%s496 + $0x328] sm:$0xf]
        %v706 = vld [vmem:[%s496 + $0x32c] sm:$0xff]
        %v707 = vld [vmem:[%s496 + $0x334] sm:$0xff]
        %v708 = vld [vmem:[%s496 + $0x33c] sm:$0xff]
        %v709 = vld [vmem:[%s496 + $0x344] sm:$0xf]
        %v710 = vld [vmem:[%s496 + $0x348] sm:$0xff]
        %v711 = vld [vmem:[%s496 + $0x350] sm:$0xff]
        %v712 = vld [vmem:[%s496 + $0x358] sm:$0xff]
        %v713 = vld [vmem:[%s496 + $0x360] sm:$0xf]
        %v714 = vld [vmem:[%s496 + $0x364] sm:$0xff]
        %v715 = vld [vmem:[%s496 + $0x36c] sm:$0xff]
        %v716 = vld [vmem:[%s496 + $0x374] sm:$0xff]
        %v717 = vld [vmem:[%s496 + $0x37c] sm:$0xf]
        %v718 = vld [vmem:[#allocation5] sm:$0xff]
        %v719 = vld [vmem:[#allocation5 + $0x8] sm:$0xff]
        %v720 = vld [vmem:[#allocation5 + $0x10] sm:$0xff]
        %v721 = vld [vmem:[#allocation5 + $0x18] sm:$0xff]
        %v722 = vld [vmem:[#allocation5 + $0x20] sm:$0xff]
        %v723 = vld [vmem:[#allocation5 + $0x28] sm:$0xff]
        %v724 = vld [vmem:[#allocation5 + $0x30] sm:$0xff]
        %v725 = vld [vmem:[#allocation5 + $0x38] sm:$0xff]
        %v726 = vld [vmem:[#allocation5 + $0x40] sm:$0xff]
        %v727 = vld [vmem:[#allocation5 + $0x48] sm:$0xff]
        %v728 = vld [vmem:[#allocation5 + $0x50] sm:$0xff]
        %v729 = vld [vmem:[#allocation5 + $0x58] sm:$0xff]
        %v730 = vld [vmem:[#allocation5 + $0x60] sm:$0xff]
        %v731 = vld [vmem:[#allocation5 + $0x68] sm:$0xff]
        %v732 = vld [vmem:[#allocation5 + $0x70] sm:$0xff]
        %v733 = vld [vmem:[#allocation5 + $0x78] sm:$0xff]
        %v734 = vld [vmem:[#allocation5 + $0x80] sm:$0xff]
        %v735 = vld [vmem:[#allocation5 + $0x88] sm:$0xff]
        %v736 = vld [vmem:[#allocation5 + $0x90] sm:$0xff]
        %v737 = vld [vmem:[#allocation5 + $0x98] sm:$0xff]
        %v738 = vld [vmem:[#allocation5 + $0xa0] sm:$0xff]
        %v739 = vld [vmem:[#allocation5 + $0xa8] sm:$0xff]
        %v740 = vld [vmem:[#allocation5 + $0xb0] sm:$0xff]
        %v741 = vld [vmem:[#allocation5 + $0xb8] sm:$0xff]
        %v742 = vld [vmem:[#allocation5 + $0xc0] sm:$0xff]
        %v743 = vld [vmem:[#allocation5 + $0xc8] sm:$0xff]
        %v744 = vld [vmem:[#allocation5 + $0xd0] sm:$0xff]
        %v745 = vld [vmem:[#allocation5 + $0xd8] sm:$0xff]
        %v746 = vld [vmem:[#allocation5 + $0xe0] sm:$0xff]
        %v747 = vld [vmem:[#allocation5 + $0xe8] sm:$0xff]
        %v748 = vld [vmem:[#allocation5 + $0xf0] sm:$0xff]
        %v749 = vld [vmem:[#allocation5 + $0xf8] sm:$0xff]
        %v750 = vld [vmem:[#allocation5 + $0x100] sm:$0xff]
        %v751 = vld [vmem:[#allocation5 + $0x108] sm:$0xff]
        %v752 = vld [vmem:[#allocation5 + $0x110] sm:$0xff]
        %v753 = vld [vmem:[#allocation5 + $0x118] sm:$0xff]
        %v754 = vld [vmem:[#allocation5 + $0x120] sm:$0xff]
        %v755 = vld [vmem:[#allocation5 + $0x128] sm:$0xff]
        %v756 = vld [vmem:[#allocation5 + $0x130] sm:$0xff]
        %v757 = vld [vmem:[#allocation5 + $0x138] sm:$0xff]
        %v758 = vld [vmem:[#allocation5 + $0x140] sm:$0xff]
        %v759 = vld [vmem:[#allocation5 + $0x148] sm:$0xff]
        %v760 = vld [vmem:[#allocation5 + $0x150] sm:$0xff]
        %v761 = vld [vmem:[#allocation5 + $0x158] sm:$0xff]
        %v762 = vld [vmem:[#allocation5 + $0x160] sm:$0xff]
        %v763 = vld [vmem:[#allocation5 + $0x168] sm:$0xff]
        %v764 = vld [vmem:[#allocation5 + $0x170] sm:$0xff]
        %v765 = vld [vmem:[#allocation5 + $0x178] sm:$0xff]
        %v766 = vld [vmem:[#allocation5 + $0x180] sm:$0xff]
        %v767 = vld [vmem:[#allocation5 + $0x188] sm:$0xff]
        %v768 = vld [vmem:[#allocation5 + $0x190] sm:$0xff]
        %v769 = vld [vmem:[#allocation5 + $0x198] sm:$0xff]
        %v770 = vld [vmem:[#allocation5 + $0x1a0] sm:$0xff]
        %v771 = vld [vmem:[#allocation5 + $0x1a8] sm:$0xff]
        %v772 = vld [vmem:[#allocation5 + $0x1b0] sm:$0xff]
        %v773 = vld [vmem:[#allocation5 + $0x1b8] sm:$0xff]
        %v774 = vld [vmem:[#allocation5 + $0x1c0] sm:$0xff]
        %v775 = vld [vmem:[#allocation5 + $0x1c8] sm:$0xff]
        %v776 = vld [vmem:[#allocation5 + $0x1d0] sm:$0xff]
        %v777 = vld [vmem:[#allocation5 + $0x1d8] sm:$0xff]
        %v778 = vld [vmem:[#allocation5 + $0x1e0] sm:$0xff]
        %v779 = vld [vmem:[#allocation5 + $0x1e8] sm:$0xff]
        %v780 = vld [vmem:[#allocation5 + $0x1f0] sm:$0xff]
        %v781 = vld [vmem:[#allocation5 + $0x1f8] sm:$0xff]
        %v782 = vld [vmem:[#allocation5 + $0x200] sm:$0xff]
        %v783 = vld [vmem:[#allocation5 + $0x208] sm:$0xff]
        %v784 = vld [vmem:[#allocation5 + $0x210] sm:$0xff]
        %v785 = vld [vmem:[#allocation5 + $0x218] sm:$0xff]
        %v786 = vld [vmem:[#allocation5 + $0x220] sm:$0xff]
        %v787 = vld [vmem:[#allocation5 + $0x228] sm:$0xff]
        %v788 = vld [vmem:[#allocation5 + $0x230] sm:$0xff]
        %v789 = vld [vmem:[#allocation5 + $0x238] sm:$0xff]
        %v790 = vld [vmem:[#allocation5 + $0x240] sm:$0xff]
        %v791 = vld [vmem:[#allocation5 + $0x248] sm:$0xff]
        %v792 = vld [vmem:[#allocation5 + $0x250] sm:$0xff]
        %v793 = vld [vmem:[#allocation5 + $0x258] sm:$0xff]
        %v794 = vld [vmem:[#allocation5 + $0x260] sm:$0xff]
        %v795 = vld [vmem:[#allocation5 + $0x268] sm:$0xff]
        %v796 = vld [vmem:[#allocation5 + $0x270] sm:$0xff]
        %v797 = vld [vmem:[#allocation5 + $0x278] sm:$0xff]
        %v798 = vld [vmem:[#allocation5 + $0x280] sm:$0xff]
        %v799 = vld [vmem:[#allocation5 + $0x288] sm:$0xff]
        %v800 = vld [vmem:[#allocation5 + $0x290] sm:$0xff]
        %v801 = vld [vmem:[#allocation5 + $0x298] sm:$0xff]
        %v802 = vld [vmem:[#allocation5 + $0x2a0] sm:$0xff]
        %v803 = vld [vmem:[#allocation5 + $0x2a8] sm:$0xff]
        %v804 = vld [vmem:[#allocation5 + $0x2b0] sm:$0xff]
        %v805 = vld [vmem:[#allocation5 + $0x2b8] sm:$0xff]
        %v806 = vld [vmem:[#allocation5 + $0x2c0] sm:$0xff]
        %v807 = vld [vmem:[#allocation5 + $0x2c8] sm:$0xff]
        %v808 = vld [vmem:[#allocation5 + $0x2d0] sm:$0xff]
        %v809 = vld [vmem:[#allocation5 + $0x2d8] sm:$0xff]
        %v810 = vld [vmem:[#allocation5 + $0x2e0] sm:$0xff]
        %v811 = vld [vmem:[#allocation5 + $0x2e8] sm:$0xff]
        %v812 = vld [vmem:[#allocation5 + $0x2f0] sm:$0xff]
        %v813 = vld [vmem:[#allocation5 + $0x2f8] sm:$0xff]
        %v814 = vld [vmem:[#allocation5 + $0x300] sm:$0xff]
        %v815 = vld [vmem:[#allocation5 + $0x308] sm:$0xff]
        %v816 = vld [vmem:[#allocation5 + $0x310] sm:$0xff]
        %v817 = vld [vmem:[#allocation5 + $0x318] sm:$0xff]
        %v818 = vld [vmem:[#allocation5 + $0x320] sm:$0xff]
        %v819 = vld [vmem:[#allocation5 + $0x328] sm:$0xff]
        %v820 = vld [vmem:[#allocation5 + $0x330] sm:$0xff]
        %v821 = vld [vmem:[#allocation5 + $0x338] sm:$0xff]
        %v822 = vld [vmem:[#allocation5 + $0x340] sm:$0xff]
        %v823 = vld [vmem:[#allocation5 + $0x348] sm:$0xff]
        %v824 = vld [vmem:[#allocation5 + $0x350] sm:$0xff]
        %v825 = vld [vmem:[#allocation5 + $0x358] sm:$0xff]
        %v826 = vld [vmem:[#allocation5 + $0x360] sm:$0xff]
        %v827 = vld [vmem:[#allocation5 + $0x368] sm:$0xff]
        %v828 = vld [vmem:[#allocation5 + $0x370] sm:$0xff]
        %v829 = vld [vmem:[#allocation5 + $0x378] sm:$0xff]
        %v830 = vld [vmem:[%s4] sm:$0x3]
        %v832 = vlaneseq
        %v833 = vshrl.u32 %v832, 7
        %v834 = vsub.s32 0, %v833
        %v835 = vrot.slane %v830, %v834
        %v836 = vlaneseq
        %v837 = vshrl.u32 %v836, 7
        %v838 = vsub.s32 1, %v837
        %v839 = vrot.slane %v830, %v838
        %v970 = vunpack.c.l.b16 %v590
        %v971 = vunpack.c.h.b16 %v590
        %v972 = vunpack.c.l.b16 %v591
        %v973 = vunpack.c.h.b16 %v591
        %v974 = vunpack.c.l.b16 %v592
        %v975 = vunpack.c.h.b16 %v592
        %v976 = vunpack.c.l.b16 %v593
        %v977 = vunpack.c.l.b16 %v594
        %v978 = vunpack.c.h.b16 %v594
        %v979 = vunpack.c.l.b16 %v595
        %v980 = vunpack.c.h.b16 %v595
        %v981 = vunpack.c.l.b16 %v596
        %v982 = vunpack.c.h.b16 %v596
        %v983 = vunpack.c.l.b16 %v597
        %v984 = vunpack.c.l.b16 %v598
        %v985 = vunpack.c.h.b16 %v598
        %v986 = vunpack.c.l.b16 %v599
        %v987 = vunpack.c.h.b16 %v599
        %v988 = vunpack.c.l.b16 %v600
        %v989 = vunpack.c.h.b16 %v600
        %v990 = vunpack.c.l.b16 %v601
        %v991 = vunpack.c.l.b16 %v602
        %v992 = vunpack.c.h.b16 %v602
        %v993 = vunpack.c.l.b16 %v603
        %v994 = vunpack.c.h.b16 %v603
        %v995 = vunpack.c.l.b16 %v604
        %v996 = vunpack.c.h.b16 %v604
        %v997 = vunpack.c.l.b16 %v605
        %v998 = vunpack.c.l.b16 %v606
        %v999 = vunpack.c.h.b16 %v606
        %v1000 = vunpack.c.l.b16 %v607
        %v1001 = vunpack.c.h.b16 %v607
        %v1002 = vunpack.c.l.b16 %v608
        %v1003 = vunpack.c.h.b16 %v608
        %v1004 = vunpack.c.l.b16 %v609
        %v1005 = vunpack.c.l.b16 %v610
        %v1006 = vunpack.c.h.b16 %v610
        %v1007 = vunpack.c.l.b16 %v611
        %v1008 = vunpack.c.h.b16 %v611
        %v1009 = vunpack.c.l.b16 %v612
        %v1010 = vunpack.c.h.b16 %v612
        %v1011 = vunpack.c.l.b16 %v613
        %v1012 = vunpack.c.l.b16 %v614
        %v1013 = vunpack.c.h.b16 %v614
        %v1014 = vunpack.c.l.b16 %v615
        %v1015 = vunpack.c.h.b16 %v615
        %v1016 = vunpack.c.l.b16 %v616
        %v1017 = vunpack.c.h.b16 %v616
        %v1018 = vunpack.c.l.b16 %v617
        %v1019 = vunpack.c.l.b16 %v618
        %v1020 = vunpack.c.h.b16 %v618
        %v1021 = vunpack.c.l.b16 %v619
        %v1022 = vunpack.c.h.b16 %v619
        %v1023 = vunpack.c.l.b16 %v620
        %v1024 = vunpack.c.h.b16 %v620
        %v1025 = vunpack.c.l.b16 %v621
        %v1026 = vunpack.c.l.b16 %v622
        %v1027 = vunpack.c.h.b16 %v622
        %v1028 = vunpack.c.l.b16 %v623
        %v1029 = vunpack.c.h.b16 %v623
        %v1030 = vunpack.c.l.b16 %v624
        %v1031 = vunpack.c.h.b16 %v624
        %v1032 = vunpack.c.l.b16 %v625
        %v1033 = vunpack.c.l.b16 %v626
        %v1034 = vunpack.c.h.b16 %v626
        %v1035 = vunpack.c.l.b16 %v627
        %v1036 = vunpack.c.h.b16 %v627
        %v1037 = vunpack.c.l.b16 %v628
        %v1038 = vunpack.c.h.b16 %v628
        %v1039 = vunpack.c.l.b16 %v629
        %v1040 = vunpack.c.l.b16 %v630
        %v1041 = vunpack.c.h.b16 %v630
        %v1042 = vunpack.c.l.b16 %v631
        %v1043 = vunpack.c.h.b16 %v631
        %v1044 = vunpack.c.l.b16 %v632
        %v1045 = vunpack.c.h.b16 %v632
        %v1046 = vunpack.c.l.b16 %v633
        %v1047 = vunpack.c.l.b16 %v634
        %v1048 = vunpack.c.h.b16 %v634
        %v1049 = vunpack.c.l.b16 %v635
        %v1050 = vunpack.c.h.b16 %v635
        %v1051 = vunpack.c.l.b16 %v636
        %v1052 = vunpack.c.h.b16 %v636
        %v1053 = vunpack.c.l.b16 %v637
        %v1054 = vunpack.c.l.b16 %v638
        %v1055 = vunpack.c.h.b16 %v638
        %v1056 = vunpack.c.l.b16 %v639
        %v1057 = vunpack.c.h.b16 %v639
        %v1058 = vunpack.c.l.b16 %v640
        %v1059 = vunpack.c.h.b16 %v640
        %v1060 = vunpack.c.l.b16 %v641
        %v1061 = vunpack.c.l.b16 %v642
        %v1062 = vunpack.c.h.b16 %v642
        %v1063 = vunpack.c.l.b16 %v643
        %v1064 = vunpack.c.h.b16 %v643
        %v1065 = vunpack.c.l.b16 %v644
        %v1066 = vunpack.c.h.b16 %v644
        %v1067 = vunpack.c.l.b16 %v645
        %v1068 = vunpack.c.l.b16 %v646
        %v1069 = vunpack.c.h.b16 %v646
        %v1070 = vunpack.c.l.b16 %v647
        %v1071 = vunpack.c.h.b16 %v647
        %v1072 = vunpack.c.l.b16 %v648
        %v1073 = vunpack.c.h.b16 %v648
        %v1074 = vunpack.c.l.b16 %v649
        %v1075 = vunpack.c.l.b16 %v650
        %v1076 = vunpack.c.h.b16 %v650
        %v1077 = vunpack.c.l.b16 %v651
        %v1078 = vunpack.c.h.b16 %v651
        %v1079 = vunpack.c.l.b16 %v652
        %v1080 = vunpack.c.h.b16 %v652
        %v1081 = vunpack.c.l.b16 %v653
        %v1082 = vunpack.c.l.b16 %v654
        %v1083 = vunpack.c.h.b16 %v654
        %v1084 = vunpack.c.l.b16 %v655
        %v1085 = vunpack.c.h.b16 %v655
        %v1086 = vunpack.c.l.b16 %v656
        %v1087 = vunpack.c.h.b16 %v656
        %v1088 = vunpack.c.l.b16 %v657
        %v1089 = vunpack.c.l.b16 %v658
        %v1090 = vunpack.c.h.b16 %v658
        %v1091 = vunpack.c.l.b16 %v659
        %v1092 = vunpack.c.h.b16 %v659
        %v1093 = vunpack.c.l.b16 %v660
        %v1094 = vunpack.c.h.b16 %v660
        %v1095 = vunpack.c.l.b16 %v661
        %v1096 = vunpack.c.l.b16 %v662
        %v1097 = vunpack.c.h.b16 %v662
        %v1098 = vunpack.c.l.b16 %v663
        %v1099 = vunpack.c.h.b16 %v663
        %v1100 = vunpack.c.l.b16 %v664
        %v1101 = vunpack.c.h.b16 %v664
        %v1102 = vunpack.c.l.b16 %v665
        %v1103 = vunpack.c.l.b16 %v666
        %v1104 = vunpack.c.h.b16 %v666
        %v1105 = vunpack.c.l.b16 %v667
        %v1106 = vunpack.c.h.b16 %v667
        %v1107 = vunpack.c.l.b16 %v668
        %v1108 = vunpack.c.h.b16 %v668
        %v1109 = vunpack.c.l.b16 %v669
        %v1110 = vunpack.c.l.b16 %v670
        %v1111 = vunpack.c.h.b16 %v670
        %v1112 = vunpack.c.l.b16 %v671
        %v1113 = vunpack.c.h.b16 %v671
        %v1114 = vunpack.c.l.b16 %v672
        %v1115 = vunpack.c.h.b16 %v672
        %v1116 = vunpack.c.l.b16 %v673
        %v1117 = vunpack.c.l.b16 %v674
        %v1118 = vunpack.c.h.b16 %v674
        %v1119 = vunpack.c.l.b16 %v675
        %v1120 = vunpack.c.h.b16 %v675
        %v1121 = vunpack.c.l.b16 %v676
        %v1122 = vunpack.c.h.b16 %v676
        %v1123 = vunpack.c.l.b16 %v677
        %v1124 = vunpack.c.l.b16 %v678
        %v1125 = vunpack.c.h.b16 %v678
        %v1126 = vunpack.c.l.b16 %v679
        %v1127 = vunpack.c.h.b16 %v679
        %v1128 = vunpack.c.l.b16 %v680
        %v1129 = vunpack.c.h.b16 %v680
        %v1130 = vunpack.c.l.b16 %v681
        %v1131 = vunpack.c.l.b16 %v682
        %v1132 = vunpack.c.h.b16 %v682
        %v1133 = vunpack.c.l.b16 %v683
        %v1134 = vunpack.c.h.b16 %v683
        %v1135 = vunpack.c.l.b16 %v684
        %v1136 = vunpack.c.h.b16 %v684
        %v1137 = vunpack.c.l.b16 %v685
        %v1138 = vunpack.c.l.b16 %v686
        %v1139 = vunpack.c.h.b16 %v686
        %v1140 = vunpack.c.l.b16 %v687
        %v1141 = vunpack.c.h.b16 %v687
        %v1142 = vunpack.c.l.b16 %v688
        %v1143 = vunpack.c.h.b16 %v688
        %v1144 = vunpack.c.l.b16 %v689
        %v1145 = vunpack.c.l.b16 %v690
        %v1146 = vunpack.c.h.b16 %v690
        %v1147 = vunpack.c.l.b16 %v691
        %v1148 = vunpack.c.h.b16 %v691
        %v1149 = vunpack.c.l.b16 %v692
        %v1150 = vunpack.c.h.b16 %v692
        %v1151 = vunpack.c.l.b16 %v693
        %v1152 = vunpack.c.l.b16 %v694
        %v1153 = vunpack.c.h.b16 %v694
        %v1154 = vunpack.c.l.b16 %v695
        %v1155 = vunpack.c.h.b16 %v695
        %v1156 = vunpack.c.l.b16 %v696
        %v1157 = vunpack.c.h.b16 %v696
        %v1158 = vunpack.c.l.b16 %v697
        %v1159 = vunpack.c.l.b16 %v698
        %v1160 = vunpack.c.h.b16 %v698
        %v1161 = vunpack.c.l.b16 %v699
        %v1162 = vunpack.c.h.b16 %v699
        %v1163 = vunpack.c.l.b16 %v700
        %v1164 = vunpack.c.h.b16 %v700
        %v1165 = vunpack.c.l.b16 %v701
        %v1166 = vunpack.c.l.b16 %v702
        %v1167 = vunpack.c.h.b16 %v702
        %v1168 = vunpack.c.l.b16 %v703
        %v1169 = vunpack.c.h.b16 %v703
        %v1170 = vunpack.c.l.b16 %v704
        %v1171 = vunpack.c.h.b16 %v704
        %v1172 = vunpack.c.l.b16 %v705
        %v1173 = vunpack.c.l.b16 %v706
        %v1174 = vunpack.c.h.b16 %v706
        %v1175 = vunpack.c.l.b16 %v707
        %v1176 = vunpack.c.h.b16 %v707
        %v1177 = vunpack.c.l.b16 %v708
        %v1178 = vunpack.c.h.b16 %v708
        %v1179 = vunpack.c.l.b16 %v709
        %v1180 = vunpack.c.l.b16 %v710
        %v1181 = vunpack.c.h.b16 %v710
        %v1182 = vunpack.c.l.b16 %v711
        %v1183 = vunpack.c.h.b16 %v711
        %v1184 = vunpack.c.l.b16 %v712
        %v1185 = vunpack.c.h.b16 %v712
        %v1186 = vunpack.c.l.b16 %v713
        %v1187 = vunpack.c.l.b16 %v714
        %v1188 = vunpack.c.h.b16 %v714
        %v1189 = vunpack.c.l.b16 %v715
        %v1190 = vunpack.c.h.b16 %v715
        %v1191 = vunpack.c.l.b16 %v716
        %v1192 = vunpack.c.h.b16 %v716
        %v1193 = vunpack.c.l.b16 %v717
        %v1194 = vpack.c.b16 %v977, %v970
        %v1195 = vpack.c.b16 %v978, %v971
        %v1196 = vpack.c.b16 %v979, %v972
        %v1197 = vpack.c.b16 %v980, %v973
        %v1198 = vpack.c.b16 %v981, %v974
        %v1199 = vpack.c.b16 %v982, %v975
        %v1200 = vpack.c.b16 %v983, %v976
        %v1201 = vpack.c.b16 %v991, %v984
        %v1202 = vpack.c.b16 %v992, %v985
        %v1203 = vpack.c.b16 %v993, %v986
        %v1204 = vpack.c.b16 %v994, %v987
        %v1205 = vpack.c.b16 %v995, %v988
        %v1206 = vpack.c.b16 %v996, %v989
        %v1207 = vpack.c.b16 %v997, %v990
        %v1208 = vpack.c.b16 %v1005, %v998
        %v1209 = vpack.c.b16 %v1006, %v999
        %v1210 = vpack.c.b16 %v1007, %v1000
        %v1211 = vpack.c.b16 %v1008, %v1001
        %v1212 = vpack.c.b16 %v1009, %v1002
        %v1213 = vpack.c.b16 %v1010, %v1003
        %v1214 = vpack.c.b16 %v1011, %v1004
        %v1215 = vpack.c.b16 %v1019, %v1012
        %v1216 = vpack.c.b16 %v1020, %v1013
        %v1217 = vpack.c.b16 %v1021, %v1014
        %v1218 = vpack.c.b16 %v1022, %v1015
        %v1219 = vpack.c.b16 %v1023, %v1016
        %v1220 = vpack.c.b16 %v1024, %v1017
        %v1221 = vpack.c.b16 %v1025, %v1018
        %v1222 = vpack.c.b16 %v1033, %v1026
        %v1223 = vpack.c.b16 %v1034, %v1027
        %v1224 = vpack.c.b16 %v1035, %v1028
        %v1225 = vpack.c.b16 %v1036, %v1029
        %v1226 = vpack.c.b16 %v1037, %v1030
        %v1227 = vpack.c.b16 %v1038, %v1031
        %v1228 = vpack.c.b16 %v1039, %v1032
        %v1229 = vpack.c.b16 %v1047, %v1040
        %v1230 = vpack.c.b16 %v1048, %v1041
        %v1231 = vpack.c.b16 %v1049, %v1042
        %v1232 = vpack.c.b16 %v1050, %v1043
        %v1233 = vpack.c.b16 %v1051, %v1044
        %v1234 = vpack.c.b16 %v1052, %v1045
        %v1235 = vpack.c.b16 %v1053, %v1046
        %v1236 = vpack.c.b16 %v1061, %v1054
        %v1237 = vpack.c.b16 %v1062, %v1055
        %v1238 = vpack.c.b16 %v1063, %v1056
        %v1239 = vpack.c.b16 %v1064, %v1057
        %v1240 = vpack.c.b16 %v1065, %v1058
        %v1241 = vpack.c.b16 %v1066, %v1059
        %v1242 = vpack.c.b16 %v1067, %v1060
        %v1243 = vpack.c.b16 %v1075, %v1068
        %v1244 = vpack.c.b16 %v1076, %v1069
        %v1245 = vpack.c.b16 %v1077, %v1070
        %v1246 = vpack.c.b16 %v1078, %v1071
        %v1247 = vpack.c.b16 %v1079, %v1072
        %v1248 = vpack.c.b16 %v1080, %v1073
        %v1249 = vpack.c.b16 %v1081, %v1074
        %v1250 = vpack.c.b16 %v1089, %v1082
        %v1251 = vpack.c.b16 %v1090, %v1083
        %v1252 = vpack.c.b16 %v1091, %v1084
        %v1253 = vpack.c.b16 %v1092, %v1085
        %v1254 = vpack.c.b16 %v1093, %v1086
        %v1255 = vpack.c.b16 %v1094, %v1087
        %v1256 = vpack.c.b16 %v1095, %v1088
        %v1257 = vpack.c.b16 %v1103, %v1096
        %v1258 = vpack.c.b16 %v1104, %v1097
        %v1259 = vpack.c.b16 %v1105, %v1098
        %v1260 = vpack.c.b16 %v1106, %v1099
        %v1261 = vpack.c.b16 %v1107, %v1100
        %v1262 = vpack.c.b16 %v1108, %v1101
        %v1263 = vpack.c.b16 %v1109, %v1102
        %v1264 = vpack.c.b16 %v1117, %v1110
        %v1265 = vpack.c.b16 %v1118, %v1111
        %v1266 = vpack.c.b16 %v1119, %v1112
        %v1267 = vpack.c.b16 %v1120, %v1113
        %v1268 = vpack.c.b16 %v1121, %v1114
        %v1269 = vpack.c.b16 %v1122, %v1115
        %v1270 = vpack.c.b16 %v1123, %v1116
        %v1271 = vpack.c.b16 %v1131, %v1124
        %v1272 = vpack.c.b16 %v1132, %v1125
        %v1273 = vpack.c.b16 %v1133, %v1126
        %v1274 = vpack.c.b16 %v1134, %v1127
        %v1275 = vpack.c.b16 %v1135, %v1128
        %v1276 = vpack.c.b16 %v1136, %v1129
        %v1277 = vpack.c.b16 %v1137, %v1130
        %v1278 = vpack.c.b16 %v1145, %v1138
        %v1279 = vpack.c.b16 %v1146, %v1139
        %v1280 = vpack.c.b16 %v1147, %v1140
        %v1281 = vpack.c.b16 %v1148, %v1141
        %v1282 = vpack.c.b16 %v1149, %v1142
        %v1283 = vpack.c.b16 %v1150, %v1143
        %v1284 = vpack.c.b16 %v1151, %v1144
        %v1285 = vpack.c.b16 %v1159, %v1152
        %v1286 = vpack.c.b16 %v1160, %v1153
        %v1287 = vpack.c.b16 %v1161, %v1154
        %v1288 = vpack.c.b16 %v1162, %v1155
        %v1289 = vpack.c.b16 %v1163, %v1156
        %v1290 = vpack.c.b16 %v1164, %v1157
        %v1291 = vpack.c.b16 %v1165, %v1158
        %v1292 = vpack.c.b16 %v1173, %v1166
        %v1293 = vpack.c.b16 %v1174, %v1167
        %v1294 = vpack.c.b16 %v1175, %v1168
        %v1295 = vpack.c.b16 %v1176, %v1169
        %v1296 = vpack.c.b16 %v1177, %v1170
        %v1297 = vpack.c.b16 %v1178, %v1171
        %v1298 = vpack.c.b16 %v1179, %v1172
        %v1299 = vpack.c.b16 %v1187, %v1180
        %v1300 = vpack.c.b16 %v1188, %v1181
        %v1301 = vpack.c.b16 %v1189, %v1182
        %v1302 = vpack.c.b16 %v1190, %v1183
        %v1303 = vpack.c.b16 %v1191, %v1184
        %v1304 = vpack.c.b16 %v1192, %v1185
        %v1305 = vpack.c.b16 %v1193, %v1186
        %v1530 = vunpack.c.l.b16 %v718
        %v1531 = vunpack.c.h.b16 %v718
        %v1532 = vunpack.c.l.b16 %v719
        %v1533 = vunpack.c.h.b16 %v719
        %v1534 = vunpack.c.l.b16 %v720
        %v1535 = vunpack.c.h.b16 %v720
        %v1536 = vunpack.c.l.b16 %v721
        %v1537 = vunpack.c.h.b16 %v721
        %v1538 = vunpack.c.l.b16 %v722
        %v1539 = vunpack.c.h.b16 %v722
        %v1540 = vunpack.c.l.b16 %v723
        %v1541 = vunpack.c.h.b16 %v723
        %v1542 = vunpack.c.l.b16 %v724
        %v1543 = vunpack.c.h.b16 %v724
        %v1544 = vunpack.c.l.b16 %v725
        %v1545 = vunpack.c.h.b16 %v725
        %v1546 = vunpack.c.l.b16 %v726
        %v1547 = vunpack.c.h.b16 %v726
        %v1548 = vunpack.c.l.b16 %v727
        %v1549 = vunpack.c.h.b16 %v727
        %v1550 = vunpack.c.l.b16 %v728
        %v1551 = vunpack.c.h.b16 %v728
        %v1552 = vunpack.c.l.b16 %v729
        %v1553 = vunpack.c.h.b16 %v729
        %v1554 = vunpack.c.l.b16 %v730
        %v1555 = vunpack.c.h.b16 %v730
        %v1556 = vunpack.c.l.b16 %v731
        %v1557 = vunpack.c.h.b16 %v731
        %v1558 = vunpack.c.l.b16 %v732
        %v1559 = vunpack.c.h.b16 %v732
        %v1560 = vunpack.c.l.b16 %v733
        %v1561 = vunpack.c.h.b16 %v733
        %v1562 = vunpack.c.l.b16 %v734
        %v1563 = vunpack.c.h.b16 %v734
        %v1564 = vunpack.c.l.b16 %v735
        %v1565 = vunpack.c.h.b16 %v735
        %v1566 = vunpack.c.l.b16 %v736
        %v1567 = vunpack.c.h.b16 %v736
        %v1568 = vunpack.c.l.b16 %v737
        %v1569 = vunpack.c.h.b16 %v737
        %v1570 = vunpack.c.l.b16 %v738
        %v1571 = vunpack.c.h.b16 %v738
        %v1572 = vunpack.c.l.b16 %v739
        %v1573 = vunpack.c.h.b16 %v739
        %v1574 = vunpack.c.l.b16 %v740
        %v1575 = vunpack.c.h.b16 %v740
        %v1576 = vunpack.c.l.b16 %v741
        %v1577 = vunpack.c.h.b16 %v741
        %v1578 = vunpack.c.l.b16 %v742
        %v1579 = vunpack.c.h.b16 %v742
        %v1580 = vunpack.c.l.b16 %v743
        %v1581 = vunpack.c.h.b16 %v743
        %v1582 = vunpack.c.l.b16 %v744
        %v1583 = vunpack.c.h.b16 %v744
        %v1584 = vunpack.c.l.b16 %v745
        %v1585 = vunpack.c.h.b16 %v745
        %v1586 = vunpack.c.l.b16 %v746
        %v1587 = vunpack.c.h.b16 %v746
        %v1588 = vunpack.c.l.b16 %v747
        %v1589 = vunpack.c.h.b16 %v747
        %v1590 = vunpack.c.l.b16 %v748
        %v1591 = vunpack.c.h.b16 %v748
        %v1592 = vunpack.c.l.b16 %v749
        %v1593 = vunpack.c.h.b16 %v749
        %v1594 = vunpack.c.l.b16 %v750
        %v1595 = vunpack.c.h.b16 %v750
        %v1596 = vunpack.c.l.b16 %v751
        %v1597 = vunpack.c.h.b16 %v751
        %v1598 = vunpack.c.l.b16 %v752
        %v1599 = vunpack.c.h.b16 %v752
        %v1600 = vunpack.c.l.b16 %v753
        %v1601 = vunpack.c.h.b16 %v753
        %v1602 = vunpack.c.l.b16 %v754
        %v1603 = vunpack.c.h.b16 %v754
        %v1604 = vunpack.c.l.b16 %v755
        %v1605 = vunpack.c.h.b16 %v755
        %v1606 = vunpack.c.l.b16 %v756
        %v1607 = vunpack.c.h.b16 %v756
        %v1608 = vunpack.c.l.b16 %v757
        %v1609 = vunpack.c.h.b16 %v757
        %v1610 = vunpack.c.l.b16 %v758
        %v1611 = vunpack.c.h.b16 %v758
        %v1612 = vunpack.c.l.b16 %v759
        %v1613 = vunpack.c.h.b16 %v759
        %v1614 = vunpack.c.l.b16 %v760
        %v1615 = vunpack.c.h.b16 %v760
        %v1616 = vunpack.c.l.b16 %v761
        %v1617 = vunpack.c.h.b16 %v761
        %v1618 = vunpack.c.l.b16 %v762
        %v1619 = vunpack.c.h.b16 %v762
        %v1620 = vunpack.c.l.b16 %v763
        %v1621 = vunpack.c.h.b16 %v763
        %v1622 = vunpack.c.l.b16 %v764
        %v1623 = vunpack.c.h.b16 %v764
        %v1624 = vunpack.c.l.b16 %v765
        %v1625 = vunpack.c.h.b16 %v765
        %v1626 = vunpack.c.l.b16 %v766
        %v1627 = vunpack.c.h.b16 %v766
        %v1628 = vunpack.c.l.b16 %v767
        %v1629 = vunpack.c.h.b16 %v767
        %v1630 = vunpack.c.l.b16 %v768
        %v1631 = vunpack.c.h.b16 %v768
        %v1632 = vunpack.c.l.b16 %v769
        %v1633 = vunpack.c.h.b16 %v769
        %v1634 = vunpack.c.l.b16 %v770
        %v1635 = vunpack.c.h.b16 %v770
        %v1636 = vunpack.c.l.b16 %v771
        %v1637 = vunpack.c.h.b16 %v771
        %v1638 = vunpack.c.l.b16 %v772
        %v1639 = vunpack.c.h.b16 %v772
        %v1640 = vunpack.c.l.b16 %v773
        %v1641 = vunpack.c.h.b16 %v773
        %v1642 = vunpack.c.l.b16 %v774
        %v1643 = vunpack.c.h.b16 %v774
        %v1644 = vunpack.c.l.b16 %v775
        %v1645 = vunpack.c.h.b16 %v775
        %v1646 = vunpack.c.l.b16 %v776
        %v1647 = vunpack.c.h.b16 %v776
        %v1648 = vunpack.c.l.b16 %v777
        %v1649 = vunpack.c.h.b16 %v777
        %v1650 = vunpack.c.l.b16 %v778
        %v1651 = vunpack.c.h.b16 %v778
        %v1652 = vunpack.c.l.b16 %v779
        %v1653 = vunpack.c.h.b16 %v779
        %v1654 = vunpack.c.l.b16 %v780
        %v1655 = vunpack.c.h.b16 %v780
        %v1656 = vunpack.c.l.b16 %v781
        %v1657 = vunpack.c.h.b16 %v781
        %v1658 = vunpack.c.l.b16 %v782
        %v1659 = vunpack.c.h.b16 %v782
        %v1660 = vunpack.c.l.b16 %v783
        %v1661 = vunpack.c.h.b16 %v783
        %v1662 = vunpack.c.l.b16 %v784
        %v1663 = vunpack.c.h.b16 %v784
        %v1664 = vunpack.c.l.b16 %v785
        %v1665 = vunpack.c.h.b16 %v785
        %v1666 = vunpack.c.l.b16 %v786
        %v1667 = vunpack.c.h.b16 %v786
        %v1668 = vunpack.c.l.b16 %v787
        %v1669 = vunpack.c.h.b16 %v787
        %v1670 = vunpack.c.l.b16 %v788
        %v1671 = vunpack.c.h.b16 %v788
        %v1672 = vunpack.c.l.b16 %v789
        %v1673 = vunpack.c.h.b16 %v789
        %v1674 = vunpack.c.l.b16 %v790
        %v1675 = vunpack.c.h.b16 %v790
        %v1676 = vunpack.c.l.b16 %v791
        %v1677 = vunpack.c.h.b16 %v791
        %v1678 = vunpack.c.l.b16 %v792
        %v1679 = vunpack.c.h.b16 %v792
        %v1680 = vunpack.c.l.b16 %v793
        %v1681 = vunpack.c.h.b16 %v793
        %v1682 = vunpack.c.l.b16 %v794
        %v1683 = vunpack.c.h.b16 %v794
        %v1684 = vunpack.c.l.b16 %v795
        %v1685 = vunpack.c.h.b16 %v795
        %v1686 = vunpack.c.l.b16 %v796
        %v1687 = vunpack.c.h.b16 %v796
        %v1688 = vunpack.c.l.b16 %v797
        %v1689 = vunpack.c.h.b16 %v797
        %v1690 = vunpack.c.l.b16 %v798
        %v1691 = vunpack.c.h.b16 %v798
        %v1692 = vunpack.c.l.b16 %v799
        %v1693 = vunpack.c.h.b16 %v799
        %v1694 = vunpack.c.l.b16 %v800
        %v1695 = vunpack.c.h.b16 %v800
        %v1696 = vunpack.c.l.b16 %v801
        %v1697 = vunpack.c.h.b16 %v801
        %v1698 = vunpack.c.l.b16 %v802
        %v1699 = vunpack.c.h.b16 %v802
        %v1700 = vunpack.c.l.b16 %v803
        %v1701 = vunpack.c.h.b16 %v803
        %v1702 = vunpack.c.l.b16 %v804
        %v1703 = vunpack.c.h.b16 %v804
        %v1704 = vunpack.c.l.b16 %v805
        %v1705 = vunpack.c.h.b16 %v805
        %v1706 = vunpack.c.l.b16 %v806
        %v1707 = vunpack.c.h.b16 %v806
        %v1708 = vunpack.c.l.b16 %v807
        %v1709 = vunpack.c.h.b16 %v807
        %v1710 = vunpack.c.l.b16 %v808
        %v1711 = vunpack.c.h.b16 %v808
        %v1712 = vunpack.c.l.b16 %v809
        %v1713 = vunpack.c.h.b16 %v809
        %v1714 = vunpack.c.l.b16 %v810
        %v1715 = vunpack.c.h.b16 %v810
        %v1716 = vunpack.c.l.b16 %v811
        %v1717 = vunpack.c.h.b16 %v811
        %v1718 = vunpack.c.l.b16 %v812
        %v1719 = vunpack.c.h.b16 %v812
        %v1720 = vunpack.c.l.b16 %v813
        %v1721 = vunpack.c.h.b16 %v813
        %v1722 = vunpack.c.l.b16 %v814
        %v1723 = vunpack.c.h.b16 %v814
        %v1724 = vunpack.c.l.b16 %v815
        %v1725 = vunpack.c.h.b16 %v815
        %v1726 = vunpack.c.l.b16 %v816
        %v1727 = vunpack.c.h.b16 %v816
        %v1728 = vunpack.c.l.b16 %v817
        %v1729 = vunpack.c.h.b16 %v817
        %v1730 = vunpack.c.l.b16 %v818
        %v1731 = vunpack.c.h.b16 %v818
        %v1732 = vunpack.c.l.b16 %v819
        %v1733 = vunpack.c.h.b16 %v819
        %v1734 = vunpack.c.l.b16 %v820
        %v1735 = vunpack.c.h.b16 %v820
        %v1736 = vunpack.c.l.b16 %v821
        %v1737 = vunpack.c.h.b16 %v821
        %v1738 = vunpack.c.l.b16 %v822
        %v1739 = vunpack.c.h.b16 %v822
        %v1740 = vunpack.c.l.b16 %v823
        %v1741 = vunpack.c.h.b16 %v823
        %v1742 = vunpack.c.l.b16 %v824
        %v1743 = vunpack.c.h.b16 %v824
        %v1744 = vunpack.c.l.b16 %v825
        %v1745 = vunpack.c.h.b16 %v825
        %v1746 = vunpack.c.l.b16 %v826
        %v1747 = vunpack.c.h.b16 %v826
        %v1748 = vunpack.c.l.b16 %v827
        %v1749 = vunpack.c.h.b16 %v827
        %v1750 = vunpack.c.l.b16 %v828
        %v1751 = vunpack.c.h.b16 %v828
        %v1752 = vunpack.c.l.b16 %v829
        %v1753 = vunpack.c.h.b16 %v829
        %v1754 = vpack.c.b16 %v1532, %v1530
        %v1755 = vpack.c.b16 %v1533, %v1531
        %v1756 = vpack.c.b16 %v1536, %v1534
        %v1757 = vpack.c.b16 %v1537, %v1535
        %v1758 = vpack.c.b16 %v1540, %v1538
        %v1759 = vpack.c.b16 %v1541, %v1539
        %v1760 = vpack.c.b16 %v1544, %v1542
        %v1761 = vpack.c.b16 %v1545, %v1543
        %v1762 = vpack.c.b16 %v1548, %v1546
        %v1763 = vpack.c.b16 %v1549, %v1547
        %v1764 = vpack.c.b16 %v1552, %v1550
        %v1765 = vpack.c.b16 %v1553, %v1551
        %v1766 = vpack.c.b16 %v1556, %v1554
        %v1767 = vpack.c.b16 %v1557, %v1555
        %v1768 = vpack.c.b16 %v1560, %v1558
        %v1769 = vpack.c.b16 %v1561, %v1559
        %v1770 = vpack.c.b16 %v1564, %v1562
        %v1771 = vpack.c.b16 %v1565, %v1563
        %v1772 = vpack.c.b16 %v1568, %v1566
        %v1773 = vpack.c.b16 %v1569, %v1567
        %v1774 = vpack.c.b16 %v1572, %v1570
        %v1775 = vpack.c.b16 %v1573, %v1571
        %v1776 = vpack.c.b16 %v1576, %v1574
        %v1777 = vpack.c.b16 %v1577, %v1575
        %v1778 = vpack.c.b16 %v1580, %v1578
        %v1779 = vpack.c.b16 %v1581, %v1579
        %v1780 = vpack.c.b16 %v1584, %v1582
        %v1781 = vpack.c.b16 %v1585, %v1583
        %v1782 = vpack.c.b16 %v1588, %v1586
        %v1783 = vpack.c.b16 %v1589, %v1587
        %v1784 = vpack.c.b16 %v1592, %v1590
        %v1785 = vpack.c.b16 %v1593, %v1591
        %v1786 = vpack.c.b16 %v1596, %v1594
        %v1787 = vpack.c.b16 %v1597, %v1595
        %v1788 = vpack.c.b16 %v1600, %v1598
        %v1789 = vpack.c.b16 %v1601, %v1599
        %v1790 = vpack.c.b16 %v1604, %v1602
        %v1791 = vpack.c.b16 %v1605, %v1603
        %v1792 = vpack.c.b16 %v1608, %v1606
        %v1793 = vpack.c.b16 %v1609, %v1607
        %v1794 = vpack.c.b16 %v1612, %v1610
        %v1795 = vpack.c.b16 %v1613, %v1611
        %v1796 = vpack.c.b16 %v1616, %v1614
        %v1797 = vpack.c.b16 %v1617, %v1615
        %v1798 = vpack.c.b16 %v1620, %v1618
        %v1799 = vpack.c.b16 %v1621, %v1619
        %v1800 = vpack.c.b16 %v1624, %v1622
        %v1801 = vpack.c.b16 %v1625, %v1623
        %v1802 = vpack.c.b16 %v1628, %v1626
        %v1803 = vpack.c.b16 %v1629, %v1627
        %v1804 = vpack.c.b16 %v1632, %v1630
        %v1805 = vpack.c.b16 %v1633, %v1631
        %v1806 = vpack.c.b16 %v1636, %v1634
        %v1807 = vpack.c.b16 %v1637, %v1635
        %v1808 = vpack.c.b16 %v1640, %v1638
        %v1809 = vpack.c.b16 %v1641, %v1639
        %v1810 = vpack.c.b16 %v1644, %v1642
        %v1811 = vpack.c.b16 %v1645, %v1643
        %v1812 = vpack.c.b16 %v1648, %v1646
        %v1813 = vpack.c.b16 %v1649, %v1647
        %v1814 = vpack.c.b16 %v1652, %v1650
        %v1815 = vpack.c.b16 %v1653, %v1651
        %v1816 = vpack.c.b16 %v1656, %v1654
        %v1817 = vpack.c.b16 %v1657, %v1655
        %v1818 = vpack.c.b16 %v1660, %v1658
        %v1819 = vpack.c.b16 %v1661, %v1659
        %v1820 = vpack.c.b16 %v1664, %v1662
        %v1821 = vpack.c.b16 %v1665, %v1663
        %v1822 = vpack.c.b16 %v1668, %v1666
        %v1823 = vpack.c.b16 %v1669, %v1667
        %v1824 = vpack.c.b16 %v1672, %v1670
        %v1825 = vpack.c.b16 %v1673, %v1671
        %v1826 = vpack.c.b16 %v1676, %v1674
        %v1827 = vpack.c.b16 %v1677, %v1675
        %v1828 = vpack.c.b16 %v1680, %v1678
        %v1829 = vpack.c.b16 %v1681, %v1679
        %v1830 = vpack.c.b16 %v1684, %v1682
        %v1831 = vpack.c.b16 %v1685, %v1683
        %v1832 = vpack.c.b16 %v1688, %v1686
        %v1833 = vpack.c.b16 %v1689, %v1687
        %v1834 = vpack.c.b16 %v1692, %v1690
        %v1835 = vpack.c.b16 %v1693, %v1691
        %v1836 = vpack.c.b16 %v1696, %v1694
        %v1837 = vpack.c.b16 %v1697, %v1695
        %v1838 = vpack.c.b16 %v1700, %v1698
        %v1839 = vpack.c.b16 %v1701, %v1699
        %v1840 = vpack.c.b16 %v1704, %v1702
        %v1841 = vpack.c.b16 %v1705, %v1703
        %v1842 = vpack.c.b16 %v1708, %v1706
        %v1843 = vpack.c.b16 %v1709, %v1707
        %v1844 = vpack.c.b16 %v1712, %v1710
        %v1845 = vpack.c.b16 %v1713, %v1711
        %v1846 = vpack.c.b16 %v1716, %v1714
        %v1847 = vpack.c.b16 %v1717, %v1715
        %v1848 = vpack.c.b16 %v1720, %v1718
        %v1849 = vpack.c.b16 %v1721, %v1719
        %v1850 = vpack.c.b16 %v1724, %v1722
        %v1851 = vpack.c.b16 %v1725, %v1723
        %v1852 = vpack.c.b16 %v1728, %v1726
        %v1853 = vpack.c.b16 %v1729, %v1727
        %v1854 = vpack.c.b16 %v1732, %v1730
        %v1855 = vpack.c.b16 %v1733, %v1731
        %v1856 = vpack.c.b16 %v1736, %v1734
        %v1857 = vpack.c.b16 %v1737, %v1735
        %v1858 = vpack.c.b16 %v1740, %v1738
        %v1859 = vpack.c.b16 %v1741, %v1739
        %v1860 = vpack.c.b16 %v1744, %v1742
        %v1861 = vpack.c.b16 %v1745, %v1743
        %v1862 = vpack.c.b16 %v1748, %v1746
        %v1863 = vpack.c.b16 %v1749, %v1747
        %v1864 = vpack.c.b16 %v1752, %v1750
        %v1865 = vpack.c.b16 %v1753, %v1751
        %1978 = vmatprep.subr.bf16.mxu0 %v1755
        %1979 = vmatpush1.bf16.msra.mxu0 %v1754
        %1980 = vmatprep.subr.bf16.mxu0 %v1757
        %1981 = vmatpush1.bf16.msra.mxu0 %v1756
        %1982 = vmatprep.subr.bf16.mxu0 %v1759
        %1983 = vmatpush1.bf16.msra.mxu0 %v1758
        %1984 = vmatprep.subr.bf16.mxu0 %v1761
        %1985 = vmatpush1.bf16.msra.mxu0 %v1760
        %1986 = vmatprep.subr.bf16.mxu0 %v1763
        %1987 = vmatpush1.bf16.msra.mxu0 %v1762
        %1988 = vmatprep.subr.bf16.mxu0 %v1765
        %1989 = vmatpush1.bf16.msra.mxu0 %v1764
        %1990 = vmatprep.subr.bf16.mxu0 %v1767
        %1991 = vmatpush1.bf16.msra.mxu0 %v1766
        %1992 = vmatprep.subr.bf16.mxu0 %v1769
        %1993 = vmatpush1.bf16.msra.mxu0 %v1768
        %1994 = vmatprep.subr.bf16.mxu0 %v1771
        %1995 = vmatpush1.bf16.msra.mxu0 %v1770
        %1996 = vmatprep.subr.bf16.mxu0 %v1773
        %1997 = vmatpush1.bf16.msra.mxu0 %v1772
        %1998 = vmatprep.subr.bf16.mxu0 %v1775
        %1999 = vmatpush1.bf16.msra.mxu0 %v1774
        %2000 = vmatprep.subr.bf16.mxu0 %v1777
        %2001 = vmatpush1.bf16.msra.mxu0 %v1776
        %2002 = vmatprep.subr.bf16.mxu0 %v1779
        %2003 = vmatpush1.bf16.msra.mxu0 %v1778
        %2004 = vmatprep.subr.bf16.mxu0 %v1781
        %2005 = vmatpush1.bf16.msra.mxu0 %v1780
        %2006 = vmatprep.subr.bf16.mxu0 %v1783
        %2007 = vmatpush1.bf16.msra.mxu0 %v1782
        %2008 = vmatprep.subr.bf16.mxu0 %v1785
        %2009 = vmatpush1.bf16.msra.mxu0 %v1784
        %2010 = vmatprep.mubr.bf16.mxu0 %v1195
        %2011 = vmatmul.mubr.bf16.gmra.mrb[0].mxu0 %v1194
        %v2012 = vpop.f32.mrb[0].mxu0
        %v2013 = vadd.f32 %v835, %v2012
        %v2014 = vpop.f32.mrb[0].mxu0
        %v2015 = vadd.f32 %v839, %v2014
        %v2016 = vpop.f32.mrb[0].mxu0
        %v2017 = vadd.f32 %v835, %v2016
        %v2018 = vpop.f32.mrb[0].mxu0
        %v2019 = vadd.f32 %v839, %v2018
        %2020 = vmatprep.mubr.bf16.mxu0 %v1202
        %2021 = vmatmul.mubr.bf16.gmra.mrb[0].mxu0 %v1201
        %v2022 = vpop.f32.mrb[0].mxu0
        %v2023 = vadd.f32 %v835, %v2022
        %v2024 = vpop.f32.mrb[0].mxu0
        %v2025 = vadd.f32 %v839, %v2024
        %v2026 = vpop.f32.mrb[0].mxu0
        %v2027 = vadd.f32 %v835, %v2026
        %v2028 = vpop.f32.mrb[0].mxu0
        %v2029 = vadd.f32 %v839, %v2028
        %2030 = vmatprep.mubr.bf16.mxu0 %v1209
        %2031 = vmatmul.mubr.bf16.gmra.mrb[0].mxu0 %v1208
        %v2032 = vpop.f32.mrb[0].mxu0
        %v2033 = vadd.f32 %v835, %v2032
        %v2034 = vpop.f32.mrb[0].mxu0
        %v2035 = vadd.f32 %v839, %v2034
        %v2036 = vpop.f32.mrb[0].mxu0
        %v2037 = vadd.f32 %v835, %v2036
        %v2038 = vpop.f32.mrb[0].mxu0
        %v2039 = vadd.f32 %v839, %v2038
        %2040 = vmatprep.mubr.bf16.mxu0 %v1216
        %2041 = vmatmul.mubr.bf16.gmra.mrb[0].mxu0 %v1215
        %v2042 = vpop.f32.mrb[0].mxu0
        %v2043 = vadd.f32 %v835, %v2042
        %v2044 = vpop.f32.mrb[0].mxu0
        %v2045 = vadd.f32 %v839, %v2044
        %v2046 = vpop.f32.mrb[0].mxu0
        %v2047 = vadd.f32 %v835, %v2046
        %v2048 = vpop.f32.mrb[0].mxu0
        %v2049 = vadd.f32 %v839, %v2048
        %2050 = vmatprep.mubr.bf16.mxu0 %v1223
        %2051 = vmatmul.mubr.bf16.gmra.mrb[0].mxu0 %v1222
        %v2052 = vpop.f32.mrb[0].mxu0
        %v2053 = vadd.f32 %v835, %v2052
        %v2054 = vpop.f32.mrb[0].mxu0
        %v2055 = vadd.f32 %v839, %v2054
        %v2056 = vpop.f32.mrb[0].mxu0
        %v2057 = vadd.f32 %v835, %v2056
        %v2058 = vpop.f32.mrb[0].mxu0
        %v2059 = vadd.f32 %v839, %v2058
        %2060 = vmatprep.mubr.bf16.mxu0 %v1230
        %2061 = vmatmul.mubr.bf16.gmra.mrb[0].mxu0 %v1229
        %v2062 = vpop.f32.mrb[0].mxu0
        %v2063 = vadd.f32 %v835, %v2062
        %v2064 = vpop.f32.mrb[0].mxu0
        %v2065 = vadd.f32 %v839, %v2064
        %v2066 = vpop.f32.mrb[0].mxu0
        %v2067 = vadd.f32 %v835, %v2066
        %v2068 = vpop.f32.mrb[0].mxu0
        %v2069 = vadd.f32 %v839, %v2068
        %2070 = vmatprep.mubr.bf16.mxu0 %v1237
        %2071 = vmatmul.mubr.bf16.gmra.mrb[0].mxu0 %v1236
        %v2072 = vpop.f32.mrb[0].mxu0
        %v2073 = vadd.f32 %v835, %v2072
        %v2074 = vpop.f32.mrb[0].mxu0
        %v2075 = vadd.f32 %v839, %v2074
        %v2076 = vpop.f32.mrb[0].mxu0
        %v2077 = vadd.f32 %v835, %v2076
        %v2078 = vpop.f32.mrb[0].mxu0
        %v2079 = vadd.f32 %v839, %v2078
        %2080 = vmatprep.mubr.bf16.mxu0 %v1244
        %2081 = vmatmul.mubr.bf16.gmra.mrb[0].mxu0 %v1243
        %v2082 = vpop.f32.mrb[0].mxu0
        %v2083 = vadd.f32 %v835, %v2082
        %v2084 = vpop.f32.mrb[0].mxu0
        %v2085 = vadd.f32 %v839, %v2084
        %v2086 = vpop.f32.mrb[0].mxu0
        %v2087 = vadd.f32 %v835, %v2086
        %v2088 = vpop.f32.mrb[0].mxu0
        %v2089 = vadd.f32 %v839, %v2088
        %2090 = vmatprep.mubr.bf16.mxu0 %v1251
        %2091 = vmatmul.mubr.bf16.gmra.mrb[0].mxu0 %v1250
        %v2092 = vpop.f32.mrb[0].mxu0
        %v2093 = vadd.f32 %v835, %v2092
        %v2094 = vpop.f32.mrb[0].mxu0
        %v2095 = vadd.f32 %v839, %v2094
        %v2096 = vpop.f32.mrb[0].mxu0
        %v2097 = vadd.f32 %v835, %v2096
        %v2098 = vpop.f32.mrb[0].mxu0
        %v2099 = vadd.f32 %v839, %v2098
        %2100 = vmatprep.mubr.bf16.mxu0 %v1258
        %2101 = vmatmul.mubr.bf16.gmra.mrb[0].mxu0 %v1257
        %v2102 = vpop.f32.mrb[0].mxu0
        %v2103 = vadd.f32 %v835, %v2102
        %v2104 = vpop.f32.mrb[0].mxu0
        %v2105 = vadd.f32 %v839, %v2104
        %v2106 = vpop.f32.mrb[0].mxu0
        %v2107 = vadd.f32 %v835, %v2106
        %v2108 = vpop.f32.mrb[0].mxu0
        %v2109 = vadd.f32 %v839, %v2108
        %2110 = vmatprep.mubr.bf16.mxu0 %v1265
        %2111 = vmatmul.mubr.bf16.gmra.mrb[0].mxu0 %v1264
        %v2112 = vpop.f32.mrb[0].mxu0
        %v2113 = vadd.f32 %v835, %v2112
        %v2114 = vpop.f32.mrb[0].mxu0
        %v2115 = vadd.f32 %v839, %v2114
        %v2116 = vpop.f32.mrb[0].mxu0
        %v2117 = vadd.f32 %v835, %v2116
        %v2118 = vpop.f32.mrb[0].mxu0
        %v2119 = vadd.f32 %v839, %v2118
        %2120 = vmatprep.mubr.bf16.mxu0 %v1272
        %2121 = vmatmul.mubr.bf16.gmra.mrb[0].mxu0 %v1271
        %v2122 = vpop.f32.mrb[0].mxu0
        %v2123 = vadd.f32 %v835, %v2122
        %v2124 = vpop.f32.mrb[0].mxu0
        %v2125 = vadd.f32 %v839, %v2124
        %v2126 = vpop.f32.mrb[0].mxu0
        %v2127 = vadd.f32 %v835, %v2126
        %v2128 = vpop.f32.mrb[0].mxu0
        %v2129 = vadd.f32 %v839, %v2128
        %2130 = vmatprep.mubr.bf16.mxu0 %v1279
        %2131 = vmatmul.mubr.bf16.gmra.mrb[0].mxu0 %v1278
        %v2132 = vpop.f32.mrb[0].mxu0
        %v2133 = vadd.f32 %v835, %v2132
        %v2134 = vpop.f32.mrb[0].mxu0
        %v2135 = vadd.f32 %v839, %v2134
        %v2136 = vpop.f32.mrb[0].mxu0
        %v2137 = vadd.f32 %v835, %v2136
        %v2138 = vpop.f32.mrb[0].mxu0
        %v2139 = vadd.f32 %v839, %v2138
        %2140 = vmatprep.mubr.bf16.mxu0 %v1286
        %2141 = vmatmul.mubr.bf16.gmra.mrb[0].mxu0 %v1285
        %v2142 = vpop.f32.mrb[0].mxu0
        %v2143 = vadd.f32 %v835, %v2142
        %v2144 = vpop.f32.mrb[0].mxu0
        %v2145 = vadd.f32 %v839, %v2144
        %v2146 = vpop.f32.mrb[0].mxu0
        %v2147 = vadd.f32 %v835, %v2146
        %v2148 = vpop.f32.mrb[0].mxu0
        %v2149 = vadd.f32 %v839, %v2148
        %2150 = vmatprep.mubr.bf16.mxu0 %v1293
        %2151 = vmatmul.mubr.bf16.gmra.mrb[0].mxu0 %v1292
        %v2152 = vpop.f32.mrb[0].mxu0
        %v2153 = vadd.f32 %v835, %v2152
        %v2154 = vpop.f32.mrb[0].mxu0
        %v2155 = vadd.f32 %v839, %v2154
        %v2156 = vpop.f32.mrb[0].mxu0
        %v2157 = vadd.f32 %v835, %v2156
        %v2158 = vpop.f32.mrb[0].mxu0
        %v2159 = vadd.f32 %v839, %v2158
        %2160 = vmatprep.mubr.bf16.mxu0 %v1300
        %2161 = vmatmul.mubr.bf16.gmra.mrb[0].mxu0 %v1299
        %v2162 = vpop.f32.mrb[0].mxu0
        %v2163 = vadd.f32 %v835, %v2162
        %v2164 = vpop.f32.mrb[0].mxu0
        %v2165 = vadd.f32 %v839, %v2164
        %v2166 = vpop.f32.mrb[0].mxu0
        %v2167 = vadd.f32 %v835, %v2166
        %v2168 = vpop.f32.mrb[0].mxu0
        %v2169 = vadd.f32 %v839, %v2168
        %2170 = vdwg.mxu0
        %2171 = vmatprep.subr.bf16.mxu0 %v1787
        %2172 = vmatpush1.bf16.msra.mxu0 %v1786
        %2173 = vmatprep.subr.bf16.mxu0 %v1789
        %2174 = vmatpush1.bf16.msra.mxu0 %v1788
        %2175 = vmatprep.subr.bf16.mxu0 %v1791
        %2176 = vmatpush1.bf16.msra.mxu0 %v1790
        %2177 = vmatprep.subr.bf16.mxu0 %v1793
        %2178 = vmatpush1.bf16.msra.mxu0 %v1792
        %2179 = vmatprep.subr.bf16.mxu0 %v1795
        %2180 = vmatpush1.bf16.msra.mxu0 %v1794
        %2181 = vmatprep.subr.bf16.mxu0 %v1797
        %2182 = vmatpush1.bf16.msra.mxu0 %v1796
        %2183 = vmatprep.subr.bf16.mxu0 %v1799
        %2184 = vmatpush1.bf16.msra.mxu0 %v1798
        %2185 = vmatprep.subr.bf16.mxu0 %v1801
        %2186 = vmatpush1.bf16.msra.mxu0 %v1800
        %2187 = vmatprep.subr.bf16.mxu0 %v1803
        %2188 = vmatpush1.bf16.msra.mxu0 %v1802
        %2189 = vmatprep.subr.bf16.mxu0 %v1805
        %2190 = vmatpush1.bf16.msra.mxu0 %v1804
        %2191 = vmatprep.subr.bf16.mxu0 %v1807
        %2192 = vmatpush1.bf16.msra.mxu0 %v1806
        %2193 = vmatprep.subr.bf16.mxu0 %v1809
        %2194 = vmatpush1.bf16.msra.mxu0 %v1808
        %2195 = vmatprep.subr.bf16.mxu0 %v1811
        %2196 = vmatpush1.bf16.msra.mxu0 %v1810
        %2197 = vmatprep.subr.bf16.mxu0 %v1813
        %2198 = vmatpush1.bf16.msra.mxu0 %v1812
        %2199 = vmatprep.subr.bf16.mxu0 %v1815
        %2200 = vmatpush1.bf16.msra.mxu0 %v1814
        %2201 = vmatprep.subr.bf16.mxu0 %v1817
        %2202 = vmatpush1.bf16.msra.mxu0 %v1816
        %2203 = vmatprep.mubr.bf16.mxu0 %v1197
        %2204 = vmatmul.mubr.bf16.gmra.mrb[0].mxu0 %v1196
        %v2205 = vpop.f32.mrb[0].mxu0
        %v2206 = vadd.f32 %v2013, %v2205
        %v2207 = vpop.f32.mrb[0].mxu0
        %v2208 = vadd.f32 %v2015, %v2207
        %v2209 = vpop.f32.mrb[0].mxu0
        %v2210 = vadd.f32 %v2017, %v2209
        %v2211 = vpop.f32.mrb[0].mxu0
        %v2212 = vadd.f32 %v2019, %v2211
        %2213 = vmatprep.mubr.bf16.mxu0 %v1204
        %2214 = vmatmul.mubr.bf16.gmra.mrb[0].mxu0 %v1203
        %v2215 = vpop.f32.mrb[0].mxu0
        %v2216 = vadd.f32 %v2023, %v2215
        %v2217 = vpop.f32.mrb[0].mxu0
        %v2218 = vadd.f32 %v2025, %v2217
        %v2219 = vpop.f32.mrb[0].mxu0
        %v2220 = vadd.f32 %v2027, %v2219
        %v2221 = vpop.f32.mrb[0].mxu0
        %v2222 = vadd.f32 %v2029, %v2221
        %2223 = vmatprep.mubr.bf16.mxu0 %v1211
        %2224 = vmatmul.mubr.bf16.gmra.mrb[0].mxu0 %v1210
        %v2225 = vpop.f32.mrb[0].mxu0
        %v2226 = vadd.f32 %v2033, %v2225
        %v2227 = vpop.f32.mrb[0].mxu0
        %v2228 = vadd.f32 %v2035, %v2227
        %v2229 = vpop.f32.mrb[0].mxu0
        %v2230 = vadd.f32 %v2037, %v2229
        %v2231 = vpop.f32.mrb[0].mxu0
        %v2232 = vadd.f32 %v2039, %v2231
        %2233 = vmatprep.mubr.bf16.mxu0 %v1218
        %2234 = vmatmul.mubr.bf16.gmra.mrb[0].mxu0 %v1217
        %v2235 = vpop.f32.mrb[0].mxu0
        %v2236 = vadd.f32 %v2043, %v2235
        %v2237 = vpop.f32.mrb[0].mxu0
        %v2238 = vadd.f32 %v2045, %v2237
        %v2239 = vpop.f32.mrb[0].mxu0
        %v2240 = vadd.f32 %v2047, %v2239
        %v2241 = vpop.f32.mrb[0].mxu0
        %v2242 = vadd.f32 %v2049, %v2241
        %2243 = vmatprep.mubr.bf16.mxu0 %v1225
        %2244 = vmatmul.mubr.bf16.gmra.mrb[0].mxu0 %v1224
        %v2245 = vpop.f32.mrb[0].mxu0
        %v2246 = vadd.f32 %v2053, %v2245
        %v2247 = vpop.f32.mrb[0].mxu0
        %v2248 = vadd.f32 %v2055, %v2247
        %v2249 = vpop.f32.mrb[0].mxu0
        %v2250 = vadd.f32 %v2057, %v2249
        %v2251 = vpop.f32.mrb[0].mxu0
        %v2252 = vadd.f32 %v2059, %v2251
        %2253 = vmatprep.mubr.bf16.mxu0 %v1232
        %2254 = vmatmul.mubr.bf16.gmra.mrb[0].mxu0 %v1231
        %v2255 = vpop.f32.mrb[0].mxu0
        %v2256 = vadd.f32 %v2063, %v2255
        %v2257 = vpop.f32.mrb[0].mxu0
        %v2258 = vadd.f32 %v2065, %v2257
        %v2259 = vpop.f32.mrb[0].mxu0
        %v2260 = vadd.f32 %v2067, %v2259
        %v2261 = vpop.f32.mrb[0].mxu0
        %v2262 = vadd.f32 %v2069, %v2261
        %2263 = vmatprep.mubr.bf16.mxu0 %v1239
        %2264 = vmatmul.mubr.bf16.gmra.mrb[0].mxu0 %v1238
        %v2265 = vpop.f32.mrb[0].mxu0
        %v2266 = vadd.f32 %v2073, %v2265
        %v2267 = vpop.f32.mrb[0].mxu0
        %v2268 = vadd.f32 %v2075, %v2267
        %v2269 = vpop.f32.mrb[0].mxu0
        %v2270 = vadd.f32 %v2077, %v2269
        %v2271 = vpop.f32.mrb[0].mxu0
        %v2272 = vadd.f32 %v2079, %v2271
        %2273 = vmatprep.mubr.bf16.mxu0 %v1246
        %2274 = vmatmul.mubr.bf16.gmra.mrb[0].mxu0 %v1245
        %v2275 = vpop.f32.mrb[0].mxu0
        %v2276 = vadd.f32 %v2083, %v2275
        %v2277 = vpop.f32.mrb[0].mxu0
        %v2278 = vadd.f32 %v2085, %v2277
        %v2279 = vpop.f32.mrb[0].mxu0
        %v2280 = vadd.f32 %v2087, %v2279
        %v2281 = vpop.f32.mrb[0].mxu0
        %v2282 = vadd.f32 %v2089, %v2281
        %2283 = vmatprep.mubr.bf16.mxu0 %v1253
        %2284 = vmatmul.mubr.bf16.gmra.mrb[0].mxu0 %v1252
        %v2285 = vpop.f32.mrb[0].mxu0
        %v2286 = vadd.f32 %v2093, %v2285
        %v2287 = vpop.f32.mrb[0].mxu0
        %v2288 = vadd.f32 %v2095, %v2287
        %v2289 = vpop.f32.mrb[0].mxu0
        %v2290 = vadd.f32 %v2097, %v2289
        %v2291 = vpop.f32.mrb[0].mxu0
        %v2292 = vadd.f32 %v2099, %v2291
        %2293 = vmatprep.mubr.bf16.mxu0 %v1260
        %2294 = vmatmul.mubr.bf16.gmra.mrb[0].mxu0 %v1259
        %v2295 = vpop.f32.mrb[0].mxu0
        %v2296 = vadd.f32 %v2103, %v2295
        %v2297 = vpop.f32.mrb[0].mxu0
        %v2298 = vadd.f32 %v2105, %v2297
        %v2299 = vpop.f32.mrb[0].mxu0
        %v2300 = vadd.f32 %v2107, %v2299
        %v2301 = vpop.f32.mrb[0].mxu0
        %v2302 = vadd.f32 %v2109, %v2301
        %2303 = vmatprep.mubr.bf16.mxu0 %v1267
        %2304 = vmatmul.mubr.bf16.gmra.mrb[0].mxu0 %v1266
        %v2305 = vpop.f32.mrb[0].mxu0
        %v2306 = vadd.f32 %v2113, %v2305
        %v2307 = vpop.f32.mrb[0].mxu0
        %v2308 = vadd.f32 %v2115, %v2307
        %v2309 = vpop.f32.mrb[0].mxu0
        %v2310 = vadd.f32 %v2117, %v2309
        %v2311 = vpop.f32.mrb[0].mxu0
        %v2312 = vadd.f32 %v2119, %v2311
        %2313 = vmatprep.mubr.bf16.mxu0 %v1274
        %2314 = vmatmul.mubr.bf16.gmra.mrb[0].mxu0 %v1273
        %v2315 = vpop.f32.mrb[0].mxu0
        %v2316 = vadd.f32 %v2123, %v2315
        %v2317 = vpop.f32.mrb[0].mxu0
        %v2318 = vadd.f32 %v2125, %v2317
        %v2319 = vpop.f32.mrb[0].mxu0
        %v2320 = vadd.f32 %v2127, %v2319
        %v2321 = vpop.f32.mrb[0].mxu0
        %v2322 = vadd.f32 %v2129, %v2321
        %2323 = vmatprep.mubr.bf16.mxu0 %v1281
        %2324 = vmatmul.mubr.bf16.gmra.mrb[0].mxu0 %v1280
        %v2325 = vpop.f32.mrb[0].mxu0
        %v2326 = vadd.f32 %v2133, %v2325
        %v2327 = vpop.f32.mrb[0].mxu0
        %v2328 = vadd.f32 %v2135, %v2327
        %v2329 = vpop.f32.mrb[0].mxu0
        %v2330 = vadd.f32 %v2137, %v2329
        %v2331 = vpop.f32.mrb[0].mxu0
        %v2332 = vadd.f32 %v2139, %v2331
        %2333 = vmatprep.mubr.bf16.mxu0 %v1288
        %2334 = vmatmul.mubr.bf16.gmra.mrb[0].mxu0 %v1287
        %v2335 = vpop.f32.mrb[0].mxu0
        %v2336 = vadd.f32 %v2143, %v2335
        %v2337 = vpop.f32.mrb[0].mxu0
        %v2338 = vadd.f32 %v2145, %v2337
        %v2339 = vpop.f32.mrb[0].mxu0
        %v2340 = vadd.f32 %v2147, %v2339
        %v2341 = vpop.f32.mrb[0].mxu0
        %v2342 = vadd.f32 %v2149, %v2341
        %2343 = vmatprep.mubr.bf16.mxu0 %v1295
        %2344 = vmatmul.mubr.bf16.gmra.mrb[0].mxu0 %v1294
        %v2345 = vpop.f32.mrb[0].mxu0
        %v2346 = vadd.f32 %v2153, %v2345
        %v2347 = vpop.f32.mrb[0].mxu0
        %v2348 = vadd.f32 %v2155, %v2347
        %v2349 = vpop.f32.mrb[0].mxu0
        %v2350 = vadd.f32 %v2157, %v2349
        %v2351 = vpop.f32.mrb[0].mxu0
        %v2352 = vadd.f32 %v2159, %v2351
        %2353 = vmatprep.mubr.bf16.mxu0 %v1302
        %2354 = vmatmul.mubr.bf16.gmra.mrb[0].mxu0 %v1301
        %v2355 = vpop.f32.mrb[0].mxu0
        %v2356 = vadd.f32 %v2163, %v2355
        %v2357 = vpop.f32.mrb[0].mxu0
        %v2358 = vadd.f32 %v2165, %v2357
        %v2359 = vpop.f32.mrb[0].mxu0
        %v2360 = vadd.f32 %v2167, %v2359
        %v2361 = vpop.f32.mrb[0].mxu0
        %v2362 = vadd.f32 %v2169, %v2361
        %2363 = vdwg.mxu0
        %2364 = vmatprep.subr.bf16.mxu0 %v1819
        %2365 = vmatpush1.bf16.msra.mxu0 %v1818
        %2366 = vmatprep.subr.bf16.mxu0 %v1821
        %2367 = vmatpush1.bf16.msra.mxu0 %v1820
        %2368 = vmatprep.subr.bf16.mxu0 %v1823
        %2369 = vmatpush1.bf16.msra.mxu0 %v1822
        %2370 = vmatprep.subr.bf16.mxu0 %v1825
        %2371 = vmatpush1.bf16.msra.mxu0 %v1824
        %2372 = vmatprep.subr.bf16.mxu0 %v1827
        %2373 = vmatpush1.bf16.msra.mxu0 %v1826
        %2374 = vmatprep.subr.bf16.mxu0 %v1829
        %2375 = vmatpush1.bf16.msra.mxu0 %v1828
        %2376 = vmatprep.subr.bf16.mxu0 %v1831
        %2377 = vmatpush1.bf16.msra.mxu0 %v1830
        %2378 = vmatprep.subr.bf16.mxu0 %v1833
        %2379 = vmatpush1.bf16.msra.mxu0 %v1832
        %2380 = vmatprep.subr.bf16.mxu0 %v1835
        %2381 = vmatpush1.bf16.msra.mxu0 %v1834
        %2382 = vmatprep.subr.bf16.mxu0 %v1837
        %2383 = vmatpush1.bf16.msra.mxu0 %v1836
        %2384 = vmatprep.subr.bf16.mxu0 %v1839
        %2385 = vmatpush1.bf16.msra.mxu0 %v1838
        %2386 = vmatprep.subr.bf16.mxu0 %v1841
        %2387 = vmatpush1.bf16.msra.mxu0 %v1840
        %2388 = vmatprep.subr.bf16.mxu0 %v1843
        %2389 = vmatpush1.bf16.msra.mxu0 %v1842
        %2390 = vmatprep.subr.bf16.mxu0 %v1845
        %2391 = vmatpush1.bf16.msra.mxu0 %v1844
        %2392 = vmatprep.subr.bf16.mxu0 %v1847
        %2393 = vmatpush1.bf16.msra.mxu0 %v1846
        %2394 = vmatprep.subr.bf16.mxu0 %v1849
        %2395 = vmatpush1.bf16.msra.mxu0 %v1848
        %2396 = vmatprep.mubr.bf16.mxu0 %v1199
        %2397 = vmatmul.mubr.bf16.gmra.mrb[0].mxu0 %v1198
        %v2398 = vpop.f32.mrb[0].mxu0
        %v2399 = vadd.f32 %v2206, %v2398
        %v2400 = vpop.f32.mrb[0].mxu0
        %v2401 = vadd.f32 %v2208, %v2400
        %v2402 = vpop.f32.mrb[0].mxu0
        %v2403 = vadd.f32 %v2210, %v2402
        %v2404 = vpop.f32.mrb[0].mxu0
        %v2405 = vadd.f32 %v2212, %v2404
        %2406 = vmatprep.mubr.bf16.mxu0 %v1206
        %2407 = vmatmul.mubr.bf16.gmra.mrb[0].mxu0 %v1205
        %v2408 = vpop.f32.mrb[0].mxu0
        %v2409 = vadd.f32 %v2216, %v2408
        %v2410 = vpop.f32.mrb[0].mxu0
        %v2411 = vadd.f32 %v2218, %v2410
        %v2412 = vpop.f32.mrb[0].mxu0
        %v2413 = vadd.f32 %v2220, %v2412
        %v2414 = vpop.f32.mrb[0].mxu0
        %v2415 = vadd.f32 %v2222, %v2414
        %2416 = vmatprep.mubr.bf16.mxu0 %v1213
        %2417 = vmatmul.mubr.bf16.gmra.mrb[0].mxu0 %v1212
        %v2418 = vpop.f32.mrb[0].mxu0
        %v2419 = vadd.f32 %v2226, %v2418
        %v2420 = vpop.f32.mrb[0].mxu0
        %v2421 = vadd.f32 %v2228, %v2420
        %v2422 = vpop.f32.mrb[0].mxu0
        %v2423 = vadd.f32 %v2230, %v2422
        %v2424 = vpop.f32.mrb[0].mxu0
        %v2425 = vadd.f32 %v2232, %v2424
        %2426 = vmatprep.mubr.bf16.mxu0 %v1220
        %2427 = vmatmul.mubr.bf16.gmra.mrb[0].mxu0 %v1219
        %v2428 = vpop.f32.mrb[0].mxu0
        %v2429 = vadd.f32 %v2236, %v2428
        %v2430 = vpop.f32.mrb[0].mxu0
        %v2431 = vadd.f32 %v2238, %v2430
        %v2432 = vpop.f32.mrb[0].mxu0
        %v2433 = vadd.f32 %v2240, %v2432
        %v2434 = vpop.f32.mrb[0].mxu0
        %v2435 = vadd.f32 %v2242, %v2434
        %2436 = vmatprep.mubr.bf16.mxu0 %v1227
        %2437 = vmatmul.mubr.bf16.gmra.mrb[0].mxu0 %v1226
        %v2438 = vpop.f32.mrb[0].mxu0
        %v2439 = vadd.f32 %v2246, %v2438
        %v2440 = vpop.f32.mrb[0].mxu0
        %v2441 = vadd.f32 %v2248, %v2440
        %v2442 = vpop.f32.mrb[0].mxu0
        %v2443 = vadd.f32 %v2250, %v2442
        %v2444 = vpop.f32.mrb[0].mxu0
        %v2445 = vadd.f32 %v2252, %v2444
        %2446 = vmatprep.mubr.bf16.mxu0 %v1234
        %2447 = vmatmul.mubr.bf16.gmra.mrb[0].mxu0 %v1233
        %v2448 = vpop.f32.mrb[0].mxu0
        %v2449 = vadd.f32 %v2256, %v2448
        %v2450 = vpop.f32.mrb[0].mxu0
        %v2451 = vadd.f32 %v2258, %v2450
        %v2452 = vpop.f32.mrb[0].mxu0
        %v2453 = vadd.f32 %v2260, %v2452
        %v2454 = vpop.f32.mrb[0].mxu0
        %v2455 = vadd.f32 %v2262, %v2454
        %2456 = vmatprep.mubr.bf16.mxu0 %v1241
        %2457 = vmatmul.mubr.bf16.gmra.mrb[0].mxu0 %v1240
        %v2458 = vpop.f32.mrb[0].mxu0
        %v2459 = vadd.f32 %v2266, %v2458
        %v2460 = vpop.f32.mrb[0].mxu0
        %v2461 = vadd.f32 %v2268, %v2460
        %v2462 = vpop.f32.mrb[0].mxu0
        %v2463 = vadd.f32 %v2270, %v2462
        %v2464 = vpop.f32.mrb[0].mxu0
        %v2465 = vadd.f32 %v2272, %v2464
        %2466 = vmatprep.mubr.bf16.mxu0 %v1248
        %2467 = vmatmul.mubr.bf16.gmra.mrb[0].mxu0 %v1247
        %v2468 = vpop.f32.mrb[0].mxu0
        %v2469 = vadd.f32 %v2276, %v2468
        %v2470 = vpop.f32.mrb[0].mxu0
        %v2471 = vadd.f32 %v2278, %v2470
        %v2472 = vpop.f32.mrb[0].mxu0
        %v2473 = vadd.f32 %v2280, %v2472
        %v2474 = vpop.f32.mrb[0].mxu0
        %v2475 = vadd.f32 %v2282, %v2474
        %2476 = vmatprep.mubr.bf16.mxu0 %v1255
        %2477 = vmatmul.mubr.bf16.gmra.mrb[0].mxu0 %v1254
        %v2478 = vpop.f32.mrb[0].mxu0
        %v2479 = vadd.f32 %v2286, %v2478
        %v2480 = vpop.f32.mrb[0].mxu0
        %v2481 = vadd.f32 %v2288, %v2480
        %v2482 = vpop.f32.mrb[0].mxu0
        %v2483 = vadd.f32 %v2290, %v2482
        %v2484 = vpop.f32.mrb[0].mxu0
        %v2485 = vadd.f32 %v2292, %v2484
        %2486 = vmatprep.mubr.bf16.mxu0 %v1262
        %2487 = vmatmul.mubr.bf16.gmra.mrb[0].mxu0 %v1261
        %v2488 = vpop.f32.mrb[0].mxu0
        %v2489 = vadd.f32 %v2296, %v2488
        %v2490 = vpop.f32.mrb[0].mxu0
        %v2491 = vadd.f32 %v2298, %v2490
        %v2492 = vpop.f32.mrb[0].mxu0
        %v2493 = vadd.f32 %v2300, %v2492
        %v2494 = vpop.f32.mrb[0].mxu0
        %v2495 = vadd.f32 %v2302, %v2494
        %2496 = vmatprep.mubr.bf16.mxu0 %v1269
        %2497 = vmatmul.mubr.bf16.gmra.mrb[0].mxu0 %v1268
        %v2498 = vpop.f32.mrb[0].mxu0
        %v2499 = vadd.f32 %v2306, %v2498
        %v2500 = vpop.f32.mrb[0].mxu0
        %v2501 = vadd.f32 %v2308, %v2500
        %v2502 = vpop.f32.mrb[0].mxu0
        %v2503 = vadd.f32 %v2310, %v2502
        %v2504 = vpop.f32.mrb[0].mxu0
        %v2505 = vadd.f32 %v2312, %v2504
        %2506 = vmatprep.mubr.bf16.mxu0 %v1276
        %2507 = vmatmul.mubr.bf16.gmra.mrb[0].mxu0 %v1275
        %v2508 = vpop.f32.mrb[0].mxu0
        %v2509 = vadd.f32 %v2316, %v2508
        %v2510 = vpop.f32.mrb[0].mxu0
        %v2511 = vadd.f32 %v2318, %v2510
        %v2512 = vpop.f32.mrb[0].mxu0
        %v2513 = vadd.f32 %v2320, %v2512
        %v2514 = vpop.f32.mrb[0].mxu0
        %v2515 = vadd.f32 %v2322, %v2514
        %2516 = vmatprep.mubr.bf16.mxu0 %v1283
        %2517 = vmatmul.mubr.bf16.gmra.mrb[0].mxu0 %v1282
        %v2518 = vpop.f32.mrb[0].mxu0
        %v2519 = vadd.f32 %v2326, %v2518
        %v2520 = vpop.f32.mrb[0].mxu0
        %v2521 = vadd.f32 %v2328, %v2520
        %v2522 = vpop.f32.mrb[0].mxu0
        %v2523 = vadd.f32 %v2330, %v2522
        %v2524 = vpop.f32.mrb[0].mxu0
        %v2525 = vadd.f32 %v2332, %v2524
        %2526 = vmatprep.mubr.bf16.mxu0 %v1290
        %2527 = vmatmul.mubr.bf16.gmra.mrb[0].mxu0 %v1289
        %v2528 = vpop.f32.mrb[0].mxu0
        %v2529 = vadd.f32 %v2336, %v2528
        %v2530 = vpop.f32.mrb[0].mxu0
        %v2531 = vadd.f32 %v2338, %v2530
        %v2532 = vpop.f32.mrb[0].mxu0
        %v2533 = vadd.f32 %v2340, %v2532
        %v2534 = vpop.f32.mrb[0].mxu0
        %v2535 = vadd.f32 %v2342, %v2534
        %2536 = vmatprep.mubr.bf16.mxu0 %v1297
        %2537 = vmatmul.mubr.bf16.gmra.mrb[0].mxu0 %v1296
        %v2538 = vpop.f32.mrb[0].mxu0
        %v2539 = vadd.f32 %v2346, %v2538
        %v2540 = vpop.f32.mrb[0].mxu0
        %v2541 = vadd.f32 %v2348, %v2540
        %v2542 = vpop.f32.mrb[0].mxu0
        %v2543 = vadd.f32 %v2350, %v2542
        %v2544 = vpop.f32.mrb[0].mxu0
        %v2545 = vadd.f32 %v2352, %v2544
        %2546 = vmatprep.mubr.bf16.mxu0 %v1304
        %2547 = vmatmul.mubr.bf16.gmra.mrb[0].mxu0 %v1303
        %v2548 = vpop.f32.mrb[0].mxu0
        %v2549 = vadd.f32 %v2356, %v2548
        %v2550 = vpop.f32.mrb[0].mxu0
        %v2551 = vadd.f32 %v2358, %v2550
        %v2552 = vpop.f32.mrb[0].mxu0
        %v2553 = vadd.f32 %v2360, %v2552
        %v2554 = vpop.f32.mrb[0].mxu0
        %v2555 = vadd.f32 %v2362, %v2554
        %2556 = vdwg.mxu0
        %2557 = vmatprep.subr.bf16.mxu0 %v1851
        %2558 = vmatpush1.bf16.msra.mxu0 %v1850
        %2559 = vmatprep.subr.bf16.mxu0 %v1853
        %2560 = vmatpush1.bf16.msra.mxu0 %v1852
        %2561 = vmatprep.subr.bf16.mxu0 %v1855
        %2562 = vmatpush1.bf16.msra.mxu0 %v1854
        %2563 = vmatprep.subr.bf16.mxu0 %v1857
        %2564 = vmatpush1.bf16.msra.mxu0 %v1856
        %2565 = vmatprep.subr.bf16.mxu0 %v1859
        %2566 = vmatpush1.bf16.msra.mxu0 %v1858
        %2567 = vmatprep.subr.bf16.mxu0 %v1861
        %2568 = vmatpush1.bf16.msra.mxu0 %v1860
        %2569 = vmatprep.subr.bf16.mxu0 %v1863
        %2570 = vmatpush1.bf16.msra.mxu0 %v1862
        %2571 = vmatprep.subr.bf16.mxu0 %v1865
        %2572 = vmatpush1.bf16.msra.mxu0 %v1864
        %2573 = vmatprep.subr.bf16.mxu0 0
        %2574 = vmatpush1.bf16.msra.mxu0 0
        %2575 = vmatprep.subr.bf16.mxu0 0
        %2576 = vmatpush1.bf16.msra.mxu0 0
        %2577 = vmatprep.subr.bf16.mxu0 0
        %2578 = vmatpush1.bf16.msra.mxu0 0
        %2579 = vmatprep.subr.bf16.mxu0 0
        %2580 = vmatpush1.bf16.msra.mxu0 0
        %2581 = vmatprep.subr.bf16.mxu0 0
        %2582 = vmatpush1.bf16.msra.mxu0 0
        %2583 = vmatprep.subr.bf16.mxu0 0
        %2584 = vmatpush1.bf16.msra.mxu0 0
        %2585 = vmatprep.subr.bf16.mxu0 0
        %2586 = vmatpush1.bf16.msra.mxu0 0
        %2587 = vmatprep.subr.bf16.mxu0 0
        %2588 = vmatpush1.bf16.msra.mxu0 0
        %2589 = vmatprep.mubr.bf16.mxu0 0
        %2590 = vmatmul.mubr.bf16.gmra.mrb[0].mxu0 %v1200
        %v2591 = vpop.f32.mrb[0].mxu0
        %v2592 = vadd.f32 %v2399, %v2591
        %v2593 = vpop.f32.mrb[0].mxu0
        %v2594 = vadd.f32 %v2401, %v2593
        %v2595 = vpop.f32.mrb[0].mxu0
        %v2596 = vadd.f32 %v2403, %v2595
        %v2597 = vpop.f32.mrb[0].mxu0
        %v2598 = vadd.f32 %v2405, %v2597
        %2599 = vmatprep.mubr.bf16.mxu0 0
        %2600 = vmatmul.mubr.bf16.gmra.mrb[0].mxu0 %v1207
        %v2601 = vpop.f32.mrb[0].mxu0
        %v2602 = vadd.f32 %v2409, %v2601
        %v2603 = vpop.f32.mrb[0].mxu0
        %v2604 = vadd.f32 %v2411, %v2603
        %v2605 = vpop.f32.mrb[0].mxu0
        %v2606 = vadd.f32 %v2413, %v2605
        %v2607 = vpop.f32.mrb[0].mxu0
        %v2608 = vadd.f32 %v2415, %v2607
        %2609 = vmatprep.mubr.bf16.mxu0 0
        %2610 = vmatmul.mubr.bf16.gmra.mrb[0].mxu0 %v1214
        %v2611 = vpop.f32.mrb[0].mxu0
        %v2612 = vadd.f32 %v2419, %v2611
        %v2613 = vpop.f32.mrb[0].mxu0
        %v2614 = vadd.f32 %v2421, %v2613
        %v2615 = vpop.f32.mrb[0].mxu0
        %v2616 = vadd.f32 %v2423, %v2615
        %v2617 = vpop.f32.mrb[0].mxu0
        %v2618 = vadd.f32 %v2425, %v2617
        %2619 = vmatprep.mubr.bf16.mxu0 0
        %2620 = vmatmul.mubr.bf16.gmra.mrb[0].mxu0 %v1221
        %v2621 = vpop.f32.mrb[0].mxu0
        %v2622 = vadd.f32 %v2429, %v2621
        %v2623 = vpop.f32.mrb[0].mxu0
        %v2624 = vadd.f32 %v2431, %v2623
        %v2625 = vpop.f32.mrb[0].mxu0
        %v2626 = vadd.f32 %v2433, %v2625
        %v2627 = vpop.f32.mrb[0].mxu0
        %v2628 = vadd.f32 %v2435, %v2627
        %2629 = vmatprep.mubr.bf16.mxu0 0
        %2630 = vmatmul.mubr.bf16.gmra.mrb[0].mxu0 %v1228
        %v2631 = vpop.f32.mrb[0].mxu0
        %v2632 = vadd.f32 %v2439, %v2631
        %v2633 = vpop.f32.mrb[0].mxu0
        %v2634 = vadd.f32 %v2441, %v2633
        %v2635 = vpop.f32.mrb[0].mxu0
        %v2636 = vadd.f32 %v2443, %v2635
        %v2637 = vpop.f32.mrb[0].mxu0
        %v2638 = vadd.f32 %v2445, %v2637
        %2639 = vmatprep.mubr.bf16.mxu0 0
        %2640 = vmatmul.mubr.bf16.gmra.mrb[0].mxu0 %v1235
        %v2641 = vpop.f32.mrb[0].mxu0
        %v2642 = vadd.f32 %v2449, %v2641
        %v2643 = vpop.f32.mrb[0].mxu0
        %v2644 = vadd.f32 %v2451, %v2643
        %v2645 = vpop.f32.mrb[0].mxu0
        %v2646 = vadd.f32 %v2453, %v2645
        %v2647 = vpop.f32.mrb[0].mxu0
        %v2648 = vadd.f32 %v2455, %v2647
        %2649 = vmatprep.mubr.bf16.mxu0 0
        %2650 = vmatmul.mubr.bf16.gmra.mrb[0].mxu0 %v1242
        %v2651 = vpop.f32.mrb[0].mxu0
        %v2652 = vadd.f32 %v2459, %v2651
        %v2653 = vpop.f32.mrb[0].mxu0
        %v2654 = vadd.f32 %v2461, %v2653
        %v2655 = vpop.f32.mrb[0].mxu0
        %v2656 = vadd.f32 %v2463, %v2655
        %v2657 = vpop.f32.mrb[0].mxu0
        %v2658 = vadd.f32 %v2465, %v2657
        %2659 = vmatprep.mubr.bf16.mxu0 0
        %2660 = vmatmul.mubr.bf16.gmra.mrb[0].mxu0 %v1249
        %v2661 = vpop.f32.mrb[0].mxu0
        %v2662 = vadd.f32 %v2469, %v2661
        %v2663 = vpop.f32.mrb[0].mxu0
        %v2664 = vadd.f32 %v2471, %v2663
        %v2665 = vpop.f32.mrb[0].mxu0
        %v2666 = vadd.f32 %v2473, %v2665
        %v2667 = vpop.f32.mrb[0].mxu0
        %v2668 = vadd.f32 %v2475, %v2667
        %2669 = vmatprep.mubr.bf16.mxu0 0
        %2670 = vmatmul.mubr.bf16.gmra.mrb[0].mxu0 %v1256
        %v2671 = vpop.f32.mrb[0].mxu0
        %v2672 = vadd.f32 %v2479, %v2671
        %v2673 = vpop.f32.mrb[0].mxu0
        %v2674 = vadd.f32 %v2481, %v2673
        %v2675 = vpop.f32.mrb[0].mxu0
        %v2676 = vadd.f32 %v2483, %v2675
        %v2677 = vpop.f32.mrb[0].mxu0
        %v2678 = vadd.f32 %v2485, %v2677
        %2679 = vmatprep.mubr.bf16.mxu0 0
        %2680 = vmatmul.mubr.bf16.gmra.mrb[0].mxu0 %v1263
        %v2681 = vpop.f32.mrb[0].mxu0
        %v2682 = vadd.f32 %v2489, %v2681
        %v2683 = vpop.f32.mrb[0].mxu0
        %v2684 = vadd.f32 %v2491, %v2683
        %v2685 = vpop.f32.mrb[0].mxu0
        %v2686 = vadd.f32 %v2493, %v2685
        %v2687 = vpop.f32.mrb[0].mxu0
        %v2688 = vadd.f32 %v2495, %v2687
        %2689 = vmatprep.mubr.bf16.mxu0 0
        %2690 = vmatmul.mubr.bf16.gmra.mrb[0].mxu0 %v1270
        %v2691 = vpop.f32.mrb[0].mxu0
        %v2692 = vadd.f32 %v2499, %v2691
        %v2693 = vpop.f32.mrb[0].mxu0
        %v2694 = vadd.f32 %v2501, %v2693
        %v2695 = vpop.f32.mrb[0].mxu0
        %v2696 = vadd.f32 %v2503, %v2695
        %v2697 = vpop.f32.mrb[0].mxu0
        %v2698 = vadd.f32 %v2505, %v2697
        %2699 = vmatprep.mubr.bf16.mxu0 0
        %2700 = vmatmul.mubr.bf16.gmra.mrb[0].mxu0 %v1277
        %v2701 = vpop.f32.mrb[0].mxu0
        %v2702 = vadd.f32 %v2509, %v2701
        %v2703 = vpop.f32.mrb[0].mxu0
        %v2704 = vadd.f32 %v2511, %v2703
        %v2705 = vpop.f32.mrb[0].mxu0
        %v2706 = vadd.f32 %v2513, %v2705
        %v2707 = vpop.f32.mrb[0].mxu0
        %v2708 = vadd.f32 %v2515, %v2707
        %2709 = vmatprep.mubr.bf16.mxu0 0
        %2710 = vmatmul.mubr.bf16.gmra.mrb[0].mxu0 %v1284
        %v2711 = vpop.f32.mrb[0].mxu0
        %v2712 = vadd.f32 %v2519, %v2711
        %v2713 = vpop.f32.mrb[0].mxu0
        %v2714 = vadd.f32 %v2521, %v2713
        %v2715 = vpop.f32.mrb[0].mxu0
        %v2716 = vadd.f32 %v2523, %v2715
        %v2717 = vpop.f32.mrb[0].mxu0
        %v2718 = vadd.f32 %v2525, %v2717
        %2719 = vmatprep.mubr.bf16.mxu0 0
        %2720 = vmatmul.mubr.bf16.gmra.mrb[0].mxu0 %v1291
        %v2721 = vpop.f32.mrb[0].mxu0
        %v2722 = vadd.f32 %v2529, %v2721
        %v2723 = vpop.f32.mrb[0].mxu0
        %v2724 = vadd.f32 %v2531, %v2723
        %v2725 = vpop.f32.mrb[0].mxu0
        %v2726 = vadd.f32 %v2533, %v2725
        %v2727 = vpop.f32.mrb[0].mxu0
        %v2728 = vadd.f32 %v2535, %v2727
        %2729 = vmatprep.mubr.bf16.mxu0 0
        %2730 = vmatmul.mubr.bf16.gmra.mrb[0].mxu0 %v1298
        %v2731 = vpop.f32.mrb[0].mxu0
        %v2732 = vadd.f32 %v2539, %v2731
        %v2733 = vpop.f32.mrb[0].mxu0
        %v2734 = vadd.f32 %v2541, %v2733
        %v2735 = vpop.f32.mrb[0].mxu0
        %v2736 = vadd.f32 %v2543, %v2735
        %v2737 = vpop.f32.mrb[0].mxu0
        %v2738 = vadd.f32 %v2545, %v2737
        %2739 = vmatprep.mubr.bf16.mxu0 0
        %2740 = vmatmul.mubr.bf16.gmra.mrb[0].mxu0 %v1305
        %v2741 = vpop.f32.mrb[0].mxu0
        %v2742 = vadd.f32 %v2549, %v2741
        %v2743 = vpop.f32.mrb[0].mxu0
        %v2744 = vadd.f32 %v2551, %v2743
        %v2745 = vpop.f32.mrb[0].mxu0
        %v2746 = vadd.f32 %v2553, %v2745
        %v2747 = vpop.f32.mrb[0].mxu0
        %v2748 = vadd.f32 %v2555, %v2747
        %2749 = vdwg.mxu0
        %v2750 = vmax.f32 %v2592, 0.0
        %v2751 = vmax.f32 %v2594, 0.0
        %v2752 = vmax.f32 %v2596, 0.0
        %v2753 = vmax.f32 %v2598, 0.0
        %v2754 = vmax.f32 %v2602, 0.0
        %v2755 = vmax.f32 %v2604, 0.0
        %v2756 = vmax.f32 %v2606, 0.0
        %v2757 = vmax.f32 %v2608, 0.0
        %v2758 = vmax.f32 %v2612, 0.0
        %v2759 = vmax.f32 %v2614, 0.0
        %v2760 = vmax.f32 %v2616, 0.0
        %v2761 = vmax.f32 %v2618, 0.0
        %v2762 = vmax.f32 %v2622, 0.0
        %v2763 = vmax.f32 %v2624, 0.0
        %v2764 = vmax.f32 %v2626, 0.0
        %v2765 = vmax.f32 %v2628, 0.0
        %v2766 = vmax.f32 %v2632, 0.0
        %v2767 = vmax.f32 %v2634, 0.0
        %v2768 = vmax.f32 %v2636, 0.0
        %v2769 = vmax.f32 %v2638, 0.0
        %v2770 = vmax.f32 %v2642, 0.0
        %v2771 = vmax.f32 %v2644, 0.0
        %v2772 = vmax.f32 %v2646, 0.0
        %v2773 = vmax.f32 %v2648, 0.0
        %v2774 = vmax.f32 %v2652, 0.0
        %v2775 = vmax.f32 %v2654, 0.0
        %v2776 = vmax.f32 %v2656, 0.0
        %v2777 = vmax.f32 %v2658, 0.0
        %v2778 = vmax.f32 %v2662, 0.0
        %v2779 = vmax.f32 %v2664, 0.0
        %v2780 = vmax.f32 %v2666, 0.0
        %v2781 = vmax.f32 %v2668, 0.0
        %v2782 = vmax.f32 %v2672, 0.0
        %v2783 = vmax.f32 %v2674, 0.0
        %v2784 = vmax.f32 %v2676, 0.0
        %v2785 = vmax.f32 %v2678, 0.0
        %v2786 = vmax.f32 %v2682, 0.0
        %v2787 = vmax.f32 %v2684, 0.0
        %v2788 = vmax.f32 %v2686, 0.0
        %v2789 = vmax.f32 %v2688, 0.0
        %v2790 = vmax.f32 %v2692, 0.0
        %v2791 = vmax.f32 %v2694, 0.0
        %v2792 = vmax.f32 %v2696, 0.0
        %v2793 = vmax.f32 %v2698, 0.0
        %v2794 = vmax.f32 %v2702, 0.0
        %v2795 = vmax.f32 %v2704, 0.0
        %v2796 = vmax.f32 %v2706, 0.0
        %v2797 = vmax.f32 %v2708, 0.0
        %v2798 = vmax.f32 %v2712, 0.0
        %v2799 = vmax.f32 %v2714, 0.0
        %v2800 = vmax.f32 %v2716, 0.0
        %v2801 = vmax.f32 %v2718, 0.0
        %v2802 = vmax.f32 %v2722, 0.0
        %v2803 = vmax.f32 %v2724, 0.0
        %v2804 = vmax.f32 %v2726, 0.0
        %v2805 = vmax.f32 %v2728, 0.0
        %v2806 = vmax.f32 %v2732, 0.0
        %v2807 = vmax.f32 %v2734, 0.0
        %v2808 = vmax.f32 %v2736, 0.0
        %v2809 = vmax.f32 %v2738, 0.0
        %v2810 = vmax.f32 %v2742, 0.0
        %v2811 = vmax.f32 %v2744, 0.0
        %v2812 = vmax.f32 %v2746, 0.0
        %v2813 = vmax.f32 %v2748, 0.0
        %v2814 = vpack.c.bf16 %v2752, %v2750
        %v2815 = vpack.c.bf16 %v2753, %v2751
        %v2816 = vpack.c.bf16 %v2756, %v2754
        %v2817 = vpack.c.bf16 %v2757, %v2755
        %v2818 = vpack.c.bf16 %v2760, %v2758
        %v2819 = vpack.c.bf16 %v2761, %v2759
        %v2820 = vpack.c.bf16 %v2764, %v2762
        %v2821 = vpack.c.bf16 %v2765, %v2763
        %v2822 = vpack.c.bf16 %v2768, %v2766
        %v2823 = vpack.c.bf16 %v2769, %v2767
        %v2824 = vpack.c.bf16 %v2772, %v2770
        %v2825 = vpack.c.bf16 %v2773, %v2771
        %v2826 = vpack.c.bf16 %v2776, %v2774
        %v2827 = vpack.c.bf16 %v2777, %v2775
        %v2828 = vpack.c.bf16 %v2780, %v2778
        %v2829 = vpack.c.bf16 %v2781, %v2779
        %v2830 = vpack.c.bf16 %v2784, %v2782
        %v2831 = vpack.c.bf16 %v2785, %v2783
        %v2832 = vpack.c.bf16 %v2788, %v2786
        %v2833 = vpack.c.bf16 %v2789, %v2787
        %v2834 = vpack.c.bf16 %v2792, %v2790
        %v2835 = vpack.c.bf16 %v2793, %v2791
        %v2836 = vpack.c.bf16 %v2796, %v2794
        %v2837 = vpack.c.bf16 %v2797, %v2795
        %v2838 = vpack.c.bf16 %v2800, %v2798
        %v2839 = vpack.c.bf16 %v2801, %v2799
        %v2840 = vpack.c.bf16 %v2804, %v2802
        %v2841 = vpack.c.bf16 %v2805, %v2803
        %v2842 = vpack.c.bf16 %v2808, %v2806
        %v2843 = vpack.c.bf16 %v2809, %v2807
        %v2844 = vpack.c.bf16 %v2812, %v2810
        %v2845 = vpack.c.bf16 %v2813, %v2811
        %v2846 = vld [vmem:[#allocation7] sm:$0xf]
        %v2847 = vld [vmem:[#allocation7 + $0x4] sm:$0xf]
        %v2848 = vld [vmem:[#allocation7 + $0x8] sm:$0xf]
        %v2849 = vld [vmem:[#allocation7 + $0xc] sm:$0xf]
        %v2850 = vld [vmem:[#allocation7 + $0x10] sm:$0xf]
        %v2851 = vld [vmem:[#allocation7 + $0x14] sm:$0xf]
        %v2852 = vld [vmem:[#allocation7 + $0x18] sm:$0xf]
        %v2853 = vld [vmem:[#allocation7 + $0x1c] sm:$0xf]
        %v2854 = vld [vmem:[#allocation7 + $0x20] sm:$0xf]
        %v2855 = vld [vmem:[#allocation7 + $0x24] sm:$0xf]
        %v2856 = vld [vmem:[#allocation7 + $0x28] sm:$0xf]
        %v2857 = vld [vmem:[#allocation7 + $0x2c] sm:$0xf]
        %v2858 = vld [vmem:[#allocation7 + $0x30] sm:$0xf]
        %v2859 = vld [vmem:[#allocation7 + $0x34] sm:$0xf]
        %v2860 = vld [vmem:[#allocation7 + $0x38] sm:$0xf]
        %v2861 = vld [vmem:[#allocation7 + $0x3c] sm:$0xf]
        %v2862 = vld [vmem:[#allocation7 + $0x40] sm:$0xf]
        %v2863 = vld [vmem:[#allocation7 + $0x44] sm:$0xf]
        %v2864 = vld [vmem:[#allocation7 + $0x48] sm:$0xf]
        %v2865 = vld [vmem:[#allocation7 + $0x4c] sm:$0xf]
        %v2866 = vld [vmem:[#allocation7 + $0x50] sm:$0xf]
        %v2867 = vld [vmem:[#allocation7 + $0x54] sm:$0xf]
        %v2868 = vld [vmem:[#allocation7 + $0x58] sm:$0xf]
        %v2869 = vld [vmem:[#allocation7 + $0x5c] sm:$0xf]
        %v2870 = vld [vmem:[#allocation7 + $0x60] sm:$0xf]
        %v2871 = vld [vmem:[#allocation7 + $0x64] sm:$0xf]
        %v2872 = vld [vmem:[#allocation7 + $0x68] sm:$0xf]
        %v2873 = vld [vmem:[#allocation7 + $0x6c] sm:$0xf]
        %v2874 = vld [vmem:[#allocation7 + $0x70] sm:$0xf]
        %v2875 = vld [vmem:[#allocation7 + $0x74] sm:$0xf]
        %v2876 = vld [vmem:[#allocation7 + $0x78] sm:$0xf]
        %v2877 = vld [vmem:[#allocation7 + $0x7c] sm:$0xf]
        %v2878 = vld [vmem:[%s6] sm:$0x1]
        %v2880 = vlaneseq
        %v2881 = vshrl.u32 %v2880, 7
        %v2882 = vsub.s32 0, %v2881
        %v2883 = vrot.slane %v2878, %v2882
        %v2917 = vunpack.c.l.b16 %v2846
        %v2918 = vunpack.c.l.b16 %v2847
        %v2919 = vunpack.c.l.b16 %v2848
        %v2920 = vunpack.c.l.b16 %v2849
        %v2921 = vunpack.c.l.b16 %v2850
        %v2922 = vunpack.c.l.b16 %v2851
        %v2923 = vunpack.c.l.b16 %v2852
        %v2924 = vunpack.c.l.b16 %v2853
        %v2925 = vunpack.c.l.b16 %v2854
        %v2926 = vunpack.c.l.b16 %v2855
        %v2927 = vunpack.c.l.b16 %v2856
        %v2928 = vunpack.c.l.b16 %v2857
        %v2929 = vunpack.c.l.b16 %v2858
        %v2930 = vunpack.c.l.b16 %v2859
        %v2931 = vunpack.c.l.b16 %v2860
        %v2932 = vunpack.c.l.b16 %v2861
        %v2933 = vunpack.c.l.b16 %v2862
        %v2934 = vunpack.c.l.b16 %v2863
        %v2935 = vunpack.c.l.b16 %v2864
        %v2936 = vunpack.c.l.b16 %v2865
        %v2937 = vunpack.c.l.b16 %v2866
        %v2938 = vunpack.c.l.b16 %v2867
        %v2939 = vunpack.c.l.b16 %v2868
        %v2940 = vunpack.c.l.b16 %v2869
        %v2941 = vunpack.c.l.b16 %v2870
        %v2942 = vunpack.c.l.b16 %v2871
        %v2943 = vunpack.c.l.b16 %v2872
        %v2944 = vunpack.c.l.b16 %v2873
        %v2945 = vunpack.c.l.b16 %v2874
        %v2946 = vunpack.c.l.b16 %v2875
        %v2947 = vunpack.c.l.b16 %v2876
        %v2948 = vunpack.c.l.b16 %v2877
        %v2949 = vpack.c.b16 %v2918, %v2917
        %v2950 = vpack.c.b16 %v2920, %v2919
        %v2951 = vpack.c.b16 %v2922, %v2921
        %v2952 = vpack.c.b16 %v2924, %v2923
        %v2953 = vpack.c.b16 %v2926, %v2925
        %v2954 = vpack.c.b16 %v2928, %v2927
        %v2955 = vpack.c.b16 %v2930, %v2929
        %v2956 = vpack.c.b16 %v2932, %v2931
        %v2957 = vpack.c.b16 %v2934, %v2933
        %v2958 = vpack.c.b16 %v2936, %v2935
        %v2959 = vpack.c.b16 %v2938, %v2937
        %v2960 = vpack.c.b16 %v2940, %v2939
        %v2961 = vpack.c.b16 %v2942, %v2941
        %v2962 = vpack.c.b16 %v2944, %v2943
        %v2963 = vpack.c.b16 %v2946, %v2945
        %v2964 = vpack.c.b16 %v2948, %v2947
        %2981 = vmatprep.subr.bf16.mxu0 0
        %2982 = vmatpush1.bf16.msra.mxu0 %v2949
        %2983 = vmatprep.subr.bf16.mxu0 0
        %2984 = vmatpush1.bf16.msra.mxu0 %v2950
        %2985 = vmatprep.subr.bf16.mxu0 0
        %2986 = vmatpush1.bf16.msra.mxu0 %v2951
        %2987 = vmatprep.subr.bf16.mxu0 0
        %2988 = vmatpush1.bf16.msra.mxu0 %v2952
        %2989 = vmatprep.subr.bf16.mxu0 0
        %2990 = vmatpush1.bf16.msra.mxu0 %v2953
        %2991 = vmatprep.subr.bf16.mxu0 0
        %2992 = vmatpush1.bf16.msra.mxu0 %v2954
        %2993 = vmatprep.subr.bf16.mxu0 0
        %2994 = vmatpush1.bf16.msra.mxu0 %v2955
        %2995 = vmatprep.subr.bf16.mxu0 0
        %2996 = vmatpush1.bf16.msra.mxu0 %v2956
        %2997 = vmatprep.subr.bf16.mxu0 0
        %2998 = vmatpush1.bf16.msra.mxu0 %v2957
        %2999 = vmatprep.subr.bf16.mxu0 0
        %3000 = vmatpush1.bf16.msra.mxu0 %v2958
        %3001 = vmatprep.subr.bf16.mxu0 0
        %3002 = vmatpush1.bf16.msra.mxu0 %v2959
        %3003 = vmatprep.subr.bf16.mxu0 0
        %3004 = vmatpush1.bf16.msra.mxu0 %v2960
        %3005 = vmatprep.subr.bf16.mxu0 0
        %3006 = vmatpush1.bf16.msra.mxu0 %v2961
        %3007 = vmatprep.subr.bf16.mxu0 0
        %3008 = vmatpush1.bf16.msra.mxu0 %v2962
        %3009 = vmatprep.subr.bf16.mxu0 0
        %3010 = vmatpush1.bf16.msra.mxu0 %v2963
        %3011 = vmatprep.subr.bf16.mxu0 0
        %3012 = vmatpush1.bf16.msra.mxu0 %v2964
        %3013 = vmatprep.mubr.bf16.mxu0 %v2815
        %3014 = vmatmul.mubr.bf16.gmra.mrb[0].mxu0 %v2814
        %v3015 = vpop.f32.mrb[0].mxu0
        %v3016 = vadd.f32 %v2883, %v3015
        %v3017 = vpop.f32.mrb[0].mxu0
        %v3018 = vpop.f32.mrb[0].mxu0
        %v3019 = vadd.f32 %v2883, %v3018
        %v3020 = vpop.f32.mrb[0].mxu0
        %3021 = vmatprep.mubr.bf16.mxu0 %v2817
        %3022 = vmatmul.mubr.bf16.gmra.mrb[0].mxu0 %v2816
        %v3023 = vpop.f32.mrb[0].mxu0
        %v3024 = vadd.f32 %v2883, %v3023
        %v3025 = vpop.f32.mrb[0].mxu0
        %v3026 = vpop.f32.mrb[0].mxu0
        %v3027 = vadd.f32 %v2883, %v3026
        %v3028 = vpop.f32.mrb[0].mxu0
        %3029 = vmatprep.mubr.bf16.mxu0 %v2819
        %3030 = vmatmul.mubr.bf16.gmra.mrb[0].mxu0 %v2818
        %v3031 = vpop.f32.mrb[0].mxu0
        %v3032 = vadd.f32 %v2883, %v3031
        %v3033 = vpop.f32.mrb[0].mxu0
        %v3034 = vpop.f32.mrb[0].mxu0
        %v3035 = vadd.f32 %v2883, %v3034
        %v3036 = vpop.f32.mrb[0].mxu0
        %3037 = vmatprep.mubr.bf16.mxu0 %v2821
        %3038 = vmatmul.mubr.bf16.gmra.mrb[0].mxu0 %v2820
        %v3039 = vpop.f32.mrb[0].mxu0
        %v3040 = vadd.f32 %v2883, %v3039
        %v3041 = vpop.f32.mrb[0].mxu0
        %v3042 = vpop.f32.mrb[0].mxu0
        %v3043 = vadd.f32 %v2883, %v3042
        %v3044 = vpop.f32.mrb[0].mxu0
        %3045 = vmatprep.mubr.bf16.mxu0 %v2823
        %3046 = vmatmul.mubr.bf16.gmra.mrb[0].mxu0 %v2822
        %v3047 = vpop.f32.mrb[0].mxu0
        %v3048 = vadd.f32 %v2883, %v3047
        %v3049 = vpop.f32.mrb[0].mxu0
        %v3050 = vpop.f32.mrb[0].mxu0
        %v3051 = vadd.f32 %v2883, %v3050
        %v3052 = vpop.f32.mrb[0].mxu0
        %3053 = vmatprep.mubr.bf16.mxu0 %v2825
        %3054 = vmatmul.mubr.bf16.gmra.mrb[0].mxu0 %v2824
        %v3055 = vpop.f32.mrb[0].mxu0
        %v3056 = vadd.f32 %v2883, %v3055
        %v3057 = vpop.f32.mrb[0].mxu0
        %v3058 = vpop.f32.mrb[0].mxu0
        %v3059 = vadd.f32 %v2883, %v3058
        %v3060 = vpop.f32.mrb[0].mxu0
        %3061 = vmatprep.mubr.bf16.mxu0 %v2827
        %3062 = vmatmul.mubr.bf16.gmra.mrb[0].mxu0 %v2826
        %v3063 = vpop.f32.mrb[0].mxu0
        %v3064 = vadd.f32 %v2883, %v3063
        %v3065 = vpop.f32.mrb[0].mxu0
        %v3066 = vpop.f32.mrb[0].mxu0
        %v3067 = vadd.f32 %v2883, %v3066
        %v3068 = vpop.f32.mrb[0].mxu0
        %3069 = vmatprep.mubr.bf16.mxu0 %v2829
        %3070 = vmatmul.mubr.bf16.gmra.mrb[0].mxu0 %v2828
        %v3071 = vpop.f32.mrb[0].mxu0
        %v3072 = vadd.f32 %v2883, %v3071
        %v3073 = vpop.f32.mrb[0].mxu0
        %v3074 = vpop.f32.mrb[0].mxu0
        %v3075 = vadd.f32 %v2883, %v3074
        %v3076 = vpop.f32.mrb[0].mxu0
        %3077 = vmatprep.mubr.bf16.mxu0 %v2831
        %3078 = vmatmul.mubr.bf16.gmra.mrb[0].mxu0 %v2830
        %v3079 = vpop.f32.mrb[0].mxu0
        %v3080 = vadd.f32 %v2883, %v3079
        %v3081 = vpop.f32.mrb[0].mxu0
        %v3082 = vpop.f32.mrb[0].mxu0
        %v3083 = vadd.f32 %v2883, %v3082
        %v3084 = vpop.f32.mrb[0].mxu0
        %3085 = vmatprep.mubr.bf16.mxu0 %v2833
        %3086 = vmatmul.mubr.bf16.gmra.mrb[0].mxu0 %v2832
        %v3087 = vpop.f32.mrb[0].mxu0
        %v3088 = vadd.f32 %v2883, %v3087
        %v3089 = vpop.f32.mrb[0].mxu0
        %v3090 = vpop.f32.mrb[0].mxu0
        %v3091 = vadd.f32 %v2883, %v3090
        %v3092 = vpop.f32.mrb[0].mxu0
        %3093 = vmatprep.mubr.bf16.mxu0 %v2835
        %3094 = vmatmul.mubr.bf16.gmra.mrb[0].mxu0 %v2834
        %v3095 = vpop.f32.mrb[0].mxu0
        %v3096 = vadd.f32 %v2883, %v3095
        %v3097 = vpop.f32.mrb[0].mxu0
        %v3098 = vpop.f32.mrb[0].mxu0
        %v3099 = vadd.f32 %v2883, %v3098
        %v3100 = vpop.f32.mrb[0].mxu0
        %3101 = vmatprep.mubr.bf16.mxu0 %v2837
        %3102 = vmatmul.mubr.bf16.gmra.mrb[0].mxu0 %v2836
        %v3103 = vpop.f32.mrb[0].mxu0
        %v3104 = vadd.f32 %v2883, %v3103
        %v3105 = vpop.f32.mrb[0].mxu0
        %v3106 = vpop.f32.mrb[0].mxu0
        %v3107 = vadd.f32 %v2883, %v3106
        %v3108 = vpop.f32.mrb[0].mxu0
        %3109 = vmatprep.mubr.bf16.mxu0 %v2839
        %3110 = vmatmul.mubr.bf16.gmra.mrb[0].mxu0 %v2838
        %v3111 = vpop.f32.mrb[0].mxu0
        %v3112 = vadd.f32 %v2883, %v3111
        %v3113 = vpop.f32.mrb[0].mxu0
        %v3114 = vpop.f32.mrb[0].mxu0
        %v3115 = vadd.f32 %v2883, %v3114
        %v3116 = vpop.f32.mrb[0].mxu0
        %3117 = vmatprep.mubr.bf16.mxu0 %v2841
        %3118 = vmatmul.mubr.bf16.gmra.mrb[0].mxu0 %v2840
        %v3119 = vpop.f32.mrb[0].mxu0
        %v3120 = vadd.f32 %v2883, %v3119
        %v3121 = vpop.f32.mrb[0].mxu0
        %v3122 = vpop.f32.mrb[0].mxu0
        %v3123 = vadd.f32 %v2883, %v3122
        %v3124 = vpop.f32.mrb[0].mxu0
        %3125 = vmatprep.mubr.bf16.mxu0 %v2843
        %3126 = vmatmul.mubr.bf16.gmra.mrb[0].mxu0 %v2842
        %v3127 = vpop.f32.mrb[0].mxu0
        %v3128 = vadd.f32 %v2883, %v3127
        %v3129 = vpop.f32.mrb[0].mxu0
        %v3130 = vpop.f32.mrb[0].mxu0
        %v3131 = vadd.f32 %v2883, %v3130
        %v3132 = vpop.f32.mrb[0].mxu0
        %3133 = vmatprep.mubr.bf16.mxu0 %v2845
        %3134 = vmatmul.mubr.bf16.gmra.mrb[0].mxu0 %v2844
        %v3135 = vpop.f32.mrb[0].mxu0
        %v3136 = vadd.f32 %v2883, %v3135
        %v3137 = vpop.f32.mrb[0].mxu0
        %v3138 = vpop.f32.mrb[0].mxu0
        %v3139 = vadd.f32 %v2883, %v3138
        %v3140 = vpop.f32.mrb[0].mxu0
        %3141 = vdwg.mxu0
        %v3142 = vld [vmem:[%s585] sm:$0xff]
        %v3143 = vld [vmem:[%s585 + $0x8] sm:$0xff]
        %v3144 = vld [vmem:[%s585 + $0x10] sm:$0xff]
        %v3145 = vld [vmem:[%s585 + $0x18] sm:$0xff]
        %v3146 = vld [vmem:[%s585 + $0x20] sm:$0xff]
        %v3147 = vld [vmem:[%s585 + $0x28] sm:$0xff]
        %v3148 = vld [vmem:[%s585 + $0x30] sm:$0xff]
        %v3149 = vld [vmem:[%s585 + $0x38] sm:$0xff]
        %v3150 = vld [vmem:[%s585 + $0x40] sm:$0xff]
        %v3151 = vld [vmem:[%s585 + $0x48] sm:$0xff]
        %v3152 = vld [vmem:[%s585 + $0x50] sm:$0xff]
        %v3153 = vld [vmem:[%s585 + $0x58] sm:$0xff]
        %v3154 = vld [vmem:[%s585 + $0x60] sm:$0xff]
        %v3155 = vld [vmem:[%s585 + $0x68] sm:$0xff]
        %v3156 = vld [vmem:[%s585 + $0x70] sm:$0xff]
        %v3157 = vld [vmem:[%s585 + $0x78] sm:$0xff]
        %v3158 = vld [vmem:[%s585 + $0x80] sm:$0xff]
        %v3159 = vld [vmem:[%s585 + $0x88] sm:$0xff]
        %v3160 = vld [vmem:[%s585 + $0x90] sm:$0xff]
        %v3161 = vld [vmem:[%s585 + $0x98] sm:$0xff]
        %v3162 = vld [vmem:[%s585 + $0xa0] sm:$0xff]
        %v3163 = vld [vmem:[%s585 + $0xa8] sm:$0xff]
        %v3164 = vld [vmem:[%s585 + $0xb0] sm:$0xff]
        %v3165 = vld [vmem:[%s585 + $0xb8] sm:$0xff]
        %v3166 = vld [vmem:[%s585 + $0xc0] sm:$0xff]
        %v3167 = vld [vmem:[%s585 + $0xc8] sm:$0xff]
        %v3168 = vld [vmem:[%s585 + $0xd0] sm:$0xff]
        %v3169 = vld [vmem:[%s585 + $0xd8] sm:$0xff]
        %v3170 = vld [vmem:[%s585 + $0xe0] sm:$0xff]
        %v3171 = vld [vmem:[%s585 + $0xe8] sm:$0xff]
        %v3172 = vld [vmem:[%s585 + $0xf0] sm:$0xff]
        %v3173 = vld [vmem:[%s585 + $0xf8] sm:$0xff]
        %v3174 = vmul.f32 %v3016, 0.5
        %v3175 = vmul.f32 %v3019, 0.5
        %v3176 = vmul.f32 %v3024, 0.5
        %v3177 = vmul.f32 %v3027, 0.5
        %v3178 = vmul.f32 %v3032, 0.5
        %v3179 = vmul.f32 %v3035, 0.5
        %v3180 = vmul.f32 %v3040, 0.5
        %v3181 = vmul.f32 %v3043, 0.5
        %v3182 = vmul.f32 %v3048, 0.5
        %v3183 = vmul.f32 %v3051, 0.5
        %v3184 = vmul.f32 %v3056, 0.5
        %v3185 = vmul.f32 %v3059, 0.5
        %v3186 = vmul.f32 %v3064, 0.5
        %v3187 = vmul.f32 %v3067, 0.5
        %v3188 = vmul.f32 %v3072, 0.5
        %v3189 = vmul.f32 %v3075, 0.5
        %v3190 = vmul.f32 %v3080, 0.5
        %v3191 = vmul.f32 %v3083, 0.5
        %v3192 = vmul.f32 %v3088, 0.5
        %v3193 = vmul.f32 %v3091, 0.5
        %v3194 = vmul.f32 %v3096, 0.5
        %v3195 = vmul.f32 %v3099, 0.5
        %v3196 = vmul.f32 %v3104, 0.5
        %v3197 = vmul.f32 %v3107, 0.5
        %v3198 = vmul.f32 %v3112, 0.5
        %v3199 = vmul.f32 %v3115, 0.5
        %v3200 = vmul.f32 %v3120, 0.5
        %v3201 = vmul.f32 %v3123, 0.5
        %v3202 = vmul.f32 %v3128, 0.5
        %v3203 = vmul.f32 %v3131, 0.5
        %v3204 = vmul.f32 %v3136, 0.5
        %v3205 = vmul.f32 %v3139, 0.5
        %v3206 = vmul.f32 %v3174, 1.442695
        %v3207 = vpow.pop %v3206
        %v3208 = vmul.f32 %v3175, 1.442695
        %v3209 = vpow.pop %v3208
        %v3210 = vmul.f32 %v3176, 1.442695
        %v3211 = vpow.pop %v3210
        %v3212 = vmul.f32 %v3177, 1.442695
        %v3213 = vpow.pop %v3212
        %v3214 = vmul.f32 %v3178, 1.442695
        %v3215 = vpow.pop %v3214
        %v3216 = vmul.f32 %v3179, 1.442695
        %v3217 = vpow.pop %v3216
        %v3218 = vmul.f32 %v3180, 1.442695
        %v3219 = vpow.pop %v3218
        %v3220 = vmul.f32 %v3181, 1.442695
        %v3221 = vpow.pop %v3220
        %v3222 = vmul.f32 %v3182, 1.442695
        %v3223 = vpow.pop %v3222
        %v3224 = vmul.f32 %v3183, 1.442695
        %v3225 = vpow.pop %v3224
        %v3226 = vmul.f32 %v3184, 1.442695
        %v3227 = vpow.pop %v3226
        %v3228 = vmul.f32 %v3185, 1.442695
        %v3229 = vpow.pop %v3228
        %v3230 = vmul.f32 %v3186, 1.442695
        %v3231 = vpow.pop %v3230
        %v3232 = vmul.f32 %v3187, 1.442695
        %v3233 = vpow.pop %v3232
        %v3234 = vmul.f32 %v3188, 1.442695
        %v3235 = vpow.pop %v3234
        %v3236 = vmul.f32 %v3189, 1.442695
        %v3237 = vpow.pop %v3236
        %v3238 = vmul.f32 %v3190, 1.442695
        %v3239 = vpow.pop %v3238
        %v3240 = vmul.f32 %v3191, 1.442695
        %v3241 = vpow.pop %v3240
        %v3242 = vmul.f32 %v3192, 1.442695
        %v3243 = vpow.pop %v3242
        %v3244 = vmul.f32 %v3193, 1.442695
        %v3245 = vpow.pop %v3244
        %v3246 = vmul.f32 %v3194, 1.442695
        %v3247 = vpow.pop %v3246
        %v3248 = vmul.f32 %v3195, 1.442695
        %v3249 = vpow.pop %v3248
        %v3250 = vmul.f32 %v3196, 1.442695
        %v3251 = vpow.pop %v3250
        %v3252 = vmul.f32 %v3197, 1.442695
        %v3253 = vpow.pop %v3252
        %v3254 = vmul.f32 %v3198, 1.442695
        %v3255 = vpow.pop %v3254
        %v3256 = vmul.f32 %v3199, 1.442695
        %v3257 = vpow.pop %v3256
        %v3258 = vmul.f32 %v3200, 1.442695
        %v3259 = vpow.pop %v3258
        %v3260 = vmul.f32 %v3201, 1.442695
        %v3261 = vpow.pop %v3260
        %v3262 = vmul.f32 %v3202, 1.442695
        %v3263 = vpow.pop %v3262
        %v3264 = vmul.f32 %v3203, 1.442695
        %v3265 = vpow.pop %v3264
        %v3266 = vmul.f32 %v3204, 1.442695
        %v3267 = vpow.pop %v3266
        %v3268 = vmul.f32 %v3205, 1.442695
        %v3269 = vpow.pop %v3268
        %3302 = vrot.lane.b32.xlu0 %v3207, 112
        %v3303 = vpop.permute.xlu0 %3302
        %3304 = vrot.lane.b32.xlu0 %v3209, 112
        %v3305 = vpop.permute.xlu0 %3304
        %3306 = vrot.lane.b32.xlu0 %v3211, 112
        %v3307 = vpop.permute.xlu0 %3306
        %3308 = vrot.lane.b32.xlu0 %v3213, 112
        %v3309 = vpop.permute.xlu0 %3308
        %3310 = vrot.lane.b32.xlu0 %v3215, 112
        %v3311 = vpop.permute.xlu0 %3310
        %3312 = vrot.lane.b32.xlu0 %v3217, 112
        %v3313 = vpop.permute.xlu0 %3312
        %3314 = vrot.lane.b32.xlu0 %v3219, 112
        %v3315 = vpop.permute.xlu0 %3314
        %3316 = vrot.lane.b32.xlu0 %v3221, 112
        %v3317 = vpop.permute.xlu0 %3316
        %3318 = vrot.lane.b32.xlu0 %v3223, 112
        %v3319 = vpop.permute.xlu0 %3318
        %3320 = vrot.lane.b32.xlu0 %v3225, 112
        %v3321 = vpop.permute.xlu0 %3320
        %3322 = vrot.lane.b32.xlu0 %v3227, 112
        %v3323 = vpop.permute.xlu0 %3322
        %3324 = vrot.lane.b32.xlu0 %v3229, 112
        %v3325 = vpop.permute.xlu0 %3324
        %3326 = vrot.lane.b32.xlu0 %v3231, 112
        %v3327 = vpop.permute.xlu0 %3326
        %3328 = vrot.lane.b32.xlu0 %v3233, 112
        %v3329 = vpop.permute.xlu0 %3328
        %3330 = vrot.lane.b32.xlu0 %v3235, 112
        %v3331 = vpop.permute.xlu0 %3330
        %3332 = vrot.lane.b32.xlu0 %v3237, 112
        %v3333 = vpop.permute.xlu0 %3332
        %3334 = vrot.lane.b32.xlu0 %v3239, 112
        %v3335 = vpop.permute.xlu0 %3334
        %3336 = vrot.lane.b32.xlu0 %v3241, 112
        %v3337 = vpop.permute.xlu0 %3336
        %3338 = vrot.lane.b32.xlu0 %v3243, 112
        %v3339 = vpop.permute.xlu0 %3338
        %3340 = vrot.lane.b32.xlu0 %v3245, 112
        %v3341 = vpop.permute.xlu0 %3340
        %3342 = vrot.lane.b32.xlu0 %v3247, 112
        %v3343 = vpop.permute.xlu0 %3342
        %3344 = vrot.lane.b32.xlu0 %v3249, 112
        %v3345 = vpop.permute.xlu0 %3344
        %3346 = vrot.lane.b32.xlu0 %v3251, 112
        %v3347 = vpop.permute.xlu0 %3346
        %3348 = vrot.lane.b32.xlu0 %v3253, 112
        %v3349 = vpop.permute.xlu0 %3348
        %3350 = vrot.lane.b32.xlu0 %v3255, 112
        %v3351 = vpop.permute.xlu0 %3350
        %3352 = vrot.lane.b32.xlu0 %v3257, 112
        %v3353 = vpop.permute.xlu0 %3352
        %3354 = vrot.lane.b32.xlu0 %v3259, 112
        %v3355 = vpop.permute.xlu0 %3354
        %3356 = vrot.lane.b32.xlu0 %v3261, 112
        %v3357 = vpop.permute.xlu0 %3356
        %3358 = vrot.lane.b32.xlu0 %v3263, 112
        %v3359 = vpop.permute.xlu0 %3358
        %3360 = vrot.lane.b32.xlu0 %v3265, 112
        %v3361 = vpop.permute.xlu0 %3360
        %3362 = vrot.lane.b32.xlu0 %v3267, 112
        %v3363 = vpop.permute.xlu0 %3362
        %3364 = vrot.lane.b32.xlu0 %v3269, 112
        %v3365 = vpop.permute.xlu0 %3364
        %v3398 = vmul.f32 %v3142, %v3303
        %v3399 = vmul.f32 %v3143, %v3305
        %v3400 = vmul.f32 %v3144, %v3307
        %v3401 = vmul.f32 %v3145, %v3309
        %v3402 = vmul.f32 %v3146, %v3311
        %v3403 = vmul.f32 %v3147, %v3313
        %v3404 = vmul.f32 %v3148, %v3315
        %v3405 = vmul.f32 %v3149, %v3317
        %v3406 = vmul.f32 %v3150, %v3319
        %v3407 = vmul.f32 %v3151, %v3321
        %v3408 = vmul.f32 %v3152, %v3323
        %v3409 = vmul.f32 %v3153, %v3325
        %v3410 = vmul.f32 %v3154, %v3327
        %v3411 = vmul.f32 %v3155, %v3329
        %v3412 = vmul.f32 %v3156, %v3331
        %v3413 = vmul.f32 %v3157, %v3333
        %v3414 = vmul.f32 %v3158, %v3335
        %v3415 = vmul.f32 %v3159, %v3337
        %v3416 = vmul.f32 %v3160, %v3339
        %v3417 = vmul.f32 %v3161, %v3341
        %v3418 = vmul.f32 %v3162, %v3343
        %v3419 = vmul.f32 %v3163, %v3345
        %v3420 = vmul.f32 %v3164, %v3347
        %v3421 = vmul.f32 %v3165, %v3349
        %v3422 = vmul.f32 %v3166, %v3351
        %v3423 = vmul.f32 %v3167, %v3353
        %v3424 = vmul.f32 %v3168, %v3355
        %v3425 = vmul.f32 %v3169, %v3357
        %v3426 = vmul.f32 %v3170, %v3359
        %v3427 = vmul.f32 %v3171, %v3361
        %v3428 = vmul.f32 %v3172, %v3363
        %v3429 = vmul.f32 %v3173, %v3365
        %v3430 = vadd.f32 %v3016, %v3398
        %v3431 = vadd.f32 %v3019, %v3399
        %v3432 = vadd.f32 %v3024, %v3400
        %v3433 = vadd.f32 %v3027, %v3401
        %v3434 = vadd.f32 %v3032, %v3402
        %v3435 = vadd.f32 %v3035, %v3403
        %v3436 = vadd.f32 %v3040, %v3404
        %v3437 = vadd.f32 %v3043, %v3405
        %v3438 = vadd.f32 %v3048, %v3406
        %v3439 = vadd.f32 %v3051, %v3407
        %v3440 = vadd.f32 %v3056, %v3408
        %v3441 = vadd.f32 %v3059, %v3409
        %v3442 = vadd.f32 %v3064, %v3410
        %v3443 = vadd.f32 %v3067, %v3411
        %v3444 = vadd.f32 %v3072, %v3412
        %v3445 = vadd.f32 %v3075, %v3413
        %v3446 = vadd.f32 %v3080, %v3414
        %v3447 = vadd.f32 %v3083, %v3415
        %v3448 = vadd.f32 %v3088, %v3416
        %v3449 = vadd.f32 %v3091, %v3417
        %v3450 = vadd.f32 %v3096, %v3418
        %v3451 = vadd.f32 %v3099, %v3419
        %v3452 = vadd.f32 %v3104, %v3420
        %v3453 = vadd.f32 %v3107, %v3421
        %v3454 = vadd.f32 %v3112, %v3422
        %v3455 = vadd.f32 %v3115, %v3423
        %v3456 = vadd.f32 %v3120, %v3424
        %v3457 = vadd.f32 %v3123, %v3425
        %v3458 = vadd.f32 %v3128, %v3426
        %v3459 = vadd.f32 %v3131, %v3427
        %v3460 = vadd.f32 %v3136, %v3428
        %v3461 = vadd.f32 %v3139, %v3429
        %v3462 = vpack.c.bf16 %v3431, %v3430
        %v3463 = vpack.c.bf16 %v3433, %v3432
        %v3464 = vpack.c.bf16 %v3435, %v3434
        %v3465 = vpack.c.bf16 %v3437, %v3436
        %v3466 = vpack.c.bf16 %v3439, %v3438
        %v3467 = vpack.c.bf16 %v3441, %v3440
        %v3468 = vpack.c.bf16 %v3443, %v3442
        %v3469 = vpack.c.bf16 %v3445, %v3444
        %v3470 = vpack.c.bf16 %v3447, %v3446
        %v3471 = vpack.c.bf16 %v3449, %v3448
        %v3472 = vpack.c.bf16 %v3451, %v3450
        %v3473 = vpack.c.bf16 %v3453, %v3452
        %v3474 = vpack.c.bf16 %v3455, %v3454
        %v3475 = vpack.c.bf16 %v3457, %v3456
        %v3476 = vpack.c.bf16 %v3459, %v3458
        %v3477 = vpack.c.bf16 %v3461, %v3460
        %v3478 = vld [vmem:[#allocation8] sm:$0xff]
        %v3479 = vld [vmem:[#allocation8 + $0x8] sm:$0xff]
        %v3480 = vld [vmem:[%s579] sm:$0xf]
        %v3481 = vld [vmem:[%s579 + $0x4] sm:$0xf]
        %v3482 = vld [vmem:[%s579 + $0x8] sm:$0xf]
        %v3483 = vld [vmem:[%s579 + $0xc] sm:$0xf]
        %v3484 = vld [vmem:[%s579 + $0x10] sm:$0xf]
        %v3485 = vld [vmem:[%s579 + $0x14] sm:$0xf]
        %v3486 = vld [vmem:[%s579 + $0x18] sm:$0xf]
        %v3487 = vld [vmem:[%s579 + $0x1c] sm:$0xf]
        %v3488 = vld [vmem:[%s579 + $0x20] sm:$0xf]
        %v3489 = vld [vmem:[%s579 + $0x24] sm:$0xf]
        %v3490 = vld [vmem:[%s579 + $0x28] sm:$0xf]
        %v3491 = vld [vmem:[%s579 + $0x2c] sm:$0xf]
        %v3492 = vld [vmem:[%s579 + $0x30] sm:$0xf]
        %v3493 = vld [vmem:[%s579 + $0x34] sm:$0xf]
        %v3494 = vld [vmem:[%s579 + $0x38] sm:$0xf]
        %v3495 = vld [vmem:[%s579 + $0x3c] sm:$0xf]
        %v3496 = vld [vmem:[%s579 + $0x40] sm:$0xf]
        %v3497 = vld [vmem:[%s579 + $0x44] sm:$0xf]
        %v3498 = vld [vmem:[%s579 + $0x48] sm:$0xf]
        %v3499 = vld [vmem:[%s579 + $0x4c] sm:$0xf]
        %v3500 = vld [vmem:[%s579 + $0x50] sm:$0xf]
        %v3501 = vld [vmem:[%s579 + $0x54] sm:$0xf]
        %v3502 = vld [vmem:[%s579 + $0x58] sm:$0xf]
        %v3503 = vld [vmem:[%s579 + $0x5c] sm:$0xf]
        %v3504 = vld [vmem:[%s579 + $0x60] sm:$0xf]
        %v3505 = vld [vmem:[%s579 + $0x64] sm:$0xf]
        %v3506 = vld [vmem:[%s579 + $0x68] sm:$0xf]
        %v3507 = vld [vmem:[%s579 + $0x6c] sm:$0xf]
        %v3508 = vld [vmem:[%s579 + $0x70] sm:$0xf]
        %v3509 = vld [vmem:[%s579 + $0x74] sm:$0xf]
        %v3510 = vld [vmem:[%s579 + $0x78] sm:$0xf]
        %v3511 = vld [vmem:[%s579 + $0x7c] sm:$0xf]
        %v3512 = vld [vmem:[#allocation10] sm:$0xff]
        %v3513 = vld [vmem:[#allocation10 + $0x8] sm:$0x11]
        %v3546 = vunpack.c.l.b16 %v3480
        %v3547 = vunpack.c.l.b16 %v3481
        %v3548 = vunpack.c.l.b16 %v3482
        %v3549 = vunpack.c.l.b16 %v3483
        %v3550 = vunpack.c.l.b16 %v3484
        %v3551 = vunpack.c.l.b16 %v3485
        %v3552 = vunpack.c.l.b16 %v3486
        %v3553 = vunpack.c.l.b16 %v3487
        %v3554 = vunpack.c.l.b16 %v3488
        %v3555 = vunpack.c.l.b16 %v3489
        %v3556 = vunpack.c.l.b16 %v3490
        %v3557 = vunpack.c.l.b16 %v3491
        %v3558 = vunpack.c.l.b16 %v3492
        %v3559 = vunpack.c.l.b16 %v3493
        %v3560 = vunpack.c.l.b16 %v3494
        %v3561 = vunpack.c.l.b16 %v3495
        %v3562 = vunpack.c.l.b16 %v3496
        %v3563 = vunpack.c.l.b16 %v3497
        %v3564 = vunpack.c.l.b16 %v3498
        %v3565 = vunpack.c.l.b16 %v3499
        %v3566 = vunpack.c.l.b16 %v3500
        %v3567 = vunpack.c.l.b16 %v3501
        %v3568 = vunpack.c.l.b16 %v3502
        %v3569 = vunpack.c.l.b16 %v3503
        %v3570 = vunpack.c.l.b16 %v3504
        %v3571 = vunpack.c.l.b16 %v3505
        %v3572 = vunpack.c.l.b16 %v3506
        %v3573 = vunpack.c.l.b16 %v3507
        %v3574 = vunpack.c.l.b16 %v3508
        %v3575 = vunpack.c.l.b16 %v3509
        %v3576 = vunpack.c.l.b16 %v3510
        %v3577 = vunpack.c.l.b16 %v3511
        %v3578 = vpack.c.b16 %v3547, %v3546
        %v3579 = vpack.c.b16 %v3549, %v3548
        %v3580 = vpack.c.b16 %v3551, %v3550
        %v3581 = vpack.c.b16 %v3553, %v3552
        %v3582 = vpack.c.b16 %v3555, %v3554
        %v3583 = vpack.c.b16 %v3557, %v3556
        %v3584 = vpack.c.b16 %v3559, %v3558
        %v3585 = vpack.c.b16 %v3561, %v3560
        %v3586 = vpack.c.b16 %v3563, %v3562
        %v3587 = vpack.c.b16 %v3565, %v3564
        %v3588 = vpack.c.b16 %v3567, %v3566
        %v3589 = vpack.c.b16 %v3569, %v3568
        %v3590 = vpack.c.b16 %v3571, %v3570
        %v3591 = vpack.c.b16 %v3573, %v3572
        %v3592 = vpack.c.b16 %v3575, %v3574
        %v3593 = vpack.c.b16 %v3577, %v3576
        %v3596 = vunpack.c.l.b16 %v3512
        %v3597 = vunpack.c.h.b16 %v3512
        %v3598 = vunpack.c.l.b16 %v3513
        %v3599 = vunpack.c.h.b16 %v3513
        %v3600 = vpack.c.b16 %v3598, %v3596
        %v3601 = vpack.c.b16 %v3599, %v3597
        %vm3602 = vcmask 80896
        %v3604 = vsel %vm3602, %v3578, 0
        %v3607 = vsel %vm3602, %v3579, 0
        %v3610 = vsel %vm3602, %v3580, 0
        %v3613 = vsel %vm3602, %v3581, 0
        %v3616 = vsel %vm3602, %v3582, 0
        %v3619 = vsel %vm3602, %v3583, 0
        %v3622 = vsel %vm3602, %v3584, 0
        %v3625 = vsel %vm3602, %v3585, 0
        %v3628 = vsel %vm3602, %v3586, 0
        %v3631 = vsel %vm3602, %v3587, 0
        %v3634 = vsel %vm3602, %v3588, 0
        %v3637 = vsel %vm3602, %v3589, 0
        %v3640 = vsel %vm3602, %v3590, 0
        %v3643 = vsel %vm3602, %v3591, 0
        %v3646 = vsel %vm3602, %v3592, 0
        %v3649 = vsel %vm3602, %v3593, 0
        %vm3651 = vcmask 1044480
        %v3653 = vsel %vm3651, %v3600, 0
        %v3656 = vsel %vm3651, %v3601, 0
        %3658 = vmatprep.subr.bf16.mxu0 %v3656
        %3659 = vmatpush1.bf16.msra.mxu0 %v3653
        %3660 = vmatprep.subr.bf16.mxu0 0
        %3661 = vmatpush1.bf16.msra.mxu0 0
        %3662 = vmatprep.subr.bf16.mxu0 0
        %3663 = vmatpush1.bf16.msra.mxu0 0
        %3664 = vmatprep.subr.bf16.mxu0 0
        %3665 = vmatpush1.bf16.msra.mxu0 0
        %3666 = vmatprep.subr.bf16.mxu0 0
        %3667 = vmatpush1.bf16.msra.mxu0 0
        %3668 = vmatprep.subr.bf16.mxu0 0
        %3669 = vmatpush1.bf16.msra.mxu0 0
        %3670 = vmatprep.subr.bf16.mxu0 0
        %3671 = vmatpush1.bf16.msra.mxu0 0
        %3672 = vmatprep.subr.bf16.mxu0 0
        %3673 = vmatpush1.bf16.msra.mxu0 0
        %3674 = vmatprep.subr.bf16.mxu0 0
        %3675 = vmatpush1.bf16.msra.mxu0 0
        %3676 = vmatprep.subr.bf16.mxu0 0
        %3677 = vmatpush1.bf16.msra.mxu0 0
        %3678 = vmatprep.subr.bf16.mxu0 0
        %3679 = vmatpush1.bf16.msra.mxu0 0
        %3680 = vmatprep.subr.bf16.mxu0 0
        %3681 = vmatpush1.bf16.msra.mxu0 0
        %3682 = vmatprep.subr.bf16.mxu0 0
        %3683 = vmatpush1.bf16.msra.mxu0 0
        %3684 = vmatprep.subr.bf16.mxu0 0
        %3685 = vmatpush1.bf16.msra.mxu0 0
        %3686 = vmatprep.subr.bf16.mxu0 0
        %3687 = vmatpush1.bf16.msra.mxu0 0
        %3688 = vmatprep.subr.bf16.mxu0 0
        %3689 = vmatpush1.bf16.msra.mxu0 0
        %3690 = vmatprep.mubr.bf16.mxu0 0
        %3691 = vmatmul.mubr.bf16.gmra.mrb[0].mxu0 %v3604
        %v3692 = vpop.f32.mrb[0].mxu0
        %v3693 = vadd.f32 0.0, %v3692
        %v3694 = vpop.f32.mrb[0].mxu0
        %v3695 = vadd.f32 0.0, %v3694
        %v3696 = vpop.f32.mrb[0].mxu0
        %v3697 = vadd.f32 0.0, %v3696
        %v3698 = vpop.f32.mrb[0].mxu0
        %v3699 = vadd.f32 0.0, %v3698
        %3700 = vmatprep.mubr.bf16.mxu0 0
        %3701 = vmatmul.mubr.bf16.gmra.mrb[0].mxu0 %v3607
        %v3702 = vpop.f32.mrb[0].mxu0
        %v3703 = vadd.f32 0.0, %v3702
        %v3704 = vpop.f32.mrb[0].mxu0
        %v3705 = vadd.f32 0.0, %v3704
        %v3706 = vpop.f32.mrb[0].mxu0
        %v3707 = vadd.f32 0.0, %v3706
        %v3708 = vpop.f32.mrb[0].mxu0
        %v3709 = vadd.f32 0.0, %v3708
        %3710 = vmatprep.mubr.bf16.mxu0 0
        %3711 = vmatmul.mubr.bf16.gmra.mrb[0].mxu0 %v3610
        %v3712 = vpop.f32.mrb[0].mxu0
        %v3713 = vadd.f32 0.0, %v3712
        %v3714 = vpop.f32.mrb[0].mxu0
        %v3715 = vadd.f32 0.0, %v3714
        %v3716 = vpop.f32.mrb[0].mxu0
        %v3717 = vadd.f32 0.0, %v3716
        %v3718 = vpop.f32.mrb[0].mxu0
        %v3719 = vadd.f32 0.0, %v3718
        %3720 = vmatprep.mubr.bf16.mxu0 0
        %3721 = vmatmul.mubr.bf16.gmra.mrb[0].mxu0 %v3613
        %v3722 = vpop.f32.mrb[0].mxu0
        %v3723 = vadd.f32 0.0, %v3722
        %v3724 = vpop.f32.mrb[0].mxu0
        %v3725 = vadd.f32 0.0, %v3724
        %v3726 = vpop.f32.mrb[0].mxu0
        %v3727 = vadd.f32 0.0, %v3726
        %v3728 = vpop.f32.mrb[0].mxu0
        %v3729 = vadd.f32 0.0, %v3728
        %3730 = vmatprep.mubr.bf16.mxu0 0
        %3731 = vmatmul.mubr.bf16.gmra.mrb[0].mxu0 %v3616
        %v3732 = vpop.f32.mrb[0].mxu0
        %v3733 = vadd.f32 0.0, %v3732
        %v3734 = vpop.f32.mrb[0].mxu0
        %v3735 = vadd.f32 0.0, %v3734
        %v3736 = vpop.f32.mrb[0].mxu0
        %v3737 = vadd.f32 0.0, %v3736
        %v3738 = vpop.f32.mrb[0].mxu0
        %v3739 = vadd.f32 0.0, %v3738
        %3740 = vmatprep.mubr.bf16.mxu0 0
        %3741 = vmatmul.mubr.bf16.gmra.mrb[0].mxu0 %v3619
        %v3742 = vpop.f32.mrb[0].mxu0
        %v3743 = vadd.f32 0.0, %v3742
        %v3744 = vpop.f32.mrb[0].mxu0
        %v3745 = vadd.f32 0.0, %v3744
        %v3746 = vpop.f32.mrb[0].mxu0
        %v3747 = vadd.f32 0.0, %v3746
        %v3748 = vpop.f32.mrb[0].mxu0
        %v3749 = vadd.f32 0.0, %v3748
        %3750 = vmatprep.mubr.bf16.mxu0 0
        %3751 = vmatmul.mubr.bf16.gmra.mrb[0].mxu0 %v3622
        %v3752 = vpop.f32.mrb[0].mxu0
        %v3753 = vadd.f32 0.0, %v3752
        %v3754 = vpop.f32.mrb[0].mxu0
        %v3755 = vadd.f32 0.0, %v3754
        %v3756 = vpop.f32.mrb[0].mxu0
        %v3757 = vadd.f32 0.0, %v3756
        %v3758 = vpop.f32.mrb[0].mxu0
        %v3759 = vadd.f32 0.0, %v3758
        %3760 = vmatprep.mubr.bf16.mxu0 0
        %3761 = vmatmul.mubr.bf16.gmra.mrb[0].mxu0 %v3625
        %v3762 = vpop.f32.mrb[0].mxu0
        %v3763 = vadd.f32 0.0, %v3762
        %v3764 = vpop.f32.mrb[0].mxu0
        %v3765 = vadd.f32 0.0, %v3764
        %v3766 = vpop.f32.mrb[0].mxu0
        %v3767 = vadd.f32 0.0, %v3766
        %v3768 = vpop.f32.mrb[0].mxu0
        %v3769 = vadd.f32 0.0, %v3768
        %3770 = vmatprep.mubr.bf16.mxu0 0
        %3771 = vmatmul.mubr.bf16.gmra.mrb[0].mxu0 %v3628
        %v3772 = vpop.f32.mrb[0].mxu0
        %v3773 = vadd.f32 0.0, %v3772
        %v3774 = vpop.f32.mrb[0].mxu0
        %v3775 = vadd.f32 0.0, %v3774
        %v3776 = vpop.f32.mrb[0].mxu0
        %v3777 = vadd.f32 0.0, %v3776
        %v3778 = vpop.f32.mrb[0].mxu0
        %v3779 = vadd.f32 0.0, %v3778
        %3780 = vmatprep.mubr.bf16.mxu0 0
        %3781 = vmatmul.mubr.bf16.gmra.mrb[0].mxu0 %v3631
        %v3782 = vpop.f32.mrb[0].mxu0
        %v3783 = vadd.f32 0.0, %v3782
        %v3784 = vpop.f32.mrb[0].mxu0
        %v3785 = vadd.f32 0.0, %v3784
        %v3786 = vpop.f32.mrb[0].mxu0
        %v3787 = vadd.f32 0.0, %v3786
        %v3788 = vpop.f32.mrb[0].mxu0
        %v3789 = vadd.f32 0.0, %v3788
        %3790 = vmatprep.mubr.bf16.mxu0 0
        %3791 = vmatmul.mubr.bf16.gmra.mrb[0].mxu0 %v3634
        %v3792 = vpop.f32.mrb[0].mxu0
        %v3793 = vadd.f32 0.0, %v3792
        %v3794 = vpop.f32.mrb[0].mxu0
        %v3795 = vadd.f32 0.0, %v3794
        %v3796 = vpop.f32.mrb[0].mxu0
        %v3797 = vadd.f32 0.0, %v3796
        %v3798 = vpop.f32.mrb[0].mxu0
        %v3799 = vadd.f32 0.0, %v3798
        %3800 = vmatprep.mubr.bf16.mxu0 0
        %3801 = vmatmul.mubr.bf16.gmra.mrb[0].mxu0 %v3637
        %v3802 = vpop.f32.mrb[0].mxu0
        %v3803 = vadd.f32 0.0, %v3802
        %v3804 = vpop.f32.mrb[0].mxu0
        %v3805 = vadd.f32 0.0, %v3804
        %v3806 = vpop.f32.mrb[0].mxu0
        %v3807 = vadd.f32 0.0, %v3806
        %v3808 = vpop.f32.mrb[0].mxu0
        %v3809 = vadd.f32 0.0, %v3808
        %3810 = vmatprep.mubr.bf16.mxu0 0
        %3811 = vmatmul.mubr.bf16.gmra.mrb[0].mxu0 %v3640
        %v3812 = vpop.f32.mrb[0].mxu0
        %v3813 = vadd.f32 0.0, %v3812
        %v3814 = vpop.f32.mrb[0].mxu0
        %v3815 = vadd.f32 0.0, %v3814
        %v3816 = vpop.f32.mrb[0].mxu0
        %v3817 = vadd.f32 0.0, %v3816
        %v3818 = vpop.f32.mrb[0].mxu0
        %v3819 = vadd.f32 0.0, %v3818
        %3820 = vmatprep.mubr.bf16.mxu0 0
        %3821 = vmatmul.mubr.bf16.gmra.mrb[0].mxu0 %v3643
        %v3822 = vpop.f32.mrb[0].mxu0
        %v3823 = vadd.f32 0.0, %v3822
        %v3824 = vpop.f32.mrb[0].mxu0
        %v3825 = vadd.f32 0.0, %v3824
        %v3826 = vpop.f32.mrb[0].mxu0
        %v3827 = vadd.f32 0.0, %v3826
        %v3828 = vpop.f32.mrb[0].mxu0
        %v3829 = vadd.f32 0.0, %v3828
        %3830 = vmatprep.mubr.bf16.mxu0 0
        %3831 = vmatmul.mubr.bf16.gmra.mrb[0].mxu0 %v3646
        %v3832 = vpop.f32.mrb[0].mxu0
        %v3833 = vadd.f32 0.0, %v3832
        %v3834 = vpop.f32.mrb[0].mxu0
        %v3835 = vadd.f32 0.0, %v3834
        %v3836 = vpop.f32.mrb[0].mxu0
        %v3837 = vadd.f32 0.0, %v3836
        %v3838 = vpop.f32.mrb[0].mxu0
        %v3839 = vadd.f32 0.0, %v3838
        %3840 = vmatprep.mubr.bf16.mxu0 0
        %3841 = vmatmul.mubr.bf16.gmra.mrb[0].mxu0 %v3649
        %v3842 = vpop.f32.mrb[0].mxu0
        %v3843 = vadd.f32 0.0, %v3842
        %v3844 = vpop.f32.mrb[0].mxu0
        %v3845 = vadd.f32 0.0, %v3844
        %v3846 = vpop.f32.mrb[0].mxu0
        %v3847 = vadd.f32 0.0, %v3846
        %v3848 = vpop.f32.mrb[0].mxu0
        %v3849 = vadd.f32 0.0, %v3848
        %3850 = vdwg.mxu0
        %v3853 = vunpack.c.l.b16 %v3478
        %v3854 = vunpack.c.h.b16 %v3478
        %v3855 = vunpack.c.l.b16 %v3479
        %v3856 = vunpack.c.h.b16 %v3479
        %v3857 = vpack.c.b16 %v3855, %v3853
        %v3858 = vpack.c.b16 %v3856, %v3854
        %vm3861 = vcmask 130048
        %v3863 = vsel %vm3861, %v3462, 0
        %v3866 = vsel %vm3861, %v3463, 0
        %v3869 = vsel %vm3861, %v3464, 0
        %v3872 = vsel %vm3861, %v3465, 0
        %v3875 = vsel %vm3861, %v3466, 0
        %v3878 = vsel %vm3861, %v3467, 0
        %v3881 = vsel %vm3861, %v3468, 0
        %v3884 = vsel %vm3861, %v3469, 0
        %v3887 = vsel %vm3861, %v3470, 0
        %v3890 = vsel %vm3861, %v3471, 0
        %v3893 = vsel %vm3861, %v3472, 0
        %v3896 = vsel %vm3861, %v3473, 0
        %v3899 = vsel %vm3861, %v3474, 0
        %v3902 = vsel %vm3861, %v3475, 0
        %v3905 = vsel %vm3861, %v3476, 0
        %v3908 = vsel %vm3861, %v3477, 0
        %3910 = vmatprep.subr.bf16.mxu0 %v3858
        %3911 = vmatpush1.bf16.msra.mxu0 %v3857
        %3912 = vmatprep.subr.bf16.mxu0 0
        %3913 = vmatpush1.bf16.msra.mxu0 0
        %3914 = vmatprep.subr.bf16.mxu0 0
        %3915 = vmatpush1.bf16.msra.mxu0 0
        %3916 = vmatprep.subr.bf16.mxu0 0
        %3917 = vmatpush1.bf16.msra.mxu0 0
        %3918 = vmatprep.subr.bf16.mxu0 0
        %3919 = vmatpush1.bf16.msra.mxu0 0
        %3920 = vmatprep.subr.bf16.mxu0 0
        %3921 = vmatpush1.bf16.msra.mxu0 0
        %3922 = vmatprep.subr.bf16.mxu0 0
        %3923 = vmatpush1.bf16.msra.mxu0 0
        %3924 = vmatprep.subr.bf16.mxu0 0
        %3925 = vmatpush1.bf16.msra.mxu0 0
        %3926 = vmatprep.subr.bf16.mxu0 0
        %3927 = vmatpush1.bf16.msra.mxu0 0
        %3928 = vmatprep.subr.bf16.mxu0 0
        %3929 = vmatpush1.bf16.msra.mxu0 0
        %3930 = vmatprep.subr.bf16.mxu0 0
        %3931 = vmatpush1.bf16.msra.mxu0 0
        %3932 = vmatprep.subr.bf16.mxu0 0
        %3933 = vmatpush1.bf16.msra.mxu0 0
        %3934 = vmatprep.subr.bf16.mxu0 0
        %3935 = vmatpush1.bf16.msra.mxu0 0
        %3936 = vmatprep.subr.bf16.mxu0 0
        %3937 = vmatpush1.bf16.msra.mxu0 0
        %3938 = vmatprep.subr.bf16.mxu0 0
        %3939 = vmatpush1.bf16.msra.mxu0 0
        %3940 = vmatprep.subr.bf16.mxu0 0
        %3941 = vmatpush1.bf16.msra.mxu0 0
        %3942 = vmatprep.mubr.bf16.mxu0 0
        %3943 = vmatmul.mubr.bf16.gmra.mrb[0].mxu0 %v3863
        %v3944 = vpop.f32.mrb[0].mxu0
        %v3945 = vadd.f32 %v3693, %v3944
        %v3946 = vpop.f32.mrb[0].mxu0
        %v3947 = vadd.f32 %v3695, %v3946
        %v3948 = vpop.f32.mrb[0].mxu0
        %v3949 = vadd.f32 %v3697, %v3948
        %v3950 = vpop.f32.mrb[0].mxu0
        %v3951 = vadd.f32 %v3699, %v3950
        %3952 = vmatprep.mubr.bf16.mxu0 0
        %3953 = vmatmul.mubr.bf16.gmra.mrb[0].mxu0 %v3866
        %v3954 = vpop.f32.mrb[0].mxu0
        %v3955 = vadd.f32 %v3703, %v3954
        %v3956 = vpop.f32.mrb[0].mxu0
        %v3957 = vadd.f32 %v3705, %v3956
        %v3958 = vpop.f32.mrb[0].mxu0
        %v3959 = vadd.f32 %v3707, %v3958
        %v3960 = vpop.f32.mrb[0].mxu0
        %v3961 = vadd.f32 %v3709, %v3960
        %3962 = vmatprep.mubr.bf16.mxu0 0
        %3963 = vmatmul.mubr.bf16.gmra.mrb[0].mxu0 %v3869
        %v3964 = vpop.f32.mrb[0].mxu0
        %v3965 = vadd.f32 %v3713, %v3964
        %v3966 = vpop.f32.mrb[0].mxu0
        %v3967 = vadd.f32 %v3715, %v3966
        %v3968 = vpop.f32.mrb[0].mxu0
        %v3969 = vadd.f32 %v3717, %v3968
        %v3970 = vpop.f32.mrb[0].mxu0
        %v3971 = vadd.f32 %v3719, %v3970
        %3972 = vmatprep.mubr.bf16.mxu0 0
        %3973 = vmatmul.mubr.bf16.gmra.mrb[0].mxu0 %v3872
        %v3974 = vpop.f32.mrb[0].mxu0
        %v3975 = vadd.f32 %v3723, %v3974
        %v3976 = vpop.f32.mrb[0].mxu0
        %v3977 = vadd.f32 %v3725, %v3976
        %v3978 = vpop.f32.mrb[0].mxu0
        %v3979 = vadd.f32 %v3727, %v3978
        %v3980 = vpop.f32.mrb[0].mxu0
        %v3981 = vadd.f32 %v3729, %v3980
        %3982 = vmatprep.mubr.bf16.mxu0 0
        %3983 = vmatmul.mubr.bf16.gmra.mrb[0].mxu0 %v3875
        %v3984 = vpop.f32.mrb[0].mxu0
        %v3985 = vadd.f32 %v3733, %v3984
        %v3986 = vpop.f32.mrb[0].mxu0
        %v3987 = vadd.f32 %v3735, %v3986
        %v3988 = vpop.f32.mrb[0].mxu0
        %v3989 = vadd.f32 %v3737, %v3988
        %v3990 = vpop.f32.mrb[0].mxu0
        %v3991 = vadd.f32 %v3739, %v3990
        %3992 = vmatprep.mubr.bf16.mxu0 0
        %3993 = vmatmul.mubr.bf16.gmra.mrb[0].mxu0 %v3878
        %v3994 = vpop.f32.mrb[0].mxu0
        %v3995 = vadd.f32 %v3743, %v3994
        %v3996 = vpop.f32.mrb[0].mxu0
        %v3997 = vadd.f32 %v3745, %v3996
        %v3998 = vpop.f32.mrb[0].mxu0
        %v3999 = vadd.f32 %v3747, %v3998
        %v4000 = vpop.f32.mrb[0].mxu0
        %v4001 = vadd.f32 %v3749, %v4000
        %4002 = vmatprep.mubr.bf16.mxu0 0
        %4003 = vmatmul.mubr.bf16.gmra.mrb[0].mxu0 %v3881
        %v4004 = vpop.f32.mrb[0].mxu0
        %v4005 = vadd.f32 %v3753, %v4004
        %v4006 = vpop.f32.mrb[0].mxu0
        %v4007 = vadd.f32 %v3755, %v4006
        %v4008 = vpop.f32.mrb[0].mxu0
        %v4009 = vadd.f32 %v3757, %v4008
        %v4010 = vpop.f32.mrb[0].mxu0
        %v4011 = vadd.f32 %v3759, %v4010
        %4012 = vmatprep.mubr.bf16.mxu0 0
        %4013 = vmatmul.mubr.bf16.gmra.mrb[0].mxu0 %v3884
        %v4014 = vpop.f32.mrb[0].mxu0
        %v4015 = vadd.f32 %v3763, %v4014
        %v4016 = vpop.f32.mrb[0].mxu0
        %v4017 = vadd.f32 %v3765, %v4016
        %v4018 = vpop.f32.mrb[0].mxu0
        %v4019 = vadd.f32 %v3767, %v4018
        %v4020 = vpop.f32.mrb[0].mxu0
        %v4021 = vadd.f32 %v3769, %v4020
        %4022 = vmatprep.mubr.bf16.mxu0 0
        %4023 = vmatmul.mubr.bf16.gmra.mrb[0].mxu0 %v3887
        %v4024 = vpop.f32.mrb[0].mxu0
        %v4025 = vadd.f32 %v3773, %v4024
        %v4026 = vpop.f32.mrb[0].mxu0
        %v4027 = vadd.f32 %v3775, %v4026
        %v4028 = vpop.f32.mrb[0].mxu0
        %v4029 = vadd.f32 %v3777, %v4028
        %v4030 = vpop.f32.mrb[0].mxu0
        %v4031 = vadd.f32 %v3779, %v4030
        %4032 = vmatprep.mubr.bf16.mxu0 0
        %4033 = vmatmul.mubr.bf16.gmra.mrb[0].mxu0 %v3890
        %v4034 = vpop.f32.mrb[0].mxu0
        %v4035 = vadd.f32 %v3783, %v4034
        %v4036 = vpop.f32.mrb[0].mxu0
        %v4037 = vadd.f32 %v3785, %v4036
        %v4038 = vpop.f32.mrb[0].mxu0
        %v4039 = vadd.f32 %v3787, %v4038
        %v4040 = vpop.f32.mrb[0].mxu0
        %v4041 = vadd.f32 %v3789, %v4040
        %4042 = vmatprep.mubr.bf16.mxu0 0
        %4043 = vmatmul.mubr.bf16.gmra.mrb[0].mxu0 %v3893
        %v4044 = vpop.f32.mrb[0].mxu0
        %v4045 = vadd.f32 %v3793, %v4044
        %v4046 = vpop.f32.mrb[0].mxu0
        %v4047 = vadd.f32 %v3795, %v4046
        %v4048 = vpop.f32.mrb[0].mxu0
        %v4049 = vadd.f32 %v3797, %v4048
        %v4050 = vpop.f32.mrb[0].mxu0
        %v4051 = vadd.f32 %v3799, %v4050
        %4052 = vmatprep.mubr.bf16.mxu0 0
        %4053 = vmatmul.mubr.bf16.gmra.mrb[0].mxu0 %v3896
        %v4054 = vpop.f32.mrb[0].mxu0
        %v4055 = vadd.f32 %v3803, %v4054
        %v4056 = vpop.f32.mrb[0].mxu0
        %v4057 = vadd.f32 %v3805, %v4056
        %v4058 = vpop.f32.mrb[0].mxu0
        %v4059 = vadd.f32 %v3807, %v4058
        %v4060 = vpop.f32.mrb[0].mxu0
        %v4061 = vadd.f32 %v3809, %v4060
        %4062 = vmatprep.mubr.bf16.mxu0 0
        %4063 = vmatmul.mubr.bf16.gmra.mrb[0].mxu0 %v3899
        %v4064 = vpop.f32.mrb[0].mxu0
        %v4065 = vadd.f32 %v3813, %v4064
        %v4066 = vpop.f32.mrb[0].mxu0
        %v4067 = vadd.f32 %v3815, %v4066
        %v4068 = vpop.f32.mrb[0].mxu0
        %v4069 = vadd.f32 %v3817, %v4068
        %v4070 = vpop.f32.mrb[0].mxu0
        %v4071 = vadd.f32 %v3819, %v4070
        %4072 = vmatprep.mubr.bf16.mxu0 0
        %4073 = vmatmul.mubr.bf16.gmra.mrb[0].mxu0 %v3902
        %v4074 = vpop.f32.mrb[0].mxu0
        %v4075 = vadd.f32 %v3823, %v4074
        %v4076 = vpop.f32.mrb[0].mxu0
        %v4077 = vadd.f32 %v3825, %v4076
        %v4078 = vpop.f32.mrb[0].mxu0
        %v4079 = vadd.f32 %v3827, %v4078
        %v4080 = vpop.f32.mrb[0].mxu0
        %v4081 = vadd.f32 %v3829, %v4080
        %4082 = vmatprep.mubr.bf16.mxu0 0
        %4083 = vmatmul.mubr.bf16.gmra.mrb[0].mxu0 %v3905
        %v4084 = vpop.f32.mrb[0].mxu0
        %v4085 = vadd.f32 %v3833, %v4084
        %v4086 = vpop.f32.mrb[0].mxu0
        %v4087 = vadd.f32 %v3835, %v4086
        %v4088 = vpop.f32.mrb[0].mxu0
        %v4089 = vadd.f32 %v3837, %v4088
        %v4090 = vpop.f32.mrb[0].mxu0
        %v4091 = vadd.f32 %v3839, %v4090
        %4092 = vmatprep.mubr.bf16.mxu0 0
        %4093 = vmatmul.mubr.bf16.gmra.mrb[0].mxu0 %v3908
        %v4094 = vpop.f32.mrb[0].mxu0
        %v4095 = vadd.f32 %v3843, %v4094
        %v4096 = vpop.f32.mrb[0].mxu0
        %v4097 = vadd.f32 %v3845, %v4096
        %v4098 = vpop.f32.mrb[0].mxu0
        %v4099 = vadd.f32 %v3847, %v4098
        %v4100 = vpop.f32.mrb[0].mxu0
        %v4101 = vadd.f32 %v3849, %v4100
        %4102 = vdwg.mxu0
        %v4103 = vld [vmem:[%s9] sm:$0x3]
        %v4105 = vlaneseq
        %v4106 = vshrl.u32 %v4105, 7
        %v4107 = vsub.s32 0, %v4106
        %v4108 = vrot.slane %v4103, %v4107
        %v4109 = vlaneseq
        %v4110 = vshrl.u32 %v4109, 7
        %v4111 = vsub.s32 1, %v4110
        %v4112 = vrot.slane %v4103, %v4111
        %v4115 = vadd.f32 %v3945, %v4108
        %v4116 = vadd.f32 %v3947, %v4112
        %v4117 = vadd.f32 %v3949, %v4108
        %v4118 = vadd.f32 %v3951, %v4112
        %v4119 = vadd.f32 %v3955, %v4108
        %v4120 = vadd.f32 %v3957, %v4112
        %v4121 = vadd.f32 %v3959, %v4108
        %v4122 = vadd.f32 %v3961, %v4112
        %v4123 = vadd.f32 %v3965, %v4108
        %v4124 = vadd.f32 %v3967, %v4112
        %v4125 = vadd.f32 %v3969, %v4108
        %v4126 = vadd.f32 %v3971, %v4112
        %v4127 = vadd.f32 %v3975, %v4108
        %v4128 = vadd.f32 %v3977, %v4112
        %v4129 = vadd.f32 %v3979, %v4108
        %v4130 = vadd.f32 %v3981, %v4112
        %v4131 = vadd.f32 %v3985, %v4108
        %v4132 = vadd.f32 %v3987, %v4112
        %v4133 = vadd.f32 %v3989, %v4108
        %v4134 = vadd.f32 %v3991, %v4112
        %v4135 = vadd.f32 %v3995, %v4108
        %v4136 = vadd.f32 %v3997, %v4112
        %v4137 = vadd.f32 %v3999, %v4108
        %v4138 = vadd.f32 %v4001, %v4112
        %v4139 = vadd.f32 %v4005, %v4108
        %v4140 = vadd.f32 %v4007, %v4112
        %v4141 = vadd.f32 %v4009, %v4108
        %v4142 = vadd.f32 %v4011, %v4112
        %v4143 = vadd.f32 %v4015, %v4108
        %v4144 = vadd.f32 %v4017, %v4112
        %v4145 = vadd.f32 %v4019, %v4108
        %v4146 = vadd.f32 %v4021, %v4112
        %v4147 = vadd.f32 %v4025, %v4108
        %v4148 = vadd.f32 %v4027, %v4112
        %v4149 = vadd.f32 %v4029, %v4108
        %v4150 = vadd.f32 %v4031, %v4112
        %v4151 = vadd.f32 %v4035, %v4108
        %v4152 = vadd.f32 %v4037, %v4112
        %v4153 = vadd.f32 %v4039, %v4108
        %v4154 = vadd.f32 %v4041, %v4112
        %v4155 = vadd.f32 %v4045, %v4108
        %v4156 = vadd.f32 %v4047, %v4112
        %v4157 = vadd.f32 %v4049, %v4108
        %v4158 = vadd.f32 %v4051, %v4112
        %v4159 = vadd.f32 %v4055, %v4108
        %v4160 = vadd.f32 %v4057, %v4112
        %v4161 = vadd.f32 %v4059, %v4108
        %v4162 = vadd.f32 %v4061, %v4112
        %v4163 = vadd.f32 %v4065, %v4108
        %v4164 = vadd.f32 %v4067, %v4112
        %v4165 = vadd.f32 %v4069, %v4108
        %v4166 = vadd.f32 %v4071, %v4112
        %v4167 = vadd.f32 %v4075, %v4108
        %v4168 = vadd.f32 %v4077, %v4112
        %v4169 = vadd.f32 %v4079, %v4108
        %v4170 = vadd.f32 %v4081, %v4112
        %v4171 = vadd.f32 %v4085, %v4108
        %v4172 = vadd.f32 %v4087, %v4112
        %v4173 = vadd.f32 %v4089, %v4108
        %v4174 = vadd.f32 %v4091, %v4112
        %v4175 = vadd.f32 %v4095, %v4108
        %v4176 = vadd.f32 %v4097, %v4112
        %v4177 = vadd.f32 %v4099, %v4108
        %v4178 = vadd.f32 %v4101, %v4112
        %v4179 = vmax.f32 %v4115, 0.0
        %v4180 = vmax.f32 %v4116, 0.0
        %v4181 = vmax.f32 %v4117, 0.0
        %v4182 = vmax.f32 %v4118, 0.0
        %v4183 = vmax.f32 %v4119, 0.0
        %v4184 = vmax.f32 %v4120, 0.0
        %v4185 = vmax.f32 %v4121, 0.0
        %v4186 = vmax.f32 %v4122, 0.0
        %v4187 = vmax.f32 %v4123, 0.0
        %v4188 = vmax.f32 %v4124, 0.0
        %v4189 = vmax.f32 %v4125, 0.0
        %v4190 = vmax.f32 %v4126, 0.0
        %v4191 = vmax.f32 %v4127, 0.0
        %v4192 = vmax.f32 %v4128, 0.0
        %v4193 = vmax.f32 %v4129, 0.0
        %v4194 = vmax.f32 %v4130, 0.0
        %v4195 = vmax.f32 %v4131, 0.0
        %v4196 = vmax.f32 %v4132, 0.0
        %v4197 = vmax.f32 %v4133, 0.0
        %v4198 = vmax.f32 %v4134, 0.0
        %v4199 = vmax.f32 %v4135, 0.0
        %v4200 = vmax.f32 %v4136, 0.0
        %v4201 = vmax.f32 %v4137, 0.0
        %v4202 = vmax.f32 %v4138, 0.0
        %v4203 = vmax.f32 %v4139, 0.0
        %v4204 = vmax.f32 %v4140, 0.0
        %v4205 = vmax.f32 %v4141, 0.0
        %v4206 = vmax.f32 %v4142, 0.0
        %v4207 = vmax.f32 %v4143, 0.0
        %v4208 = vmax.f32 %v4144, 0.0
        %v4209 = vmax.f32 %v4145, 0.0
        %v4210 = vmax.f32 %v4146, 0.0
        %v4211 = vmax.f32 %v4147, 0.0
        %v4212 = vmax.f32 %v4148, 0.0
        %v4213 = vmax.f32 %v4149, 0.0
        %v4214 = vmax.f32 %v4150, 0.0
        %v4215 = vmax.f32 %v4151, 0.0
        %v4216 = vmax.f32 %v4152, 0.0
        %v4217 = vmax.f32 %v4153, 0.0
        %v4218 = vmax.f32 %v4154, 0.0
        %v4219 = vmax.f32 %v4155, 0.0
        %v4220 = vmax.f32 %v4156, 0.0
        %v4221 = vmax.f32 %v4157, 0.0
        %v4222 = vmax.f32 %v4158, 0.0
        %v4223 = vmax.f32 %v4159, 0.0
        %v4224 = vmax.f32 %v4160, 0.0
        %v4225 = vmax.f32 %v4161, 0.0
        %v4226 = vmax.f32 %v4162, 0.0
        %v4227 = vmax.f32 %v4163, 0.0
        %v4228 = vmax.f32 %v4164, 0.0
        %v4229 = vmax.f32 %v4165, 0.0
        %v4230 = vmax.f32 %v4166, 0.0
        %v4231 = vmax.f32 %v4167, 0.0
        %v4232 = vmax.f32 %v4168, 0.0
        %v4233 = vmax.f32 %v4169, 0.0
        %v4234 = vmax.f32 %v4170, 0.0
        %v4235 = vmax.f32 %v4171, 0.0
        %v4236 = vmax.f32 %v4172, 0.0
        %v4237 = vmax.f32 %v4173, 0.0
        %v4238 = vmax.f32 %v4174, 0.0
        %v4239 = vmax.f32 %v4175, 0.0
        %v4240 = vmax.f32 %v4176, 0.0
        %v4241 = vmax.f32 %v4177, 0.0
        %v4242 = vmax.f32 %v4178, 0.0
        %v4243 = vpack.c.bf16 %v4181, %v4179
        %v4244 = vpack.c.bf16 %v4182, %v4180
        %v4245 = vpack.c.bf16 %v4185, %v4183
        %v4246 = vpack.c.bf16 %v4186, %v4184
        %v4247 = vpack.c.bf16 %v4189, %v4187
        %v4248 = vpack.c.bf16 %v4190, %v4188
        %v4249 = vpack.c.bf16 %v4193, %v4191
        %v4250 = vpack.c.bf16 %v4194, %v4192
        %v4251 = vpack.c.bf16 %v4197, %v4195
        %v4252 = vpack.c.bf16 %v4198, %v4196
        %v4253 = vpack.c.bf16 %v4201, %v4199
        %v4254 = vpack.c.bf16 %v4202, %v4200
        %v4255 = vpack.c.bf16 %v4205, %v4203
        %v4256 = vpack.c.bf16 %v4206, %v4204
        %v4257 = vpack.c.bf16 %v4209, %v4207
        %v4258 = vpack.c.bf16 %v4210, %v4208
        %v4259 = vpack.c.bf16 %v4213, %v4211
        %v4260 = vpack.c.bf16 %v4214, %v4212
        %v4261 = vpack.c.bf16 %v4217, %v4215
        %v4262 = vpack.c.bf16 %v4218, %v4216
        %v4263 = vpack.c.bf16 %v4221, %v4219
        %v4264 = vpack.c.bf16 %v4222, %v4220
        %v4265 = vpack.c.bf16 %v4225, %v4223
        %v4266 = vpack.c.bf16 %v4226, %v4224
        %v4267 = vpack.c.bf16 %v4229, %v4227
        %v4268 = vpack.c.bf16 %v4230, %v4228
        %v4269 = vpack.c.bf16 %v4233, %v4231
        %v4270 = vpack.c.bf16 %v4234, %v4232
        %v4271 = vpack.c.bf16 %v4237, %v4235
        %v4272 = vpack.c.bf16 %v4238, %v4236
        %v4273 = vpack.c.bf16 %v4241, %v4239
        %v4274 = vpack.c.bf16 %v4242, %v4240
        %v4275 = vld [vmem:[%s10] sm:$0xff]
        %v4276 = vld [vmem:[%s10 + $0x8] sm:$0xff]
        %v4277 = vld [vmem:[%s10 + $0x10] sm:$0xff]
        %v4278 = vld [vmem:[%s10 + $0x18] sm:$0xf]
        %v4279 = vld [vmem:[%s10 + $0x1c] sm:$0xff]
        %v4280 = vld [vmem:[%s10 + $0x24] sm:$0xff]
        %v4281 = vld [vmem:[%s10 + $0x2c] sm:$0xff]
        %v4282 = vld [vmem:[%s10 + $0x34] sm:$0xf]
        %v4283 = vld [vmem:[%s10 + $0x38] sm:$0xff]
        %v4284 = vld [vmem:[%s10 + $0x40] sm:$0xff]
        %v4285 = vld [vmem:[%s10 + $0x48] sm:$0xff]
        %v4286 = vld [vmem:[%s10 + $0x50] sm:$0xf]
        %v4287 = vld [vmem:[%s10 + $0x54] sm:$0xff]
        %v4288 = vld [vmem:[%s10 + $0x5c] sm:$0xff]
        %v4289 = vld [vmem:[%s10 + $0x64] sm:$0xff]
        %v4290 = vld [vmem:[%s10 + $0x6c] sm:$0xf]
        %v4291 = vld [vmem:[%s10 + $0x70] sm:$0xff]
        %v4292 = vld [vmem:[%s10 + $0x78] sm:$0xff]
        %v4293 = vld [vmem:[%s10 + $0x80] sm:$0xff]
        %v4294 = vld [vmem:[%s10 + $0x88] sm:$0xf]
        %v4295 = vld [vmem:[%s10 + $0x8c] sm:$0xff]
        %v4296 = vld [vmem:[%s10 + $0x94] sm:$0xff]
        %v4297 = vld [vmem:[%s10 + $0x9c] sm:$0xff]
        %v4298 = vld [vmem:[%s10 + $0xa4] sm:$0xf]
        %v4299 = vld [vmem:[%s10 + $0xa8] sm:$0xff]
        %v4300 = vld [vmem:[%s10 + $0xb0] sm:$0xff]
        %v4301 = vld [vmem:[%s10 + $0xb8] sm:$0xff]
        %v4302 = vld [vmem:[%s10 + $0xc0] sm:$0xf]
        %v4303 = vld [vmem:[%s10 + $0xc4] sm:$0xff]
        %v4304 = vld [vmem:[%s10 + $0xcc] sm:$0xff]
        %v4305 = vld [vmem:[%s10 + $0xd4] sm:$0xff]
        %v4306 = vld [vmem:[%s10 + $0xdc] sm:$0xf]
        %v4307 = vld [vmem:[%s10 + $0xe0] sm:$0xff]
        %v4308 = vld [vmem:[%s10 + $0xe8] sm:$0xff]
        %v4309 = vld [vmem:[%s10 + $0xf0] sm:$0xff]
        %v4310 = vld [vmem:[%s10 + $0xf8] sm:$0xf]
        %v4311 = vld [vmem:[%s10 + $0xfc] sm:$0xff]
        %v4312 = vld [vmem:[%s10 + $0x104] sm:$0xff]
        %v4313 = vld [vmem:[%s10 + $0x10c] sm:$0xff]
        %v4314 = vld [vmem:[%s10 + $0x114] sm:$0xf]
        %v4315 = vld [vmem:[%s10 + $0x118] sm:$0xff]
        %v4316 = vld [vmem:[%s10 + $0x120] sm:$0xff]
        %v4317 = vld [vmem:[%s10 + $0x128] sm:$0xff]
        %v4318 = vld [vmem:[%s10 + $0x130] sm:$0xf]
        %v4319 = vld [vmem:[%s10 + $0x134] sm:$0xff]
        %v4320 = vld [vmem:[%s10 + $0x13c] sm:$0xff]
        %v4321 = vld [vmem:[%s10 + $0x144] sm:$0xff]
        %v4322 = vld [vmem:[%s10 + $0x14c] sm:$0xf]
        %v4323 = vld [vmem:[%s10 + $0x150] sm:$0xff]
        %v4324 = vld [vmem:[%s10 + $0x158] sm:$0xff]
        %v4325 = vld [vmem:[%s10 + $0x160] sm:$0xff]
        %v4326 = vld [vmem:[%s10 + $0x168] sm:$0xf]
        %v4327 = vld [vmem:[%s10 + $0x16c] sm:$0xff]
        %v4328 = vld [vmem:[%s10 + $0x174] sm:$0xff]
        %v4329 = vld [vmem:[%s10 + $0x17c] sm:$0xff]
        %v4330 = vld [vmem:[%s10 + $0x184] sm:$0xf]
        %v4331 = vld [vmem:[%s10 + $0x188] sm:$0xff]
        %v4332 = vld [vmem:[%s10 + $0x190] sm:$0xff]
        %v4333 = vld [vmem:[%s10 + $0x198] sm:$0xff]
        %v4334 = vld [vmem:[%s10 + $0x1a0] sm:$0xf]
        %v4335 = vld [vmem:[%s10 + $0x1a4] sm:$0xff]
        %v4336 = vld [vmem:[%s10 + $0x1ac] sm:$0xff]
        %v4337 = vld [vmem:[%s10 + $0x1b4] sm:$0xff]
        %v4338 = vld [vmem:[%s10 + $0x1bc] sm:$0xf]
        %v4339 = vld [vmem:[%s10 + $0x1c0] sm:$0xff]
        %v4340 = vld [vmem:[%s10 + $0x1c8] sm:$0xff]
        %v4341 = vld [vmem:[%s10 + $0x1d0] sm:$0xff]
        %v4342 = vld [vmem:[%s10 + $0x1d8] sm:$0xf]
        %v4343 = vld [vmem:[%s10 + $0x1dc] sm:$0xff]
        %v4344 = vld [vmem:[%s10 + $0x1e4] sm:$0xff]
        %v4345 = vld [vmem:[%s10 + $0x1ec] sm:$0xff]
        %v4346 = vld [vmem:[%s10 + $0x1f4] sm:$0xf]
        %v4347 = vld [vmem:[%s10 + $0x1f8] sm:$0xff]
        %v4348 = vld [vmem:[%s10 + $0x200] sm:$0xff]
        %v4349 = vld [vmem:[%s10 + $0x208] sm:$0xff]
        %v4350 = vld [vmem:[%s10 + $0x210] sm:$0xf]
        %v4351 = vld [vmem:[%s10 + $0x214] sm:$0xff]
        %v4352 = vld [vmem:[%s10 + $0x21c] sm:$0xff]
        %v4353 = vld [vmem:[%s10 + $0x224] sm:$0xff]
        %v4354 = vld [vmem:[%s10 + $0x22c] sm:$0xf]
        %v4355 = vld [vmem:[%s10 + $0x230] sm:$0xff]
        %v4356 = vld [vmem:[%s10 + $0x238] sm:$0xff]
        %v4357 = vld [vmem:[%s10 + $0x240] sm:$0xff]
        %v4358 = vld [vmem:[%s10 + $0x248] sm:$0xf]
        %v4359 = vld [vmem:[%s10 + $0x24c] sm:$0xff]
        %v4360 = vld [vmem:[%s10 + $0x254] sm:$0xff]
        %v4361 = vld [vmem:[%s10 + $0x25c] sm:$0xff]
        %v4362 = vld [vmem:[%s10 + $0x264] sm:$0xf]
        %v4363 = vld [vmem:[%s10 + $0x268] sm:$0xff]
        %v4364 = vld [vmem:[%s10 + $0x270] sm:$0xff]
        %v4365 = vld [vmem:[%s10 + $0x278] sm:$0xff]
        %v4366 = vld [vmem:[%s10 + $0x280] sm:$0xf]
        %v4367 = vld [vmem:[%s10 + $0x284] sm:$0xff]
        %v4368 = vld [vmem:[%s10 + $0x28c] sm:$0xff]
        %v4369 = vld [vmem:[%s10 + $0x294] sm:$0xff]
        %v4370 = vld [vmem:[%s10 + $0x29c] sm:$0xf]
        %v4371 = vld [vmem:[%s10 + $0x2a0] sm:$0xff]
        %v4372 = vld [vmem:[%s10 + $0x2a8] sm:$0xff]
        %v4373 = vld [vmem:[%s10 + $0x2b0] sm:$0xff]
        %v4374 = vld [vmem:[%s10 + $0x2b8] sm:$0xf]
        %v4375 = vld [vmem:[%s10 + $0x2bc] sm:$0xff]
        %v4376 = vld [vmem:[%s10 + $0x2c4] sm:$0xff]
        %v4377 = vld [vmem:[%s10 + $0x2cc] sm:$0xff]
        %v4378 = vld [vmem:[%s10 + $0x2d4] sm:$0xf]
        %v4379 = vld [vmem:[%s10 + $0x2d8] sm:$0xff]
        %v4380 = vld [vmem:[%s10 + $0x2e0] sm:$0xff]
        %v4381 = vld [vmem:[%s10 + $0x2e8] sm:$0xff]
        %v4382 = vld [vmem:[%s10 + $0x2f0] sm:$0xf]
        %v4383 = vld [vmem:[%s10 + $0x2f4] sm:$0xff]
        %v4384 = vld [vmem:[%s10 + $0x2fc] sm:$0xff]
        %v4385 = vld [vmem:[%s10 + $0x304] sm:$0xff]
        %v4386 = vld [vmem:[%s10 + $0x30c] sm:$0xf]
        %v4387 = vld [vmem:[%s10 + $0x310] sm:$0xff]
        %v4388 = vld [vmem:[%s10 + $0x318] sm:$0xff]
        %v4389 = vld [vmem:[%s10 + $0x320] sm:$0xff]
        %v4390 = vld [vmem:[%s10 + $0x328] sm:$0xf]
        %v4391 = vld [vmem:[%s10 + $0x32c] sm:$0xff]
        %v4392 = vld [vmem:[%s10 + $0x334] sm:$0xff]
        %v4393 = vld [vmem:[%s10 + $0x33c] sm:$0xff]
        %v4394 = vld [vmem:[%s10 + $0x344] sm:$0xf]
        %v4395 = vld [vmem:[%s10 + $0x348] sm:$0xff]
        %v4396 = vld [vmem:[%s10 + $0x350] sm:$0xff]
        %v4397 = vld [vmem:[%s10 + $0x358] sm:$0xff]
        %v4398 = vld [vmem:[%s10 + $0x360] sm:$0xf]
        %v4399 = vld [vmem:[%s10 + $0x364] sm:$0xff]
        %v4400 = vld [vmem:[%s10 + $0x36c] sm:$0xff]
        %v4401 = vld [vmem:[%s10 + $0x374] sm:$0xff]
        %v4402 = vld [vmem:[%s10 + $0x37c] sm:$0xf]
        %v4403 = vld [vmem:[#allocation11] sm:$0xff]
        %v4405 = vlaneseq
        %v4406 = vshrl.u32 %v4405, 7
        %v4407 = vsub.s32 0, %v4406
        %v4408 = vrot.slane %v4403, %v4407
        %v4409 = vlaneseq
        %v4410 = vshrl.u32 %v4409, 7
        %v4411 = vsub.s32 1, %v4410
        %v4412 = vrot.slane %v4403, %v4411
        %v4413 = vlaneseq
        %v4414 = vshrl.u32 %v4413, 7
        %v4415 = vsub.s32 2, %v4414
        %v4416 = vrot.slane %v4403, %v4415
        %v4417 = vlaneseq
        %v4418 = vshrl.u32 %v4417, 7
        %v4419 = vsub.s32 3, %v4418
        %v4420 = vrot.slane %v4403, %v4419
        %v4421 = vlaneseq
        %v4422 = vshrl.u32 %v4421, 7
        %v4423 = vsub.s32 4, %v4422
        %v4424 = vrot.slane %v4403, %v4423
        %v4425 = vlaneseq
        %v4426 = vshrl.u32 %v4425, 7
        %v4427 = vsub.s32 5, %v4426
        %v4428 = vrot.slane %v4403, %v4427
        %v4429 = vlaneseq
        %v4430 = vshrl.u32 %v4429, 7
        %v4431 = vsub.s32 6, %v4430
        %v4432 = vrot.slane %v4403, %v4431
        %v4568 = vunpack.c.l.b16 %v4275
        %v4569 = vunpack.c.h.b16 %v4275
        %v4570 = vunpack.c.l.b16 %v4276
        %v4571 = vunpack.c.h.b16 %v4276
        %v4572 = vunpack.c.l.b16 %v4277
        %v4573 = vunpack.c.h.b16 %v4277
        %v4574 = vunpack.c.l.b16 %v4278
        %v4575 = vunpack.c.l.b16 %v4279
        %v4576 = vunpack.c.h.b16 %v4279
        %v4577 = vunpack.c.l.b16 %v4280
        %v4578 = vunpack.c.h.b16 %v4280
        %v4579 = vunpack.c.l.b16 %v4281
        %v4580 = vunpack.c.h.b16 %v4281
        %v4581 = vunpack.c.l.b16 %v4282
        %v4582 = vunpack.c.l.b16 %v4283
        %v4583 = vunpack.c.h.b16 %v4283
        %v4584 = vunpack.c.l.b16 %v4284
        %v4585 = vunpack.c.h.b16 %v4284
        %v4586 = vunpack.c.l.b16 %v4285
        %v4587 = vunpack.c.h.b16 %v4285
        %v4588 = vunpack.c.l.b16 %v4286
        %v4589 = vunpack.c.l.b16 %v4287
        %v4590 = vunpack.c.h.b16 %v4287
        %v4591 = vunpack.c.l.b16 %v4288
        %v4592 = vunpack.c.h.b16 %v4288
        %v4593 = vunpack.c.l.b16 %v4289
        %v4594 = vunpack.c.h.b16 %v4289
        %v4595 = vunpack.c.l.b16 %v4290
        %v4596 = vunpack.c.l.b16 %v4291
        %v4597 = vunpack.c.h.b16 %v4291
        %v4598 = vunpack.c.l.b16 %v4292
        %v4599 = vunpack.c.h.b16 %v4292
        %v4600 = vunpack.c.l.b16 %v4293
        %v4601 = vunpack.c.h.b16 %v4293
        %v4602 = vunpack.c.l.b16 %v4294
        %v4603 = vunpack.c.l.b16 %v4295
        %v4604 = vunpack.c.h.b16 %v4295
        %v4605 = vunpack.c.l.b16 %v4296
        %v4606 = vunpack.c.h.b16 %v4296
        %v4607 = vunpack.c.l.b16 %v4297
        %v4608 = vunpack.c.h.b16 %v4297
        %v4609 = vunpack.c.l.b16 %v4298
        %v4610 = vunpack.c.l.b16 %v4299
        %v4611 = vunpack.c.h.b16 %v4299
        %v4612 = vunpack.c.l.b16 %v4300
        %v4613 = vunpack.c.h.b16 %v4300
        %v4614 = vunpack.c.l.b16 %v4301
        %v4615 = vunpack.c.h.b16 %v4301
        %v4616 = vunpack.c.l.b16 %v4302
        %v4617 = vunpack.c.l.b16 %v4303
        %v4618 = vunpack.c.h.b16 %v4303
        %v4619 = vunpack.c.l.b16 %v4304
        %v4620 = vunpack.c.h.b16 %v4304
        %v4621 = vunpack.c.l.b16 %v4305
        %v4622 = vunpack.c.h.b16 %v4305
        %v4623 = vunpack.c.l.b16 %v4306
        %v4624 = vunpack.c.l.b16 %v4307
        %v4625 = vunpack.c.h.b16 %v4307
        %v4626 = vunpack.c.l.b16 %v4308
        %v4627 = vunpack.c.h.b16 %v4308
        %v4628 = vunpack.c.l.b16 %v4309
        %v4629 = vunpack.c.h.b16 %v4309
        %v4630 = vunpack.c.l.b16 %v4310
        %v4631 = vunpack.c.l.b16 %v4311
        %v4632 = vunpack.c.h.b16 %v4311
        %v4633 = vunpack.c.l.b16 %v4312
        %v4634 = vunpack.c.h.b16 %v4312
        %v4635 = vunpack.c.l.b16 %v4313
        %v4636 = vunpack.c.h.b16 %v4313
        %v4637 = vunpack.c.l.b16 %v4314
        %v4638 = vunpack.c.l.b16 %v4315
        %v4639 = vunpack.c.h.b16 %v4315
        %v4640 = vunpack.c.l.b16 %v4316
        %v4641 = vunpack.c.h.b16 %v4316
        %v4642 = vunpack.c.l.b16 %v4317
        %v4643 = vunpack.c.h.b16 %v4317
        %v4644 = vunpack.c.l.b16 %v4318
        %v4645 = vunpack.c.l.b16 %v4319
        %v4646 = vunpack.c.h.b16 %v4319
        %v4647 = vunpack.c.l.b16 %v4320
        %v4648 = vunpack.c.h.b16 %v4320
        %v4649 = vunpack.c.l.b16 %v4321
        %v4650 = vunpack.c.h.b16 %v4321
        %v4651 = vunpack.c.l.b16 %v4322
        %v4652 = vunpack.c.l.b16 %v4323
        %v4653 = vunpack.c.h.b16 %v4323
        %v4654 = vunpack.c.l.b16 %v4324
        %v4655 = vunpack.c.h.b16 %v4324
        %v4656 = vunpack.c.l.b16 %v4325
        %v4657 = vunpack.c.h.b16 %v4325
        %v4658 = vunpack.c.l.b16 %v4326
        %v4659 = vunpack.c.l.b16 %v4327
        %v4660 = vunpack.c.h.b16 %v4327
        %v4661 = vunpack.c.l.b16 %v4328
        %v4662 = vunpack.c.h.b16 %v4328
        %v4663 = vunpack.c.l.b16 %v4329
        %v4664 = vunpack.c.h.b16 %v4329
        %v4665 = vunpack.c.l.b16 %v4330
        %v4666 = vunpack.c.l.b16 %v4331
        %v4667 = vunpack.c.h.b16 %v4331
        %v4668 = vunpack.c.l.b16 %v4332
        %v4669 = vunpack.c.h.b16 %v4332
        %v4670 = vunpack.c.l.b16 %v4333
        %v4671 = vunpack.c.h.b16 %v4333
        %v4672 = vunpack.c.l.b16 %v4334
        %v4673 = vunpack.c.l.b16 %v4335
        %v4674 = vunpack.c.h.b16 %v4335
        %v4675 = vunpack.c.l.b16 %v4336
        %v4676 = vunpack.c.h.b16 %v4336
        %v4677 = vunpack.c.l.b16 %v4337
        %v4678 = vunpack.c.h.b16 %v4337
        %v4679 = vunpack.c.l.b16 %v4338
        %v4680 = vunpack.c.l.b16 %v4339
        %v4681 = vunpack.c.h.b16 %v4339
        %v4682 = vunpack.c.l.b16 %v4340
        %v4683 = vunpack.c.h.b16 %v4340
        %v4684 = vunpack.c.l.b16 %v4341
        %v4685 = vunpack.c.h.b16 %v4341
        %v4686 = vunpack.c.l.b16 %v4342
        %v4687 = vunpack.c.l.b16 %v4343
        %v4688 = vunpack.c.h.b16 %v4343
        %v4689 = vunpack.c.l.b16 %v4344
        %v4690 = vunpack.c.h.b16 %v4344
        %v4691 = vunpack.c.l.b16 %v4345
        %v4692 = vunpack.c.h.b16 %v4345
        %v4693 = vunpack.c.l.b16 %v4346
        %v4694 = vunpack.c.l.b16 %v4347
        %v4695 = vunpack.c.h.b16 %v4347
        %v4696 = vunpack.c.l.b16 %v4348
        %v4697 = vunpack.c.h.b16 %v4348
        %v4698 = vunpack.c.l.b16 %v4349
        %v4699 = vunpack.c.h.b16 %v4349
        %v4700 = vunpack.c.l.b16 %v4350
        %v4701 = vunpack.c.l.b16 %v4351
        %v4702 = vunpack.c.h.b16 %v4351
        %v4703 = vunpack.c.l.b16 %v4352
        %v4704 = vunpack.c.h.b16 %v4352
        %v4705 = vunpack.c.l.b16 %v4353
        %v4706 = vunpack.c.h.b16 %v4353
        %v4707 = vunpack.c.l.b16 %v4354
        %v4708 = vunpack.c.l.b16 %v4355
        %v4709 = vunpack.c.h.b16 %v4355
        %v4710 = vunpack.c.l.b16 %v4356
        %v4711 = vunpack.c.h.b16 %v4356
        %v4712 = vunpack.c.l.b16 %v4357
        %v4713 = vunpack.c.h.b16 %v4357
        %v4714 = vunpack.c.l.b16 %v4358
        %v4715 = vunpack.c.l.b16 %v4359
        %v4716 = vunpack.c.h.b16 %v4359
        %v4717 = vunpack.c.l.b16 %v4360
        %v4718 = vunpack.c.h.b16 %v4360
        %v4719 = vunpack.c.l.b16 %v4361
        %v4720 = vunpack.c.h.b16 %v4361
        %v4721 = vunpack.c.l.b16 %v4362
        %v4722 = vunpack.c.l.b16 %v4363
        %v4723 = vunpack.c.h.b16 %v4363
        %v4724 = vunpack.c.l.b16 %v4364
        %v4725 = vunpack.c.h.b16 %v4364
        %v4726 = vunpack.c.l.b16 %v4365
        %v4727 = vunpack.c.h.b16 %v4365
        %v4728 = vunpack.c.l.b16 %v4366
        %v4729 = vunpack.c.l.b16 %v4367
        %v4730 = vunpack.c.h.b16 %v4367
        %v4731 = vunpack.c.l.b16 %v4368
        %v4732 = vunpack.c.h.b16 %v4368
        %v4733 = vunpack.c.l.b16 %v4369
        %v4734 = vunpack.c.h.b16 %v4369
        %v4735 = vunpack.c.l.b16 %v4370
        %v4736 = vunpack.c.l.b16 %v4371
        %v4737 = vunpack.c.h.b16 %v4371
        %v4738 = vunpack.c.l.b16 %v4372
        %v4739 = vunpack.c.h.b16 %v4372
        %v4740 = vunpack.c.l.b16 %v4373
        %v4741 = vunpack.c.h.b16 %v4373
        %v4742 = vunpack.c.l.b16 %v4374
        %v4743 = vunpack.c.l.b16 %v4375
        %v4744 = vunpack.c.h.b16 %v4375
        %v4745 = vunpack.c.l.b16 %v4376
        %v4746 = vunpack.c.h.b16 %v4376
        %v4747 = vunpack.c.l.b16 %v4377
        %v4748 = vunpack.c.h.b16 %v4377
        %v4749 = vunpack.c.l.b16 %v4378
        %v4750 = vunpack.c.l.b16 %v4379
        %v4751 = vunpack.c.h.b16 %v4379
        %v4752 = vunpack.c.l.b16 %v4380
        %v4753 = vunpack.c.h.b16 %v4380
        %v4754 = vunpack.c.l.b16 %v4381
        %v4755 = vunpack.c.h.b16 %v4381
        %v4756 = vunpack.c.l.b16 %v4382
        %v4757 = vunpack.c.l.b16 %v4383
        %v4758 = vunpack.c.h.b16 %v4383
        %v4759 = vunpack.c.l.b16 %v4384
        %v4760 = vunpack.c.h.b16 %v4384
        %v4761 = vunpack.c.l.b16 %v4385
        %v4762 = vunpack.c.h.b16 %v4385
        %v4763 = vunpack.c.l.b16 %v4386
        %v4764 = vunpack.c.l.b16 %v4387
        %v4765 = vunpack.c.h.b16 %v4387
        %v4766 = vunpack.c.l.b16 %v4388
        %v4767 = vunpack.c.h.b16 %v4388
        %v4768 = vunpack.c.l.b16 %v4389
        %v4769 = vunpack.c.h.b16 %v4389
        %v4770 = vunpack.c.l.b16 %v4390
        %v4771 = vunpack.c.l.b16 %v4391
        %v4772 = vunpack.c.h.b16 %v4391
        %v4773 = vunpack.c.l.b16 %v4392
        %v4774 = vunpack.c.h.b16 %v4392
        %v4775 = vunpack.c.l.b16 %v4393
        %v4776 = vunpack.c.h.b16 %v4393
        %v4777 = vunpack.c.l.b16 %v4394
        %v4778 = vunpack.c.l.b16 %v4395
        %v4779 = vunpack.c.h.b16 %v4395
        %v4780 = vunpack.c.l.b16 %v4396
        %v4781 = vunpack.c.h.b16 %v4396
        %v4782 = vunpack.c.l.b16 %v4397
        %v4783 = vunpack.c.h.b16 %v4397
        %v4784 = vunpack.c.l.b16 %v4398
        %v4785 = vunpack.c.l.b16 %v4399
        %v4786 = vunpack.c.h.b16 %v4399
        %v4787 = vunpack.c.l.b16 %v4400
        %v4788 = vunpack.c.h.b16 %v4400
        %v4789 = vunpack.c.l.b16 %v4401
        %v4790 = vunpack.c.h.b16 %v4401
        %v4791 = vunpack.c.l.b16 %v4402
        %v4792 = vpack.c.b16 %v4575, %v4568
        %v4793 = vpack.c.b16 %v4576, %v4569
        %v4794 = vpack.c.b16 %v4577, %v4570
        %v4795 = vpack.c.b16 %v4578, %v4571
        %v4796 = vpack.c.b16 %v4579, %v4572
        %v4797 = vpack.c.b16 %v4580, %v4573
        %v4798 = vpack.c.b16 %v4581, %v4574
        %v4799 = vpack.c.b16 %v4589, %v4582
        %v4800 = vpack.c.b16 %v4590, %v4583
        %v4801 = vpack.c.b16 %v4591, %v4584
        %v4802 = vpack.c.b16 %v4592, %v4585
        %v4803 = vpack.c.b16 %v4593, %v4586
        %v4804 = vpack.c.b16 %v4594, %v4587
        %v4805 = vpack.c.b16 %v4595, %v4588
        %v4806 = vpack.c.b16 %v4603, %v4596
        %v4807 = vpack.c.b16 %v4604, %v4597
        %v4808 = vpack.c.b16 %v4605, %v4598
        %v4809 = vpack.c.b16 %v4606, %v4599
        %v4810 = vpack.c.b16 %v4607, %v4600
        %v4811 = vpack.c.b16 %v4608, %v4601
        %v4812 = vpack.c.b16 %v4609, %v4602
        %v4813 = vpack.c.b16 %v4617, %v4610
        %v4814 = vpack.c.b16 %v4618, %v4611
        %v4815 = vpack.c.b16 %v4619, %v4612
        %v4816 = vpack.c.b16 %v4620, %v4613
        %v4817 = vpack.c.b16 %v4621, %v4614
        %v4818 = vpack.c.b16 %v4622, %v4615
        %v4819 = vpack.c.b16 %v4623, %v4616
        %v4820 = vpack.c.b16 %v4631, %v4624
        %v4821 = vpack.c.b16 %v4632, %v4625
        %v4822 = vpack.c.b16 %v4633, %v4626
        %v4823 = vpack.c.b16 %v4634, %v4627
        %v4824 = vpack.c.b16 %v4635, %v4628
        %v4825 = vpack.c.b16 %v4636, %v4629
        %v4826 = vpack.c.b16 %v4637, %v4630
        %v4827 = vpack.c.b16 %v4645, %v4638
        %v4828 = vpack.c.b16 %v4646, %v4639
        %v4829 = vpack.c.b16 %v4647, %v4640
        %v4830 = vpack.c.b16 %v4648, %v4641
        %v4831 = vpack.c.b16 %v4649, %v4642
        %v4832 = vpack.c.b16 %v4650, %v4643
        %v4833 = vpack.c.b16 %v4651, %v4644
        %v4834 = vpack.c.b16 %v4659, %v4652
        %v4835 = vpack.c.b16 %v4660, %v4653
        %v4836 = vpack.c.b16 %v4661, %v4654
        %v4837 = vpack.c.b16 %v4662, %v4655
        %v4838 = vpack.c.b16 %v4663, %v4656
        %v4839 = vpack.c.b16 %v4664, %v4657
        %v4840 = vpack.c.b16 %v4665, %v4658
        %v4841 = vpack.c.b16 %v4673, %v4666
        %v4842 = vpack.c.b16 %v4674, %v4667
        %v4843 = vpack.c.b16 %v4675, %v4668
        %v4844 = vpack.c.b16 %v4676, %v4669
        %v4845 = vpack.c.b16 %v4677, %v4670
        %v4846 = vpack.c.b16 %v4678, %v4671
        %v4847 = vpack.c.b16 %v4679, %v4672
        %v4848 = vpack.c.b16 %v4687, %v4680
        %v4849 = vpack.c.b16 %v4688, %v4681
        %v4850 = vpack.c.b16 %v4689, %v4682
        %v4851 = vpack.c.b16 %v4690, %v4683
        %v4852 = vpack.c.b16 %v4691, %v4684
        %v4853 = vpack.c.b16 %v4692, %v4685
        %v4854 = vpack.c.b16 %v4693, %v4686
        %v4855 = vpack.c.b16 %v4701, %v4694
        %v4856 = vpack.c.b16 %v4702, %v4695
        %v4857 = vpack.c.b16 %v4703, %v4696
        %v4858 = vpack.c.b16 %v4704, %v4697
        %v4859 = vpack.c.b16 %v4705, %v4698
        %v4860 = vpack.c.b16 %v4706, %v4699
        %v4861 = vpack.c.b16 %v4707, %v4700
        %v4862 = vpack.c.b16 %v4715, %v4708
        %v4863 = vpack.c.b16 %v4716, %v4709
        %v4864 = vpack.c.b16 %v4717, %v4710
        %v4865 = vpack.c.b16 %v4718, %v4711
        %v4866 = vpack.c.b16 %v4719, %v4712
        %v4867 = vpack.c.b16 %v4720, %v4713
        %v4868 = vpack.c.b16 %v4721, %v4714
        %v4869 = vpack.c.b16 %v4729, %v4722
        %v4870 = vpack.c.b16 %v4730, %v4723
        %v4871 = vpack.c.b16 %v4731, %v4724
        %v4872 = vpack.c.b16 %v4732, %v4725
        %v4873 = vpack.c.b16 %v4733, %v4726
        %v4874 = vpack.c.b16 %v4734, %v4727
        %v4875 = vpack.c.b16 %v4735, %v4728
        %v4876 = vpack.c.b16 %v4743, %v4736
        %v4877 = vpack.c.b16 %v4744, %v4737
        %v4878 = vpack.c.b16 %v4745, %v4738
        %v4879 = vpack.c.b16 %v4746, %v4739
        %v4880 = vpack.c.b16 %v4747, %v4740
        %v4881 = vpack.c.b16 %v4748, %v4741
        %v4882 = vpack.c.b16 %v4749, %v4742
        %v4883 = vpack.c.b16 %v4757, %v4750
        %v4884 = vpack.c.b16 %v4758, %v4751
        %v4885 = vpack.c.b16 %v4759, %v4752
        %v4886 = vpack.c.b16 %v4760, %v4753
        %v4887 = vpack.c.b16 %v4761, %v4754
        %v4888 = vpack.c.b16 %v4762, %v4755
        %v4889 = vpack.c.b16 %v4763, %v4756
        %v4890 = vpack.c.b16 %v4771, %v4764
        %v4891 = vpack.c.b16 %v4772, %v4765
        %v4892 = vpack.c.b16 %v4773, %v4766
        %v4893 = vpack.c.b16 %v4774, %v4767
        %v4894 = vpack.c.b16 %v4775, %v4768
        %v4895 = vpack.c.b16 %v4776, %v4769
        %v4896 = vpack.c.b16 %v4777, %v4770
        %v4897 = vpack.c.b16 %v4785, %v4778
        %v4898 = vpack.c.b16 %v4786, %v4779
        %v4899 = vpack.c.b16 %v4787, %v4780
        %v4900 = vpack.c.b16 %v4788, %v4781
        %v4901 = vpack.c.b16 %v4789, %v4782
        %v4902 = vpack.c.b16 %v4790, %v4783
        %v4903 = vpack.c.b16 %v4791, %v4784
        %5016 = vmatprep.subr.bf16.mxu0 %v4793
        %5017 = vmatpush1.bf16.msra.mxu0 %v4792
        %5018 = vmatprep.subr.bf16.mxu0 %v4800
        %5019 = vmatpush1.bf16.msra.mxu0 %v4799
        %5020 = vmatprep.subr.bf16.mxu0 %v4807
        %5021 = vmatpush1.bf16.msra.mxu0 %v4806
        %5022 = vmatprep.subr.bf16.mxu0 %v4814
        %5023 = vmatpush1.bf16.msra.mxu0 %v4813
        %5024 = vmatprep.subr.bf16.mxu0 %v4821
        %5025 = vmatpush1.bf16.msra.mxu0 %v4820
        %5026 = vmatprep.subr.bf16.mxu0 %v4828
        %5027 = vmatpush1.bf16.msra.mxu0 %v4827
        %5028 = vmatprep.subr.bf16.mxu0 %v4835
        %5029 = vmatpush1.bf16.msra.mxu0 %v4834
        %5030 = vmatprep.subr.bf16.mxu0 %v4842
        %5031 = vmatpush1.bf16.msra.mxu0 %v4841
        %5032 = vmatprep.subr.bf16.mxu0 %v4849
        %5033 = vmatpush1.bf16.msra.mxu0 %v4848
        %5034 = vmatprep.subr.bf16.mxu0 %v4856
        %5035 = vmatpush1.bf16.msra.mxu0 %v4855
        %5036 = vmatprep.subr.bf16.mxu0 %v4863
        %5037 = vmatpush1.bf16.msra.mxu0 %v4862
        %5038 = vmatprep.subr.bf16.mxu0 %v4870
        %5039 = vmatpush1.bf16.msra.mxu0 %v4869
        %5040 = vmatprep.subr.bf16.mxu0 %v4877
        %5041 = vmatpush1.bf16.msra.mxu0 %v4876
        %5042 = vmatprep.subr.bf16.mxu0 %v4884
        %5043 = vmatpush1.bf16.msra.mxu0 %v4883
        %5044 = vmatprep.subr.bf16.mxu0 %v4891
        %5045 = vmatpush1.bf16.msra.mxu0 %v4890
        %5046 = vmatprep.subr.bf16.mxu0 %v4898
        %5047 = vmatpush1.bf16.msra.mxu0 %v4897
        %5048 = vmatprep.mubr.bf16.mxu0 %v4244
        %5049 = vmatmul.mubr.bf16.gmra.mrb[0].mxu0 %v4243
        %v5050 = vpop.f32.mrb[0].mxu0
        %v5051 = vadd.f32 %v4408, %v5050
        %v5052 = vpop.f32.mrb[0].mxu0
        %v5053 = vadd.f32 %v4412, %v5052
        %v5054 = vpop.f32.mrb[0].mxu0
        %v5055 = vadd.f32 %v4408, %v5054
        %v5056 = vpop.f32.mrb[0].mxu0
        %v5057 = vadd.f32 %v4412, %v5056
        %5058 = vmatprep.mubr.bf16.mxu0 %v4246
        %5059 = vmatmul.mubr.bf16.gmra.mrb[0].mxu0 %v4245
        %v5060 = vpop.f32.mrb[0].mxu0
        %v5061 = vadd.f32 %v4408, %v5060
        %v5062 = vpop.f32.mrb[0].mxu0
        %v5063 = vadd.f32 %v4412, %v5062
        %v5064 = vpop.f32.mrb[0].mxu0
        %v5065 = vadd.f32 %v4408, %v5064
        %v5066 = vpop.f32.mrb[0].mxu0
        %v5067 = vadd.f32 %v4412, %v5066
        %5068 = vmatprep.mubr.bf16.mxu0 %v4248
        %5069 = vmatmul.mubr.bf16.gmra.mrb[0].mxu0 %v4247
        %v5070 = vpop.f32.mrb[0].mxu0
        %v5071 = vadd.f32 %v4408, %v5070
        %v5072 = vpop.f32.mrb[0].mxu0
        %v5073 = vadd.f32 %v4412, %v5072
        %v5074 = vpop.f32.mrb[0].mxu0
        %v5075 = vadd.f32 %v4408, %v5074
        %v5076 = vpop.f32.mrb[0].mxu0
        %v5077 = vadd.f32 %v4412, %v5076
        %5078 = vmatprep.mubr.bf16.mxu0 %v4250
        %5079 = vmatmul.mubr.bf16.gmra.mrb[0].mxu0 %v4249
        %v5080 = vpop.f32.mrb[0].mxu0
        %v5081 = vadd.f32 %v4408, %v5080
        %v5082 = vpop.f32.mrb[0].mxu0
        %v5083 = vadd.f32 %v4412, %v5082
        %v5084 = vpop.f32.mrb[0].mxu0
        %v5085 = vadd.f32 %v4408, %v5084
        %v5086 = vpop.f32.mrb[0].mxu0
        %v5087 = vadd.f32 %v4412, %v5086
        %5088 = vmatprep.mubr.bf16.mxu0 %v4252
        %5089 = vmatmul.mubr.bf16.gmra.mrb[0].mxu0 %v4251
        %v5090 = vpop.f32.mrb[0].mxu0
        %v5091 = vadd.f32 %v4408, %v5090
        %v5092 = vpop.f32.mrb[0].mxu0
        %v5093 = vadd.f32 %v4412, %v5092
        %v5094 = vpop.f32.mrb[0].mxu0
        %v5095 = vadd.f32 %v4408, %v5094
        %v5096 = vpop.f32.mrb[0].mxu0
        %v5097 = vadd.f32 %v4412, %v5096
        %5098 = vmatprep.mubr.bf16.mxu0 %v4254
        %5099 = vmatmul.mubr.bf16.gmra.mrb[0].mxu0 %v4253
        %v5100 = vpop.f32.mrb[0].mxu0
        %v5101 = vadd.f32 %v4408, %v5100
        %v5102 = vpop.f32.mrb[0].mxu0
        %v5103 = vadd.f32 %v4412, %v5102
        %v5104 = vpop.f32.mrb[0].mxu0
        %v5105 = vadd.f32 %v4408, %v5104
        %v5106 = vpop.f32.mrb[0].mxu0
        %v5107 = vadd.f32 %v4412, %v5106
        %5108 = vmatprep.mubr.bf16.mxu0 %v4256
        %5109 = vmatmul.mubr.bf16.gmra.mrb[0].mxu0 %v4255
        %v5110 = vpop.f32.mrb[0].mxu0
        %v5111 = vadd.f32 %v4408, %v5110
        %v5112 = vpop.f32.mrb[0].mxu0
        %v5113 = vadd.f32 %v4412, %v5112
        %v5114 = vpop.f32.mrb[0].mxu0
        %v5115 = vadd.f32 %v4408, %v5114
        %v5116 = vpop.f32.mrb[0].mxu0
        %v5117 = vadd.f32 %v4412, %v5116
        %5118 = vmatprep.mubr.bf16.mxu0 %v4258
        %5119 = vmatmul.mubr.bf16.gmra.mrb[0].mxu0 %v4257
        %v5120 = vpop.f32.mrb[0].mxu0
        %v5121 = vadd.f32 %v4408, %v5120
        %v5122 = vpop.f32.mrb[0].mxu0
        %v5123 = vadd.f32 %v4412, %v5122
        %v5124 = vpop.f32.mrb[0].mxu0
        %v5125 = vadd.f32 %v4408, %v5124
        %v5126 = vpop.f32.mrb[0].mxu0
        %v5127 = vadd.f32 %v4412, %v5126
        %5128 = vmatprep.mubr.bf16.mxu0 %v4260
        %5129 = vmatmul.mubr.bf16.gmra.mrb[0].mxu0 %v4259
        %v5130 = vpop.f32.mrb[0].mxu0
        %v5131 = vadd.f32 %v4408, %v5130
        %v5132 = vpop.f32.mrb[0].mxu0
        %v5133 = vadd.f32 %v4412, %v5132
        %v5134 = vpop.f32.mrb[0].mxu0
        %v5135 = vadd.f32 %v4408, %v5134
        %v5136 = vpop.f32.mrb[0].mxu0
        %v5137 = vadd.f32 %v4412, %v5136
        %5138 = vmatprep.mubr.bf16.mxu0 %v4262
        %5139 = vmatmul.mubr.bf16.gmra.mrb[0].mxu0 %v4261
        %v5140 = vpop.f32.mrb[0].mxu0
        %v5141 = vadd.f32 %v4408, %v5140
        %v5142 = vpop.f32.mrb[0].mxu0
        %v5143 = vadd.f32 %v4412, %v5142
        %v5144 = vpop.f32.mrb[0].mxu0
        %v5145 = vadd.f32 %v4408, %v5144
        %v5146 = vpop.f32.mrb[0].mxu0
        %v5147 = vadd.f32 %v4412, %v5146
        %5148 = vmatprep.mubr.bf16.mxu0 %v4264
        %5149 = vmatmul.mubr.bf16.gmra.mrb[0].mxu0 %v4263
        %v5150 = vpop.f32.mrb[0].mxu0
        %v5151 = vadd.f32 %v4408, %v5150
        %v5152 = vpop.f32.mrb[0].mxu0
        %v5153 = vadd.f32 %v4412, %v5152
        %v5154 = vpop.f32.mrb[0].mxu0
        %v5155 = vadd.f32 %v4408, %v5154
        %v5156 = vpop.f32.mrb[0].mxu0
        %v5157 = vadd.f32 %v4412, %v5156
        %5158 = vmatprep.mubr.bf16.mxu0 %v4266
        %5159 = vmatmul.mubr.bf16.gmra.mrb[0].mxu0 %v4265
        %v5160 = vpop.f32.mrb[0].mxu0
        %v5161 = vadd.f32 %v4408, %v5160
        %v5162 = vpop.f32.mrb[0].mxu0
        %v5163 = vadd.f32 %v4412, %v5162
        %v5164 = vpop.f32.mrb[0].mxu0
        %v5165 = vadd.f32 %v4408, %v5164
        %v5166 = vpop.f32.mrb[0].mxu0
        %v5167 = vadd.f32 %v4412, %v5166
        %5168 = vmatprep.mubr.bf16.mxu0 %v4268
        %5169 = vmatmul.mubr.bf16.gmra.mrb[0].mxu0 %v4267
        %v5170 = vpop.f32.mrb[0].mxu0
        %v5171 = vadd.f32 %v4408, %v5170
        %v5172 = vpop.f32.mrb[0].mxu0
        %v5173 = vadd.f32 %v4412, %v5172
        %v5174 = vpop.f32.mrb[0].mxu0
        %v5175 = vadd.f32 %v4408, %v5174
        %v5176 = vpop.f32.mrb[0].mxu0
        %v5177 = vadd.f32 %v4412, %v5176
        %5178 = vmatprep.mubr.bf16.mxu0 %v4270
        %5179 = vmatmul.mubr.bf16.gmra.mrb[0].mxu0 %v4269
        %v5180 = vpop.f32.mrb[0].mxu0
        %v5181 = vadd.f32 %v4408, %v5180
        %v5182 = vpop.f32.mrb[0].mxu0
        %v5183 = vadd.f32 %v4412, %v5182
        %v5184 = vpop.f32.mrb[0].mxu0
        %v5185 = vadd.f32 %v4408, %v5184
        %v5186 = vpop.f32.mrb[0].mxu0
        %v5187 = vadd.f32 %v4412, %v5186
        %5188 = vmatprep.mubr.bf16.mxu0 %v4272
        %5189 = vmatmul.mubr.bf16.gmra.mrb[0].mxu0 %v4271
        %v5190 = vpop.f32.mrb[0].mxu0
        %v5191 = vadd.f32 %v4408, %v5190
        %v5192 = vpop.f32.mrb[0].mxu0
        %v5193 = vadd.f32 %v4412, %v5192
        %v5194 = vpop.f32.mrb[0].mxu0
        %v5195 = vadd.f32 %v4408, %v5194
        %v5196 = vpop.f32.mrb[0].mxu0
        %v5197 = vadd.f32 %v4412, %v5196
        %5198 = vmatprep.mubr.bf16.mxu0 %v4274
        %5199 = vmatmul.mubr.bf16.gmra.mrb[0].mxu0 %v4273
        %v5200 = vpop.f32.mrb[0].mxu0
        %v5201 = vadd.f32 %v4408, %v5200
        %v5202 = vpop.f32.mrb[0].mxu0
        %v5203 = vadd.f32 %v4412, %v5202
        %v5204 = vpop.f32.mrb[0].mxu0
        %v5205 = vadd.f32 %v4408, %v5204
        %v5206 = vpop.f32.mrb[0].mxu0
        %v5207 = vadd.f32 %v4412, %v5206
        %5208 = vdwg.mxu0
        %5209 = vmatprep.subr.bf16.mxu0 %v4795
        %5210 = vmatpush1.bf16.msra.mxu0 %v4794
        %5211 = vmatprep.subr.bf16.mxu0 %v4802
        %5212 = vmatpush1.bf16.msra.mxu0 %v4801
        %5213 = vmatprep.subr.bf16.mxu0 %v4809
        %5214 = vmatpush1.bf16.msra.mxu0 %v4808
        %5215 = vmatprep.subr.bf16.mxu0 %v4816
        %5216 = vmatpush1.bf16.msra.mxu0 %v4815
        %5217 = vmatprep.subr.bf16.mxu0 %v4823
        %5218 = vmatpush1.bf16.msra.mxu0 %v4822
        %5219 = vmatprep.subr.bf16.mxu0 %v4830
        %5220 = vmatpush1.bf16.msra.mxu0 %v4829
        %5221 = vmatprep.subr.bf16.mxu0 %v4837
        %5222 = vmatpush1.bf16.msra.mxu0 %v4836
        %5223 = vmatprep.subr.bf16.mxu0 %v4844
        %5224 = vmatpush1.bf16.msra.mxu0 %v4843
        %5225 = vmatprep.subr.bf16.mxu0 %v4851
        %5226 = vmatpush1.bf16.msra.mxu0 %v4850
        %5227 = vmatprep.subr.bf16.mxu0 %v4858
        %5228 = vmatpush1.bf16.msra.mxu0 %v4857
        %5229 = vmatprep.subr.bf16.mxu0 %v4865
        %5230 = vmatpush1.bf16.msra.mxu0 %v4864
        %5231 = vmatprep.subr.bf16.mxu0 %v4872
        %5232 = vmatpush1.bf16.msra.mxu0 %v4871
        %5233 = vmatprep.subr.bf16.mxu0 %v4879
        %5234 = vmatpush1.bf16.msra.mxu0 %v4878
        %5235 = vmatprep.subr.bf16.mxu0 %v4886
        %5236 = vmatpush1.bf16.msra.mxu0 %v4885
        %5237 = vmatprep.subr.bf16.mxu0 %v4893
        %5238 = vmatpush1.bf16.msra.mxu0 %v4892
        %5239 = vmatprep.subr.bf16.mxu0 %v4900
        %5240 = vmatpush1.bf16.msra.mxu0 %v4899
        %5241 = vmatprep.mubr.bf16.mxu0 %v4244
        %5242 = vmatmul.mubr.bf16.gmra.mrb[0].mxu0 %v4243
        %v5243 = vpop.f32.mrb[0].mxu0
        %v5244 = vadd.f32 %v4416, %v5243
        %v5245 = vpop.f32.mrb[0].mxu0
        %v5246 = vadd.f32 %v4420, %v5245
        %v5247 = vpop.f32.mrb[0].mxu0
        %v5248 = vadd.f32 %v4416, %v5247
        %v5249 = vpop.f32.mrb[0].mxu0
        %v5250 = vadd.f32 %v4420, %v5249
        %5251 = vmatprep.mubr.bf16.mxu0 %v4246
        %5252 = vmatmul.mubr.bf16.gmra.mrb[0].mxu0 %v4245
        %v5253 = vpop.f32.mrb[0].mxu0
        %v5254 = vadd.f32 %v4416, %v5253
        %v5255 = vpop.f32.mrb[0].mxu0
        %v5256 = vadd.f32 %v4420, %v5255
        %v5257 = vpop.f32.mrb[0].mxu0
        %v5258 = vadd.f32 %v4416, %v5257
        %v5259 = vpop.f32.mrb[0].mxu0
        %v5260 = vadd.f32 %v4420, %v5259
        %5261 = vmatprep.mubr.bf16.mxu0 %v4248
        %5262 = vmatmul.mubr.bf16.gmra.mrb[0].mxu0 %v4247
        %v5263 = vpop.f32.mrb[0].mxu0
        %v5264 = vadd.f32 %v4416, %v5263
        %v5265 = vpop.f32.mrb[0].mxu0
        %v5266 = vadd.f32 %v4420, %v5265
        %v5267 = vpop.f32.mrb[0].mxu0
        %v5268 = vadd.f32 %v4416, %v5267
        %v5269 = vpop.f32.mrb[0].mxu0
        %v5270 = vadd.f32 %v4420, %v5269
        %5271 = vmatprep.mubr.bf16.mxu0 %v4250
        %5272 = vmatmul.mubr.bf16.gmra.mrb[0].mxu0 %v4249
        %v5273 = vpop.f32.mrb[0].mxu0
        %v5274 = vadd.f32 %v4416, %v5273
        %v5275 = vpop.f32.mrb[0].mxu0
        %v5276 = vadd.f32 %v4420, %v5275
        %v5277 = vpop.f32.mrb[0].mxu0
        %v5278 = vadd.f32 %v4416, %v5277
        %v5279 = vpop.f32.mrb[0].mxu0
        %v5280 = vadd.f32 %v4420, %v5279
        %5281 = vmatprep.mubr.bf16.mxu0 %v4252
        %5282 = vmatmul.mubr.bf16.gmra.mrb[0].mxu0 %v4251
        %v5283 = vpop.f32.mrb[0].mxu0
        %v5284 = vadd.f32 %v4416, %v5283
        %v5285 = vpop.f32.mrb[0].mxu0
        %v5286 = vadd.f32 %v4420, %v5285
        %v5287 = vpop.f32.mrb[0].mxu0
        %v5288 = vadd.f32 %v4416, %v5287
        %v5289 = vpop.f32.mrb[0].mxu0
        %v5290 = vadd.f32 %v4420, %v5289
        %5291 = vmatprep.mubr.bf16.mxu0 %v4254
        %5292 = vmatmul.mubr.bf16.gmra.mrb[0].mxu0 %v4253
        %v5293 = vpop.f32.mrb[0].mxu0
        %v5294 = vadd.f32 %v4416, %v5293
        %v5295 = vpop.f32.mrb[0].mxu0
        %v5296 = vadd.f32 %v4420, %v5295
        %v5297 = vpop.f32.mrb[0].mxu0
        %v5298 = vadd.f32 %v4416, %v5297
        %v5299 = vpop.f32.mrb[0].mxu0
        %v5300 = vadd.f32 %v4420, %v5299
        %5301 = vmatprep.mubr.bf16.mxu0 %v4256
        %5302 = vmatmul.mubr.bf16.gmra.mrb[0].mxu0 %v4255
        %v5303 = vpop.f32.mrb[0].mxu0
        %v5304 = vadd.f32 %v4416, %v5303
        %v5305 = vpop.f32.mrb[0].mxu0
        %v5306 = vadd.f32 %v4420, %v5305
        %v5307 = vpop.f32.mrb[0].mxu0
        %v5308 = vadd.f32 %v4416, %v5307
        %v5309 = vpop.f32.mrb[0].mxu0
        %v5310 = vadd.f32 %v4420, %v5309
        %5311 = vmatprep.mubr.bf16.mxu0 %v4258
        %5312 = vmatmul.mubr.bf16.gmra.mrb[0].mxu0 %v4257
        %v5313 = vpop.f32.mrb[0].mxu0
        %v5314 = vadd.f32 %v4416, %v5313
        %v5315 = vpop.f32.mrb[0].mxu0
        %v5316 = vadd.f32 %v4420, %v5315
        %v5317 = vpop.f32.mrb[0].mxu0
        %v5318 = vadd.f32 %v4416, %v5317
        %v5319 = vpop.f32.mrb[0].mxu0
        %v5320 = vadd.f32 %v4420, %v5319
        %5321 = vmatprep.mubr.bf16.mxu0 %v4260
        %5322 = vmatmul.mubr.bf16.gmra.mrb[0].mxu0 %v4259
        %v5323 = vpop.f32.mrb[0].mxu0
        %v5324 = vadd.f32 %v4416, %v5323
        %v5325 = vpop.f32.mrb[0].mxu0
        %v5326 = vadd.f32 %v4420, %v5325
        %v5327 = vpop.f32.mrb[0].mxu0
        %v5328 = vadd.f32 %v4416, %v5327
        %v5329 = vpop.f32.mrb[0].mxu0
        %v5330 = vadd.f32 %v4420, %v5329
        %5331 = vmatprep.mubr.bf16.mxu0 %v4262
        %5332 = vmatmul.mubr.bf16.gmra.mrb[0].mxu0 %v4261
        %v5333 = vpop.f32.mrb[0].mxu0
        %v5334 = vadd.f32 %v4416, %v5333
        %v5335 = vpop.f32.mrb[0].mxu0
        %v5336 = vadd.f32 %v4420, %v5335
        %v5337 = vpop.f32.mrb[0].mxu0
        %v5338 = vadd.f32 %v4416, %v5337
        %v5339 = vpop.f32.mrb[0].mxu0
        %v5340 = vadd.f32 %v4420, %v5339
        %5341 = vmatprep.mubr.bf16.mxu0 %v4264
        %5342 = vmatmul.mubr.bf16.gmra.mrb[0].mxu0 %v4263
        %v5343 = vpop.f32.mrb[0].mxu0
        %v5344 = vadd.f32 %v4416, %v5343
        %v5345 = vpop.f32.mrb[0].mxu0
        %v5346 = vadd.f32 %v4420, %v5345
        %v5347 = vpop.f32.mrb[0].mxu0
        %v5348 = vadd.f32 %v4416, %v5347
        %v5349 = vpop.f32.mrb[0].mxu0
        %v5350 = vadd.f32 %v4420, %v5349
        %5351 = vmatprep.mubr.bf16.mxu0 %v4266
        %5352 = vmatmul.mubr.bf16.gmra.mrb[0].mxu0 %v4265
        %v5353 = vpop.f32.mrb[0].mxu0
        %v5354 = vadd.f32 %v4416, %v5353
        %v5355 = vpop.f32.mrb[0].mxu0
        %v5356 = vadd.f32 %v4420, %v5355
        %v5357 = vpop.f32.mrb[0].mxu0
        %v5358 = vadd.f32 %v4416, %v5357
        %v5359 = vpop.f32.mrb[0].mxu0
        %v5360 = vadd.f32 %v4420, %v5359
        %5361 = vmatprep.mubr.bf16.mxu0 %v4268
        %5362 = vmatmul.mubr.bf16.gmra.mrb[0].mxu0 %v4267
        %v5363 = vpop.f32.mrb[0].mxu0
        %v5364 = vadd.f32 %v4416, %v5363
        %v5365 = vpop.f32.mrb[0].mxu0
        %v5366 = vadd.f32 %v4420, %v5365
        %v5367 = vpop.f32.mrb[0].mxu0
        %v5368 = vadd.f32 %v4416, %v5367
        %v5369 = vpop.f32.mrb[0].mxu0
        %v5370 = vadd.f32 %v4420, %v5369
        %5371 = vmatprep.mubr.bf16.mxu0 %v4270
        %5372 = vmatmul.mubr.bf16.gmra.mrb[0].mxu0 %v4269
        %v5373 = vpop.f32.mrb[0].mxu0
        %v5374 = vadd.f32 %v4416, %v5373
        %v5375 = vpop.f32.mrb[0].mxu0
        %v5376 = vadd.f32 %v4420, %v5375
        %v5377 = vpop.f32.mrb[0].mxu0
        %v5378 = vadd.f32 %v4416, %v5377
        %v5379 = vpop.f32.mrb[0].mxu0
        %v5380 = vadd.f32 %v4420, %v5379
        %5381 = vmatprep.mubr.bf16.mxu0 %v4272
        %5382 = vmatmul.mubr.bf16.gmra.mrb[0].mxu0 %v4271
        %v5383 = vpop.f32.mrb[0].mxu0
        %v5384 = vadd.f32 %v4416, %v5383
        %v5385 = vpop.f32.mrb[0].mxu0
        %v5386 = vadd.f32 %v4420, %v5385
        %v5387 = vpop.f32.mrb[0].mxu0
        %v5388 = vadd.f32 %v4416, %v5387
        %v5389 = vpop.f32.mrb[0].mxu0
        %v5390 = vadd.f32 %v4420, %v5389
        %5391 = vmatprep.mubr.bf16.mxu0 %v4274
        %5392 = vmatmul.mubr.bf16.gmra.mrb[0].mxu0 %v4273
        %v5393 = vpop.f32.mrb[0].mxu0
        %v5394 = vadd.f32 %v4416, %v5393
        %v5395 = vpop.f32.mrb[0].mxu0
        %v5396 = vadd.f32 %v4420, %v5395
        %v5397 = vpop.f32.mrb[0].mxu0
        %v5398 = vadd.f32 %v4416, %v5397
        %v5399 = vpop.f32.mrb[0].mxu0
        %v5400 = vadd.f32 %v4420, %v5399
        %5401 = vdwg.mxu0
        %5402 = vmatprep.subr.bf16.mxu0 %v4797
        %5403 = vmatpush1.bf16.msra.mxu0 %v4796
        %5404 = vmatprep.subr.bf16.mxu0 %v4804
        %5405 = vmatpush1.bf16.msra.mxu0 %v4803
        %5406 = vmatprep.subr.bf16.mxu0 %v4811
        %5407 = vmatpush1.bf16.msra.mxu0 %v4810
        %5408 = vmatprep.subr.bf16.mxu0 %v4818
        %5409 = vmatpush1.bf16.msra.mxu0 %v4817
        %5410 = vmatprep.subr.bf16.mxu0 %v4825
        %5411 = vmatpush1.bf16.msra.mxu0 %v4824
        %5412 = vmatprep.subr.bf16.mxu0 %v4832
        %5413 = vmatpush1.bf16.msra.mxu0 %v4831
        %5414 = vmatprep.subr.bf16.mxu0 %v4839
        %5415 = vmatpush1.bf16.msra.mxu0 %v4838
        %5416 = vmatprep.subr.bf16.mxu0 %v4846
        %5417 = vmatpush1.bf16.msra.mxu0 %v4845
        %5418 = vmatprep.subr.bf16.mxu0 %v4853
        %5419 = vmatpush1.bf16.msra.mxu0 %v4852
        %5420 = vmatprep.subr.bf16.mxu0 %v4860
        %5421 = vmatpush1.bf16.msra.mxu0 %v4859
        %5422 = vmatprep.subr.bf16.mxu0 %v4867
        %5423 = vmatpush1.bf16.msra.mxu0 %v4866
        %5424 = vmatprep.subr.bf16.mxu0 %v4874
        %5425 = vmatpush1.bf16.msra.mxu0 %v4873
        %5426 = vmatprep.subr.bf16.mxu0 %v4881
        %5427 = vmatpush1.bf16.msra.mxu0 %v4880
        %5428 = vmatprep.subr.bf16.mxu0 %v4888
        %5429 = vmatpush1.bf16.msra.mxu0 %v4887
        %5430 = vmatprep.subr.bf16.mxu0 %v4895
        %5431 = vmatpush1.bf16.msra.mxu0 %v4894
        %5432 = vmatprep.subr.bf16.mxu0 %v4902
        %5433 = vmatpush1.bf16.msra.mxu0 %v4901
        %5434 = vmatprep.mubr.bf16.mxu0 %v4244
        %5435 = vmatmul.mubr.bf16.gmra.mrb[0].mxu0 %v4243
        %v5436 = vpop.f32.mrb[0].mxu0
        %v5437 = vadd.f32 %v4424, %v5436
        %v5438 = vpop.f32.mrb[0].mxu0
        %v5439 = vadd.f32 %v4428, %v5438
        %v5440 = vpop.f32.mrb[0].mxu0
        %v5441 = vadd.f32 %v4424, %v5440
        %v5442 = vpop.f32.mrb[0].mxu0
        %v5443 = vadd.f32 %v4428, %v5442
        %5444 = vmatprep.mubr.bf16.mxu0 %v4246
        %5445 = vmatmul.mubr.bf16.gmra.mrb[0].mxu0 %v4245
        %v5446 = vpop.f32.mrb[0].mxu0
        %v5447 = vadd.f32 %v4424, %v5446
        %v5448 = vpop.f32.mrb[0].mxu0
        %v5449 = vadd.f32 %v4428, %v5448
        %v5450 = vpop.f32.mrb[0].mxu0
        %v5451 = vadd.f32 %v4424, %v5450
        %v5452 = vpop.f32.mrb[0].mxu0
        %v5453 = vadd.f32 %v4428, %v5452
        %5454 = vmatprep.mubr.bf16.mxu0 %v4248
        %5455 = vmatmul.mubr.bf16.gmra.mrb[0].mxu0 %v4247
        %v5456 = vpop.f32.mrb[0].mxu0
        %v5457 = vadd.f32 %v4424, %v5456
        %v5458 = vpop.f32.mrb[0].mxu0
        %v5459 = vadd.f32 %v4428, %v5458
        %v5460 = vpop.f32.mrb[0].mxu0
        %v5461 = vadd.f32 %v4424, %v5460
        %v5462 = vpop.f32.mrb[0].mxu0
        %v5463 = vadd.f32 %v4428, %v5462
        %5464 = vmatprep.mubr.bf16.mxu0 %v4250
        %5465 = vmatmul.mubr.bf16.gmra.mrb[0].mxu0 %v4249
        %v5466 = vpop.f32.mrb[0].mxu0
        %v5467 = vadd.f32 %v4424, %v5466
        %v5468 = vpop.f32.mrb[0].mxu0
        %v5469 = vadd.f32 %v4428, %v5468
        %v5470 = vpop.f32.mrb[0].mxu0
        %v5471 = vadd.f32 %v4424, %v5470
        %v5472 = vpop.f32.mrb[0].mxu0
        %v5473 = vadd.f32 %v4428, %v5472
        %5474 = vmatprep.mubr.bf16.mxu0 %v4252
        %5475 = vmatmul.mubr.bf16.gmra.mrb[0].mxu0 %v4251
        %v5476 = vpop.f32.mrb[0].mxu0
        %v5477 = vadd.f32 %v4424, %v5476
        %v5478 = vpop.f32.mrb[0].mxu0
        %v5479 = vadd.f32 %v4428, %v5478
        %v5480 = vpop.f32.mrb[0].mxu0
        %v5481 = vadd.f32 %v4424, %v5480
        %v5482 = vpop.f32.mrb[0].mxu0
        %v5483 = vadd.f32 %v4428, %v5482
        %5484 = vmatprep.mubr.bf16.mxu0 %v4254
        %5485 = vmatmul.mubr.bf16.gmra.mrb[0].mxu0 %v4253
        %v5486 = vpop.f32.mrb[0].mxu0
        %v5487 = vadd.f32 %v4424, %v5486
        %v5488 = vpop.f32.mrb[0].mxu0
        %v5489 = vadd.f32 %v4428, %v5488
        %v5490 = vpop.f32.mrb[0].mxu0
        %v5491 = vadd.f32 %v4424, %v5490
        %v5492 = vpop.f32.mrb[0].mxu0
        %v5493 = vadd.f32 %v4428, %v5492
        %5494 = vmatprep.mubr.bf16.mxu0 %v4256
        %5495 = vmatmul.mubr.bf16.gmra.mrb[0].mxu0 %v4255
        %v5496 = vpop.f32.mrb[0].mxu0
        %v5497 = vadd.f32 %v4424, %v5496
        %v5498 = vpop.f32.mrb[0].mxu0
        %v5499 = vadd.f32 %v4428, %v5498
        %v5500 = vpop.f32.mrb[0].mxu0
        %v5501 = vadd.f32 %v4424, %v5500
        %v5502 = vpop.f32.mrb[0].mxu0
        %v5503 = vadd.f32 %v4428, %v5502
        %5504 = vmatprep.mubr.bf16.mxu0 %v4258
        %5505 = vmatmul.mubr.bf16.gmra.mrb[0].mxu0 %v4257
        %v5506 = vpop.f32.mrb[0].mxu0
        %v5507 = vadd.f32 %v4424, %v5506
        %v5508 = vpop.f32.mrb[0].mxu0
        %v5509 = vadd.f32 %v4428, %v5508
        %v5510 = vpop.f32.mrb[0].mxu0
        %v5511 = vadd.f32 %v4424, %v5510
        %v5512 = vpop.f32.mrb[0].mxu0
        %v5513 = vadd.f32 %v4428, %v5512
        %5514 = vmatprep.mubr.bf16.mxu0 %v4260
        %5515 = vmatmul.mubr.bf16.gmra.mrb[0].mxu0 %v4259
        %v5516 = vpop.f32.mrb[0].mxu0
        %v5517 = vadd.f32 %v4424, %v5516
        %v5518 = vpop.f32.mrb[0].mxu0
        %v5519 = vadd.f32 %v4428, %v5518
        %v5520 = vpop.f32.mrb[0].mxu0
        %v5521 = vadd.f32 %v4424, %v5520
        %v5522 = vpop.f32.mrb[0].mxu0
        %v5523 = vadd.f32 %v4428, %v5522
        %5524 = vmatprep.mubr.bf16.mxu0 %v4262
        %5525 = vmatmul.mubr.bf16.gmra.mrb[0].mxu0 %v4261
        %v5526 = vpop.f32.mrb[0].mxu0
        %v5527 = vadd.f32 %v4424, %v5526
        %v5528 = vpop.f32.mrb[0].mxu0
        %v5529 = vadd.f32 %v4428, %v5528
        %v5530 = vpop.f32.mrb[0].mxu0
        %v5531 = vadd.f32 %v4424, %v5530
        %v5532 = vpop.f32.mrb[0].mxu0
        %v5533 = vadd.f32 %v4428, %v5532
        %5534 = vmatprep.mubr.bf16.mxu0 %v4264
        %5535 = vmatmul.mubr.bf16.gmra.mrb[0].mxu0 %v4263
        %v5536 = vpop.f32.mrb[0].mxu0
        %v5537 = vadd.f32 %v4424, %v5536
        %v5538 = vpop.f32.mrb[0].mxu0
        %v5539 = vadd.f32 %v4428, %v5538
        %v5540 = vpop.f32.mrb[0].mxu0
        %v5541 = vadd.f32 %v4424, %v5540
        %v5542 = vpop.f32.mrb[0].mxu0
        %v5543 = vadd.f32 %v4428, %v5542
        %5544 = vmatprep.mubr.bf16.mxu0 %v4266
        %5545 = vmatmul.mubr.bf16.gmra.mrb[0].mxu0 %v4265
        %v5546 = vpop.f32.mrb[0].mxu0
        %v5547 = vadd.f32 %v4424, %v5546
        %v5548 = vpop.f32.mrb[0].mxu0
        %v5549 = vadd.f32 %v4428, %v5548
        %v5550 = vpop.f32.mrb[0].mxu0
        %v5551 = vadd.f32 %v4424, %v5550
        %v5552 = vpop.f32.mrb[0].mxu0
        %v5553 = vadd.f32 %v4428, %v5552
        %5554 = vmatprep.mubr.bf16.mxu0 %v4268
        %5555 = vmatmul.mubr.bf16.gmra.mrb[0].mxu0 %v4267
        %v5556 = vpop.f32.mrb[0].mxu0
        %v5557 = vadd.f32 %v4424, %v5556
        %v5558 = vpop.f32.mrb[0].mxu0
        %v5559 = vadd.f32 %v4428, %v5558
        %v5560 = vpop.f32.mrb[0].mxu0
        %v5561 = vadd.f32 %v4424, %v5560
        %v5562 = vpop.f32.mrb[0].mxu0
        %v5563 = vadd.f32 %v4428, %v5562
        %5564 = vmatprep.mubr.bf16.mxu0 %v4270
        %5565 = vmatmul.mubr.bf16.gmra.mrb[0].mxu0 %v4269
        %v5566 = vpop.f32.mrb[0].mxu0
        %v5567 = vadd.f32 %v4424, %v5566
        %v5568 = vpop.f32.mrb[0].mxu0
        %v5569 = vadd.f32 %v4428, %v5568
        %v5570 = vpop.f32.mrb[0].mxu0
        %v5571 = vadd.f32 %v4424, %v5570
        %v5572 = vpop.f32.mrb[0].mxu0
        %v5573 = vadd.f32 %v4428, %v5572
        %5574 = vmatprep.mubr.bf16.mxu0 %v4272
        %5575 = vmatmul.mubr.bf16.gmra.mrb[0].mxu0 %v4271
        %v5576 = vpop.f32.mrb[0].mxu0
        %v5577 = vadd.f32 %v4424, %v5576
        %v5578 = vpop.f32.mrb[0].mxu0
        %v5579 = vadd.f32 %v4428, %v5578
        %v5580 = vpop.f32.mrb[0].mxu0
        %v5581 = vadd.f32 %v4424, %v5580
        %v5582 = vpop.f32.mrb[0].mxu0
        %v5583 = vadd.f32 %v4428, %v5582
        %5584 = vmatprep.mubr.bf16.mxu0 %v4274
        %5585 = vmatmul.mubr.bf16.gmra.mrb[0].mxu0 %v4273
        %v5586 = vpop.f32.mrb[0].mxu0
        %v5587 = vadd.f32 %v4424, %v5586
        %v5588 = vpop.f32.mrb[0].mxu0
        %v5589 = vadd.f32 %v4428, %v5588
        %v5590 = vpop.f32.mrb[0].mxu0
        %v5591 = vadd.f32 %v4424, %v5590
        %v5592 = vpop.f32.mrb[0].mxu0
        %v5593 = vadd.f32 %v4428, %v5592
        %5594 = vdwg.mxu0
        %5595 = vmatprep.subr.bf16.mxu0 0
        %5596 = vmatpush1.bf16.msra.mxu0 %v4798
        %5597 = vmatprep.subr.bf16.mxu0 0
        %5598 = vmatpush1.bf16.msra.mxu0 %v4805
        %5599 = vmatprep.subr.bf16.mxu0 0
        %5600 = vmatpush1.bf16.msra.mxu0 %v4812
        %5601 = vmatprep.subr.bf16.mxu0 0
        %5602 = vmatpush1.bf16.msra.mxu0 %v4819
        %5603 = vmatprep.subr.bf16.mxu0 0
        %5604 = vmatpush1.bf16.msra.mxu0 %v4826
        %5605 = vmatprep.subr.bf16.mxu0 0
        %5606 = vmatpush1.bf16.msra.mxu0 %v4833
        %5607 = vmatprep.subr.bf16.mxu0 0
        %5608 = vmatpush1.bf16.msra.mxu0 %v4840
        %5609 = vmatprep.subr.bf16.mxu0 0
        %5610 = vmatpush1.bf16.msra.mxu0 %v4847
        %5611 = vmatprep.subr.bf16.mxu0 0
        %5612 = vmatpush1.bf16.msra.mxu0 %v4854
        %5613 = vmatprep.subr.bf16.mxu0 0
        %5614 = vmatpush1.bf16.msra.mxu0 %v4861
        %5615 = vmatprep.subr.bf16.mxu0 0
        %5616 = vmatpush1.bf16.msra.mxu0 %v4868
        %5617 = vmatprep.subr.bf16.mxu0 0
        %5618 = vmatpush1.bf16.msra.mxu0 %v4875
        %5619 = vmatprep.subr.bf16.mxu0 0
        %5620 = vmatpush1.bf16.msra.mxu0 %v4882
        %5621 = vmatprep.subr.bf16.mxu0 0
        %5622 = vmatpush1.bf16.msra.mxu0 %v4889
        %5623 = vmatprep.subr.bf16.mxu0 0
        %5624 = vmatpush1.bf16.msra.mxu0 %v4896
        %5625 = vmatprep.subr.bf16.mxu0 0
        %5626 = vmatpush1.bf16.msra.mxu0 %v4903
        %5627 = vmatprep.mubr.bf16.mxu0 %v4244
        %5628 = vmatmul.mubr.bf16.gmra.mrb[0].mxu0 %v4243
        %v5629 = vpop.f32.mrb[0].mxu0
        %v5630 = vadd.f32 %v4432, %v5629
        %v5631 = vpop.f32.mrb[0].mxu0
        %v5632 = vpop.f32.mrb[0].mxu0
        %v5633 = vadd.f32 %v4432, %v5632
        %v5634 = vpop.f32.mrb[0].mxu0
        %5635 = vmatprep.mubr.bf16.mxu0 %v4246
        %5636 = vmatmul.mubr.bf16.gmra.mrb[0].mxu0 %v4245
        %v5637 = vpop.f32.mrb[0].mxu0
        %v5638 = vadd.f32 %v4432, %v5637
        %v5639 = vpop.f32.mrb[0].mxu0
        %v5640 = vpop.f32.mrb[0].mxu0
        %v5641 = vadd.f32 %v4432, %v5640
        %v5642 = vpop.f32.mrb[0].mxu0
        %5643 = vmatprep.mubr.bf16.mxu0 %v4248
        %5644 = vmatmul.mubr.bf16.gmra.mrb[0].mxu0 %v4247
        %v5645 = vpop.f32.mrb[0].mxu0
        %v5646 = vadd.f32 %v4432, %v5645
        %v5647 = vpop.f32.mrb[0].mxu0
        %v5648 = vpop.f32.mrb[0].mxu0
        %v5649 = vadd.f32 %v4432, %v5648
        %v5650 = vpop.f32.mrb[0].mxu0
        %5651 = vmatprep.mubr.bf16.mxu0 %v4250
        %5652 = vmatmul.mubr.bf16.gmra.mrb[0].mxu0 %v4249
        %v5653 = vpop.f32.mrb[0].mxu0
        %v5654 = vadd.f32 %v4432, %v5653
        %v5655 = vpop.f32.mrb[0].mxu0
        %v5656 = vpop.f32.mrb[0].mxu0
        %v5657 = vadd.f32 %v4432, %v5656
        %v5658 = vpop.f32.mrb[0].mxu0
        %5659 = vmatprep.mubr.bf16.mxu0 %v4252
        %5660 = vmatmul.mubr.bf16.gmra.mrb[0].mxu0 %v4251
        %v5661 = vpop.f32.mrb[0].mxu0
        %v5662 = vadd.f32 %v4432, %v5661
        %v5663 = vpop.f32.mrb[0].mxu0
        %v5664 = vpop.f32.mrb[0].mxu0
        %v5665 = vadd.f32 %v4432, %v5664
        %v5666 = vpop.f32.mrb[0].mxu0
        %5667 = vmatprep.mubr.bf16.mxu0 %v4254
        %5668 = vmatmul.mubr.bf16.gmra.mrb[0].mxu0 %v4253
        %v5669 = vpop.f32.mrb[0].mxu0
        %v5670 = vadd.f32 %v4432, %v5669
        %v5671 = vpop.f32.mrb[0].mxu0
        %v5672 = vpop.f32.mrb[0].mxu0
        %v5673 = vadd.f32 %v4432, %v5672
        %v5674 = vpop.f32.mrb[0].mxu0
        %5675 = vmatprep.mubr.bf16.mxu0 %v4256
        %5676 = vmatmul.mubr.bf16.gmra.mrb[0].mxu0 %v4255
        %v5677 = vpop.f32.mrb[0].mxu0
        %v5678 = vadd.f32 %v4432, %v5677
        %v5679 = vpop.f32.mrb[0].mxu0
        %v5680 = vpop.f32.mrb[0].mxu0
        %v5681 = vadd.f32 %v4432, %v5680
        %v5682 = vpop.f32.mrb[0].mxu0
        %5683 = vmatprep.mubr.bf16.mxu0 %v4258
        %5684 = vmatmul.mubr.bf16.gmra.mrb[0].mxu0 %v4257
        %v5685 = vpop.f32.mrb[0].mxu0
        %v5686 = vadd.f32 %v4432, %v5685
        %v5687 = vpop.f32.mrb[0].mxu0
        %v5688 = vpop.f32.mrb[0].mxu0
        %v5689 = vadd.f32 %v4432, %v5688
        %v5690 = vpop.f32.mrb[0].mxu0
        %5691 = vmatprep.mubr.bf16.mxu0 %v4260
        %5692 = vmatmul.mubr.bf16.gmra.mrb[0].mxu0 %v4259
        %v5693 = vpop.f32.mrb[0].mxu0
        %v5694 = vadd.f32 %v4432, %v5693
        %v5695 = vpop.f32.mrb[0].mxu0
        %v5696 = vpop.f32.mrb[0].mxu0
        %v5697 = vadd.f32 %v4432, %v5696
        %v5698 = vpop.f32.mrb[0].mxu0
        %5699 = vmatprep.mubr.bf16.mxu0 %v4262
        %5700 = vmatmul.mubr.bf16.gmra.mrb[0].mxu0 %v4261
        %v5701 = vpop.f32.mrb[0].mxu0
        %v5702 = vadd.f32 %v4432, %v5701
        %v5703 = vpop.f32.mrb[0].mxu0
        %v5704 = vpop.f32.mrb[0].mxu0
        %v5705 = vadd.f32 %v4432, %v5704
        %v5706 = vpop.f32.mrb[0].mxu0
        %5707 = vmatprep.mubr.bf16.mxu0 %v4264
        %5708 = vmatmul.mubr.bf16.gmra.mrb[0].mxu0 %v4263
        %v5709 = vpop.f32.mrb[0].mxu0
        %v5710 = vadd.f32 %v4432, %v5709
        %v5711 = vpop.f32.mrb[0].mxu0
        %v5712 = vpop.f32.mrb[0].mxu0
        %v5713 = vadd.f32 %v4432, %v5712
        %v5714 = vpop.f32.mrb[0].mxu0
        %5715 = vmatprep.mubr.bf16.mxu0 %v4266
        %5716 = vmatmul.mubr.bf16.gmra.mrb[0].mxu0 %v4265
        %v5717 = vpop.f32.mrb[0].mxu0
        %v5718 = vadd.f32 %v4432, %v5717
        %v5719 = vpop.f32.mrb[0].mxu0
        %v5720 = vpop.f32.mrb[0].mxu0
        %v5721 = vadd.f32 %v4432, %v5720
        %v5722 = vpop.f32.mrb[0].mxu0
        %5723 = vmatprep.mubr.bf16.mxu0 %v4268
        %5724 = vmatmul.mubr.bf16.gmra.mrb[0].mxu0 %v4267
        %v5725 = vpop.f32.mrb[0].mxu0
        %v5726 = vadd.f32 %v4432, %v5725
        %v5727 = vpop.f32.mrb[0].mxu0
        %v5728 = vpop.f32.mrb[0].mxu0
        %v5729 = vadd.f32 %v4432, %v5728
        %v5730 = vpop.f32.mrb[0].mxu0
        %5731 = vmatprep.mubr.bf16.mxu0 %v4270
        %5732 = vmatmul.mubr.bf16.gmra.mrb[0].mxu0 %v4269
        %v5733 = vpop.f32.mrb[0].mxu0
        %v5734 = vadd.f32 %v4432, %v5733
        %v5735 = vpop.f32.mrb[0].mxu0
        %v5736 = vpop.f32.mrb[0].mxu0
        %v5737 = vadd.f32 %v4432, %v5736
        %v5738 = vpop.f32.mrb[0].mxu0
        %5739 = vmatprep.mubr.bf16.mxu0 %v4272
        %5740 = vmatmul.mubr.bf16.gmra.mrb[0].mxu0 %v4271
        %v5741 = vpop.f32.mrb[0].mxu0
        %v5742 = vadd.f32 %v4432, %v5741
        %v5743 = vpop.f32.mrb[0].mxu0
        %v5744 = vpop.f32.mrb[0].mxu0
        %v5745 = vadd.f32 %v4432, %v5744
        %v5746 = vpop.f32.mrb[0].mxu0
        %5747 = vmatprep.mubr.bf16.mxu0 %v4274
        %5748 = vmatmul.mubr.bf16.gmra.mrb[0].mxu0 %v4273
        %v5749 = vpop.f32.mrb[0].mxu0
        %v5750 = vadd.f32 %v4432, %v5749
        %v5751 = vpop.f32.mrb[0].mxu0
        %v5752 = vpop.f32.mrb[0].mxu0
        %v5753 = vadd.f32 %v4432, %v5752
        %v5754 = vpop.f32.mrb[0].mxu0
        %5755 = vdwg.mxu0
        %v5756 = vsub.f32 0.0, %v5051
        %v5757 = vsub.f32 0.0, %v5053
        %v5758 = vsub.f32 0.0, %v5244
        %v5759 = vsub.f32 0.0, %v5246
        %v5760 = vsub.f32 0.0, %v5437
        %v5761 = vsub.f32 0.0, %v5439
        %v5762 = vsub.f32 0.0, %v5630
        %v5763 = vsub.f32 0.0, %v5055
        %v5764 = vsub.f32 0.0, %v5057
        %v5765 = vsub.f32 0.0, %v5248
        %v5766 = vsub.f32 0.0, %v5250
        %v5767 = vsub.f32 0.0, %v5441
        %v5768 = vsub.f32 0.0, %v5443
        %v5769 = vsub.f32 0.0, %v5633
        %v5770 = vsub.f32 0.0, %v5061
        %v5771 = vsub.f32 0.0, %v5063
        %v5772 = vsub.f32 0.0, %v5254
        %v5773 = vsub.f32 0.0, %v5256
        %v5774 = vsub.f32 0.0, %v5447
        %v5775 = vsub.f32 0.0, %v5449
        %v5776 = vsub.f32 0.0, %v5638
        %v5777 = vsub.f32 0.0, %v5065
        %v5778 = vsub.f32 0.0, %v5067
        %v5779 = vsub.f32 0.0, %v5258
        %v5780 = vsub.f32 0.0, %v5260
        %v5781 = vsub.f32 0.0, %v5451
        %v5782 = vsub.f32 0.0, %v5453
        %v5783 = vsub.f32 0.0, %v5641
        %v5784 = vsub.f32 0.0, %v5071
        %v5785 = vsub.f32 0.0, %v5073
        %v5786 = vsub.f32 0.0, %v5264
        %v5787 = vsub.f32 0.0, %v5266
        %v5788 = vsub.f32 0.0, %v5457
        %v5789 = vsub.f32 0.0, %v5459
        %v5790 = vsub.f32 0.0, %v5646
        %v5791 = vsub.f32 0.0, %v5075
        %v5792 = vsub.f32 0.0, %v5077
        %v5793 = vsub.f32 0.0, %v5268
        %v5794 = vsub.f32 0.0, %v5270
        %v5795 = vsub.f32 0.0, %v5461
        %v5796 = vsub.f32 0.0, %v5463
        %v5797 = vsub.f32 0.0, %v5649
        %v5798 = vsub.f32 0.0, %v5081
        %v5799 = vsub.f32 0.0, %v5083
        %v5800 = vsub.f32 0.0, %v5274
        %v5801 = vsub.f32 0.0, %v5276
        %v5802 = vsub.f32 0.0, %v5467
        %v5803 = vsub.f32 0.0, %v5469
        %v5804 = vsub.f32 0.0, %v5654
        %v5805 = vsub.f32 0.0, %v5085
        %v5806 = vsub.f32 0.0, %v5087
        %v5807 = vsub.f32 0.0, %v5278
        %v5808 = vsub.f32 0.0, %v5280
        %v5809 = vsub.f32 0.0, %v5471
        %v5810 = vsub.f32 0.0, %v5473
        %v5811 = vsub.f32 0.0, %v5657
        %v5812 = vsub.f32 0.0, %v5091
        %v5813 = vsub.f32 0.0, %v5093
        %v5814 = vsub.f32 0.0, %v5284
        %v5815 = vsub.f32 0.0, %v5286
        %v5816 = vsub.f32 0.0, %v5477
        %v5817 = vsub.f32 0.0, %v5479
        %v5818 = vsub.f32 0.0, %v5662
        %v5819 = vsub.f32 0.0, %v5095
        %v5820 = vsub.f32 0.0, %v5097
        %v5821 = vsub.f32 0.0, %v5288
        %v5822 = vsub.f32 0.0, %v5290
        %v5823 = vsub.f32 0.0, %v5481
        %v5824 = vsub.f32 0.0, %v5483
        %v5825 = vsub.f32 0.0, %v5665
        %v5826 = vsub.f32 0.0, %v5101
        %v5827 = vsub.f32 0.0, %v5103
        %v5828 = vsub.f32 0.0, %v5294
        %v5829 = vsub.f32 0.0, %v5296
        %v5830 = vsub.f32 0.0, %v5487
        %v5831 = vsub.f32 0.0, %v5489
        %v5832 = vsub.f32 0.0, %v5670
        %v5833 = vsub.f32 0.0, %v5105
        %v5834 = vsub.f32 0.0, %v5107
        %v5835 = vsub.f32 0.0, %v5298
        %v5836 = vsub.f32 0.0, %v5300
        %v5837 = vsub.f32 0.0, %v5491
        %v5838 = vsub.f32 0.0, %v5493
        %v5839 = vsub.f32 0.0, %v5673
        %v5840 = vsub.f32 0.0, %v5111
        %v5841 = vsub.f32 0.0, %v5113
        %v5842 = vsub.f32 0.0, %v5304
        %v5843 = vsub.f32 0.0, %v5306
        %v5844 = vsub.f32 0.0, %v5497
        %v5845 = vsub.f32 0.0, %v5499
        %v5846 = vsub.f32 0.0, %v5678
        %v5847 = vsub.f32 0.0, %v5115
        %v5848 = vsub.f32 0.0, %v5117
        %v5849 = vsub.f32 0.0, %v5308
        %v5850 = vsub.f32 0.0, %v5310
        %v5851 = vsub.f32 0.0, %v5501
        %v5852 = vsub.f32 0.0, %v5503
        %v5853 = vsub.f32 0.0, %v5681
        %v5854 = vsub.f32 0.0, %v5121
        %v5855 = vsub.f32 0.0, %v5123
        %v5856 = vsub.f32 0.0, %v5314
        %v5857 = vsub.f32 0.0, %v5316
        %v5858 = vsub.f32 0.0, %v5507
        %v5859 = vsub.f32 0.0, %v5509
        %v5860 = vsub.f32 0.0, %v5686
        %v5861 = vsub.f32 0.0, %v5125
        %v5862 = vsub.f32 0.0, %v5127
        %v5863 = vsub.f32 0.0, %v5318
        %v5864 = vsub.f32 0.0, %v5320
        %v5865 = vsub.f32 0.0, %v5511
        %v5866 = vsub.f32 0.0, %v5513
        %v5867 = vsub.f32 0.0, %v5689
        %v5868 = vsub.f32 0.0, %v5131
        %v5869 = vsub.f32 0.0, %v5133
        %v5870 = vsub.f32 0.0, %v5324
        %v5871 = vsub.f32 0.0, %v5326
        %v5872 = vsub.f32 0.0, %v5517
        %v5873 = vsub.f32 0.0, %v5519
        %v5874 = vsub.f32 0.0, %v5694
        %v5875 = vsub.f32 0.0, %v5135
        %v5876 = vsub.f32 0.0, %v5137
        %v5877 = vsub.f32 0.0, %v5328
        %v5878 = vsub.f32 0.0, %v5330
        %v5879 = vsub.f32 0.0, %v5521
        %v5880 = vsub.f32 0.0, %v5523
        %v5881 = vsub.f32 0.0, %v5697
        %v5882 = vsub.f32 0.0, %v5141
        %v5883 = vsub.f32 0.0, %v5143
        %v5884 = vsub.f32 0.0, %v5334
        %v5885 = vsub.f32 0.0, %v5336
        %v5886 = vsub.f32 0.0, %v5527
        %v5887 = vsub.f32 0.0, %v5529
        %v5888 = vsub.f32 0.0, %v5702
        %v5889 = vsub.f32 0.0, %v5145
        %v5890 = vsub.f32 0.0, %v5147
        %v5891 = vsub.f32 0.0, %v5338
        %v5892 = vsub.f32 0.0, %v5340
        %v5893 = vsub.f32 0.0, %v5531
        %v5894 = vsub.f32 0.0, %v5533
        %v5895 = vsub.f32 0.0, %v5705
        %v5896 = vsub.f32 0.0, %v5151
        %v5897 = vsub.f32 0.0, %v5153
        %v5898 = vsub.f32 0.0, %v5344
        %v5899 = vsub.f32 0.0, %v5346
        %v5900 = vsub.f32 0.0, %v5537
        %v5901 = vsub.f32 0.0, %v5539
        %v5902 = vsub.f32 0.0, %v5710
        %v5903 = vsub.f32 0.0, %v5155
        %v5904 = vsub.f32 0.0, %v5157
        %v5905 = vsub.f32 0.0, %v5348
        %v5906 = vsub.f32 0.0, %v5350
        %v5907 = vsub.f32 0.0, %v5541
        %v5908 = vsub.f32 0.0, %v5543
        %v5909 = vsub.f32 0.0, %v5713
        %v5910 = vsub.f32 0.0, %v5161
        %v5911 = vsub.f32 0.0, %v5163
        %v5912 = vsub.f32 0.0, %v5354
        %v5913 = vsub.f32 0.0, %v5356
        %v5914 = vsub.f32 0.0, %v5547
        %v5915 = vsub.f32 0.0, %v5549
        %v5916 = vsub.f32 0.0, %v5718
        %v5917 = vsub.f32 0.0, %v5165
        %v5918 = vsub.f32 0.0, %v5167
        %v5919 = vsub.f32 0.0, %v5358
        %v5920 = vsub.f32 0.0, %v5360
        %v5921 = vsub.f32 0.0, %v5551
        %v5922 = vsub.f32 0.0, %v5553
        %v5923 = vsub.f32 0.0, %v5721
        %v5924 = vsub.f32 0.0, %v5171
        %v5925 = vsub.f32 0.0, %v5173
        %v5926 = vsub.f32 0.0, %v5364
        %v5927 = vsub.f32 0.0, %v5366
        %v5928 = vsub.f32 0.0, %v5557
        %v5929 = vsub.f32 0.0, %v5559
        %v5930 = vsub.f32 0.0, %v5726
        %v5931 = vsub.f32 0.0, %v5175
        %v5932 = vsub.f32 0.0, %v5177
        %v5933 = vsub.f32 0.0, %v5368
        %v5934 = vsub.f32 0.0, %v5370
        %v5935 = vsub.f32 0.0, %v5561
        %v5936 = vsub.f32 0.0, %v5563
        %v5937 = vsub.f32 0.0, %v5729
        %v5938 = vsub.f32 0.0, %v5181
        %v5939 = vsub.f32 0.0, %v5183
        %v5940 = vsub.f32 0.0, %v5374
        %v5941 = vsub.f32 0.0, %v5376
        %v5942 = vsub.f32 0.0, %v5567
        %v5943 = vsub.f32 0.0, %v5569
        %v5944 = vsub.f32 0.0, %v5734
        %v5945 = vsub.f32 0.0, %v5185
        %v5946 = vsub.f32 0.0, %v5187
        %v5947 = vsub.f32 0.0, %v5378
        %v5948 = vsub.f32 0.0, %v5380
        %v5949 = vsub.f32 0.0, %v5571
        %v5950 = vsub.f32 0.0, %v5573
        %v5951 = vsub.f32 0.0, %v5737
        %v5952 = vsub.f32 0.0, %v5191
        %v5953 = vsub.f32 0.0, %v5193
        %v5954 = vsub.f32 0.0, %v5384
        %v5955 = vsub.f32 0.0, %v5386
        %v5956 = vsub.f32 0.0, %v5577
        %v5957 = vsub.f32 0.0, %v5579
        %v5958 = vsub.f32 0.0, %v5742
        %v5959 = vsub.f32 0.0, %v5195
        %v5960 = vsub.f32 0.0, %v5197
        %v5961 = vsub.f32 0.0, %v5388
        %v5962 = vsub.f32 0.0, %v5390
        %v5963 = vsub.f32 0.0, %v5581
        %v5964 = vsub.f32 0.0, %v5583
        %v5965 = vsub.f32 0.0, %v5745
        %v5966 = vsub.f32 0.0, %v5201
        %v5967 = vsub.f32 0.0, %v5203
        %v5968 = vsub.f32 0.0, %v5394
        %v5969 = vsub.f32 0.0, %v5396
        %v5970 = vsub.f32 0.0, %v5587
        %v5971 = vsub.f32 0.0, %v5589
        %v5972 = vsub.f32 0.0, %v5750
        %v5973 = vsub.f32 0.0, %v5205
        %v5974 = vsub.f32 0.0, %v5207
        %v5975 = vsub.f32 0.0, %v5398
        %v5976 = vsub.f32 0.0, %v5400
        %v5977 = vsub.f32 0.0, %v5591
        %v5978 = vsub.f32 0.0, %v5593
        %v5979 = vsub.f32 0.0, %v5753
        %v5980 = vmul.f32 %v5756, 1.442695
        %v5981 = vpow.pop %v5980
        %v5982 = vmul.f32 %v5757, 1.442695
        %v5983 = vpow.pop %v5982
        %v5984 = vmul.f32 %v5758, 1.442695
        %v5985 = vpow.pop %v5984
        %v5986 = vmul.f32 %v5759, 1.442695
        %v5987 = vpow.pop %v5986
        %v5988 = vmul.f32 %v5760, 1.442695
        %v5989 = vpow.pop %v5988
        %v5990 = vmul.f32 %v5761, 1.442695
        %v5991 = vpow.pop %v5990
        %v5992 = vmul.f32 %v5762, 1.442695
        %v5993 = vpow.pop %v5992
        %v5994 = vmul.f32 %v5763, 1.442695
        %v5995 = vpow.pop %v5994
        %v5996 = vmul.f32 %v5764, 1.442695
        %v5997 = vpow.pop %v5996
        %v5998 = vmul.f32 %v5765, 1.442695
        %v5999 = vpow.pop %v5998
        %v6000 = vmul.f32 %v5766, 1.442695
        %v6001 = vpow.pop %v6000
        %v6002 = vmul.f32 %v5767, 1.442695
        %v6003 = vpow.pop %v6002
        %v6004 = vmul.f32 %v5768, 1.442695
        %v6005 = vpow.pop %v6004
        %v6006 = vmul.f32 %v5769, 1.442695
        %v6007 = vpow.pop %v6006
        %v6008 = vmul.f32 %v5770, 1.442695
        %v6009 = vpow.pop %v6008
        %v6010 = vmul.f32 %v5771, 1.442695
        %v6011 = vpow.pop %v6010
        %v6012 = vmul.f32 %v5772, 1.442695
        %v6013 = vpow.pop %v6012
        %v6014 = vmul.f32 %v5773, 1.442695
        %v6015 = vpow.pop %v6014
        %v6016 = vmul.f32 %v5774, 1.442695
        %v6017 = vpow.pop %v6016
        %v6018 = vmul.f32 %v5775, 1.442695
        %v6019 = vpow.pop %v6018
        %v6020 = vmul.f32 %v5776, 1.442695
        %v6021 = vpow.pop %v6020
        %v6022 = vmul.f32 %v5777, 1.442695
        %v6023 = vpow.pop %v6022
        %v6024 = vmul.f32 %v5778, 1.442695
        %v6025 = vpow.pop %v6024
        %v6026 = vmul.f32 %v5779, 1.442695
        %v6027 = vpow.pop %v6026
        %v6028 = vmul.f32 %v5780, 1.442695
        %v6029 = vpow.pop %v6028
        %v6030 = vmul.f32 %v5781, 1.442695
        %v6031 = vpow.pop %v6030
        %v6032 = vmul.f32 %v5782, 1.442695
        %v6033 = vpow.pop %v6032
        %v6034 = vmul.f32 %v5783, 1.442695
        %v6035 = vpow.pop %v6034
        %v6036 = vmul.f32 %v5784, 1.442695
        %v6037 = vpow.pop %v6036
        %v6038 = vmul.f32 %v5785, 1.442695
        %v6039 = vpow.pop %v6038
        %v6040 = vmul.f32 %v5786, 1.442695
        %v6041 = vpow.pop %v6040
        %v6042 = vmul.f32 %v5787, 1.442695
        %v6043 = vpow.pop %v6042
        %v6044 = vmul.f32 %v5788, 1.442695
        %v6045 = vpow.pop %v6044
        %v6046 = vmul.f32 %v5789, 1.442695
        %v6047 = vpow.pop %v6046
        %v6048 = vmul.f32 %v5790, 1.442695
        %v6049 = vpow.pop %v6048
        %v6050 = vmul.f32 %v5791, 1.442695
        %v6051 = vpow.pop %v6050
        %v6052 = vmul.f32 %v5792, 1.442695
        %v6053 = vpow.pop %v6052
        %v6054 = vmul.f32 %v5793, 1.442695
        %v6055 = vpow.pop %v6054
        %v6056 = vmul.f32 %v5794, 1.442695
        %v6057 = vpow.pop %v6056
        %v6058 = vmul.f32 %v5795, 1.442695
        %v6059 = vpow.pop %v6058
        %v6060 = vmul.f32 %v5796, 1.442695
        %v6061 = vpow.pop %v6060
        %v6062 = vmul.f32 %v5797, 1.442695
        %v6063 = vpow.pop %v6062
        %v6064 = vmul.f32 %v5798, 1.442695
        %v6065 = vpow.pop %v6064
        %v6066 = vmul.f32 %v5799, 1.442695
        %v6067 = vpow.pop %v6066
        %v6068 = vmul.f32 %v5800, 1.442695
        %v6069 = vpow.pop %v6068
        %v6070 = vmul.f32 %v5801, 1.442695
        %v6071 = vpow.pop %v6070
        %v6072 = vmul.f32 %v5802, 1.442695
        %v6073 = vpow.pop %v6072
        %v6074 = vmul.f32 %v5803, 1.442695
        %v6075 = vpow.pop %v6074
        %v6076 = vmul.f32 %v5804, 1.442695
        %v6077 = vpow.pop %v6076
        %v6078 = vmul.f32 %v5805, 1.442695
        %v6079 = vpow.pop %v6078
        %v6080 = vmul.f32 %v5806, 1.442695
        %v6081 = vpow.pop %v6080
        %v6082 = vmul.f32 %v5807, 1.442695
        %v6083 = vpow.pop %v6082
        %v6084 = vmul.f32 %v5808, 1.442695
        %v6085 = vpow.pop %v6084
        %v6086 = vmul.f32 %v5809, 1.442695
        %v6087 = vpow.pop %v6086
        %v6088 = vmul.f32 %v5810, 1.442695
        %v6089 = vpow.pop %v6088
        %v6090 = vmul.f32 %v5811, 1.442695
        %v6091 = vpow.pop %v6090
        %v6092 = vmul.f32 %v5812, 1.442695
        %v6093 = vpow.pop %v6092
        %v6094 = vmul.f32 %v5813, 1.442695
        %v6095 = vpow.pop %v6094
        %v6096 = vmul.f32 %v5814, 1.442695
        %v6097 = vpow.pop %v6096
        %v6098 = vmul.f32 %v5815, 1.442695
        %v6099 = vpow.pop %v6098
        %v6100 = vmul.f32 %v5816, 1.442695
        %v6101 = vpow.pop %v6100
        %v6102 = vmul.f32 %v5817, 1.442695
        %v6103 = vpow.pop %v6102
        %v6104 = vmul.f32 %v5818, 1.442695
        %v6105 = vpow.pop %v6104
        %v6106 = vmul.f32 %v5819, 1.442695
        %v6107 = vpow.pop %v6106
        %v6108 = vmul.f32 %v5820, 1.442695
        %v6109 = vpow.pop %v6108
        %v6110 = vmul.f32 %v5821, 1.442695
        %v6111 = vpow.pop %v6110
        %v6112 = vmul.f32 %v5822, 1.442695
        %v6113 = vpow.pop %v6112
        %v6114 = vmul.f32 %v5823, 1.442695
        %v6115 = vpow.pop %v6114
        %v6116 = vmul.f32 %v5824, 1.442695
        %v6117 = vpow.pop %v6116
        %v6118 = vmul.f32 %v5825, 1.442695
        %v6119 = vpow.pop %v6118
        %v6120 = vmul.f32 %v5826, 1.442695
        %v6121 = vpow.pop %v6120
        %v6122 = vmul.f32 %v5827, 1.442695
        %v6123 = vpow.pop %v6122
        %v6124 = vmul.f32 %v5828, 1.442695
        %v6125 = vpow.pop %v6124
        %v6126 = vmul.f32 %v5829, 1.442695
        %v6127 = vpow.pop %v6126
        %v6128 = vmul.f32 %v5830, 1.442695
        %v6129 = vpow.pop %v6128
        %v6130 = vmul.f32 %v5831, 1.442695
        %v6131 = vpow.pop %v6130
        %v6132 = vmul.f32 %v5832, 1.442695
        %v6133 = vpow.pop %v6132
        %v6134 = vmul.f32 %v5833, 1.442695
        %v6135 = vpow.pop %v6134
        %v6136 = vmul.f32 %v5834, 1.442695
        %v6137 = vpow.pop %v6136
        %v6138 = vmul.f32 %v5835, 1.442695
        %v6139 = vpow.pop %v6138
        %v6140 = vmul.f32 %v5836, 1.442695
        %v6141 = vpow.pop %v6140
        %v6142 = vmul.f32 %v5837, 1.442695
        %v6143 = vpow.pop %v6142
        %v6144 = vmul.f32 %v5838, 1.442695
        %v6145 = vpow.pop %v6144
        %v6146 = vmul.f32 %v5839, 1.442695
        %v6147 = vpow.pop %v6146
        %v6148 = vmul.f32 %v5840, 1.442695
        %v6149 = vpow.pop %v6148
        %v6150 = vmul.f32 %v5841, 1.442695
        %v6151 = vpow.pop %v6150
        %v6152 = vmul.f32 %v5842, 1.442695
        %v6153 = vpow.pop %v6152
        %v6154 = vmul.f32 %v5843, 1.442695
        %v6155 = vpow.pop %v6154
        %v6156 = vmul.f32 %v5844, 1.442695
        %v6157 = vpow.pop %v6156
        %v6158 = vmul.f32 %v5845, 1.442695
        %v6159 = vpow.pop %v6158
        %v6160 = vmul.f32 %v5846, 1.442695
        %v6161 = vpow.pop %v6160
        %v6162 = vmul.f32 %v5847, 1.442695
        %v6163 = vpow.pop %v6162
        %v6164 = vmul.f32 %v5848, 1.442695
        %v6165 = vpow.pop %v6164
        %v6166 = vmul.f32 %v5849, 1.442695
        %v6167 = vpow.pop %v6166
        %v6168 = vmul.f32 %v5850, 1.442695
        %v6169 = vpow.pop %v6168
        %v6170 = vmul.f32 %v5851, 1.442695
        %v6171 = vpow.pop %v6170
        %v6172 = vmul.f32 %v5852, 1.442695
        %v6173 = vpow.pop %v6172
        %v6174 = vmul.f32 %v5853, 1.442695
        %v6175 = vpow.pop %v6174
        %v6176 = vmul.f32 %v5854, 1.442695
        %v6177 = vpow.pop %v6176
        %v6178 = vmul.f32 %v5855, 1.442695
        %v6179 = vpow.pop %v6178
        %v6180 = vmul.f32 %v5856, 1.442695
        %v6181 = vpow.pop %v6180
        %v6182 = vmul.f32 %v5857, 1.442695
        %v6183 = vpow.pop %v6182
        %v6184 = vmul.f32 %v5858, 1.442695
        %v6185 = vpow.pop %v6184
        %v6186 = vmul.f32 %v5859, 1.442695
        %v6187 = vpow.pop %v6186
        %v6188 = vmul.f32 %v5860, 1.442695
        %v6189 = vpow.pop %v6188
        %v6190 = vmul.f32 %v5861, 1.442695
        %v6191 = vpow.pop %v6190
        %v6192 = vmul.f32 %v5862, 1.442695
        %v6193 = vpow.pop %v6192
        %v6194 = vmul.f32 %v5863, 1.442695
        %v6195 = vpow.pop %v6194
        %v6196 = vmul.f32 %v5864, 1.442695
        %v6197 = vpow.pop %v6196
        %v6198 = vmul.f32 %v5865, 1.442695
        %v6199 = vpow.pop %v6198
        %v6200 = vmul.f32 %v5866, 1.442695
        %v6201 = vpow.pop %v6200
        %v6202 = vmul.f32 %v5867, 1.442695
        %v6203 = vpow.pop %v6202
        %v6204 = vmul.f32 %v5868, 1.442695
        %v6205 = vpow.pop %v6204
        %v6206 = vmul.f32 %v5869, 1.442695
        %v6207 = vpow.pop %v6206
        %v6208 = vmul.f32 %v5870, 1.442695
        %v6209 = vpow.pop %v6208
        %v6210 = vmul.f32 %v5871, 1.442695
        %v6211 = vpow.pop %v6210
        %v6212 = vmul.f32 %v5872, 1.442695
        %v6213 = vpow.pop %v6212
        %v6214 = vmul.f32 %v5873, 1.442695
        %v6215 = vpow.pop %v6214
        %v6216 = vmul.f32 %v5874, 1.442695
        %v6217 = vpow.pop %v6216
        %v6218 = vmul.f32 %v5875, 1.442695
        %v6219 = vpow.pop %v6218
        %v6220 = vmul.f32 %v5876, 1.442695
        %v6221 = vpow.pop %v6220
        %v6222 = vmul.f32 %v5877, 1.442695
        %v6223 = vpow.pop %v6222
        %v6224 = vmul.f32 %v5878, 1.442695
        %v6225 = vpow.pop %v6224
        %v6226 = vmul.f32 %v5879, 1.442695
        %v6227 = vpow.pop %v6226
        %v6228 = vmul.f32 %v5880, 1.442695
        %v6229 = vpow.pop %v6228
        %v6230 = vmul.f32 %v5881, 1.442695
        %v6231 = vpow.pop %v6230
        %v6232 = vmul.f32 %v5882, 1.442695
        %v6233 = vpow.pop %v6232
        %v6234 = vmul.f32 %v5883, 1.442695
        %v6235 = vpow.pop %v6234
        %v6236 = vmul.f32 %v5884, 1.442695
        %v6237 = vpow.pop %v6236
        %v6238 = vmul.f32 %v5885, 1.442695
        %v6239 = vpow.pop %v6238
        %v6240 = vmul.f32 %v5886, 1.442695
        %v6241 = vpow.pop %v6240
        %v6242 = vmul.f32 %v5887, 1.442695
        %v6243 = vpow.pop %v6242
        %v6244 = vmul.f32 %v5888, 1.442695
        %v6245 = vpow.pop %v6244
        %v6246 = vmul.f32 %v5889, 1.442695
        %v6247 = vpow.pop %v6246
        %v6248 = vmul.f32 %v5890, 1.442695
        %v6249 = vpow.pop %v6248
        %v6250 = vmul.f32 %v5891, 1.442695
        %v6251 = vpow.pop %v6250
        %v6252 = vmul.f32 %v5892, 1.442695
        %v6253 = vpow.pop %v6252
        %v6254 = vmul.f32 %v5893, 1.442695
        %v6255 = vpow.pop %v6254
        %v6256 = vmul.f32 %v5894, 1.442695
        %v6257 = vpow.pop %v6256
        %v6258 = vmul.f32 %v5895, 1.442695
        %v6259 = vpow.pop %v6258
        %v6260 = vmul.f32 %v5896, 1.442695
        %v6261 = vpow.pop %v6260
        %v6262 = vmul.f32 %v5897, 1.442695
        %v6263 = vpow.pop %v6262
        %v6264 = vmul.f32 %v5898, 1.442695
        %v6265 = vpow.pop %v6264
        %v6266 = vmul.f32 %v5899, 1.442695
        %v6267 = vpow.pop %v6266
        %v6268 = vmul.f32 %v5900, 1.442695
        %v6269 = vpow.pop %v6268
        %v6270 = vmul.f32 %v5901, 1.442695
        %v6271 = vpow.pop %v6270
        %v6272 = vmul.f32 %v5902, 1.442695
        %v6273 = vpow.pop %v6272
        %v6274 = vmul.f32 %v5903, 1.442695
        %v6275 = vpow.pop %v6274
        %v6276 = vmul.f32 %v5904, 1.442695
        %v6277 = vpow.pop %v6276
        %v6278 = vmul.f32 %v5905, 1.442695
        %v6279 = vpow.pop %v6278
        %v6280 = vmul.f32 %v5906, 1.442695
        %v6281 = vpow.pop %v6280
        %v6282 = vmul.f32 %v5907, 1.442695
        %v6283 = vpow.pop %v6282
        %v6284 = vmul.f32 %v5908, 1.442695
        %v6285 = vpow.pop %v6284
        %v6286 = vmul.f32 %v5909, 1.442695
        %v6287 = vpow.pop %v6286
        %v6288 = vmul.f32 %v5910, 1.442695
        %v6289 = vpow.pop %v6288
        %v6290 = vmul.f32 %v5911, 1.442695
        %v6291 = vpow.pop %v6290
        %v6292 = vmul.f32 %v5912, 1.442695
        %v6293 = vpow.pop %v6292
        %v6294 = vmul.f32 %v5913, 1.442695
        %v6295 = vpow.pop %v6294
        %v6296 = vmul.f32 %v5914, 1.442695
        %v6297 = vpow.pop %v6296
        %v6298 = vmul.f32 %v5915, 1.442695
        %v6299 = vpow.pop %v6298
        %v6300 = vmul.f32 %v5916, 1.442695
        %v6301 = vpow.pop %v6300
        %v6302 = vmul.f32 %v5917, 1.442695
        %v6303 = vpow.pop %v6302
        %v6304 = vmul.f32 %v5918, 1.442695
        %v6305 = vpow.pop %v6304
        %v6306 = vmul.f32 %v5919, 1.442695
        %v6307 = vpow.pop %v6306
        %v6308 = vmul.f32 %v5920, 1.442695
        %v6309 = vpow.pop %v6308
        %v6310 = vmul.f32 %v5921, 1.442695
        %v6311 = vpow.pop %v6310
        %v6312 = vmul.f32 %v5922, 1.442695
        %v6313 = vpow.pop %v6312
        %v6314 = vmul.f32 %v5923, 1.442695
        %v6315 = vpow.pop %v6314
        %v6316 = vmul.f32 %v5924, 1.442695
        %v6317 = vpow.pop %v6316
        %v6318 = vmul.f32 %v5925, 1.442695
        %v6319 = vpow.pop %v6318
        %v6320 = vmul.f32 %v5926, 1.442695
        %v6321 = vpow.pop %v6320
        %v6322 = vmul.f32 %v5927, 1.442695
        %v6323 = vpow.pop %v6322
        %v6324 = vmul.f32 %v5928, 1.442695
        %v6325 = vpow.pop %v6324
        %v6326 = vmul.f32 %v5929, 1.442695
        %v6327 = vpow.pop %v6326
        %v6328 = vmul.f32 %v5930, 1.442695
        %v6329 = vpow.pop %v6328
        %v6330 = vmul.f32 %v5931, 1.442695
        %v6331 = vpow.pop %v6330
        %v6332 = vmul.f32 %v5932, 1.442695
        %v6333 = vpow.pop %v6332
        %v6334 = vmul.f32 %v5933, 1.442695
        %v6335 = vpow.pop %v6334
        %v6336 = vmul.f32 %v5934, 1.442695
        %v6337 = vpow.pop %v6336
        %v6338 = vmul.f32 %v5935, 1.442695
        %v6339 = vpow.pop %v6338
        %v6340 = vmul.f32 %v5936, 1.442695
        %v6341 = vpow.pop %v6340
        %v6342 = vmul.f32 %v5937, 1.442695
        %v6343 = vpow.pop %v6342
        %v6344 = vmul.f32 %v5938, 1.442695
        %v6345 = vpow.pop %v6344
        %v6346 = vmul.f32 %v5939, 1.442695
        %v6347 = vpow.pop %v6346
        %v6348 = vmul.f32 %v5940, 1.442695
        %v6349 = vpow.pop %v6348
        %v6350 = vmul.f32 %v5941, 1.442695
        %v6351 = vpow.pop %v6350
        %v6352 = vmul.f32 %v5942, 1.442695
        %v6353 = vpow.pop %v6352
        %v6354 = vmul.f32 %v5943, 1.442695
        %v6355 = vpow.pop %v6354
        %v6356 = vmul.f32 %v5944, 1.442695
        %v6357 = vpow.pop %v6356
        %v6358 = vmul.f32 %v5945, 1.442695
        %v6359 = vpow.pop %v6358
        %v6360 = vmul.f32 %v5946, 1.442695
        %v6361 = vpow.pop %v6360
        %v6362 = vmul.f32 %v5947, 1.442695
        %v6363 = vpow.pop %v6362
        %v6364 = vmul.f32 %v5948, 1.442695
        %v6365 = vpow.pop %v6364
        %v6366 = vmul.f32 %v5949, 1.442695
        %v6367 = vpow.pop %v6366
        %v6368 = vmul.f32 %v5950, 1.442695
        %v6369 = vpow.pop %v6368
        %v6370 = vmul.f32 %v5951, 1.442695
        %v6371 = vpow.pop %v6370
        %v6372 = vmul.f32 %v5952, 1.442695
        %v6373 = vpow.pop %v6372
        %v6374 = vmul.f32 %v5953, 1.442695
        %v6375 = vpow.pop %v6374
        %v6376 = vmul.f32 %v5954, 1.442695
        %v6377 = vpow.pop %v6376
        %v6378 = vmul.f32 %v5955, 1.442695
        %v6379 = vpow.pop %v6378
        %v6380 = vmul.f32 %v5956, 1.442695
        %v6381 = vpow.pop %v6380
        %v6382 = vmul.f32 %v5957, 1.442695
        %v6383 = vpow.pop %v6382
        %v6384 = vmul.f32 %v5958, 1.442695
        %v6385 = vpow.pop %v6384
        %v6386 = vmul.f32 %v5959, 1.442695
        %v6387 = vpow.pop %v6386
        %v6388 = vmul.f32 %v5960, 1.442695
        %v6389 = vpow.pop %v6388
        %v6390 = vmul.f32 %v5961, 1.442695
        %v6391 = vpow.pop %v6390
        %v6392 = vmul.f32 %v5962, 1.442695
        %v6393 = vpow.pop %v6392
        %v6394 = vmul.f32 %v5963, 1.442695
        %v6395 = vpow.pop %v6394
        %v6396 = vmul.f32 %v5964, 1.442695
        %v6397 = vpow.pop %v6396
        %v6398 = vmul.f32 %v5965, 1.442695
        %v6399 = vpow.pop %v6398
        %v6400 = vmul.f32 %v5966, 1.442695
        %v6401 = vpow.pop %v6400
        %v6402 = vmul.f32 %v5967, 1.442695
        %v6403 = vpow.pop %v6402
        %v6404 = vmul.f32 %v5968, 1.442695
        %v6405 = vpow.pop %v6404
        %v6406 = vmul.f32 %v5969, 1.442695
        %v6407 = vpow.pop %v6406
        %v6408 = vmul.f32 %v5970, 1.442695
        %v6409 = vpow.pop %v6408
        %v6410 = vmul.f32 %v5971, 1.442695
        %v6411 = vpow.pop %v6410
        %v6412 = vmul.f32 %v5972, 1.442695
        %v6413 = vpow.pop %v6412
        %v6414 = vmul.f32 %v5973, 1.442695
        %v6415 = vpow.pop %v6414
        %v6416 = vmul.f32 %v5974, 1.442695
        %v6417 = vpow.pop %v6416
        %v6418 = vmul.f32 %v5975, 1.442695
        %v6419 = vpow.pop %v6418
        %v6420 = vmul.f32 %v5976, 1.442695
        %v6421 = vpow.pop %v6420
        %v6422 = vmul.f32 %v5977, 1.442695
        %v6423 = vpow.pop %v6422
        %v6424 = vmul.f32 %v5978, 1.442695
        %v6425 = vpow.pop %v6424
        %v6426 = vmul.f32 %v5979, 1.442695
        %v6427 = vpow.pop %v6426
        %v6428 = vadd.f32 %v5981, 1.0
        %v6429 = vadd.f32 %v5983, 1.0
        %v6430 = vadd.f32 %v5985, 1.0
        %v6431 = vadd.f32 %v5987, 1.0
        %v6432 = vadd.f32 %v5989, 1.0
        %v6433 = vadd.f32 %v5991, 1.0
        %v6434 = vadd.f32 %v5993, 1.0
        %v6435 = vadd.f32 %v5995, 1.0
        %v6436 = vadd.f32 %v5997, 1.0
        %v6437 = vadd.f32 %v5999, 1.0
        %v6438 = vadd.f32 %v6001, 1.0
        %v6439 = vadd.f32 %v6003, 1.0
        %v6440 = vadd.f32 %v6005, 1.0
        %v6441 = vadd.f32 %v6007, 1.0
        %v6442 = vadd.f32 %v6009, 1.0
        %v6443 = vadd.f32 %v6011, 1.0
        %v6444 = vadd.f32 %v6013, 1.0
        %v6445 = vadd.f32 %v6015, 1.0
        %v6446 = vadd.f32 %v6017, 1.0
        %v6447 = vadd.f32 %v6019, 1.0
        %v6448 = vadd.f32 %v6021, 1.0
        %v6449 = vadd.f32 %v6023, 1.0
        %v6450 = vadd.f32 %v6025, 1.0
        %v6451 = vadd.f32 %v6027, 1.0
        %v6452 = vadd.f32 %v6029, 1.0
        %v6453 = vadd.f32 %v6031, 1.0
        %v6454 = vadd.f32 %v6033, 1.0
        %v6455 = vadd.f32 %v6035, 1.0
        %v6456 = vadd.f32 %v6037, 1.0
        %v6457 = vadd.f32 %v6039, 1.0
        %v6458 = vadd.f32 %v6041, 1.0
        %v6459 = vadd.f32 %v6043, 1.0
        %v6460 = vadd.f32 %v6045, 1.0
        %v6461 = vadd.f32 %v6047, 1.0
        %v6462 = vadd.f32 %v6049, 1.0
        %v6463 = vadd.f32 %v6051, 1.0
        %v6464 = vadd.f32 %v6053, 1.0
        %v6465 = vadd.f32 %v6055, 1.0
        %v6466 = vadd.f32 %v6057, 1.0
        %v6467 = vadd.f32 %v6059, 1.0
        %v6468 = vadd.f32 %v6061, 1.0
        %v6469 = vadd.f32 %v6063, 1.0
        %v6470 = vadd.f32 %v6065, 1.0
        %v6471 = vadd.f32 %v6067, 1.0
        %v6472 = vadd.f32 %v6069, 1.0
        %v6473 = vadd.f32 %v6071, 1.0
        %v6474 = vadd.f32 %v6073, 1.0
        %v6475 = vadd.f32 %v6075, 1.0
        %v6476 = vadd.f32 %v6077, 1.0
        %v6477 = vadd.f32 %v6079, 1.0
        %v6478 = vadd.f32 %v6081, 1.0
        %v6479 = vadd.f32 %v6083, 1.0
        %v6480 = vadd.f32 %v6085, 1.0
        %v6481 = vadd.f32 %v6087, 1.0
        %v6482 = vadd.f32 %v6089, 1.0
        %v6483 = vadd.f32 %v6091, 1.0
        %v6484 = vadd.f32 %v6093, 1.0
        %v6485 = vadd.f32 %v6095, 1.0
        %v6486 = vadd.f32 %v6097, 1.0
        %v6487 = vadd.f32 %v6099, 1.0
        %v6488 = vadd.f32 %v6101, 1.0
        %v6489 = vadd.f32 %v6103, 1.0
        %v6490 = vadd.f32 %v6105, 1.0
        %v6491 = vadd.f32 %v6107, 1.0
        %v6492 = vadd.f32 %v6109, 1.0
        %v6493 = vadd.f32 %v6111, 1.0
        %v6494 = vadd.f32 %v6113, 1.0
        %v6495 = vadd.f32 %v6115, 1.0
        %v6496 = vadd.f32 %v6117, 1.0
        %v6497 = vadd.f32 %v6119, 1.0
        %v6498 = vadd.f32 %v6121, 1.0
        %v6499 = vadd.f32 %v6123, 1.0
        %v6500 = vadd.f32 %v6125, 1.0
        %v6501 = vadd.f32 %v6127, 1.0
        %v6502 = vadd.f32 %v6129, 1.0
        %v6503 = vadd.f32 %v6131, 1.0
        %v6504 = vadd.f32 %v6133, 1.0
        %v6505 = vadd.f32 %v6135, 1.0
        %v6506 = vadd.f32 %v6137, 1.0
        %v6507 = vadd.f32 %v6139, 1.0
        %v6508 = vadd.f32 %v6141, 1.0
        %v6509 = vadd.f32 %v6143, 1.0
        %v6510 = vadd.f32 %v6145, 1.0
        %v6511 = vadd.f32 %v6147, 1.0
        %v6512 = vadd.f32 %v6149, 1.0
        %v6513 = vadd.f32 %v6151, 1.0
        %v6514 = vadd.f32 %v6153, 1.0
        %v6515 = vadd.f32 %v6155, 1.0
        %v6516 = vadd.f32 %v6157, 1.0
        %v6517 = vadd.f32 %v6159, 1.0
        %v6518 = vadd.f32 %v6161, 1.0
        %v6519 = vadd.f32 %v6163, 1.0
        %v6520 = vadd.f32 %v6165, 1.0
        %v6521 = vadd.f32 %v6167, 1.0
        %v6522 = vadd.f32 %v6169, 1.0
        %v6523 = vadd.f32 %v6171, 1.0
        %v6524 = vadd.f32 %v6173, 1.0
        %v6525 = vadd.f32 %v6175, 1.0
        %v6526 = vadd.f32 %v6177, 1.0
        %v6527 = vadd.f32 %v6179, 1.0
        %v6528 = vadd.f32 %v6181, 1.0
        %v6529 = vadd.f32 %v6183, 1.0
        %v6530 = vadd.f32 %v6185, 1.0
        %v6531 = vadd.f32 %v6187, 1.0
        %v6532 = vadd.f32 %v6189, 1.0
        %v6533 = vadd.f32 %v6191, 1.0
        %v6534 = vadd.f32 %v6193, 1.0
        %v6535 = vadd.f32 %v6195, 1.0
        %v6536 = vadd.f32 %v6197, 1.0
        %v6537 = vadd.f32 %v6199, 1.0
        %v6538 = vadd.f32 %v6201, 1.0
        %v6539 = vadd.f32 %v6203, 1.0
        %v6540 = vadd.f32 %v6205, 1.0
        %v6541 = vadd.f32 %v6207, 1.0
        %v6542 = vadd.f32 %v6209, 1.0
        %v6543 = vadd.f32 %v6211, 1.0
        %v6544 = vadd.f32 %v6213, 1.0
        %v6545 = vadd.f32 %v6215, 1.0
        %v6546 = vadd.f32 %v6217, 1.0
        %v6547 = vadd.f32 %v6219, 1.0
        %v6548 = vadd.f32 %v6221, 1.0
        %v6549 = vadd.f32 %v6223, 1.0
        %v6550 = vadd.f32 %v6225, 1.0
        %v6551 = vadd.f32 %v6227, 1.0
        %v6552 = vadd.f32 %v6229, 1.0
        %v6553 = vadd.f32 %v6231, 1.0
        %v6554 = vadd.f32 %v6233, 1.0
        %v6555 = vadd.f32 %v6235, 1.0
        %v6556 = vadd.f32 %v6237, 1.0
        %v6557 = vadd.f32 %v6239, 1.0
        %v6558 = vadd.f32 %v6241, 1.0
        %v6559 = vadd.f32 %v6243, 1.0
        %v6560 = vadd.f32 %v6245, 1.0
        %v6561 = vadd.f32 %v6247, 1.0
        %v6562 = vadd.f32 %v6249, 1.0
        %v6563 = vadd.f32 %v6251, 1.0
        %v6564 = vadd.f32 %v6253, 1.0
        %v6565 = vadd.f32 %v6255, 1.0
        %v6566 = vadd.f32 %v6257, 1.0
        %v6567 = vadd.f32 %v6259, 1.0
        %v6568 = vadd.f32 %v6261, 1.0
        %v6569 = vadd.f32 %v6263, 1.0
        %v6570 = vadd.f32 %v6265, 1.0
        %v6571 = vadd.f32 %v6267, 1.0
        %v6572 = vadd.f32 %v6269, 1.0
        %v6573 = vadd.f32 %v6271, 1.0
        %v6574 = vadd.f32 %v6273, 1.0
        %v6575 = vadd.f32 %v6275, 1.0
        %v6576 = vadd.f32 %v6277, 1.0
        %v6577 = vadd.f32 %v6279, 1.0
        %v6578 = vadd.f32 %v6281, 1.0
        %v6579 = vadd.f32 %v6283, 1.0
        %v6580 = vadd.f32 %v6285, 1.0
        %v6581 = vadd.f32 %v6287, 1.0
        %v6582 = vadd.f32 %v6289, 1.0
        %v6583 = vadd.f32 %v6291, 1.0
        %v6584 = vadd.f32 %v6293, 1.0
        %v6585 = vadd.f32 %v6295, 1.0
        %v6586 = vadd.f32 %v6297, 1.0
        %v6587 = vadd.f32 %v6299, 1.0
        %v6588 = vadd.f32 %v6301, 1.0
        %v6589 = vadd.f32 %v6303, 1.0
        %v6590 = vadd.f32 %v6305, 1.0
        %v6591 = vadd.f32 %v6307, 1.0
        %v6592 = vadd.f32 %v6309, 1.0
        %v6593 = vadd.f32 %v6311, 1.0
        %v6594 = vadd.f32 %v6313, 1.0
        %v6595 = vadd.f32 %v6315, 1.0
        %v6596 = vadd.f32 %v6317, 1.0
        %v6597 = vadd.f32 %v6319, 1.0
        %v6598 = vadd.f32 %v6321, 1.0
        %v6599 = vadd.f32 %v6323, 1.0
        %v6600 = vadd.f32 %v6325, 1.0
        %v6601 = vadd.f32 %v6327, 1.0
        %v6602 = vadd.f32 %v6329, 1.0
        %v6603 = vadd.f32 %v6331, 1.0
        %v6604 = vadd.f32 %v6333, 1.0
        %v6605 = vadd.f32 %v6335, 1.0
        %v6606 = vadd.f32 %v6337, 1.0
        %v6607 = vadd.f32 %v6339, 1.0
        %v6608 = vadd.f32 %v6341, 1.0
        %v6609 = vadd.f32 %v6343, 1.0
        %v6610 = vadd.f32 %v6345, 1.0
        %v6611 = vadd.f32 %v6347, 1.0
        %v6612 = vadd.f32 %v6349, 1.0
        %v6613 = vadd.f32 %v6351, 1.0
        %v6614 = vadd.f32 %v6353, 1.0
        %v6615 = vadd.f32 %v6355, 1.0
        %v6616 = vadd.f32 %v6357, 1.0
        %v6617 = vadd.f32 %v6359, 1.0
        %v6618 = vadd.f32 %v6361, 1.0
        %v6619 = vadd.f32 %v6363, 1.0
        %v6620 = vadd.f32 %v6365, 1.0
        %v6621 = vadd.f32 %v6367, 1.0
        %v6622 = vadd.f32 %v6369, 1.0
        %v6623 = vadd.f32 %v6371, 1.0
        %v6624 = vadd.f32 %v6373, 1.0
        %v6625 = vadd.f32 %v6375, 1.0
        %v6626 = vadd.f32 %v6377, 1.0
        %v6627 = vadd.f32 %v6379, 1.0
        %v6628 = vadd.f32 %v6381, 1.0
        %v6629 = vadd.f32 %v6383, 1.0
        %v6630 = vadd.f32 %v6385, 1.0
        %v6631 = vadd.f32 %v6387, 1.0
        %v6632 = vadd.f32 %v6389, 1.0
        %v6633 = vadd.f32 %v6391, 1.0
        %v6634 = vadd.f32 %v6393, 1.0
        %v6635 = vadd.f32 %v6395, 1.0
        %v6636 = vadd.f32 %v6397, 1.0
        %v6637 = vadd.f32 %v6399, 1.0
        %v6638 = vadd.f32 %v6401, 1.0
        %v6639 = vadd.f32 %v6403, 1.0
        %v6640 = vadd.f32 %v6405, 1.0
        %v6641 = vadd.f32 %v6407, 1.0
        %v6642 = vadd.f32 %v6409, 1.0
        %v6643 = vadd.f32 %v6411, 1.0
        %v6644 = vadd.f32 %v6413, 1.0
        %v6645 = vadd.f32 %v6415, 1.0
        %v6646 = vadd.f32 %v6417, 1.0
        %v6647 = vadd.f32 %v6419, 1.0
        %v6648 = vadd.f32 %v6421, 1.0
        %v6649 = vadd.f32 %v6423, 1.0
        %v6650 = vadd.f32 %v6425, 1.0
        %v6651 = vadd.f32 %v6427, 1.0
        %v6652 = vrcp.pop %v6428
        %v6653 = vrcp.pop %v6429
        %v6654 = vrcp.pop %v6430
        %v6655 = vrcp.pop %v6431
        %v6656 = vrcp.pop %v6432
        %v6657 = vrcp.pop %v6433
        %v6658 = vrcp.pop %v6434
        %v6659 = vrcp.pop %v6435
        %v6660 = vrcp.pop %v6436
        %v6661 = vrcp.pop %v6437
        %v6662 = vrcp.pop %v6438
        %v6663 = vrcp.pop %v6439
        %v6664 = vrcp.pop %v6440
        %v6665 = vrcp.pop %v6441
        %v6666 = vrcp.pop %v6442
        %v6667 = vrcp.pop %v6443
        %v6668 = vrcp.pop %v6444
        %v6669 = vrcp.pop %v6445
        %v6670 = vrcp.pop %v6446
        %v6671 = vrcp.pop %v6447
        %v6672 = vrcp.pop %v6448
        %v6673 = vrcp.pop %v6449
        %v6674 = vrcp.pop %v6450
        %v6675 = vrcp.pop %v6451
        %v6676 = vrcp.pop %v6452
        %v6677 = vrcp.pop %v6453
        %v6678 = vrcp.pop %v6454
        %v6679 = vrcp.pop %v6455
        %v6680 = vrcp.pop %v6456
        %v6681 = vrcp.pop %v6457
        %v6682 = vrcp.pop %v6458
        %v6683 = vrcp.pop %v6459
        %v6684 = vrcp.pop %v6460
        %v6685 = vrcp.pop %v6461
        %v6686 = vrcp.pop %v6462
        %v6687 = vrcp.pop %v6463
        %v6688 = vrcp.pop %v6464
        %v6689 = vrcp.pop %v6465
        %v6690 = vrcp.pop %v6466
        %v6691 = vrcp.pop %v6467
        %v6692 = vrcp.pop %v6468
        %v6693 = vrcp.pop %v6469
        %v6694 = vrcp.pop %v6470
        %v6695 = vrcp.pop %v6471
        %v6696 = vrcp.pop %v6472
        %v6697 = vrcp.pop %v6473
        %v6698 = vrcp.pop %v6474
        %v6699 = vrcp.pop %v6475
        %v6700 = vrcp.pop %v6476
        %v6701 = vrcp.pop %v6477
        %v6702 = vrcp.pop %v6478
        %v6703 = vrcp.pop %v6479
        %v6704 = vrcp.pop %v6480
        %v6705 = vrcp.pop %v6481
        %v6706 = vrcp.pop %v6482
        %v6707 = vrcp.pop %v6483
        %v6708 = vrcp.pop %v6484
        %v6709 = vrcp.pop %v6485
        %v6710 = vrcp.pop %v6486
        %v6711 = vrcp.pop %v6487
        %v6712 = vrcp.pop %v6488
        %v6713 = vrcp.pop %v6489
        %v6714 = vrcp.pop %v6490
        %v6715 = vrcp.pop %v6491
        %v6716 = vrcp.pop %v6492
        %v6717 = vrcp.pop %v6493
        %v6718 = vrcp.pop %v6494
        %v6719 = vrcp.pop %v6495
        %v6720 = vrcp.pop %v6496
        %v6721 = vrcp.pop %v6497
        %v6722 = vrcp.pop %v6498
        %v6723 = vrcp.pop %v6499
        %v6724 = vrcp.pop %v6500
        %v6725 = vrcp.pop %v6501
        %v6726 = vrcp.pop %v6502
        %v6727 = vrcp.pop %v6503
        %v6728 = vrcp.pop %v6504
        %v6729 = vrcp.pop %v6505
        %v6730 = vrcp.pop %v6506
        %v6731 = vrcp.pop %v6507
        %v6732 = vrcp.pop %v6508
        %v6733 = vrcp.pop %v6509
        %v6734 = vrcp.pop %v6510
        %v6735 = vrcp.pop %v6511
        %v6736 = vrcp.pop %v6512
        %v6737 = vrcp.pop %v6513
        %v6738 = vrcp.pop %v6514
        %v6739 = vrcp.pop %v6515
        %v6740 = vrcp.pop %v6516
        %v6741 = vrcp.pop %v6517
        %v6742 = vrcp.pop %v6518
        %v6743 = vrcp.pop %v6519
        %v6744 = vrcp.pop %v6520
        %v6745 = vrcp.pop %v6521
        %v6746 = vrcp.pop %v6522
        %v6747 = vrcp.pop %v6523
        %v6748 = vrcp.pop %v6524
        %v6749 = vrcp.pop %v6525
        %v6750 = vrcp.pop %v6526
        %v6751 = vrcp.pop %v6527
        %v6752 = vrcp.pop %v6528
        %v6753 = vrcp.pop %v6529
        %v6754 = vrcp.pop %v6530
        %v6755 = vrcp.pop %v6531
        %v6756 = vrcp.pop %v6532
        %v6757 = vrcp.pop %v6533
        %v6758 = vrcp.pop %v6534
        %v6759 = vrcp.pop %v6535
        %v6760 = vrcp.pop %v6536
        %v6761 = vrcp.pop %v6537
        %v6762 = vrcp.pop %v6538
        %v6763 = vrcp.pop %v6539
        %v6764 = vrcp.pop %v6540
        %v6765 = vrcp.pop %v6541
        %v6766 = vrcp.pop %v6542
        %v6767 = vrcp.pop %v6543
        %v6768 = vrcp.pop %v6544
        %v6769 = vrcp.pop %v6545
        %v6770 = vrcp.pop %v6546
        %v6771 = vrcp.pop %v6547
        %v6772 = vrcp.pop %v6548
        %v6773 = vrcp.pop %v6549
        %v6774 = vrcp.pop %v6550
        %v6775 = vrcp.pop %v6551
        %v6776 = vrcp.pop %v6552
        %v6777 = vrcp.pop %v6553
        %v6778 = vrcp.pop %v6554
        %v6779 = vrcp.pop %v6555
        %v6780 = vrcp.pop %v6556
        %v6781 = vrcp.pop %v6557
        %v6782 = vrcp.pop %v6558
        %v6783 = vrcp.pop %v6559
        %v6784 = vrcp.pop %v6560
        %v6785 = vrcp.pop %v6561
        %v6786 = vrcp.pop %v6562
        %v6787 = vrcp.pop %v6563
        %v6788 = vrcp.pop %v6564
        %v6789 = vrcp.pop %v6565
        %v6790 = vrcp.pop %v6566
        %v6791 = vrcp.pop %v6567
        %v6792 = vrcp.pop %v6568
        %v6793 = vrcp.pop %v6569
        %v6794 = vrcp.pop %v6570
        %v6795 = vrcp.pop %v6571
        %v6796 = vrcp.pop %v6572
        %v6797 = vrcp.pop %v6573
        %v6798 = vrcp.pop %v6574
        %v6799 = vrcp.pop %v6575
        %v6800 = vrcp.pop %v6576
        %v6801 = vrcp.pop %v6577
        %v6802 = vrcp.pop %v6578
        %v6803 = vrcp.pop %v6579
        %v6804 = vrcp.pop %v6580
        %v6805 = vrcp.pop %v6581
        %v6806 = vrcp.pop %v6582
        %v6807 = vrcp.pop %v6583
        %v6808 = vrcp.pop %v6584
        %v6809 = vrcp.pop %v6585
        %v6810 = vrcp.pop %v6586
        %v6811 = vrcp.pop %v6587
        %v6812 = vrcp.pop %v6588
        %v6813 = vrcp.pop %v6589
        %v6814 = vrcp.pop %v6590
        %v6815 = vrcp.pop %v6591
        %v6816 = vrcp.pop %v6592
        %v6817 = vrcp.pop %v6593
        %v6818 = vrcp.pop %v6594
        %v6819 = vrcp.pop %v6595
        %v6820 = vrcp.pop %v6596
        %v6821 = vrcp.pop %v6597
        %v6822 = vrcp.pop %v6598
        %v6823 = vrcp.pop %v6599
        %v6824 = vrcp.pop %v6600
        %v6825 = vrcp.pop %v6601
        %v6826 = vrcp.pop %v6602
        %v6827 = vrcp.pop %v6603
        %v6828 = vrcp.pop %v6604
        %v6829 = vrcp.pop %v6605
        %v6830 = vrcp.pop %v6606
        %v6831 = vrcp.pop %v6607
        %v6832 = vrcp.pop %v6608
        %v6833 = vrcp.pop %v6609
        %v6834 = vrcp.pop %v6610
        %v6835 = vrcp.pop %v6611
        %v6836 = vrcp.pop %v6612
        %v6837 = vrcp.pop %v6613
        %v6838 = vrcp.pop %v6614
        %v6839 = vrcp.pop %v6615
        %v6840 = vrcp.pop %v6616
        %v6841 = vrcp.pop %v6617
        %v6842 = vrcp.pop %v6618
        %v6843 = vrcp.pop %v6619
        %v6844 = vrcp.pop %v6620
        %v6845 = vrcp.pop %v6621
        %v6846 = vrcp.pop %v6622
        %v6847 = vrcp.pop %v6623
        %v6848 = vrcp.pop %v6624
        %v6849 = vrcp.pop %v6625
        %v6850 = vrcp.pop %v6626
        %v6851 = vrcp.pop %v6627
        %v6852 = vrcp.pop %v6628
        %v6853 = vrcp.pop %v6629
        %v6854 = vrcp.pop %v6630
        %v6855 = vrcp.pop %v6631
        %v6856 = vrcp.pop %v6632
        %v6857 = vrcp.pop %v6633
        %v6858 = vrcp.pop %v6634
        %v6859 = vrcp.pop %v6635
        %v6860 = vrcp.pop %v6636
        %v6861 = vrcp.pop %v6637
        %v6862 = vrcp.pop %v6638
        %v6863 = vrcp.pop %v6639
        %v6864 = vrcp.pop %v6640
        %v6865 = vrcp.pop %v6641
        %v6866 = vrcp.pop %v6642
        %v6867 = vrcp.pop %v6643
        %v6868 = vrcp.pop %v6644
        %v6869 = vrcp.pop %v6645
        %v6870 = vrcp.pop %v6646
        %v6871 = vrcp.pop %v6647
        %v6872 = vrcp.pop %v6648
        %v6873 = vrcp.pop %v6649
        %v6874 = vrcp.pop %v6650
        %v6875 = vrcp.pop %v6651
        %v6876 = vpack.c.bf16 %v6659, %v6652
        %v6877 = vpack.c.bf16 %v6660, %v6653
        %v6878 = vpack.c.bf16 %v6661, %v6654
        %v6879 = vpack.c.bf16 %v6662, %v6655
        %v6880 = vpack.c.bf16 %v6663, %v6656
        %v6881 = vpack.c.bf16 %v6664, %v6657
        %v6882 = vpack.c.bf16 %v6665, %v6658
        %v6883 = vpack.c.bf16 %v6673, %v6666
        %v6884 = vpack.c.bf16 %v6674, %v6667
        %v6885 = vpack.c.bf16 %v6675, %v6668
        %v6886 = vpack.c.bf16 %v6676, %v6669
        %v6887 = vpack.c.bf16 %v6677, %v6670
        %v6888 = vpack.c.bf16 %v6678, %v6671
        %v6889 = vpack.c.bf16 %v6679, %v6672
        %v6890 = vpack.c.bf16 %v6687, %v6680
        %v6891 = vpack.c.bf16 %v6688, %v6681
        %v6892 = vpack.c.bf16 %v6689, %v6682
        %v6893 = vpack.c.bf16 %v6690, %v6683
        %v6894 = vpack.c.bf16 %v6691, %v6684
        %v6895 = vpack.c.bf16 %v6692, %v6685
        %v6896 = vpack.c.bf16 %v6693, %v6686
        %v6897 = vpack.c.bf16 %v6701, %v6694
        %v6898 = vpack.c.bf16 %v6702, %v6695
        %v6899 = vpack.c.bf16 %v6703, %v6696
        %v6900 = vpack.c.bf16 %v6704, %v6697
        %v6901 = vpack.c.bf16 %v6705, %v6698
        %v6902 = vpack.c.bf16 %v6706, %v6699
        %v6903 = vpack.c.bf16 %v6707, %v6700
        %v6904 = vpack.c.bf16 %v6715, %v6708
        %v6905 = vpack.c.bf16 %v6716, %v6709
        %v6906 = vpack.c.bf16 %v6717, %v6710
        %v6907 = vpack.c.bf16 %v6718, %v6711
        %v6908 = vpack.c.bf16 %v6719, %v6712
        %v6909 = vpack.c.bf16 %v6720, %v6713
        %v6910 = vpack.c.bf16 %v6721, %v6714
        %v6911 = vpack.c.bf16 %v6729, %v6722
        %v6912 = vpack.c.bf16 %v6730, %v6723
        %v6913 = vpack.c.bf16 %v6731, %v6724
        %v6914 = vpack.c.bf16 %v6732, %v6725
        %v6915 = vpack.c.bf16 %v6733, %v6726
        %v6916 = vpack.c.bf16 %v6734, %v6727
        %v6917 = vpack.c.bf16 %v6735, %v6728
        %v6918 = vpack.c.bf16 %v6743, %v6736
        %v6919 = vpack.c.bf16 %v6744, %v6737
        %v6920 = vpack.c.bf16 %v6745, %v6738
        %v6921 = vpack.c.bf16 %v6746, %v6739
        %v6922 = vpack.c.bf16 %v6747, %v6740
        %v6923 = vpack.c.bf16 %v6748, %v6741
        %v6924 = vpack.c.bf16 %v6749, %v6742
        %v6925 = vpack.c.bf16 %v6757, %v6750
        %v6926 = vpack.c.bf16 %v6758, %v6751
        %v6927 = vpack.c.bf16 %v6759, %v6752
        %v6928 = vpack.c.bf16 %v6760, %v6753
        %v6929 = vpack.c.bf16 %v6761, %v6754
        %v6930 = vpack.c.bf16 %v6762, %v6755
        %v6931 = vpack.c.bf16 %v6763, %v6756
        %v6932 = vpack.c.bf16 %v6771, %v6764
        %v6933 = vpack.c.bf16 %v6772, %v6765
        %v6934 = vpack.c.bf16 %v6773, %v6766
        %v6935 = vpack.c.bf16 %v6774, %v6767
        %v6936 = vpack.c.bf16 %v6775, %v6768
        %v6937 = vpack.c.bf16 %v6776, %v6769
        %v6938 = vpack.c.bf16 %v6777, %v6770
        %v6939 = vpack.c.bf16 %v6785, %v6778
        %v6940 = vpack.c.bf16 %v6786, %v6779
        %v6941 = vpack.c.bf16 %v6787, %v6780
        %v6942 = vpack.c.bf16 %v6788, %v6781
        %v6943 = vpack.c.bf16 %v6789, %v6782
        %v6944 = vpack.c.bf16 %v6790, %v6783
        %v6945 = vpack.c.bf16 %v6791, %v6784
        %v6946 = vpack.c.bf16 %v6799, %v6792
        %v6947 = vpack.c.bf16 %v6800, %v6793
        %v6948 = vpack.c.bf16 %v6801, %v6794
        %v6949 = vpack.c.bf16 %v6802, %v6795
        %v6950 = vpack.c.bf16 %v6803, %v6796
        %v6951 = vpack.c.bf16 %v6804, %v6797
        %v6952 = vpack.c.bf16 %v6805, %v6798
        %v6953 = vpack.c.bf16 %v6813, %v6806
        %v6954 = vpack.c.bf16 %v6814, %v6807
        %v6955 = vpack.c.bf16 %v6815, %v6808
        %v6956 = vpack.c.bf16 %v6816, %v6809
        %v6957 = vpack.c.bf16 %v6817, %v6810
        %v6958 = vpack.c.bf16 %v6818, %v6811
        %v6959 = vpack.c.bf16 %v6819, %v6812
        %v6960 = vpack.c.bf16 %v6827, %v6820
        %v6961 = vpack.c.bf16 %v6828, %v6821
        %v6962 = vpack.c.bf16 %v6829, %v6822
        %v6963 = vpack.c.bf16 %v6830, %v6823
        %v6964 = vpack.c.bf16 %v6831, %v6824
        %v6965 = vpack.c.bf16 %v6832, %v6825
        %v6966 = vpack.c.bf16 %v6833, %v6826
        %v6967 = vpack.c.bf16 %v6841, %v6834
        %v6968 = vpack.c.bf16 %v6842, %v6835
        %v6969 = vpack.c.bf16 %v6843, %v6836
        %v6970 = vpack.c.bf16 %v6844, %v6837
        %v6971 = vpack.c.bf16 %v6845, %v6838
        %v6972 = vpack.c.bf16 %v6846, %v6839
        %v6973 = vpack.c.bf16 %v6847, %v6840
        %v6974 = vpack.c.bf16 %v6855, %v6848
        %v6975 = vpack.c.bf16 %v6856, %v6849
        %v6976 = vpack.c.bf16 %v6857, %v6850
        %v6977 = vpack.c.bf16 %v6858, %v6851
        %v6978 = vpack.c.bf16 %v6859, %v6852
        %v6979 = vpack.c.bf16 %v6860, %v6853
        %v6980 = vpack.c.bf16 %v6861, %v6854
        %v6981 = vpack.c.bf16 %v6869, %v6862
        %v6982 = vpack.c.bf16 %v6870, %v6863
        %v6983 = vpack.c.bf16 %v6871, %v6864
        %v6984 = vpack.c.bf16 %v6872, %v6865
        %v6985 = vpack.c.bf16 %v6873, %v6866
        %v6986 = vpack.c.bf16 %v6874, %v6867
        %v6987 = vpack.c.bf16 %v6875, %v6868
        %v7100 = vunpack.c.l.b16 %v6876
        %v7101 = vunpack.c.l.b16 %v6877
        %v7102 = vunpack.c.l.b16 %v6878
        %v7103 = vunpack.c.l.b16 %v6879
        %v7104 = vunpack.c.l.b16 %v6880
        %v7105 = vunpack.c.l.b16 %v6881
        %v7106 = vunpack.c.l.b16 %v6882
        %v7107 = vunpack.c.h.b16 %v6876
        %v7108 = vunpack.c.h.b16 %v6877
        %v7109 = vunpack.c.h.b16 %v6878
        %v7110 = vunpack.c.h.b16 %v6879
        %v7111 = vunpack.c.h.b16 %v6880
        %v7112 = vunpack.c.h.b16 %v6881
        %v7113 = vunpack.c.h.b16 %v6882
        %v7114 = vunpack.c.l.b16 %v6883
        %v7115 = vunpack.c.l.b16 %v6884
        %v7116 = vunpack.c.l.b16 %v6885
        %v7117 = vunpack.c.l.b16 %v6886
        %v7118 = vunpack.c.l.b16 %v6887
        %v7119 = vunpack.c.l.b16 %v6888
        %v7120 = vunpack.c.l.b16 %v6889
        %v7121 = vunpack.c.h.b16 %v6883
        %v7122 = vunpack.c.h.b16 %v6884
        %v7123 = vunpack.c.h.b16 %v6885
        %v7124 = vunpack.c.h.b16 %v6886
        %v7125 = vunpack.c.h.b16 %v6887
        %v7126 = vunpack.c.h.b16 %v6888
        %v7127 = vunpack.c.h.b16 %v6889
        %v7128 = vunpack.c.l.b16 %v6890
        %v7129 = vunpack.c.l.b16 %v6891
        %v7130 = vunpack.c.l.b16 %v6892
        %v7131 = vunpack.c.l.b16 %v6893
        %v7132 = vunpack.c.l.b16 %v6894
        %v7133 = vunpack.c.l.b16 %v6895
        %v7134 = vunpack.c.l.b16 %v6896
        %v7135 = vunpack.c.h.b16 %v6890
        %v7136 = vunpack.c.h.b16 %v6891
        %v7137 = vunpack.c.h.b16 %v6892
        %v7138 = vunpack.c.h.b16 %v6893
        %v7139 = vunpack.c.h.b16 %v6894
        %v7140 = vunpack.c.h.b16 %v6895
        %v7141 = vunpack.c.h.b16 %v6896
        %v7142 = vunpack.c.l.b16 %v6897
        %v7143 = vunpack.c.l.b16 %v6898
        %v7144 = vunpack.c.l.b16 %v6899
        %v7145 = vunpack.c.l.b16 %v6900
        %v7146 = vunpack.c.l.b16 %v6901
        %v7147 = vunpack.c.l.b16 %v6902
        %v7148 = vunpack.c.l.b16 %v6903
        %v7149 = vunpack.c.h.b16 %v6897
        %v7150 = vunpack.c.h.b16 %v6898
        %v7151 = vunpack.c.h.b16 %v6899
        %v7152 = vunpack.c.h.b16 %v6900
        %v7153 = vunpack.c.h.b16 %v6901
        %v7154 = vunpack.c.h.b16 %v6902
        %v7155 = vunpack.c.h.b16 %v6903
        %v7156 = vunpack.c.l.b16 %v6904
        %v7157 = vunpack.c.l.b16 %v6905
        %v7158 = vunpack.c.l.b16 %v6906
        %v7159 = vunpack.c.l.b16 %v6907
        %v7160 = vunpack.c.l.b16 %v6908
        %v7161 = vunpack.c.l.b16 %v6909
        %v7162 = vunpack.c.l.b16 %v6910
        %v7163 = vunpack.c.h.b16 %v6904
        %v7164 = vunpack.c.h.b16 %v6905
        %v7165 = vunpack.c.h.b16 %v6906
        %v7166 = vunpack.c.h.b16 %v6907
        %v7167 = vunpack.c.h.b16 %v6908
        %v7168 = vunpack.c.h.b16 %v6909
        %v7169 = vunpack.c.h.b16 %v6910
        %v7170 = vunpack.c.l.b16 %v6911
        %v7171 = vunpack.c.l.b16 %v6912
        %v7172 = vunpack.c.l.b16 %v6913
        %v7173 = vunpack.c.l.b16 %v6914
        %v7174 = vunpack.c.l.b16 %v6915
        %v7175 = vunpack.c.l.b16 %v6916
        %v7176 = vunpack.c.l.b16 %v6917
        %v7177 = vunpack.c.h.b16 %v6911
        %v7178 = vunpack.c.h.b16 %v6912
        %v7179 = vunpack.c.h.b16 %v6913
        %v7180 = vunpack.c.h.b16 %v6914
        %v7181 = vunpack.c.h.b16 %v6915
        %v7182 = vunpack.c.h.b16 %v6916
        %v7183 = vunpack.c.h.b16 %v6917
        %v7184 = vunpack.c.l.b16 %v6918
        %v7185 = vunpack.c.l.b16 %v6919
        %v7186 = vunpack.c.l.b16 %v6920
        %v7187 = vunpack.c.l.b16 %v6921
        %v7188 = vunpack.c.l.b16 %v6922
        %v7189 = vunpack.c.l.b16 %v6923
        %v7190 = vunpack.c.l.b16 %v6924
        %v7191 = vunpack.c.h.b16 %v6918
        %v7192 = vunpack.c.h.b16 %v6919
        %v7193 = vunpack.c.h.b16 %v6920
        %v7194 = vunpack.c.h.b16 %v6921
        %v7195 = vunpack.c.h.b16 %v6922
        %v7196 = vunpack.c.h.b16 %v6923
        %v7197 = vunpack.c.h.b16 %v6924
        %v7198 = vunpack.c.l.b16 %v6925
        %v7199 = vunpack.c.l.b16 %v6926
        %v7200 = vunpack.c.l.b16 %v6927
        %v7201 = vunpack.c.l.b16 %v6928
        %v7202 = vunpack.c.l.b16 %v6929
        %v7203 = vunpack.c.l.b16 %v6930
        %v7204 = vunpack.c.l.b16 %v6931
        %v7205 = vunpack.c.h.b16 %v6925
        %v7206 = vunpack.c.h.b16 %v6926
        %v7207 = vunpack.c.h.b16 %v6927
        %v7208 = vunpack.c.h.b16 %v6928
        %v7209 = vunpack.c.h.b16 %v6929
        %v7210 = vunpack.c.h.b16 %v6930
        %v7211 = vunpack.c.h.b16 %v6931
        %v7212 = vunpack.c.l.b16 %v6932
        %v7213 = vunpack.c.l.b16 %v6933
        %v7214 = vunpack.c.l.b16 %v6934
        %v7215 = vunpack.c.l.b16 %v6935
        %v7216 = vunpack.c.l.b16 %v6936
        %v7217 = vunpack.c.l.b16 %v6937
        %v7218 = vunpack.c.l.b16 %v6938
        %v7219 = vunpack.c.h.b16 %v6932
        %v7220 = vunpack.c.h.b16 %v6933
        %v7221 = vunpack.c.h.b16 %v6934
        %v7222 = vunpack.c.h.b16 %v6935
        %v7223 = vunpack.c.h.b16 %v6936
        %v7224 = vunpack.c.h.b16 %v6937
        %v7225 = vunpack.c.h.b16 %v6938
        %v7226 = vunpack.c.l.b16 %v6939
        %v7227 = vunpack.c.l.b16 %v6940
        %v7228 = vunpack.c.l.b16 %v6941
        %v7229 = vunpack.c.l.b16 %v6942
        %v7230 = vunpack.c.l.b16 %v6943
        %v7231 = vunpack.c.l.b16 %v6944
        %v7232 = vunpack.c.l.b16 %v6945
        %v7233 = vunpack.c.h.b16 %v6939
        %v7234 = vunpack.c.h.b16 %v6940
        %v7235 = vunpack.c.h.b16 %v6941
        %v7236 = vunpack.c.h.b16 %v6942
        %v7237 = vunpack.c.h.b16 %v6943
        %v7238 = vunpack.c.h.b16 %v6944
        %v7239 = vunpack.c.h.b16 %v6945
        %v7240 = vunpack.c.l.b16 %v6946
        %v7241 = vunpack.c.l.b16 %v6947
        %v7242 = vunpack.c.l.b16 %v6948
        %v7243 = vunpack.c.l.b16 %v6949
        %v7244 = vunpack.c.l.b16 %v6950
        %v7245 = vunpack.c.l.b16 %v6951
        %v7246 = vunpack.c.l.b16 %v6952
        %v7247 = vunpack.c.h.b16 %v6946
        %v7248 = vunpack.c.h.b16 %v6947
        %v7249 = vunpack.c.h.b16 %v6948
        %v7250 = vunpack.c.h.b16 %v6949
        %v7251 = vunpack.c.h.b16 %v6950
        %v7252 = vunpack.c.h.b16 %v6951
        %v7253 = vunpack.c.h.b16 %v6952
        %v7254 = vunpack.c.l.b16 %v6953
        %v7255 = vunpack.c.l.b16 %v6954
        %v7256 = vunpack.c.l.b16 %v6955
        %v7257 = vunpack.c.l.b16 %v6956
        %v7258 = vunpack.c.l.b16 %v6957
        %v7259 = vunpack.c.l.b16 %v6958
        %v7260 = vunpack.c.l.b16 %v6959
        %v7261 = vunpack.c.h.b16 %v6953
        %v7262 = vunpack.c.h.b16 %v6954
        %v7263 = vunpack.c.h.b16 %v6955
        %v7264 = vunpack.c.h.b16 %v6956
        %v7265 = vunpack.c.h.b16 %v6957
        %v7266 = vunpack.c.h.b16 %v6958
        %v7267 = vunpack.c.h.b16 %v6959
        %v7268 = vunpack.c.l.b16 %v6960
        %v7269 = vunpack.c.l.b16 %v6961
        %v7270 = vunpack.c.l.b16 %v6962
        %v7271 = vunpack.c.l.b16 %v6963
        %v7272 = vunpack.c.l.b16 %v6964
        %v7273 = vunpack.c.l.b16 %v6965
        %v7274 = vunpack.c.l.b16 %v6966
        %v7275 = vunpack.c.h.b16 %v6960
        %v7276 = vunpack.c.h.b16 %v6961
        %v7277 = vunpack.c.h.b16 %v6962
        %v7278 = vunpack.c.h.b16 %v6963
        %v7279 = vunpack.c.h.b16 %v6964
        %v7280 = vunpack.c.h.b16 %v6965
        %v7281 = vunpack.c.h.b16 %v6966
        %v7282 = vunpack.c.l.b16 %v6967
        %v7283 = vunpack.c.l.b16 %v6968
        %v7284 = vunpack.c.l.b16 %v6969
        %v7285 = vunpack.c.l.b16 %v6970
        %v7286 = vunpack.c.l.b16 %v6971
        %v7287 = vunpack.c.l.b16 %v6972
        %v7288 = vunpack.c.l.b16 %v6973
        %v7289 = vunpack.c.h.b16 %v6967
        %v7290 = vunpack.c.h.b16 %v6968
        %v7291 = vunpack.c.h.b16 %v6969
        %v7292 = vunpack.c.h.b16 %v6970
        %v7293 = vunpack.c.h.b16 %v6971
        %v7294 = vunpack.c.h.b16 %v6972
        %v7295 = vunpack.c.h.b16 %v6973
        %v7296 = vunpack.c.l.b16 %v6974
        %v7297 = vunpack.c.l.b16 %v6975
        %v7298 = vunpack.c.l.b16 %v6976
        %v7299 = vunpack.c.l.b16 %v6977
        %v7300 = vunpack.c.l.b16 %v6978
        %v7301 = vunpack.c.l.b16 %v6979
        %v7302 = vunpack.c.l.b16 %v6980
        %v7303 = vunpack.c.h.b16 %v6974
        %v7304 = vunpack.c.h.b16 %v6975
        %v7305 = vunpack.c.h.b16 %v6976
        %v7306 = vunpack.c.h.b16 %v6977
        %v7307 = vunpack.c.h.b16 %v6978
        %v7308 = vunpack.c.h.b16 %v6979
        %v7309 = vunpack.c.h.b16 %v6980
        %v7310 = vunpack.c.l.b16 %v6981
        %v7311 = vunpack.c.l.b16 %v6982
        %v7312 = vunpack.c.l.b16 %v6983
        %v7313 = vunpack.c.l.b16 %v6984
        %v7314 = vunpack.c.l.b16 %v6985
        %v7315 = vunpack.c.l.b16 %v6986
        %v7316 = vunpack.c.l.b16 %v6987
        %v7317 = vunpack.c.h.b16 %v6981
        %v7318 = vunpack.c.h.b16 %v6982
        %v7319 = vunpack.c.h.b16 %v6983
        %v7320 = vunpack.c.h.b16 %v6984
        %v7321 = vunpack.c.h.b16 %v6985
        %v7322 = vunpack.c.h.b16 %v6986
        %v7323 = vunpack.c.h.b16 %v6987
        %v7324 = vpack.c.b16 %v7101, %v7100
        %v7325 = vpack.c.b16 %v7103, %v7102
        %v7326 = vpack.c.b16 %v7105, %v7104
        %v7327 = vpack.c.b16 %v7106, %v7106
        %v7328 = vpack.c.b16 %v7108, %v7107
        %v7329 = vpack.c.b16 %v7110, %v7109
        %v7330 = vpack.c.b16 %v7112, %v7111
        %v7331 = vpack.c.b16 %v7113, %v7113
        %v7332 = vpack.c.b16 %v7115, %v7114
        %v7333 = vpack.c.b16 %v7117, %v7116
        %v7334 = vpack.c.b16 %v7119, %v7118
        %v7335 = vpack.c.b16 %v7120, %v7120
        %v7336 = vpack.c.b16 %v7122, %v7121
        %v7337 = vpack.c.b16 %v7124, %v7123
        %v7338 = vpack.c.b16 %v7126, %v7125
        %v7339 = vpack.c.b16 %v7127, %v7127
        %v7340 = vpack.c.b16 %v7129, %v7128
        %v7341 = vpack.c.b16 %v7131, %v7130
        %v7342 = vpack.c.b16 %v7133, %v7132
        %v7343 = vpack.c.b16 %v7134, %v7134
        %v7344 = vpack.c.b16 %v7136, %v7135
        %v7345 = vpack.c.b16 %v7138, %v7137
        %v7346 = vpack.c.b16 %v7140, %v7139
        %v7347 = vpack.c.b16 %v7141, %v7141
        %v7348 = vpack.c.b16 %v7143, %v7142
        %v7349 = vpack.c.b16 %v7145, %v7144
        %v7350 = vpack.c.b16 %v7147, %v7146
        %v7351 = vpack.c.b16 %v7148, %v7148
        %v7352 = vpack.c.b16 %v7150, %v7149
        %v7353 = vpack.c.b16 %v7152, %v7151
        %v7354 = vpack.c.b16 %v7154, %v7153
        %v7355 = vpack.c.b16 %v7155, %v7155
        %v7356 = vpack.c.b16 %v7157, %v7156
        %v7357 = vpack.c.b16 %v7159, %v7158
        %v7358 = vpack.c.b16 %v7161, %v7160
        %v7359 = vpack.c.b16 %v7162, %v7162
        %v7360 = vpack.c.b16 %v7164, %v7163
        %v7361 = vpack.c.b16 %v7166, %v7165
        %v7362 = vpack.c.b16 %v7168, %v7167
        %v7363 = vpack.c.b16 %v7169, %v7169
        %v7364 = vpack.c.b16 %v7171, %v7170
        %v7365 = vpack.c.b16 %v7173, %v7172
        %v7366 = vpack.c.b16 %v7175, %v7174
        %v7367 = vpack.c.b16 %v7176, %v7176
        %v7368 = vpack.c.b16 %v7178, %v7177
        %v7369 = vpack.c.b16 %v7180, %v7179
        %v7370 = vpack.c.b16 %v7182, %v7181
        %v7371 = vpack.c.b16 %v7183, %v7183
        %v7372 = vpack.c.b16 %v7185, %v7184
        %v7373 = vpack.c.b16 %v7187, %v7186
        %v7374 = vpack.c.b16 %v7189, %v7188
        %v7375 = vpack.c.b16 %v7190, %v7190
        %v7376 = vpack.c.b16 %v7192, %v7191
        %v7377 = vpack.c.b16 %v7194, %v7193
        %v7378 = vpack.c.b16 %v7196, %v7195
        %v7379 = vpack.c.b16 %v7197, %v7197
        %v7380 = vpack.c.b16 %v7199, %v7198
        %v7381 = vpack.c.b16 %v7201, %v7200
        %v7382 = vpack.c.b16 %v7203, %v7202
        %v7383 = vpack.c.b16 %v7204, %v7204
        %v7384 = vpack.c.b16 %v7206, %v7205
        %v7385 = vpack.c.b16 %v7208, %v7207
        %v7386 = vpack.c.b16 %v7210, %v7209
        %v7387 = vpack.c.b16 %v7211, %v7211
        %v7388 = vpack.c.b16 %v7213, %v7212
        %v7389 = vpack.c.b16 %v7215, %v7214
        %v7390 = vpack.c.b16 %v7217, %v7216
        %v7391 = vpack.c.b16 %v7218, %v7218
        %v7392 = vpack.c.b16 %v7220, %v7219
        %v7393 = vpack.c.b16 %v7222, %v7221
        %v7394 = vpack.c.b16 %v7224, %v7223
        %v7395 = vpack.c.b16 %v7225, %v7225
        %v7396 = vpack.c.b16 %v7227, %v7226
        %v7397 = vpack.c.b16 %v7229, %v7228
        %v7398 = vpack.c.b16 %v7231, %v7230
        %v7399 = vpack.c.b16 %v7232, %v7232
        %v7400 = vpack.c.b16 %v7234, %v7233
        %v7401 = vpack.c.b16 %v7236, %v7235
        %v7402 = vpack.c.b16 %v7238, %v7237
        %v7403 = vpack.c.b16 %v7239, %v7239
        %v7404 = vpack.c.b16 %v7241, %v7240
        %v7405 = vpack.c.b16 %v7243, %v7242
        %v7406 = vpack.c.b16 %v7245, %v7244
        %v7407 = vpack.c.b16 %v7246, %v7246
        %v7408 = vpack.c.b16 %v7248, %v7247
        %v7409 = vpack.c.b16 %v7250, %v7249
        %v7410 = vpack.c.b16 %v7252, %v7251
        %v7411 = vpack.c.b16 %v7253, %v7253
        %v7412 = vpack.c.b16 %v7255, %v7254
        %v7413 = vpack.c.b16 %v7257, %v7256
        %v7414 = vpack.c.b16 %v7259, %v7258
        %v7415 = vpack.c.b16 %v7260, %v7260
        %v7416 = vpack.c.b16 %v7262, %v7261
        %v7417 = vpack.c.b16 %v7264, %v7263
        %v7418 = vpack.c.b16 %v7266, %v7265
        %v7419 = vpack.c.b16 %v7267, %v7267
        %v7420 = vpack.c.b16 %v7269, %v7268
        %v7421 = vpack.c.b16 %v7271, %v7270
        %v7422 = vpack.c.b16 %v7273, %v7272
        %v7423 = vpack.c.b16 %v7274, %v7274
        %v7424 = vpack.c.b16 %v7276, %v7275
        %v7425 = vpack.c.b16 %v7278, %v7277
        %v7426 = vpack.c.b16 %v7280, %v7279
        %v7427 = vpack.c.b16 %v7281, %v7281
        %v7428 = vpack.c.b16 %v7283, %v7282
        %v7429 = vpack.c.b16 %v7285, %v7284
        %v7430 = vpack.c.b16 %v7287, %v7286
        %v7431 = vpack.c.b16 %v7288, %v7288
        %v7432 = vpack.c.b16 %v7290, %v7289
        %v7433 = vpack.c.b16 %v7292, %v7291
        %v7434 = vpack.c.b16 %v7294, %v7293
        %v7435 = vpack.c.b16 %v7295, %v7295
        %v7436 = vpack.c.b16 %v7297, %v7296
        %v7437 = vpack.c.b16 %v7299, %v7298
        %v7438 = vpack.c.b16 %v7301, %v7300
        %v7439 = vpack.c.b16 %v7302, %v7302
        %v7440 = vpack.c.b16 %v7304, %v7303
        %v7441 = vpack.c.b16 %v7306, %v7305
        %v7442 = vpack.c.b16 %v7308, %v7307
        %v7443 = vpack.c.b16 %v7309, %v7309
        %v7444 = vpack.c.b16 %v7311, %v7310
        %v7445 = vpack.c.b16 %v7313, %v7312
        %v7446 = vpack.c.b16 %v7315, %v7314
        %v7447 = vpack.c.b16 %v7316, %v7316
        %v7448 = vpack.c.b16 %v7318, %v7317
        %v7449 = vpack.c.b16 %v7320, %v7319
        %v7450 = vpack.c.b16 %v7322, %v7321
        %v7451 = vpack.c.b16 %v7323, %v7323
        %7580 = vst [vmem:[%s566] sm:$0xff] %v7324
        %7581 = vst [vmem:[%s566 + $0x8] sm:$0xff] %v7325
        %7582 = vst [vmem:[%s566 + $0x10] sm:$0xff] %v7326
        %7583 = vst [vmem:[%s566 + $0x18] sm:$0xf] %v7327
        %7584 = vst [vmem:[%s566 + $0x1c] sm:$0xff] %v7328
        %7585 = vst [vmem:[%s566 + $0x24] sm:$0xff] %v7329
        %7586 = vst [vmem:[%s566 + $0x2c] sm:$0xff] %v7330
        %7587 = vst [vmem:[%s566 + $0x34] sm:$0xf] %v7331
        %7588 = vst [vmem:[%s566 + $0x38] sm:$0xff] %v7332
        %7589 = vst [vmem:[%s566 + $0x40] sm:$0xff] %v7333
        %7590 = vst [vmem:[%s566 + $0x48] sm:$0xff] %v7334
        %7591 = vst [vmem:[%s566 + $0x50] sm:$0xf] %v7335
        %7592 = vst [vmem:[%s566 + $0x54] sm:$0xff] %v7336
        %7593 = vst [vmem:[%s566 + $0x5c] sm:$0xff] %v7337
        %7594 = vst [vmem:[%s566 + $0x64] sm:$0xff] %v7338
        %7595 = vst [vmem:[%s566 + $0x6c] sm:$0xf] %v7339
        %7596 = vst [vmem:[%s566 + $0x70] sm:$0xff] %v7340
        %7597 = vst [vmem:[%s566 + $0x78] sm:$0xff] %v7341
        %7598 = vst [vmem:[%s566 + $0x80] sm:$0xff] %v7342
        %7599 = vst [vmem:[%s566 + $0x88] sm:$0xf] %v7343
        %7600 = vst [vmem:[%s566 + $0x8c] sm:$0xff] %v7344
        %7601 = vst [vmem:[%s566 + $0x94] sm:$0xff] %v7345
        %7602 = vst [vmem:[%s566 + $0x9c] sm:$0xff] %v7346
        %7603 = vst [vmem:[%s566 + $0xa4] sm:$0xf] %v7347
        %7604 = vst [vmem:[%s566 + $0xa8] sm:$0xff] %v7348
        %7605 = vst [vmem:[%s566 + $0xb0] sm:$0xff] %v7349
        %7606 = vst [vmem:[%s566 + $0xb8] sm:$0xff] %v7350
        %7607 = vst [vmem:[%s566 + $0xc0] sm:$0xf] %v7351
        %7608 = vst [vmem:[%s566 + $0xc4] sm:$0xff] %v7352
        %7609 = vst [vmem:[%s566 + $0xcc] sm:$0xff] %v7353
        %7610 = vst [vmem:[%s566 + $0xd4] sm:$0xff] %v7354
        %7611 = vst [vmem:[%s566 + $0xdc] sm:$0xf] %v7355
        %7612 = vst [vmem:[%s566 + $0xe0] sm:$0xff] %v7356
        %7613 = vst [vmem:[%s566 + $0xe8] sm:$0xff] %v7357
        %7614 = vst [vmem:[%s566 + $0xf0] sm:$0xff] %v7358
        %7615 = vst [vmem:[%s566 + $0xf8] sm:$0xf] %v7359
        %7616 = vst [vmem:[%s566 + $0xfc] sm:$0xff] %v7360
        %7617 = vst [vmem:[%s566 + $0x104] sm:$0xff] %v7361
        %7618 = vst [vmem:[%s566 + $0x10c] sm:$0xff] %v7362
        %7619 = vst [vmem:[%s566 + $0x114] sm:$0xf] %v7363
        %7620 = vst [vmem:[%s566 + $0x118] sm:$0xff] %v7364
        %7621 = vst [vmem:[%s566 + $0x120] sm:$0xff] %v7365
        %7622 = vst [vmem:[%s566 + $0x128] sm:$0xff] %v7366
        %7623 = vst [vmem:[%s566 + $0x130] sm:$0xf] %v7367
        %7624 = vst [vmem:[%s566 + $0x134] sm:$0xff] %v7368
        %7625 = vst [vmem:[%s566 + $0x13c] sm:$0xff] %v7369
        %7626 = vst [vmem:[%s566 + $0x144] sm:$0xff] %v7370
        %7627 = vst [vmem:[%s566 + $0x14c] sm:$0xf] %v7371
        %7628 = vst [vmem:[%s566 + $0x150] sm:$0xff] %v7372
        %7629 = vst [vmem:[%s566 + $0x158] sm:$0xff] %v7373
        %7630 = vst [vmem:[%s566 + $0x160] sm:$0xff] %v7374
        %7631 = vst [vmem:[%s566 + $0x168] sm:$0xf] %v7375
        %7632 = vst [vmem:[%s566 + $0x16c] sm:$0xff] %v7376
        %7633 = vst [vmem:[%s566 + $0x174] sm:$0xff] %v7377
        %7634 = vst [vmem:[%s566 + $0x17c] sm:$0xff] %v7378
        %7635 = vst [vmem:[%s566 + $0x184] sm:$0xf] %v7379
        %7636 = vst [vmem:[%s566 + $0x188] sm:$0xff] %v7380
        %7637 = vst [vmem:[%s566 + $0x190] sm:$0xff] %v7381
        %7638 = vst [vmem:[%s566 + $0x198] sm:$0xff] %v7382
        %7639 = vst [vmem:[%s566 + $0x1a0] sm:$0xf] %v7383
        %7640 = vst [vmem:[%s566 + $0x1a4] sm:$0xff] %v7384
        %7641 = vst [vmem:[%s566 + $0x1ac] sm:$0xff] %v7385
        %7642 = vst [vmem:[%s566 + $0x1b4] sm:$0xff] %v7386
        %7643 = vst [vmem:[%s566 + $0x1bc] sm:$0xf] %v7387
        %7644 = vst [vmem:[%s566 + $0x1c0] sm:$0xff] %v7388
        %7645 = vst [vmem:[%s566 + $0x1c8] sm:$0xff] %v7389
        %7646 = vst [vmem:[%s566 + $0x1d0] sm:$0xff] %v7390
        %7647 = vst [vmem:[%s566 + $0x1d8] sm:$0xf] %v7391
        %7648 = vst [vmem:[%s566 + $0x1dc] sm:$0xff] %v7392
        %7649 = vst [vmem:[%s566 + $0x1e4] sm:$0xff] %v7393
        %7650 = vst [vmem:[%s566 + $0x1ec] sm:$0xff] %v7394
        %7651 = vst [vmem:[%s566 + $0x1f4] sm:$0xf] %v7395
        %7652 = vst [vmem:[%s566 + $0x1f8] sm:$0xff] %v7396
        %7653 = vst [vmem:[%s566 + $0x200] sm:$0xff] %v7397
        %7654 = vst [vmem:[%s566 + $0x208] sm:$0xff] %v7398
        %7655 = vst [vmem:[%s566 + $0x210] sm:$0xf] %v7399
        %7656 = vst [vmem:[%s566 + $0x214] sm:$0xff] %v7400
        %7657 = vst [vmem:[%s566 + $0x21c] sm:$0xff] %v7401
        %7658 = vst [vmem:[%s566 + $0x224] sm:$0xff] %v7402
        %7659 = vst [vmem:[%s566 + $0x22c] sm:$0xf] %v7403
        %7660 = vst [vmem:[%s566 + $0x230] sm:$0xff] %v7404
        %7661 = vst [vmem:[%s566 + $0x238] sm:$0xff] %v7405
        %7662 = vst [vmem:[%s566 + $0x240] sm:$0xff] %v7406
        %7663 = vst [vmem:[%s566 + $0x248] sm:$0xf] %v7407
        %7664 = vst [vmem:[%s566 + $0x24c] sm:$0xff] %v7408
        %7665 = vst [vmem:[%s566 + $0x254] sm:$0xff] %v7409
        %7666 = vst [vmem:[%s566 + $0x25c] sm:$0xff] %v7410
        %7667 = vst [vmem:[%s566 + $0x264] sm:$0xf] %v7411
        %7668 = vst [vmem:[%s566 + $0x268] sm:$0xff] %v7412
        %7669 = vst [vmem:[%s566 + $0x270] sm:$0xff] %v7413
        %7670 = vst [vmem:[%s566 + $0x278] sm:$0xff] %v7414
        %7671 = vst [vmem:[%s566 + $0x280] sm:$0xf] %v7415
        %7672 = vst [vmem:[%s566 + $0x284] sm:$0xff] %v7416
        %7673 = vst [vmem:[%s566 + $0x28c] sm:$0xff] %v7417
        %7674 = vst [vmem:[%s566 + $0x294] sm:$0xff] %v7418
        %7675 = vst [vmem:[%s566 + $0x29c] sm:$0xf] %v7419
        %7676 = vst [vmem:[%s566 + $0x2a0] sm:$0xff] %v7420
        %7677 = vst [vmem:[%s566 + $0x2a8] sm:$0xff] %v7421
        %7678 = vst [vmem:[%s566 + $0x2b0] sm:$0xff] %v7422
        %7679 = vst [vmem:[%s566 + $0x2b8] sm:$0xf] %v7423
        %7680 = vst [vmem:[%s566 + $0x2bc] sm:$0xff] %v7424
        %7681 = vst [vmem:[%s566 + $0x2c4] sm:$0xff] %v7425
        %7682 = vst [vmem:[%s566 + $0x2cc] sm:$0xff] %v7426
        %7683 = vst [vmem:[%s566 + $0x2d4] sm:$0xf] %v7427
        %7684 = vst [vmem:[%s566 + $0x2d8] sm:$0xff] %v7428
        %7685 = vst [vmem:[%s566 + $0x2e0] sm:$0xff] %v7429
        %7686 = vst [vmem:[%s566 + $0x2e8] sm:$0xff] %v7430
        %7687 = vst [vmem:[%s566 + $0x2f0] sm:$0xf] %v7431
        %7688 = vst [vmem:[%s566 + $0x2f4] sm:$0xff] %v7432
        %7689 = vst [vmem:[%s566 + $0x2fc] sm:$0xff] %v7433
        %7690 = vst [vmem:[%s566 + $0x304] sm:$0xff] %v7434
        %7691 = vst [vmem:[%s566 + $0x30c] sm:$0xf] %v7435
        %7692 = vst [vmem:[%s566 + $0x310] sm:$0xff] %v7436
        %7693 = vst [vmem:[%s566 + $0x318] sm:$0xff] %v7437
        %7694 = vst [vmem:[%s566 + $0x320] sm:$0xff] %v7438
        %7695 = vst [vmem:[%s566 + $0x328] sm:$0xf] %v7439
        %7696 = vst [vmem:[%s566 + $0x32c] sm:$0xff] %v7440
        %7697 = vst [vmem:[%s566 + $0x334] sm:$0xff] %v7441
        %7698 = vst [vmem:[%s566 + $0x33c] sm:$0xff] %v7442
        %7699 = vst [vmem:[%s566 + $0x344] sm:$0xf] %v7443
        %7700 = vst [vmem:[%s566 + $0x348] sm:$0xff] %v7444
        %7701 = vst [vmem:[%s566 + $0x350] sm:$0xff] %v7445
        %7702 = vst [vmem:[%s566 + $0x358] sm:$0xff] %v7446
        %7703 = vst [vmem:[%s566 + $0x360] sm:$0xf] %v7447
        %7704 = vst [vmem:[%s566 + $0x364] sm:$0xff] %v7448
        %7705 = vst [vmem:[%s566 + $0x36c] sm:$0xff] %v7449
        %7706 = vst [vmem:[%s566 + $0x374] sm:$0xff] %v7450
        %7707 = vst [vmem:[%s566 + $0x37c] sm:$0xf] %v7451
        %7708 = vst [vmem:[%s573] sm:$0xff] %v3016
        %7709 = vst [vmem:[%s573 + $0x8] sm:$0xff] %v3019
        %7710 = vst [vmem:[%s573 + $0x10] sm:$0xff] %v3024
        %7711 = vst [vmem:[%s573 + $0x18] sm:$0xff] %v3027
        %7712 = vst [vmem:[%s573 + $0x20] sm:$0xff] %v3032
        %7713 = vst [vmem:[%s573 + $0x28] sm:$0xff] %v3035
        %7714 = vst [vmem:[%s573 + $0x30] sm:$0xff] %v3040
        %7715 = vst [vmem:[%s573 + $0x38] sm:$0xff] %v3043
        %7716 = vst [vmem:[%s573 + $0x40] sm:$0xff] %v3048
        %7717 = vst [vmem:[%s573 + $0x48] sm:$0xff] %v3051
        %7718 = vst [vmem:[%s573 + $0x50] sm:$0xff] %v3056
        %7719 = vst [vmem:[%s573 + $0x58] sm:$0xff] %v3059
        %7720 = vst [vmem:[%s573 + $0x60] sm:$0xff] %v3064
        %7721 = vst [vmem:[%s573 + $0x68] sm:$0xff] %v3067
        %7722 = vst [vmem:[%s573 + $0x70] sm:$0xff] %v3072
        %7723 = vst [vmem:[%s573 + $0x78] sm:$0xff] %v3075
        %7724 = vst [vmem:[%s573 + $0x80] sm:$0xff] %v3080
        %7725 = vst [vmem:[%s573 + $0x88] sm:$0xff] %v3083
        %7726 = vst [vmem:[%s573 + $0x90] sm:$0xff] %v3088
        %7727 = vst [vmem:[%s573 + $0x98] sm:$0xff] %v3091
        %7728 = vst [vmem:[%s573 + $0xa0] sm:$0xff] %v3096
        %7729 = vst [vmem:[%s573 + $0xa8] sm:$0xff] %v3099
        %7730 = vst [vmem:[%s573 + $0xb0] sm:$0xff] %v3104
        %7731 = vst [vmem:[%s573 + $0xb8] sm:$0xff] %v3107
        %7732 = vst [vmem:[%s573 + $0xc0] sm:$0xff] %v3112
        %7733 = vst [vmem:[%s573 + $0xc8] sm:$0xff] %v3115
        %7734 = vst [vmem:[%s573 + $0xd0] sm:$0xff] %v3120
        %7735 = vst [vmem:[%s573 + $0xd8] sm:$0xff] %v3123
        %7736 = vst [vmem:[%s573 + $0xe0] sm:$0xff] %v3128
        %7737 = vst [vmem:[%s573 + $0xe8] sm:$0xff] %v3131
        %7738 = vst [vmem:[%s573 + $0xf0] sm:$0xff] %v3136
        %7739 = vst [vmem:[%s573 + $0xf8] sm:$0xff] %v3139
        %s7740 = sand.u32 %s312, 1
        %s7741 = scalar_lea.sflag [#allocation4], %s7740
        %s7742 = sand.u32 %s312, 1
        %s7743 = smul.addr %s7742, 896
        %s7744 = scalar_lea.vmem [#allocation13], %s7743
        %s7745 = sand.u32 %s338, 1
        %s7746 = scalar_lea.sflag [#allocation15], %s7745
        %s7747 = sand.u32 %s338, 1
        %s7748 = smul.addr %s7747, 256
        %s7749 = scalar_lea.vmem [#allocation14], %s7748
        // Predicated region
        $region93: #{tpu_custom_call.1} parent=67 // pred_check
          %p7750 = pneg %p322
        $region94: #{tpu_custom_call.1} parent=67 // pred_check_branch
          %7752 = sbr.rel (%p7750) target = $region96
        $region95: #{tpu_custom_call.1} parent=67 // pred_region
          %s7753 = smul.u32 32, %s37
          %s7755 = ssub.s32 14336, 14336
          %7756 = vsyncadd %s7741, %s7755
          %s7757 = smul.addr %s7753, 7
          %s7758 = smul.addr %s7757, 64
          %s7759 = scalar_lea.hbm %s12, %s7758
          %s7760 = sshll.u32 %s7744, 4
          %s7761 = int_to_ptr.vmem [resolvable:$true] %s7760
          %7766 = dma.vmem_to_hbm [thread:$0]  %s7761, 14336, %s7759, %s7741, 448, 448, 28
        $region96: #{tpu_custom_call.1} parent=67 // pred_fallthru
          _
        // Predicated region
        $region97: #{tpu_custom_call.1} parent=67 // pred_check
          %p7767 = pneg %p348
        $region98: #{tpu_custom_call.1} parent=67 // pred_check_branch
          %7769 = sbr.rel (%p7767) target = $region100
        $region99: #{tpu_custom_call.1} parent=67 // pred_region
          %s7770 = smul.u32 32, %s37
          %s7772 = ssub.s32 4096, 4096
          %7773 = vsyncadd %s7746, %s7772
          %s7774 = smul.addr %s7770, 128
          %s7775 = scalar_lea.hbm %s13, %s7774
          %s7776 = sshll.u32 %s7749, 4
          %s7777 = int_to_ptr.vmem [resolvable:$true] %s7776
          %7782 = dma.vmem_to_hbm [thread:$0]  %s7777, 4096, %s7775, %s7746, 128, 128, 8
        $region100: #{tpu_custom_call.1} parent=67 // pred_fallthru
          _
      $region68: #{tpu_custom_call.1} parent=5 // pred_fallthru
        _
      %p7783 = scmp.le.s32.totalorder 2, %s32
      // Predicated region
      $region101: #{tpu_custom_call.1} parent=5 // pred_check
        %p7784 = pneg %p7783
      $region102: #{tpu_custom_call.1} parent=5 // pred_check_branch
        %7786 = sbr.rel (%p7784) target = $region104
      $region103: #{tpu_custom_call.1} parent=5 // pred_region
        %s7787 = ssub.s32 %s32, 2
        // Predicated region
        $region105: #{tpu_custom_call.1} parent=103 // pred_check
          %p7788 = pneg %p328
        $region106: #{tpu_custom_call.1} parent=103 // pred_check_branch
          %7790 = sbr.rel (%p7788) target = $region108
        $region107: #{tpu_custom_call.1} parent=103 // pred_region
          %s7791 = sand.u32 %s313, 1
          %s7792 = scalar_lea.sflag [#allocation4], %s7791
          %s7793 = sand.u32 %s313, 1
          %s7794 = smul.addr %s7793, 896
          %s7795 = scalar_lea.vmem [#allocation13], %s7794
          %7796 = dma.done %s7792, 14336
        $region108: #{tpu_custom_call.1} parent=103 // pred_fallthru
          _
        // Predicated region
        $region109: #{tpu_custom_call.1} parent=103 // pred_check
          %p7797 = pneg %p354
        $region110: #{tpu_custom_call.1} parent=103 // pred_check_branch
          %7799 = sbr.rel (%p7797) target = $region112
        $region111: #{tpu_custom_call.1} parent=103 // pred_region
          %s7800 = sand.u32 %s339, 1
          %s7801 = scalar_lea.sflag [#allocation15], %s7800
          %s7802 = sand.u32 %s339, 1
          %s7803 = smul.addr %s7802, 256
          %s7804 = scalar_lea.vmem [#allocation14], %s7803
          %7805 = dma.done %s7801, 4096
        $region112: #{tpu_custom_call.1} parent=103 // pred_fallthru
          _
      $region104: #{tpu_custom_call.1} parent=5 // pred_fallthru
        _
    $region6: #{tpu_custom_call.1} parent=1 // loop_footer
      %s36 = sadd.s32 1, %s32
    $region7: #{tpu_custom_call.1} parent=1 // loop_footer_branch
      %31 = sbr.rel target = $region3
    $region8: #{tpu_custom_call.1} parent=1 // loop_exit
      _
    %7806 = vsyncpa [#allocation3], 1
    %s7807 = scalar_lea.sflag [#allocation3], 1
    %7808 = vsyncpa %s7807, 1
    %7809 = vsyncpa [#allocation6], 1
    %7810 = vsyncpa [#allocation9], 1
    %7811 = vsyncpa [#allocation12], 1
    %7812 = vsyncpa [#allocation4], 1
    %s7813 = scalar_lea.sflag [#allocation4], 1
    %7814 = vsyncpa %s7813, 1
    %7815 = vsyncpa [#allocation15], 1
    %s7816 = scalar_lea.sflag [#allocation15], 1
    %7817 = vsyncpa %s7816, 1

</llo_original>
